<compile_context>
chip_gen: v7x
topology: tpu7x:2x2x1
jax: 0.10.0
libtpu: 0.0.40
codegen_flags: <defaults>
</compile_context>

<pallas_src>
import jax
import jax.numpy as jnp
from jax import lax
from jax.experimental import pallas as pl
from jax.experimental.pallas import tpu as pltpu

L_IN = 1000      # hard-coded by the module (view(-1, 1000) / Linear(1000, 512))
L_OUT = 250      # conv chain: 1000 -> 500 -> 250 -> 250

# Offsets into the packed conv-param SMEM array.
_CW1, _CB1, _CW2, _CB2, _CW3, _CB3 = 0, 20, 24, 104, 108, 188
_CP_LEN = 192


# ------------------------------- fused kernel ------------------------------ #

def _fused_kernel(
    xp_ref,                                     # (7, B, 250) f32 VMEM (input phases)
    cp_ref,                                     # (192,) f32 SMEM (packed conv params)
    tail_ref,                                   # (8, 512) f32 VMEM (MLP biases + W6)
    lw1_hbm, lw2_hbm, lw3_hbm, lw4_hbm, lw5_hbm,  # big MLP weights, bf16, HBM (pl.ANY)
    o_ref,                                      # (B, 1) f32 VMEM output
    lw1_v, lw2_v, lw3_v, lw4_v, lw5_v,          # bf16 VMEM scratch for the weights
    sem,                                        # DMA semaphores (5,)
):
    f32 = jnp.float32
    bf16 = jnp.bfloat16

    # ---- kick off HBM->VMEM weight DMAs; they overlap the VPU conv work ----
    copies = [
        pltpu.make_async_copy(src, dst, sem.at[i])
        for i, (src, dst) in enumerate(
            zip([lw1_hbm, lw2_hbm, lw3_hbm, lw4_hbm, lw5_hbm],
                [lw1_v, lw2_v, lw3_v, lw4_v, lw5_v]))
    ]
    for dma in copies:
        dma.start()

    # ---- conv1: Cin=1 -> Cout=4, k=5, pad=2, stride=2 (polyphase form) -----
    # xp_ref[s][b, j] = x_pad[b, 4*j + s]  (x_pad = input padded by 2 each side)
    # even outputs y1[2j]   use phases s = t     (t = 0..4)
    # odd  outputs y1[2j+1] use phases s = t + 2 (t = 0..4)
    xs = [xp_ref[s] for s in range(7)]          # each (B, 250) f32
    y1e, y1o = [], []
    for co in range(4):
        w0 = cp_ref[_CW1 + co * 5]
        e = w0 * xs[0]
        o = w0 * xs[2]
        for t in range(1, 5):
            w = cp_ref[_CW1 + co * 5 + t]
            e = e + w * xs[t]
            o = o + w * xs[t + 2]
        b = cp_ref[_CB1 + co]
        y1e.append(jnp.maximum(e + b, 0.0))
        y1o.append(jnp.maximum(o + b, 0.0))

    # Lane-dim shifts with zero fill (length is the last / lane dimension).
    def sr1(a):   # a[:, o-1]
        return jnp.concatenate([jnp.zeros_like(a[:, :1]), a[:, :-1]], axis=1)

    def sl1(a):   # a[:, o+1]
        return jnp.concatenate([a[:, 1:], jnp.zeros_like(a[:, :1])], axis=1)

    def sr2(a):   # a[:, o-2]
        return jnp.concatenate([jnp.zeros_like(a[:, :2]), a[:, :-2]], axis=1)

    def sl2(a):   # a[:, o+2]
        return jnp.concatenate([a[:, 2:], jnp.zeros_like(a[:, :2])], axis=1)

    # ---- conv2: 4 -> 4, k=5, pad=2, stride=2 (taps map onto y1 phases) -----
    # y2[o] = sum_ci [ w[0]*y1e[o-1] + w[1]*y1o[o-1] + w[2]*y1e[o]
    #                + w[3]*y1o[o]   + w[4]*y1e[o+1] ]
    # ci-outer: shifted taps are generated lazily and die per-iteration.
    acc2 = [None] * 4
    for ci in range(4):
        e, o = y1e[ci], y1o[ci]
        e_m1, o_m1, e_p1 = sr1(e), sr1(o), sl1(e)
        for co in range(4):
            base = _CW2 + (co * 4 + ci) * 5
            term = (cp_ref[base + 0] * e_m1 + cp_ref[base + 1] * o_m1
                    + cp_ref[base + 2] * e + cp_ref[base + 3] * o
                    + cp_ref[base + 4] * e_p1)
            acc2[co] = term if acc2[co] is None else acc2[co] + term
    y2 = [jnp.maximum(acc2[co] + cp_ref[_CB2 + co], 0.0) for co in range(4)]

    # ---- conv3: 4 -> 4, k=5, pad=2, stride=1 (ci-outer, lazy taps) ---------
    acc3 = [None] * 4
    for ci in range(4):
        a = y2[ci]
        tm2, tm1, tp1, tp2 = sr2(a), sr1(a), sl1(a), sl2(a)
        for co in range(4):
            base = _CW3 + (co * 4 + ci) * 5
            term = (cp_ref[base + 0] * tm2 + cp_ref[base + 1] * tm1
                    + cp_ref[base + 2] * a + cp_ref[base + 3] * tp1
                    + cp_ref[base + 4] * tp2)
            acc3[co] = term if acc3[co] is None else acc3[co] + term
    # bf16 activations feed the MXU directly (f32 accumulation below).
    y3 = [jnp.maximum(acc3[co] + cp_ref[_CB3 + co], 0.0).astype(bf16)
          for co in range(4)]

    # ---- MLP. view(-1, 1000) is folded into a 4-chunk contraction for layer 1
    # (flat feature index = c*250 + l  <->  W1 reshaped to (4, 250, 512)).
    copies[0].wait()
    acc = None
    for c in range(4):
        part = jnp.dot(y3[c], lw1_v[c], preferred_element_type=f32)
        acc = part if acc is None else acc + part
    h = jnp.maximum(acc + tail_ref[0:1, :], 0.0)               # (B, 512) f32

    layer_cfg = [(lw2_v, 1, 512), (lw3_v, 2, 256), (lw4_v, 3, 128), (lw5_v, 4, 64)]
    for (wv, row, n), dma in zip(layer_cfg, copies[1:]):
        dma.wait()
        h = jnp.maximum(
            jnp.dot(h.astype(bf16), wv[...], preferred_element_type=f32)
            + tail_ref[row:row + 1, 0:n],
            0.0)

    # Final 64 -> 1 layer as a lane reduction (avoids an N=1 matmul); f32 on VPU.
    w6 = tail_ref[6:7, 0:64]                                   # (1, 64) f32
    b6 = tail_ref[5:6, 0:1]                                    # (1, 1) f32
    out = jnp.sum(h * w6, axis=-1, keepdims=True) + b6         # (B, 1)
    o_ref[...] = jnp.maximum(out, 0.0)


# --------------------------------- wrappers -------------------------------- #

def _vmem():
    return pl.BlockSpec(memory_space=pltpu.MemorySpace.VMEM)


def _smem():
    return pl.BlockSpec(memory_space=pltpu.MemorySpace.SMEM)


def _hbm():
    return pl.BlockSpec(memory_space=pl.ANY)


def _fused_forward(xp, p):
    B = xp.shape[1]
    kernel = pl.pallas_call(
        _fused_kernel,
        out_shape=jax.ShapeDtypeStruct((B, 1), jnp.float32),
        in_specs=(
            [_vmem()]                 # xp (input phases)
            + [_smem()]               # packed conv weights/biases
            + [_vmem()]               # packed MLP biases + final weight
            + [_hbm()] * 5            # lw1..lw5 stay in HBM, manually DMA'd
        ),
        out_specs=_vmem(),
        scratch_shapes=[
            pltpu.VMEM((4, L_OUT, 512), jnp.bfloat16),
            pltpu.VMEM((512, 512), jnp.bfloat16),
            pltpu.VMEM((512, 256), jnp.bfloat16),
            pltpu.VMEM((256, 128), jnp.bfloat16),
            pltpu.VMEM((128, 64), jnp.bfloat16),
            pltpu.SemaphoreType.DMA((5,)),
        ],
    )
    return kernel(xp, p["cp"], p["tail"],
                  p["lw1"], p["lw2"], p["lw3"], p["lw4"], p["lw5"])


@jax.jit
def model_forward(x, prep):
    """x: (B, 1, 1000) -> (B, 1)."""
    B = x.shape[0]
    xpad = jnp.pad(x[:, 0, :], ((0, 0), (2, 2)))               # (B, 1004)
    # 7 stride-4 phase views: xp[s, b, j] = xpad[b, 4*j + s]. This strided
    # slice/stack on the 8 KB input is the only per-call glue op (fuses into
    # one tiny XLA fusion).
    cols = [lax.slice(xpad, (0, s), (B, s + 4 * (L_OUT - 1) + 1), (1, 4))
            for s in range(7)]
    xp = jnp.stack(cols, axis=0)                               # (7, B, 250)
    return _fused_forward(xp, prep)


# ---------------------------- params & reference ---------------------------- #

def init_params(key):
    """PyTorch-style uniform(-1/sqrt(fan_in), 1/sqrt(fan_in)) init."""
    def uniform(k, shape, fan_in):
        bound = 1.0 / float(fan_in) ** 0.5
        return jax.random.uniform(k, shape, jnp.float32, -bound, bound)

    conv_cfg = [(1, 4, 5), (4, 4, 5), (4, 4, 5)]                # (Cin, Cout, K)
    lin_cfg = [(1000, 512), (512, 512), (512, 256),
               (256, 128), (128, 64), (64, 1)]                  # (in, out)
    keys = iter(jax.random.split(key, 2 * (len(conv_cfg) + len(lin_cfg))))

    conv_w, conv_b = [], []
    for cin, cout, k in conv_cfg:
        conv_w.append(uniform(next(keys), (cout, cin, k), cin * k))
        conv_b.append(uniform(next(keys), (cout,), cin * k))

    lin_w, lin_b = [], []
    for fin, fout in lin_cfg:
        lin_w.append(uniform(next(keys), (fin, fout), fin))     # stored (in, out)
        lin_b.append(uniform(next(keys), (fout,), fin))

    return {"conv_w": conv_w, "conv_b": conv_b, "lin_w": lin_w, "lin_b": lin_b}


def prepare_params(params):
    """One-time repack of params into kernel layout (outside the hot path)."""
    bf16 = jnp.bfloat16
    cw, cb = params["conv_w"], params["conv_b"]
    lw, lb = params["lin_w"], params["lin_b"]

    # Packed conv params for SMEM scalar reads: idx = offset + (co*Cin+ci)*K + t.
    cpack = jnp.concatenate([cw[0].reshape(-1), cb[0],
                             cw[1].reshape(-1), cb[1],
                             cw[2].reshape(-1), cb[2]]).astype(jnp.float32)
    assert cpack.shape[0] == _CP_LEN

    # Packed MLP biases + final-layer weight into one small VMEM slab.
    tail = jnp.zeros((8, 512), jnp.float32)
    tail = tail.at[0, :512].set(lb[0])
    tail = tail.at[1, :512].set(lb[1])
    tail = tail.at[2, :256].set(lb[2])
    tail = tail.at[3, :128].set(lb[3])
    tail = tail.at[4, :64].set(lb[4])
    tail = tail.at[5, 0].set(lb[5][0])
    tail = tail.at[6, :64].set(lw[5][:, 0])

    return {
        "cp": cpack,
        "tail": tail,
        # MLP weights stored bf16 (halves HBM traffic); fed to the MXU as bf16
        # with f32 accumulation in-kernel.
        "lw1": lw[0].reshape(4, L_OUT, 512).astype(bf16),
        "lw2": lw[1].astype(bf16),
        "lw3": lw[2].astype(bf16),
        "lw4": lw[3].astype(bf16),
        "lw5": lw[4].astype(bf16),
    }


def reference_forward(x, params):
    """Plain-JAX reference of the PyTorch forward using the same numerics the
    kernel uses: f32 convs, bf16 activations+weights (f32 accumulation) for the
    first 5 MLP layers, f32 final layer."""
    bf16 = jnp.bfloat16
    h = x
    cfg = [(2, 2), (2, 2), (1, 2)]                              # (stride, padding)
    for (s, p), w, b in zip(cfg, params["conv_w"], params["conv_b"]):
        h = lax.conv_general_dilated(
            h, w, window_strides=(s,), padding=[(p, p)],
            dimension_numbers=("NCH", "OIH", "NCH"),
            precision=lax.Precision.HIGHEST)
        h = jnp.maximum(h + b[None, :, None], 0.0)
    h = h.reshape(-1, 1000)
    lw, lb = params["lin_w"], params["lin_b"]
    for w, b in zip(lw[:5], lb[:5]):
        h = jnp.maximum(
            jnp.dot(h.astype(bf16), w.astype(bf16),
                    preferred_element_type=jnp.float32) + b, 0.0)
    h = jnp.maximum(
        jnp.dot(h, lw[5], precision=lax.Precision.HIGHEST) + lb[5], 0.0)
    return h


if __name__ == "__main__":
    key = jax.random.PRNGKey(0)
    kp, kx = jax.random.split(key)
    params = init_params(kp)
    prep = prepare_params(params)
    x = jax.random.normal(kx, (2, 1, L_IN), dtype=jnp.float32)

    out = model_forward(x, prep)
    jax.block_until_ready(out)

    ref = reference_forward(x, params)
    assert out.shape == (2, 1), out.shape
    assert jnp.allclose(out, ref, atol=5e-3, rtol=5e-3), (out, ref)
    print("KERNEL_OK")
</pallas_src>

<mosaic_0001>
module attributes {stable_mosaic.version = 11 : i64} {
  func.func @_fused_kernel(%arg0: memref<7x2x250xf32, #tpu.memory_space<vmem>>, %arg1: memref<192xf32, #tpu.memory_space<smem>>, %arg2: memref<8x512xf32, #tpu.memory_space<vmem>>, %arg3: memref<4x250x512xbf16, #tpu.memory_space<any>>, %arg4: memref<512x512xbf16, #tpu.memory_space<any>>, %arg5: memref<512x256xbf16, #tpu.memory_space<any>>, %arg6: memref<256x128xbf16, #tpu.memory_space<any>>, %arg7: memref<128x64xbf16, #tpu.memory_space<any>>, %arg8: memref<2x1xf32, #tpu.memory_space<vmem>>, %arg9: memref<4x250x512xbf16, #tpu.memory_space<vmem>>, %arg10: memref<512x512xbf16, #tpu.memory_space<vmem>>, %arg11: memref<512x256xbf16, #tpu.memory_space<vmem>>, %arg12: memref<256x128xbf16, #tpu.memory_space<vmem>>, %arg13: memref<128x64xbf16, #tpu.memory_space<vmem>>, %arg14: memref<5x!tpu.dma_semaphore, #tpu.memory_space<semaphore_mem>>) attributes {dimension_semantics = [], scalar_prefetch = 0 : i64, scratch_operands = 6 : i64, tpu.core_type = #tpu.core_type<tc>} {
    %c0_i32 = arith.constant 0 : i32
    %0 = tpu.memref_slice %arg14[%c0_i32] : memref<5x!tpu.dma_semaphore, #tpu.memory_space<semaphore_mem>> -> memref<1x!tpu.dma_semaphore, #tpu.memory_space<semaphore_mem>>
    %1 = tpu.memref_squeeze %0 : memref<1x!tpu.dma_semaphore, #tpu.memory_space<semaphore_mem>> -> memref<!tpu.dma_semaphore, #tpu.memory_space<semaphore_mem>>
    tpu.enqueue_dma source(%arg3 : memref<4x250x512xbf16, #tpu.memory_space<any>>) target(%arg9 : memref<4x250x512xbf16, #tpu.memory_space<vmem>>) target_semaphore(%1 : memref<!tpu.dma_semaphore, #tpu.memory_space<semaphore_mem>>)
    %c1_i32 = arith.constant 1 : i32
    %2 = tpu.memref_slice %arg14[%c1_i32] : memref<5x!tpu.dma_semaphore, #tpu.memory_space<semaphore_mem>> -> memref<1x!tpu.dma_semaphore, #tpu.memory_space<semaphore_mem>>
    %3 = tpu.memref_squeeze %2 : memref<1x!tpu.dma_semaphore, #tpu.memory_space<semaphore_mem>> -> memref<!tpu.dma_semaphore, #tpu.memory_space<semaphore_mem>>
    tpu.enqueue_dma source(%arg4 : memref<512x512xbf16, #tpu.memory_space<any>>) target(%arg10 : memref<512x512xbf16, #tpu.memory_space<vmem>>) target_semaphore(%3 : memref<!tpu.dma_semaphore, #tpu.memory_space<semaphore_mem>>)
    %c2_i32 = arith.constant 2 : i32
    %4 = tpu.memref_slice %arg14[%c2_i32] : memref<5x!tpu.dma_semaphore, #tpu.memory_space<semaphore_mem>> -> memref<1x!tpu.dma_semaphore, #tpu.memory_space<semaphore_mem>>
    %5 = tpu.memref_squeeze %4 : memref<1x!tpu.dma_semaphore, #tpu.memory_space<semaphore_mem>> -> memref<!tpu.dma_semaphore, #tpu.memory_space<semaphore_mem>>
    tpu.enqueue_dma source(%arg5 : memref<512x256xbf16, #tpu.memory_space<any>>) target(%arg11 : memref<512x256xbf16, #tpu.memory_space<vmem>>) target_semaphore(%5 : memref<!tpu.dma_semaphore, #tpu.memory_space<semaphore_mem>>)
    %c3_i32 = arith.constant 3 : i32
    %6 = tpu.memref_slice %arg14[%c3_i32] : memref<5x!tpu.dma_semaphore, #tpu.memory_space<semaphore_mem>> -> memref<1x!tpu.dma_semaphore, #tpu.memory_space<semaphore_mem>>
    %7 = tpu.memref_squeeze %6 : memref<1x!tpu.dma_semaphore, #tpu.memory_space<semaphore_mem>> -> memref<!tpu.dma_semaphore, #tpu.memory_space<semaphore_mem>>
    tpu.enqueue_dma source(%arg6 : memref<256x128xbf16, #tpu.memory_space<any>>) target(%arg12 : memref<256x128xbf16, #tpu.memory_space<vmem>>) target_semaphore(%7 : memref<!tpu.dma_semaphore, #tpu.memory_space<semaphore_mem>>)
    %c4_i32 = arith.constant 4 : i32
    %8 = tpu.memref_slice %arg14[%c4_i32] : memref<5x!tpu.dma_semaphore, #tpu.memory_space<semaphore_mem>> -> memref<1x!tpu.dma_semaphore, #tpu.memory_space<semaphore_mem>>
    %9 = tpu.memref_squeeze %8 : memref<1x!tpu.dma_semaphore, #tpu.memory_space<semaphore_mem>> -> memref<!tpu.dma_semaphore, #tpu.memory_space<semaphore_mem>>
    tpu.enqueue_dma source(%arg7 : memref<128x64xbf16, #tpu.memory_space<any>>) target(%arg13 : memref<128x64xbf16, #tpu.memory_space<vmem>>) target_semaphore(%9 : memref<!tpu.dma_semaphore, #tpu.memory_space<semaphore_mem>>)
    %c0 = arith.constant 0 : index
    %c0_0 = arith.constant 0 : index
    %c0_1 = arith.constant 0 : index
    %10 = vector.load %arg0[%c0, %c0_0, %c0_1] : memref<7x2x250xf32, #tpu.memory_space<vmem>>, vector<1x2x250xf32>
    %11 = vector.shape_cast %10 : vector<1x2x250xf32> to vector<2x250xf32>
    %c1 = arith.constant 1 : index
    %c0_2 = arith.constant 0 : index
    %c0_3 = arith.constant 0 : index
    %12 = vector.load %arg0[%c1, %c0_2, %c0_3] : memref<7x2x250xf32, #tpu.memory_space<vmem>>, vector<1x2x250xf32>
    %13 = vector.shape_cast %12 : vector<1x2x250xf32> to vector<2x250xf32>
    %c2 = arith.constant 2 : index
    %c0_4 = arith.constant 0 : index
    %c0_5 = arith.constant 0 : index
    %14 = vector.load %arg0[%c2, %c0_4, %c0_5] : memref<7x2x250xf32, #tpu.memory_space<vmem>>, vector<1x2x250xf32>
    %15 = vector.shape_cast %14 : vector<1x2x250xf32> to vector<2x250xf32>
    %c3 = arith.constant 3 : index
    %c0_6 = arith.constant 0 : index
    %c0_7 = arith.constant 0 : index
    %16 = vector.load %arg0[%c3, %c0_6, %c0_7] : memref<7x2x250xf32, #tpu.memory_space<vmem>>, vector<1x2x250xf32>
    %17 = vector.shape_cast %16 : vector<1x2x250xf32> to vector<2x250xf32>
    %c4 = arith.constant 4 : index
    %c0_8 = arith.constant 0 : index
    %c0_9 = arith.constant 0 : index
    %18 = vector.load %arg0[%c4, %c0_8, %c0_9] : memref<7x2x250xf32, #tpu.memory_space<vmem>>, vector<1x2x250xf32>
    %19 = vector.shape_cast %18 : vector<1x2x250xf32> to vector<2x250xf32>
    %c5 = arith.constant 5 : index
    %c0_10 = arith.constant 0 : index
    %c0_11 = arith.constant 0 : index
    %20 = vector.load %arg0[%c5, %c0_10, %c0_11] : memref<7x2x250xf32, #tpu.memory_space<vmem>>, vector<1x2x250xf32>
    %21 = vector.shape_cast %20 : vector<1x2x250xf32> to vector<2x250xf32>
    %c6 = arith.constant 6 : index
    %c0_12 = arith.constant 0 : index
    %c0_13 = arith.constant 0 : index
    %22 = vector.load %arg0[%c6, %c0_12, %c0_13] : memref<7x2x250xf32, #tpu.memory_space<vmem>>, vector<1x2x250xf32>
    %23 = vector.shape_cast %22 : vector<1x2x250xf32> to vector<2x250xf32>
    %c0_14 = arith.constant 0 : index
    %24 = memref.load %arg1[%c0_14] : memref<192xf32, #tpu.memory_space<smem>>
    %25 = vector.broadcast %24 : f32 to vector<2x250xf32>
    %26 = arith.mulf %25, %11 : vector<2x250xf32>
    %27 = vector.broadcast %24 : f32 to vector<2x250xf32>
    %28 = arith.mulf %27, %15 : vector<2x250xf32>
    %c1_15 = arith.constant 1 : index
    %29 = memref.load %arg1[%c1_15] : memref<192xf32, #tpu.memory_space<smem>>
    %30 = vector.broadcast %29 : f32 to vector<2x250xf32>
    %31 = arith.mulf %30, %13 : vector<2x250xf32>
    %32 = arith.addf %26, %31 : vector<2x250xf32>
    %33 = vector.broadcast %29 : f32 to vector<2x250xf32>
    %34 = arith.mulf %33, %17 : vector<2x250xf32>
    %35 = arith.addf %28, %34 : vector<2x250xf32>
    %c2_16 = arith.constant 2 : index
    %36 = memref.load %arg1[%c2_16] : memref<192xf32, #tpu.memory_space<smem>>
    %37 = vector.broadcast %36 : f32 to vector<2x250xf32>
    %38 = arith.mulf %37, %15 : vector<2x250xf32>
    %39 = arith.addf %32, %38 : vector<2x250xf32>
    %40 = vector.broadcast %36 : f32 to vector<2x250xf32>
    %41 = arith.mulf %40, %19 : vector<2x250xf32>
    %42 = arith.addf %35, %41 : vector<2x250xf32>
    %c3_17 = arith.constant 3 : index
    %43 = memref.load %arg1[%c3_17] : memref<192xf32, #tpu.memory_space<smem>>
    %44 = vector.broadcast %43 : f32 to vector<2x250xf32>
    %45 = arith.mulf %44, %17 : vector<2x250xf32>
    %46 = arith.addf %39, %45 : vector<2x250xf32>
    %47 = vector.broadcast %43 : f32 to vector<2x250xf32>
    %48 = arith.mulf %47, %21 : vector<2x250xf32>
    %49 = arith.addf %42, %48 : vector<2x250xf32>
    %c4_18 = arith.constant 4 : index
    %50 = memref.load %arg1[%c4_18] : memref<192xf32, #tpu.memory_space<smem>>
    %51 = vector.broadcast %50 : f32 to vector<2x250xf32>
    %52 = arith.mulf %51, %19 : vector<2x250xf32>
    %53 = arith.addf %46, %52 : vector<2x250xf32>
    %54 = vector.broadcast %50 : f32 to vector<2x250xf32>
    %55 = arith.mulf %54, %23 : vector<2x250xf32>
    %56 = arith.addf %49, %55 : vector<2x250xf32>
    %c20 = arith.constant 20 : index
    %57 = memref.load %arg1[%c20] : memref<192xf32, #tpu.memory_space<smem>>
    %58 = vector.broadcast %57 : f32 to vector<2x250xf32>
    %59 = arith.addf %53, %58 : vector<2x250xf32>
    %cst = arith.constant 0.000000e+00 : f32
    %60 = vector.broadcast %cst : f32 to vector<2x250xf32>
    %61 = arith.maximumf %59, %60 : vector<2x250xf32>
    %62 = vector.broadcast %57 : f32 to vector<2x250xf32>
    %63 = arith.addf %56, %62 : vector<2x250xf32>
    %cst_19 = arith.constant 0.000000e+00 : f32
    %64 = vector.broadcast %cst_19 : f32 to vector<2x250xf32>
    %65 = arith.maximumf %63, %64 : vector<2x250xf32>
    %c5_20 = arith.constant 5 : index
    %66 = memref.load %arg1[%c5_20] : memref<192xf32, #tpu.memory_space<smem>>
    %67 = vector.broadcast %66 : f32 to vector<2x250xf32>
    %68 = arith.mulf %67, %11 : vector<2x250xf32>
    %69 = vector.broadcast %66 : f32 to vector<2x250xf32>
    %70 = arith.mulf %69, %15 : vector<2x250xf32>
    %c6_21 = arith.constant 6 : index
    %71 = memref.load %arg1[%c6_21] : memref<192xf32, #tpu.memory_space<smem>>
    %72 = vector.broadcast %71 : f32 to vector<2x250xf32>
    %73 = arith.mulf %72, %13 : vector<2x250xf32>
    %74 = arith.addf %68, %73 : vector<2x250xf32>
    %75 = vector.broadcast %71 : f32 to vector<2x250xf32>
    %76 = arith.mulf %75, %17 : vector<2x250xf32>
    %77 = arith.addf %70, %76 : vector<2x250xf32>
    %c7 = arith.constant 7 : index
    %78 = memref.load %arg1[%c7] : memref<192xf32, #tpu.memory_space<smem>>
    %79 = vector.broadcast %78 : f32 to vector<2x250xf32>
    %80 = arith.mulf %79, %15 : vector<2x250xf32>
    %81 = arith.addf %74, %80 : vector<2x250xf32>
    %82 = vector.broadcast %78 : f32 to vector<2x250xf32>
    %83 = arith.mulf %82, %19 : vector<2x250xf32>
    %84 = arith.addf %77, %83 : vector<2x250xf32>
    %c8 = arith.constant 8 : index
    %85 = memref.load %arg1[%c8] : memref<192xf32, #tpu.memory_space<smem>>
    %86 = vector.broadcast %85 : f32 to vector<2x250xf32>
    %87 = arith.mulf %86, %17 : vector<2x250xf32>
    %88 = arith.addf %81, %87 : vector<2x250xf32>
    %89 = vector.broadcast %85 : f32 to vector<2x250xf32>
    %90 = arith.mulf %89, %21 : vector<2x250xf32>
    %91 = arith.addf %84, %90 : vector<2x250xf32>
    %c9 = arith.constant 9 : index
    %92 = memref.load %arg1[%c9] : memref<192xf32, #tpu.memory_space<smem>>
    %93 = vector.broadcast %92 : f32 to vector<2x250xf32>
    %94 = arith.mulf %93, %19 : vector<2x250xf32>
    %95 = arith.addf %88, %94 : vector<2x250xf32>
    %96 = vector.broadcast %92 : f32 to vector<2x250xf32>
    %97 = arith.mulf %96, %23 : vector<2x250xf32>
    %98 = arith.addf %91, %97 : vector<2x250xf32>
    %c21 = arith.constant 21 : index
    %99 = memref.load %arg1[%c21] : memref<192xf32, #tpu.memory_space<smem>>
    %100 = vector.broadcast %99 : f32 to vector<2x250xf32>
    %101 = arith.addf %95, %100 : vector<2x250xf32>
    %cst_22 = arith.constant 0.000000e+00 : f32
    %102 = vector.broadcast %cst_22 : f32 to vector<2x250xf32>
    %103 = arith.maximumf %101, %102 : vector<2x250xf32>
    %104 = vector.broadcast %99 : f32 to vector<2x250xf32>
    %105 = arith.addf %98, %104 : vector<2x250xf32>
    %cst_23 = arith.constant 0.000000e+00 : f32
    %106 = vector.broadcast %cst_23 : f32 to vector<2x250xf32>
    %107 = arith.maximumf %105, %106 : vector<2x250xf32>
    %c10 = arith.constant 10 : index
    %108 = memref.load %arg1[%c10] : memref<192xf32, #tpu.memory_space<smem>>
    %109 = vector.broadcast %108 : f32 to vector<2x250xf32>
    %110 = arith.mulf %109, %11 : vector<2x250xf32>
    %111 = vector.broadcast %108 : f32 to vector<2x250xf32>
    %112 = arith.mulf %111, %15 : vector<2x250xf32>
    %c11 = arith.constant 11 : index
    %113 = memref.load %arg1[%c11] : memref<192xf32, #tpu.memory_space<smem>>
    %114 = vector.broadcast %113 : f32 to vector<2x250xf32>
    %115 = arith.mulf %114, %13 : vector<2x250xf32>
    %116 = arith.addf %110, %115 : vector<2x250xf32>
    %117 = vector.broadcast %113 : f32 to vector<2x250xf32>
    %118 = arith.mulf %117, %17 : vector<2x250xf32>
    %119 = arith.addf %112, %118 : vector<2x250xf32>
    %c12 = arith.constant 12 : index
    %120 = memref.load %arg1[%c12] : memref<192xf32, #tpu.memory_space<smem>>
    %121 = vector.broadcast %120 : f32 to vector<2x250xf32>
    %122 = arith.mulf %121, %15 : vector<2x250xf32>
    %123 = arith.addf %116, %122 : vector<2x250xf32>
    %124 = vector.broadcast %120 : f32 to vector<2x250xf32>
    %125 = arith.mulf %124, %19 : vector<2x250xf32>
    %126 = arith.addf %119, %125 : vector<2x250xf32>
    %c13 = arith.constant 13 : index
    %127 = memref.load %arg1[%c13] : memref<192xf32, #tpu.memory_space<smem>>
    %128 = vector.broadcast %127 : f32 to vector<2x250xf32>
    %129 = arith.mulf %128, %17 : vector<2x250xf32>
    %130 = arith.addf %123, %129 : vector<2x250xf32>
    %131 = vector.broadcast %127 : f32 to vector<2x250xf32>
    %132 = arith.mulf %131, %21 : vector<2x250xf32>
    %133 = arith.addf %126, %132 : vector<2x250xf32>
    %c14 = arith.constant 14 : index
    %134 = memref.load %arg1[%c14] : memref<192xf32, #tpu.memory_space<smem>>
    %135 = vector.broadcast %134 : f32 to vector<2x250xf32>
    %136 = arith.mulf %135, %19 : vector<2x250xf32>
    %137 = arith.addf %130, %136 : vector<2x250xf32>
    %138 = vector.broadcast %134 : f32 to vector<2x250xf32>
    %139 = arith.mulf %138, %23 : vector<2x250xf32>
    %140 = arith.addf %133, %139 : vector<2x250xf32>
    %c22 = arith.constant 22 : index
    %141 = memref.load %arg1[%c22] : memref<192xf32, #tpu.memory_space<smem>>
    %142 = vector.broadcast %141 : f32 to vector<2x250xf32>
    %143 = arith.addf %137, %142 : vector<2x250xf32>
    %cst_24 = arith.constant 0.000000e+00 : f32
    %144 = vector.broadcast %cst_24 : f32 to vector<2x250xf32>
    %145 = arith.maximumf %143, %144 : vector<2x250xf32>
    %146 = vector.broadcast %141 : f32 to vector<2x250xf32>
    %147 = arith.addf %140, %146 : vector<2x250xf32>
    %cst_25 = arith.constant 0.000000e+00 : f32
    %148 = vector.broadcast %cst_25 : f32 to vector<2x250xf32>
    %149 = arith.maximumf %147, %148 : vector<2x250xf32>
    %c15 = arith.constant 15 : index
    %150 = memref.load %arg1[%c15] : memref<192xf32, #tpu.memory_space<smem>>
    %151 = vector.broadcast %150 : f32 to vector<2x250xf32>
    %152 = arith.mulf %151, %11 : vector<2x250xf32>
    %153 = vector.broadcast %150 : f32 to vector<2x250xf32>
    %154 = arith.mulf %153, %15 : vector<2x250xf32>
    %c16 = arith.constant 16 : index
    %155 = memref.load %arg1[%c16] : memref<192xf32, #tpu.memory_space<smem>>
    %156 = vector.broadcast %155 : f32 to vector<2x250xf32>
    %157 = arith.mulf %156, %13 : vector<2x250xf32>
    %158 = arith.addf %152, %157 : vector<2x250xf32>
    %159 = vector.broadcast %155 : f32 to vector<2x250xf32>
    %160 = arith.mulf %159, %17 : vector<2x250xf32>
    %161 = arith.addf %154, %160 : vector<2x250xf32>
    %c17 = arith.constant 17 : index
    %162 = memref.load %arg1[%c17] : memref<192xf32, #tpu.memory_space<smem>>
    %163 = vector.broadcast %162 : f32 to vector<2x250xf32>
    %164 = arith.mulf %163, %15 : vector<2x250xf32>
    %165 = arith.addf %158, %164 : vector<2x250xf32>
    %166 = vector.broadcast %162 : f32 to vector<2x250xf32>
    %167 = arith.mulf %166, %19 : vector<2x250xf32>
    %168 = arith.addf %161, %167 : vector<2x250xf32>
    %c18 = arith.constant 18 : index
    %169 = memref.load %arg1[%c18] : memref<192xf32, #tpu.memory_space<smem>>
    %170 = vector.broadcast %169 : f32 to vector<2x250xf32>
    %171 = arith.mulf %170, %17 : vector<2x250xf32>
    %172 = arith.addf %165, %171 : vector<2x250xf32>
    %173 = vector.broadcast %169 : f32 to vector<2x250xf32>
    %174 = arith.mulf %173, %21 : vector<2x250xf32>
    %175 = arith.addf %168, %174 : vector<2x250xf32>
    %c19 = arith.constant 19 : index
    %176 = memref.load %arg1[%c19] : memref<192xf32, #tpu.memory_space<smem>>
    %177 = vector.broadcast %176 : f32 to vector<2x250xf32>
    %178 = arith.mulf %177, %19 : vector<2x250xf32>
    %179 = arith.addf %172, %178 : vector<2x250xf32>
    %180 = vector.broadcast %176 : f32 to vector<2x250xf32>
    %181 = arith.mulf %180, %23 : vector<2x250xf32>
    %182 = arith.addf %175, %181 : vector<2x250xf32>
    %c23 = arith.constant 23 : index
    %183 = memref.load %arg1[%c23] : memref<192xf32, #tpu.memory_space<smem>>
    %184 = vector.broadcast %183 : f32 to vector<2x250xf32>
    %185 = arith.addf %179, %184 : vector<2x250xf32>
    %cst_26 = arith.constant 0.000000e+00 : f32
    %186 = vector.broadcast %cst_26 : f32 to vector<2x250xf32>
    %187 = arith.maximumf %185, %186 : vector<2x250xf32>
    %188 = vector.broadcast %183 : f32 to vector<2x250xf32>
    %189 = arith.addf %182, %188 : vector<2x250xf32>
    %cst_27 = arith.constant 0.000000e+00 : f32
    %190 = vector.broadcast %cst_27 : f32 to vector<2x250xf32>
    %191 = arith.maximumf %189, %190 : vector<2x250xf32>
    %cst_28 = arith.constant 0.000000e+00 : f32
    %192 = vector.broadcast %cst_28 : f32 to vector<2x1xf32>
    %193 = vector.extract_strided_slice %61 {offsets = [0, 0], sizes = [2, 249], strides = [1, 1]} : vector<2x250xf32> to vector<2x249xf32>
    %194 = tpu.concatenate %192, %193 in 1 : vector<2x1xf32>, vector<2x249xf32> -> vector<2x250xf32>
    %cst_29 = arith.constant 0.000000e+00 : f32
    %195 = vector.broadcast %cst_29 : f32 to vector<2x1xf32>
    %196 = vector.extract_strided_slice %65 {offsets = [0, 0], sizes = [2, 249], strides = [1, 1]} : vector<2x250xf32> to vector<2x249xf32>
    %197 = tpu.concatenate %195, %196 in 1 : vector<2x1xf32>, vector<2x249xf32> -> vector<2x250xf32>
    %198 = vector.extract_strided_slice %61 {offsets = [0, 1], sizes = [2, 249], strides = [1, 1]} : vector<2x250xf32> to vector<2x249xf32>
    %cst_30 = arith.constant 0.000000e+00 : f32
    %199 = vector.broadcast %cst_30 : f32 to vector<2x1xf32>
    %200 = tpu.concatenate %198, %199 in 1 : vector<2x249xf32>, vector<2x1xf32> -> vector<2x250xf32>
    %c24 = arith.constant 24 : index
    %201 = memref.load %arg1[%c24] : memref<192xf32, #tpu.memory_space<smem>>
    %202 = vector.broadcast %201 : f32 to vector<2x250xf32>
    %203 = arith.mulf %202, %194 : vector<2x250xf32>
    %c25 = arith.constant 25 : index
    %204 = memref.load %arg1[%c25] : memref<192xf32, #tpu.memory_space<smem>>
    %205 = vector.broadcast %204 : f32 to vector<2x250xf32>
    %206 = arith.mulf %205, %197 : vector<2x250xf32>
    %207 = arith.addf %203, %206 : vector<2x250xf32>
    %c26 = arith.constant 26 : index
    %208 = memref.load %arg1[%c26] : memref<192xf32, #tpu.memory_space<smem>>
    %209 = vector.broadcast %208 : f32 to vector<2x250xf32>
    %210 = arith.mulf %209, %61 : vector<2x250xf32>
    %211 = arith.addf %207, %210 : vector<2x250xf32>
    %c27 = arith.constant 27 : index
    %212 = memref.load %arg1[%c27] : memref<192xf32, #tpu.memory_space<smem>>
    %213 = vector.broadcast %212 : f32 to vector<2x250xf32>
    %214 = arith.mulf %213, %65 : vector<2x250xf32>
    %215 = arith.addf %211, %214 : vector<2x250xf32>
    %c28 = arith.constant 28 : index
    %216 = memref.load %arg1[%c28] : memref<192xf32, #tpu.memory_space<smem>>
    %217 = vector.broadcast %216 : f32 to vector<2x250xf32>
    %218 = arith.mulf %217, %200 : vector<2x250xf32>
    %219 = arith.addf %215, %218 : vector<2x250xf32>
    %c44 = arith.constant 44 : index
    %220 = memref.load %arg1[%c44] : memref<192xf32, #tpu.memory_space<smem>>
    %221 = vector.broadcast %220 : f32 to vector<2x250xf32>
    %222 = arith.mulf %221, %194 : vector<2x250xf32>
    %c45 = arith.constant 45 : index
    %223 = memref.load %arg1[%c45] : memref<192xf32, #tpu.memory_space<smem>>
    %224 = vector.broadcast %223 : f32 to vector<2x250xf32>
    %225 = arith.mulf %224, %197 : vector<2x250xf32>
    %226 = arith.addf %222, %225 : vector<2x250xf32>
    %c46 = arith.constant 46 : index
    %227 = memref.load %arg1[%c46] : memref<192xf32, #tpu.memory_space<smem>>
    %228 = vector.broadcast %227 : f32 to vector<2x250xf32>
    %229 = arith.mulf %228, %61 : vector<2x250xf32>
    %230 = arith.addf %226, %229 : vector<2x250xf32>
    %c47 = arith.constant 47 : index
    %231 = memref.load %arg1[%c47] : memref<192xf32, #tpu.memory_space<smem>>
    %232 = vector.broadcast %231 : f32 to vector<2x250xf32>
    %233 = arith.mulf %232, %65 : vector<2x250xf32>
    %234 = arith.addf %230, %233 : vector<2x250xf32>
    %c48 = arith.constant 48 : index
    %235 = memref.load %arg1[%c48] : memref<192xf32, #tpu.memory_space<smem>>
    %236 = vector.broadcast %235 : f32 to vector<2x250xf32>
    %237 = arith.mulf %236, %200 : vector<2x250xf32>
    %238 = arith.addf %234, %237 : vector<2x250xf32>
    %c64 = arith.constant 64 : index
    %239 = memref.load %arg1[%c64] : memref<192xf32, #tpu.memory_space<smem>>
    %240 = vector.broadcast %239 : f32 to vector<2x250xf32>
    %241 = arith.mulf %240, %194 : vector<2x250xf32>
    %c65 = arith.constant 65 : index
    %242 = memref.load %arg1[%c65] : memref<192xf32, #tpu.memory_space<smem>>
    %243 = vector.broadcast %242 : f32 to vector<2x250xf32>
    %244 = arith.mulf %243, %197 : vector<2x250xf32>
    %245 = arith.addf %241, %244 : vector<2x250xf32>
    %c66 = arith.constant 66 : index
    %246 = memref.load %arg1[%c66] : memref<192xf32, #tpu.memory_space<smem>>
    %247 = vector.broadcast %246 : f32 to vector<2x250xf32>
    %248 = arith.mulf %247, %61 : vector<2x250xf32>
    %249 = arith.addf %245, %248 : vector<2x250xf32>
    %c67 = arith.constant 67 : index
    %250 = memref.load %arg1[%c67] : memref<192xf32, #tpu.memory_space<smem>>
    %251 = vector.broadcast %250 : f32 to vector<2x250xf32>
    %252 = arith.mulf %251, %65 : vector<2x250xf32>
    %253 = arith.addf %249, %252 : vector<2x250xf32>
    %c68 = arith.constant 68 : index
    %254 = memref.load %arg1[%c68] : memref<192xf32, #tpu.memory_space<smem>>
    %255 = vector.broadcast %254 : f32 to vector<2x250xf32>
    %256 = arith.mulf %255, %200 : vector<2x250xf32>
    %257 = arith.addf %253, %256 : vector<2x250xf32>
    %c84 = arith.constant 84 : index
    %258 = memref.load %arg1[%c84] : memref<192xf32, #tpu.memory_space<smem>>
    %259 = vector.broadcast %258 : f32 to vector<2x250xf32>
    %260 = arith.mulf %259, %194 : vector<2x250xf32>
    %c85 = arith.constant 85 : index
    %261 = memref.load %arg1[%c85] : memref<192xf32, #tpu.memory_space<smem>>
    %262 = vector.broadcast %261 : f32 to vector<2x250xf32>
    %263 = arith.mulf %262, %197 : vector<2x250xf32>
    %264 = arith.addf %260, %263 : vector<2x250xf32>
    %c86 = arith.constant 86 : index
    %265 = memref.load %arg1[%c86] : memref<192xf32, #tpu.memory_space<smem>>
    %266 = vector.broadcast %265 : f32 to vector<2x250xf32>
    %267 = arith.mulf %266, %61 : vector<2x250xf32>
    %268 = arith.addf %264, %267 : vector<2x250xf32>
    %c87 = arith.constant 87 : index
    %269 = memref.load %arg1[%c87] : memref<192xf32, #tpu.memory_space<smem>>
    %270 = vector.broadcast %269 : f32 to vector<2x250xf32>
    %271 = arith.mulf %270, %65 : vector<2x250xf32>
    %272 = arith.addf %268, %271 : vector<2x250xf32>
    %c88 = arith.constant 88 : index
    %273 = memref.load %arg1[%c88] : memref<192xf32, #tpu.memory_space<smem>>
    %274 = vector.broadcast %273 : f32 to vector<2x250xf32>
    %275 = arith.mulf %274, %200 : vector<2x250xf32>
    %276 = arith.addf %272, %275 : vector<2x250xf32>
    %cst_31 = arith.constant 0.000000e+00 : f32
    %277 = vector.broadcast %cst_31 : f32 to vector<2x1xf32>
    %278 = vector.extract_strided_slice %103 {offsets = [0, 0], sizes = [2, 249], strides = [1, 1]} : vector<2x250xf32> to vector<2x249xf32>
    %279 = tpu.concatenate %277, %278 in 1 : vector<2x1xf32>, vector<2x249xf32> -> vector<2x250xf32>
    %cst_32 = arith.constant 0.000000e+00 : f32
    %280 = vector.broadcast %cst_32 : f32 to vector<2x1xf32>
    %281 = vector.extract_strided_slice %107 {offsets = [0, 0], sizes = [2, 249], strides = [1, 1]} : vector<2x250xf32> to vector<2x249xf32>
    %282 = tpu.concatenate %280, %281 in 1 : vector<2x1xf32>, vector<2x249xf32> -> vector<2x250xf32>
    %283 = vector.extract_strided_slice %103 {offsets = [0, 1], sizes = [2, 249], strides = [1, 1]} : vector<2x250xf32> to vector<2x249xf32>
    %cst_33 = arith.constant 0.000000e+00 : f32
    %284 = vector.broadcast %cst_33 : f32 to vector<2x1xf32>
    %285 = tpu.concatenate %283, %284 in 1 : vector<2x249xf32>, vector<2x1xf32> -> vector<2x250xf32>
    %c29 = arith.constant 29 : index
    %286 = memref.load %arg1[%c29] : memref<192xf32, #tpu.memory_space<smem>>
    %287 = vector.broadcast %286 : f32 to vector<2x250xf32>
    %288 = arith.mulf %287, %279 : vector<2x250xf32>
    %c30 = arith.constant 30 : index
    %289 = memref.load %arg1[%c30] : memref<192xf32, #tpu.memory_space<smem>>
    %290 = vector.broadcast %289 : f32 to vector<2x250xf32>
    %291 = arith.mulf %290, %282 : vector<2x250xf32>
    %292 = arith.addf %288, %291 : vector<2x250xf32>
    %c31 = arith.constant 31 : index
    %293 = memref.load %arg1[%c31] : memref<192xf32, #tpu.memory_space<smem>>
    %294 = vector.broadcast %293 : f32 to vector<2x250xf32>
    %295 = arith.mulf %294, %103 : vector<2x250xf32>
    %296 = arith.addf %292, %295 : vector<2x250xf32>
    %c32 = arith.constant 32 : index
    %297 = memref.load %arg1[%c32] : memref<192xf32, #tpu.memory_space<smem>>
    %298 = vector.broadcast %297 : f32 to vector<2x250xf32>
    %299 = arith.mulf %298, %107 : vector<2x250xf32>
    %300 = arith.addf %296, %299 : vector<2x250xf32>
    %c33 = arith.constant 33 : index
    %301 = memref.load %arg1[%c33] : memref<192xf32, #tpu.memory_space<smem>>
    %302 = vector.broadcast %301 : f32 to vector<2x250xf32>
    %303 = arith.mulf %302, %285 : vector<2x250xf32>
    %304 = arith.addf %300, %303 : vector<2x250xf32>
    %305 = arith.addf %219, %304 : vector<2x250xf32>
    %c49 = arith.constant 49 : index
    %306 = memref.load %arg1[%c49] : memref<192xf32, #tpu.memory_space<smem>>
    %307 = vector.broadcast %306 : f32 to vector<2x250xf32>
    %308 = arith.mulf %307, %279 : vector<2x250xf32>
    %c50 = arith.constant 50 : index
    %309 = memref.load %arg1[%c50] : memref<192xf32, #tpu.memory_space<smem>>
    %310 = vector.broadcast %309 : f32 to vector<2x250xf32>
    %311 = arith.mulf %310, %282 : vector<2x250xf32>
    %312 = arith.addf %308, %311 : vector<2x250xf32>
    %c51 = arith.constant 51 : index
    %313 = memref.load %arg1[%c51] : memref<192xf32, #tpu.memory_space<smem>>
    %314 = vector.broadcast %313 : f32 to vector<2x250xf32>
    %315 = arith.mulf %314, %103 : vector<2x250xf32>
    %316 = arith.addf %312, %315 : vector<2x250xf32>
    %c52 = arith.constant 52 : index
    %317 = memref.load %arg1[%c52] : memref<192xf32, #tpu.memory_space<smem>>
    %318 = vector.broadcast %317 : f32 to vector<2x250xf32>
    %319 = arith.mulf %318, %107 : vector<2x250xf32>
    %320 = arith.addf %316, %319 : vector<2x250xf32>
    %c53 = arith.constant 53 : index
    %321 = memref.load %arg1[%c53] : memref<192xf32, #tpu.memory_space<smem>>
    %322 = vector.broadcast %321 : f32 to vector<2x250xf32>
    %323 = arith.mulf %322, %285 : vector<2x250xf32>
    %324 = arith.addf %320, %323 : vector<2x250xf32>
    %325 = arith.addf %238, %324 : vector<2x250xf32>
    %c69 = arith.constant 69 : index
    %326 = memref.load %arg1[%c69] : memref<192xf32, #tpu.memory_space<smem>>
    %327 = vector.broadcast %326 : f32 to vector<2x250xf32>
    %328 = arith.mulf %327, %279 : vector<2x250xf32>
    %c70 = arith.constant 70 : index
    %329 = memref.load %arg1[%c70] : memref<192xf32, #tpu.memory_space<smem>>
    %330 = vector.broadcast %329 : f32 to vector<2x250xf32>
    %331 = arith.mulf %330, %282 : vector<2x250xf32>
    %332 = arith.addf %328, %331 : vector<2x250xf32>
    %c71 = arith.constant 71 : index
    %333 = memref.load %arg1[%c71] : memref<192xf32, #tpu.memory_space<smem>>
    %334 = vector.broadcast %333 : f32 to vector<2x250xf32>
    %335 = arith.mulf %334, %103 : vector<2x250xf32>
    %336 = arith.addf %332, %335 : vector<2x250xf32>
    %c72 = arith.constant 72 : index
    %337 = memref.load %arg1[%c72] : memref<192xf32, #tpu.memory_space<smem>>
    %338 = vector.broadcast %337 : f32 to vector<2x250xf32>
    %339 = arith.mulf %338, %107 : vector<2x250xf32>
    %340 = arith.addf %336, %339 : vector<2x250xf32>
    %c73 = arith.constant 73 : index
    %341 = memref.load %arg1[%c73] : memref<192xf32, #tpu.memory_space<smem>>
    %342 = vector.broadcast %341 : f32 to vector<2x250xf32>
    %343 = arith.mulf %342, %285 : vector<2x250xf32>
    %344 = arith.addf %340, %343 : vector<2x250xf32>
    %345 = arith.addf %257, %344 : vector<2x250xf32>
    %c89 = arith.constant 89 : index
    %346 = memref.load %arg1[%c89] : memref<192xf32, #tpu.memory_space<smem>>
    %347 = vector.broadcast %346 : f32 to vector<2x250xf32>
    %348 = arith.mulf %347, %279 : vector<2x250xf32>
    %c90 = arith.constant 90 : index
    %349 = memref.load %arg1[%c90] : memref<192xf32, #tpu.memory_space<smem>>
    %350 = vector.broadcast %349 : f32 to vector<2x250xf32>
    %351 = arith.mulf %350, %282 : vector<2x250xf32>
    %352 = arith.addf %348, %351 : vector<2x250xf32>
    %c91 = arith.constant 91 : index
    %353 = memref.load %arg1[%c91] : memref<192xf32, #tpu.memory_space<smem>>
    %354 = vector.broadcast %353 : f32 to vector<2x250xf32>
    %355 = arith.mulf %354, %103 : vector<2x250xf32>
    %356 = arith.addf %352, %355 : vector<2x250xf32>
    %c92 = arith.constant 92 : index
    %357 = memref.load %arg1[%c92] : memref<192xf32, #tpu.memory_space<smem>>
    %358 = vector.broadcast %357 : f32 to vector<2x250xf32>
    %359 = arith.mulf %358, %107 : vector<2x250xf32>
    %360 = arith.addf %356, %359 : vector<2x250xf32>
    %c93 = arith.constant 93 : index
    %361 = memref.load %arg1[%c93] : memref<192xf32, #tpu.memory_space<smem>>
    %362 = vector.broadcast %361 : f32 to vector<2x250xf32>
    %363 = arith.mulf %362, %285 : vector<2x250xf32>
    %364 = arith.addf %360, %363 : vector<2x250xf32>
    %365 = arith.addf %276, %364 : vector<2x250xf32>
    %cst_34 = arith.constant 0.000000e+00 : f32
    %366 = vector.broadcast %cst_34 : f32 to vector<2x1xf32>
    %367 = vector.extract_strided_slice %145 {offsets = [0, 0], sizes = [2, 249], strides = [1, 1]} : vector<2x250xf32> to vector<2x249xf32>
    %368 = tpu.concatenate %366, %367 in 1 : vector<2x1xf32>, vector<2x249xf32> -> vector<2x250xf32>
    %cst_35 = arith.constant 0.000000e+00 : f32
    %369 = vector.broadcast %cst_35 : f32 to vector<2x1xf32>
    %370 = vector.extract_strided_slice %149 {offsets = [0, 0], sizes = [2, 249], strides = [1, 1]} : vector<2x250xf32> to vector<2x249xf32>
    %371 = tpu.concatenate %369, %370 in 1 : vector<2x1xf32>, vector<2x249xf32> -> vector<2x250xf32>
    %372 = vector.extract_strided_slice %145 {offsets = [0, 1], sizes = [2, 249], strides = [1, 1]} : vector<2x250xf32> to vector<2x249xf32>
    %cst_36 = arith.constant 0.000000e+00 : f32
    %373 = vector.broadcast %cst_36 : f32 to vector<2x1xf32>
    %374 = tpu.concatenate %372, %373 in 1 : vector<2x249xf32>, vector<2x1xf32> -> vector<2x250xf32>
    %c34 = arith.constant 34 : index
    %375 = memref.load %arg1[%c34] : memref<192xf32, #tpu.memory_space<smem>>
    %376 = vector.broadcast %375 : f32 to vector<2x250xf32>
    %377 = arith.mulf %376, %368 : vector<2x250xf32>
    %c35 = arith.constant 35 : index
    %378 = memref.load %arg1[%c35] : memref<192xf32, #tpu.memory_space<smem>>
    %379 = vector.broadcast %378 : f32 to vector<2x250xf32>
    %380 = arith.mulf %379, %371 : vector<2x250xf32>
    %381 = arith.addf %377, %380 : vector<2x250xf32>
    %c36 = arith.constant 36 : index
    %382 = memref.load %arg1[%c36] : memref<192xf32, #tpu.memory_space<smem>>
    %383 = vector.broadcast %382 : f32 to vector<2x250xf32>
    %384 = arith.mulf %383, %145 : vector<2x250xf32>
    %385 = arith.addf %381, %384 : vector<2x250xf32>
    %c37 = arith.constant 37 : index
    %386 = memref.load %arg1[%c37] : memref<192xf32, #tpu.memory_space<smem>>
    %387 = vector.broadcast %386 : f32 to vector<2x250xf32>
    %388 = arith.mulf %387, %149 : vector<2x250xf32>
    %389 = arith.addf %385, %388 : vector<2x250xf32>
    %c38 = arith.constant 38 : index
    %390 = memref.load %arg1[%c38] : memref<192xf32, #tpu.memory_space<smem>>
    %391 = vector.broadcast %390 : f32 to vector<2x250xf32>
    %392 = arith.mulf %391, %374 : vector<2x250xf32>
    %393 = arith.addf %389, %392 : vector<2x250xf32>
    %394 = arith.addf %305, %393 : vector<2x250xf32>
    %c54 = arith.constant 54 : index
    %395 = memref.load %arg1[%c54] : memref<192xf32, #tpu.memory_space<smem>>
    %396 = vector.broadcast %395 : f32 to vector<2x250xf32>
    %397 = arith.mulf %396, %368 : vector<2x250xf32>
    %c55 = arith.constant 55 : index
    %398 = memref.load %arg1[%c55] : memref<192xf32, #tpu.memory_space<smem>>
    %399 = vector.broadcast %398 : f32 to vector<2x250xf32>
    %400 = arith.mulf %399, %371 : vector<2x250xf32>
    %401 = arith.addf %397, %400 : vector<2x250xf32>
    %c56 = arith.constant 56 : index
    %402 = memref.load %arg1[%c56] : memref<192xf32, #tpu.memory_space<smem>>
    %403 = vector.broadcast %402 : f32 to vector<2x250xf32>
    %404 = arith.mulf %403, %145 : vector<2x250xf32>
    %405 = arith.addf %401, %404 : vector<2x250xf32>
    %c57 = arith.constant 57 : index
    %406 = memref.load %arg1[%c57] : memref<192xf32, #tpu.memory_space<smem>>
    %407 = vector.broadcast %406 : f32 to vector<2x250xf32>
    %408 = arith.mulf %407, %149 : vector<2x250xf32>
    %409 = arith.addf %405, %408 : vector<2x250xf32>
    %c58 = arith.constant 58 : index
    %410 = memref.load %arg1[%c58] : memref<192xf32, #tpu.memory_space<smem>>
    %411 = vector.broadcast %410 : f32 to vector<2x250xf32>
    %412 = arith.mulf %411, %374 : vector<2x250xf32>
    %413 = arith.addf %409, %412 : vector<2x250xf32>
    %414 = arith.addf %325, %413 : vector<2x250xf32>
    %c74 = arith.constant 74 : index
    %415 = memref.load %arg1[%c74] : memref<192xf32, #tpu.memory_space<smem>>
    %416 = vector.broadcast %415 : f32 to vector<2x250xf32>
    %417 = arith.mulf %416, %368 : vector<2x250xf32>
    %c75 = arith.constant 75 : index
    %418 = memref.load %arg1[%c75] : memref<192xf32, #tpu.memory_space<smem>>
    %419 = vector.broadcast %418 : f32 to vector<2x250xf32>
    %420 = arith.mulf %419, %371 : vector<2x250xf32>
    %421 = arith.addf %417, %420 : vector<2x250xf32>
    %c76 = arith.constant 76 : index
    %422 = memref.load %arg1[%c76] : memref<192xf32, #tpu.memory_space<smem>>
    %423 = vector.broadcast %422 : f32 to vector<2x250xf32>
    %424 = arith.mulf %423, %145 : vector<2x250xf32>
    %425 = arith.addf %421, %424 : vector<2x250xf32>
    %c77 = arith.constant 77 : index
    %426 = memref.load %arg1[%c77] : memref<192xf32, #tpu.memory_space<smem>>
    %427 = vector.broadcast %426 : f32 to vector<2x250xf32>
    %428 = arith.mulf %427, %149 : vector<2x250xf32>
    %429 = arith.addf %425, %428 : vector<2x250xf32>
    %c78 = arith.constant 78 : index
    %430 = memref.load %arg1[%c78] : memref<192xf32, #tpu.memory_space<smem>>
    %431 = vector.broadcast %430 : f32 to vector<2x250xf32>
    %432 = arith.mulf %431, %374 : vector<2x250xf32>
    %433 = arith.addf %429, %432 : vector<2x250xf32>
    %434 = arith.addf %345, %433 : vector<2x250xf32>
    %c94 = arith.constant 94 : index
    %435 = memref.load %arg1[%c94] : memref<192xf32, #tpu.memory_space<smem>>
    %436 = vector.broadcast %435 : f32 to vector<2x250xf32>
    %437 = arith.mulf %436, %368 : vector<2x250xf32>
    %c95 = arith.constant 95 : index
    %438 = memref.load %arg1[%c95] : memref<192xf32, #tpu.memory_space<smem>>
    %439 = vector.broadcast %438 : f32 to vector<2x250xf32>
    %440 = arith.mulf %439, %371 : vector<2x250xf32>
    %441 = arith.addf %437, %440 : vector<2x250xf32>
    %c96 = arith.constant 96 : index
    %442 = memref.load %arg1[%c96] : memref<192xf32, #tpu.memory_space<smem>>
    %443 = vector.broadcast %442 : f32 to vector<2x250xf32>
    %444 = arith.mulf %443, %145 : vector<2x250xf32>
    %445 = arith.addf %441, %444 : vector<2x250xf32>
    %c97 = arith.constant 97 : index
    %446 = memref.load %arg1[%c97] : memref<192xf32, #tpu.memory_space<smem>>
    %447 = vector.broadcast %446 : f32 to vector<2x250xf32>
    %448 = arith.mulf %447, %149 : vector<2x250xf32>
    %449 = arith.addf %445, %448 : vector<2x250xf32>
    %c98 = arith.constant 98 : index
    %450 = memref.load %arg1[%c98] : memref<192xf32, #tpu.memory_space<smem>>
    %451 = vector.broadcast %450 : f32 to vector<2x250xf32>
    %452 = arith.mulf %451, %374 : vector<2x250xf32>
    %453 = arith.addf %449, %452 : vector<2x250xf32>
    %454 = arith.addf %365, %453 : vector<2x250xf32>
    %cst_37 = arith.constant 0.000000e+00 : f32
    %455 = vector.broadcast %cst_37 : f32 to vector<2x1xf32>
    %456 = vector.extract_strided_slice %187 {offsets = [0, 0], sizes = [2, 249], strides = [1, 1]} : vector<2x250xf32> to vector<2x249xf32>
    %457 = tpu.concatenate %455, %456 in 1 : vector<2x1xf32>, vector<2x249xf32> -> vector<2x250xf32>
    %cst_38 = arith.constant 0.000000e+00 : f32
    %458 = vector.broadcast %cst_38 : f32 to vector<2x1xf32>
    %459 = vector.extract_strided_slice %191 {offsets = [0, 0], sizes = [2, 249], strides = [1, 1]} : vector<2x250xf32> to vector<2x249xf32>
    %460 = tpu.concatenate %458, %459 in 1 : vector<2x1xf32>, vector<2x249xf32> -> vector<2x250xf32>
    %461 = vector.extract_strided_slice %187 {offsets = [0, 1], sizes = [2, 249], strides = [1, 1]} : vector<2x250xf32> to vector<2x249xf32>
    %cst_39 = arith.constant 0.000000e+00 : f32
    %462 = vector.broadcast %cst_39 : f32 to vector<2x1xf32>
    %463 = tpu.concatenate %461, %462 in 1 : vector<2x249xf32>, vector<2x1xf32> -> vector<2x250xf32>
    %c39 = arith.constant 39 : index
    %464 = memref.load %arg1[%c39] : memref<192xf32, #tpu.memory_space<smem>>
    %465 = vector.broadcast %464 : f32 to vector<2x250xf32>
    %466 = arith.mulf %465, %457 : vector<2x250xf32>
    %c40 = arith.constant 40 : index
    %467 = memref.load %arg1[%c40] : memref<192xf32, #tpu.memory_space<smem>>
    %468 = vector.broadcast %467 : f32 to vector<2x250xf32>
    %469 = arith.mulf %468, %460 : vector<2x250xf32>
    %470 = arith.addf %466, %469 : vector<2x250xf32>
    %c41 = arith.constant 41 : index
    %471 = memref.load %arg1[%c41] : memref<192xf32, #tpu.memory_space<smem>>
    %472 = vector.broadcast %471 : f32 to vector<2x250xf32>
    %473 = arith.mulf %472, %187 : vector<2x250xf32>
    %474 = arith.addf %470, %473 : vector<2x250xf32>
    %c42 = arith.constant 42 : index
    %475 = memref.load %arg1[%c42] : memref<192xf32, #tpu.memory_space<smem>>
    %476 = vector.broadcast %475 : f32 to vector<2x250xf32>
    %477 = arith.mulf %476, %191 : vector<2x250xf32>
    %478 = arith.addf %474, %477 : vector<2x250xf32>
    %c43 = arith.constant 43 : index
    %479 = memref.load %arg1[%c43] : memref<192xf32, #tpu.memory_space<smem>>
    %480 = vector.broadcast %479 : f32 to vector<2x250xf32>
    %481 = arith.mulf %480, %463 : vector<2x250xf32>
    %482 = arith.addf %478, %481 : vector<2x250xf32>
    %483 = arith.addf %394, %482 : vector<2x250xf32>
    %c59 = arith.constant 59 : index
    %484 = memref.load %arg1[%c59] : memref<192xf32, #tpu.memory_space<smem>>
    %485 = vector.broadcast %484 : f32 to vector<2x250xf32>
    %486 = arith.mulf %485, %457 : vector<2x250xf32>
    %c60 = arith.constant 60 : index
    %487 = memref.load %arg1[%c60] : memref<192xf32, #tpu.memory_space<smem>>
    %488 = vector.broadcast %487 : f32 to vector<2x250xf32>
    %489 = arith.mulf %488, %460 : vector<2x250xf32>
    %490 = arith.addf %486, %489 : vector<2x250xf32>
    %c61 = arith.constant 61 : index
    %491 = memref.load %arg1[%c61] : memref<192xf32, #tpu.memory_space<smem>>
    %492 = vector.broadcast %491 : f32 to vector<2x250xf32>
    %493 = arith.mulf %492, %187 : vector<2x250xf32>
    %494 = arith.addf %490, %493 : vector<2x250xf32>
    %c62 = arith.constant 62 : index
    %495 = memref.load %arg1[%c62] : memref<192xf32, #tpu.memory_space<smem>>
    %496 = vector.broadcast %495 : f32 to vector<2x250xf32>
    %497 = arith.mulf %496, %191 : vector<2x250xf32>
    %498 = arith.addf %494, %497 : vector<2x250xf32>
    %c63 = arith.constant 63 : index
    %499 = memref.load %arg1[%c63] : memref<192xf32, #tpu.memory_space<smem>>
    %500 = vector.broadcast %499 : f32 to vector<2x250xf32>
    %501 = arith.mulf %500, %463 : vector<2x250xf32>
    %502 = arith.addf %498, %501 : vector<2x250xf32>
    %503 = arith.addf %414, %502 : vector<2x250xf32>
    %c79 = arith.constant 79 : index
    %504 = memref.load %arg1[%c79] : memref<192xf32, #tpu.memory_space<smem>>
    %505 = vector.broadcast %504 : f32 to vector<2x250xf32>
    %506 = arith.mulf %505, %457 : vector<2x250xf32>
    %c80 = arith.constant 80 : index
    %507 = memref.load %arg1[%c80] : memref<192xf32, #tpu.memory_space<smem>>
    %508 = vector.broadcast %507 : f32 to vector<2x250xf32>
    %509 = arith.mulf %508, %460 : vector<2x250xf32>
    %510 = arith.addf %506, %509 : vector<2x250xf32>
    %c81 = arith.constant 81 : index
    %511 = memref.load %arg1[%c81] : memref<192xf32, #tpu.memory_space<smem>>
    %512 = vector.broadcast %511 : f32 to vector<2x250xf32>
    %513 = arith.mulf %512, %187 : vector<2x250xf32>
    %514 = arith.addf %510, %513 : vector<2x250xf32>
    %c82 = arith.constant 82 : index
    %515 = memref.load %arg1[%c82] : memref<192xf32, #tpu.memory_space<smem>>
    %516 = vector.broadcast %515 : f32 to vector<2x250xf32>
    %517 = arith.mulf %516, %191 : vector<2x250xf32>
    %518 = arith.addf %514, %517 : vector<2x250xf32>
    %c83 = arith.constant 83 : index
    %519 = memref.load %arg1[%c83] : memref<192xf32, #tpu.memory_space<smem>>
    %520 = vector.broadcast %519 : f32 to vector<2x250xf32>
    %521 = arith.mulf %520, %463 : vector<2x250xf32>
    %522 = arith.addf %518, %521 : vector<2x250xf32>
    %523 = arith.addf %434, %522 : vector<2x250xf32>
    %c99 = arith.constant 99 : index
    %524 = memref.load %arg1[%c99] : memref<192xf32, #tpu.memory_space<smem>>
    %525 = vector.broadcast %524 : f32 to vector<2x250xf32>
    %526 = arith.mulf %525, %457 : vector<2x250xf32>
    %c100 = arith.constant 100 : index
    %527 = memref.load %arg1[%c100] : memref<192xf32, #tpu.memory_space<smem>>
    %528 = vector.broadcast %527 : f32 to vector<2x250xf32>
    %529 = arith.mulf %528, %460 : vector<2x250xf32>
    %530 = arith.addf %526, %529 : vector<2x250xf32>
    %c101 = arith.constant 101 : index
    %531 = memref.load %arg1[%c101] : memref<192xf32, #tpu.memory_space<smem>>
    %532 = vector.broadcast %531 : f32 to vector<2x250xf32>
    %533 = arith.mulf %532, %187 : vector<2x250xf32>
    %534 = arith.addf %530, %533 : vector<2x250xf32>
    %c102 = arith.constant 102 : index
    %535 = memref.load %arg1[%c102] : memref<192xf32, #tpu.memory_space<smem>>
    %536 = vector.broadcast %535 : f32 to vector<2x250xf32>
    %537 = arith.mulf %536, %191 : vector<2x250xf32>
    %538 = arith.addf %534, %537 : vector<2x250xf32>
    %c103 = arith.constant 103 : index
    %539 = memref.load %arg1[%c103] : memref<192xf32, #tpu.memory_space<smem>>
    %540 = vector.broadcast %539 : f32 to vector<2x250xf32>
    %541 = arith.mulf %540, %463 : vector<2x250xf32>
    %542 = arith.addf %538, %541 : vector<2x250xf32>
    %543 = arith.addf %454, %542 : vector<2x250xf32>
    %c104 = arith.constant 104 : index
    %544 = memref.load %arg1[%c104] : memref<192xf32, #tpu.memory_space<smem>>
    %545 = vector.broadcast %544 : f32 to vector<2x250xf32>
    %546 = arith.addf %483, %545 : vector<2x250xf32>
    %cst_40 = arith.constant 0.000000e+00 : f32
    %547 = vector.broadcast %cst_40 : f32 to vector<2x250xf32>
    %548 = arith.maximumf %546, %547 : vector<2x250xf32>
    %c105 = arith.constant 105 : index
    %549 = memref.load %arg1[%c105] : memref<192xf32, #tpu.memory_space<smem>>
    %550 = vector.broadcast %549 : f32 to vector<2x250xf32>
    %551 = arith.addf %503, %550 : vector<2x250xf32>
    %cst_41 = arith.constant 0.000000e+00 : f32
    %552 = vector.broadcast %cst_41 : f32 to vector<2x250xf32>
    %553 = arith.maximumf %551, %552 : vector<2x250xf32>
    %c106 = arith.constant 106 : index
    %554 = memref.load %arg1[%c106] : memref<192xf32, #tpu.memory_space<smem>>
    %555 = vector.broadcast %554 : f32 to vector<2x250xf32>
    %556 = arith.addf %523, %555 : vector<2x250xf32>
    %cst_42 = arith.constant 0.000000e+00 : f32
    %557 = vector.broadcast %cst_42 : f32 to vector<2x250xf32>
    %558 = arith.maximumf %556, %557 : vector<2x250xf32>
    %c107 = arith.constant 107 : index
    %559 = memref.load %arg1[%c107] : memref<192xf32, #tpu.memory_space<smem>>
    %560 = vector.broadcast %559 : f32 to vector<2x250xf32>
    %561 = arith.addf %543, %560 : vector<2x250xf32>
    %cst_43 = arith.constant 0.000000e+00 : f32
    %562 = vector.broadcast %cst_43 : f32 to vector<2x250xf32>
    %563 = arith.maximumf %561, %562 : vector<2x250xf32>
    %cst_44 = arith.constant 0.000000e+00 : f32
    %564 = vector.broadcast %cst_44 : f32 to vector<2x2xf32>
    %565 = vector.extract_strided_slice %548 {offsets = [0, 0], sizes = [2, 248], strides = [1, 1]} : vector<2x250xf32> to vector<2x248xf32>
    %566 = tpu.concatenate %564, %565 in 1 : vector<2x2xf32>, vector<2x248xf32> -> vector<2x250xf32>
    %cst_45 = arith.constant 0.000000e+00 : f32
    %567 = vector.broadcast %cst_45 : f32 to vector<2x1xf32>
    %568 = vector.extract_strided_slice %548 {offsets = [0, 0], sizes = [2, 249], strides = [1, 1]} : vector<2x250xf32> to vector<2x249xf32>
    %569 = tpu.concatenate %567, %568 in 1 : vector<2x1xf32>, vector<2x249xf32> -> vector<2x250xf32>
    %570 = vector.extract_strided_slice %548 {offsets = [0, 1], sizes = [2, 249], strides = [1, 1]} : vector<2x250xf32> to vector<2x249xf32>
    %cst_46 = arith.constant 0.000000e+00 : f32
    %571 = vector.broadcast %cst_46 : f32 to vector<2x1xf32>
    %572 = tpu.concatenate %570, %571 in 1 : vector<2x249xf32>, vector<2x1xf32> -> vector<2x250xf32>
    %573 = vector.extract_strided_slice %548 {offsets = [0, 2], sizes = [2, 248], strides = [1, 1]} : vector<2x250xf32> to vector<2x248xf32>
    %cst_47 = arith.constant 0.000000e+00 : f32
    %574 = vector.broadcast %cst_47 : f32 to vector<2x2xf32>
    %575 = tpu.concatenate %573, %574 in 1 : vector<2x248xf32>, vector<2x2xf32> -> vector<2x250xf32>
    %c108 = arith.constant 108 : index
    %576 = memref.load %arg1[%c108] : memref<192xf32, #tpu.memory_space<smem>>
    %577 = vector.broadcast %576 : f32 to vector<2x250xf32>
    %578 = arith.mulf %577, %566 : vector<2x250xf32>
    %c109 = arith.constant 109 : index
    %579 = memref.load %arg1[%c109] : memref<192xf32, #tpu.memory_space<smem>>
    %580 = vector.broadcast %579 : f32 to vector<2x250xf32>
    %581 = arith.mulf %580, %569 : vector<2x250xf32>
    %582 = arith.addf %578, %581 : vector<2x250xf32>
    %c110 = arith.constant 110 : index
    %583 = memref.load %arg1[%c110] : memref<192xf32, #tpu.memory_space<smem>>
    %584 = vector.broadcast %583 : f32 to vector<2x250xf32>
    %585 = arith.mulf %584, %548 : vector<2x250xf32>
    %586 = arith.addf %582, %585 : vector<2x250xf32>
    %c111 = arith.constant 111 : index
    %587 = memref.load %arg1[%c111] : memref<192xf32, #tpu.memory_space<smem>>
    %588 = vector.broadcast %587 : f32 to vector<2x250xf32>
    %589 = arith.mulf %588, %572 : vector<2x250xf32>
    %590 = arith.addf %586, %589 : vector<2x250xf32>
    %c112 = arith.constant 112 : index
    %591 = memref.load %arg1[%c112] : memref<192xf32, #tpu.memory_space<smem>>
    %592 = vector.broadcast %591 : f32 to vector<2x250xf32>
    %593 = arith.mulf %592, %575 : vector<2x250xf32>
    %594 = arith.addf %590, %593 : vector<2x250xf32>
    %c128 = arith.constant 128 : index
    %595 = memref.load %arg1[%c128] : memref<192xf32, #tpu.memory_space<smem>>
    %596 = vector.broadcast %595 : f32 to vector<2x250xf32>
    %597 = arith.mulf %596, %566 : vector<2x250xf32>
    %c129 = arith.constant 129 : index
    %598 = memref.load %arg1[%c129] : memref<192xf32, #tpu.memory_space<smem>>
    %599 = vector.broadcast %598 : f32 to vector<2x250xf32>
    %600 = arith.mulf %599, %569 : vector<2x250xf32>
    %601 = arith.addf %597, %600 : vector<2x250xf32>
    %c130 = arith.constant 130 : index
    %602 = memref.load %arg1[%c130] : memref<192xf32, #tpu.memory_space<smem>>
    %603 = vector.broadcast %602 : f32 to vector<2x250xf32>
    %604 = arith.mulf %603, %548 : vector<2x250xf32>
    %605 = arith.addf %601, %604 : vector<2x250xf32>
    %c131 = arith.constant 131 : index
    %606 = memref.load %arg1[%c131] : memref<192xf32, #tpu.memory_space<smem>>
    %607 = vector.broadcast %606 : f32 to vector<2x250xf32>
    %608 = arith.mulf %607, %572 : vector<2x250xf32>
    %609 = arith.addf %605, %608 : vector<2x250xf32>
    %c132 = arith.constant 132 : index
    %610 = memref.load %arg1[%c132] : memref<192xf32, #tpu.memory_space<smem>>
    %611 = vector.broadcast %610 : f32 to vector<2x250xf32>
    %612 = arith.mulf %611, %575 : vector<2x250xf32>
    %613 = arith.addf %609, %612 : vector<2x250xf32>
    %c148 = arith.constant 148 : index
    %614 = memref.load %arg1[%c148] : memref<192xf32, #tpu.memory_space<smem>>
    %615 = vector.broadcast %614 : f32 to vector<2x250xf32>
    %616 = arith.mulf %615, %566 : vector<2x250xf32>
    %c149 = arith.constant 149 : index
    %617 = memref.load %arg1[%c149] : memref<192xf32, #tpu.memory_space<smem>>
    %618 = vector.broadcast %617 : f32 to vector<2x250xf32>
    %619 = arith.mulf %618, %569 : vector<2x250xf32>
    %620 = arith.addf %616, %619 : vector<2x250xf32>
    %c150 = arith.constant 150 : index
    %621 = memref.load %arg1[%c150] : memref<192xf32, #tpu.memory_space<smem>>
    %622 = vector.broadcast %621 : f32 to vector<2x250xf32>
    %623 = arith.mulf %622, %548 : vector<2x250xf32>
    %624 = arith.addf %620, %623 : vector<2x250xf32>
    %c151 = arith.constant 151 : index
    %625 = memref.load %arg1[%c151] : memref<192xf32, #tpu.memory_space<smem>>
    %626 = vector.broadcast %625 : f32 to vector<2x250xf32>
    %627 = arith.mulf %626, %572 : vector<2x250xf32>
    %628 = arith.addf %624, %627 : vector<2x250xf32>
    %c152 = arith.constant 152 : index
    %629 = memref.load %arg1[%c152] : memref<192xf32, #tpu.memory_space<smem>>
    %630 = vector.broadcast %629 : f32 to vector<2x250xf32>
    %631 = arith.mulf %630, %575 : vector<2x250xf32>
    %632 = arith.addf %628, %631 : vector<2x250xf32>
    %c168 = arith.constant 168 : index
    %633 = memref.load %arg1[%c168] : memref<192xf32, #tpu.memory_space<smem>>
    %634 = vector.broadcast %633 : f32 to vector<2x250xf32>
    %635 = arith.mulf %634, %566 : vector<2x250xf32>
    %c169 = arith.constant 169 : index
    %636 = memref.load %arg1[%c169] : memref<192xf32, #tpu.memory_space<smem>>
    %637 = vector.broadcast %636 : f32 to vector<2x250xf32>
    %638 = arith.mulf %637, %569 : vector<2x250xf32>
    %639 = arith.addf %635, %638 : vector<2x250xf32>
    %c170 = arith.constant 170 : index
    %640 = memref.load %arg1[%c170] : memref<192xf32, #tpu.memory_space<smem>>
    %641 = vector.broadcast %640 : f32 to vector<2x250xf32>
    %642 = arith.mulf %641, %548 : vector<2x250xf32>
    %643 = arith.addf %639, %642 : vector<2x250xf32>
    %c171 = arith.constant 171 : index
    %644 = memref.load %arg1[%c171] : memref<192xf32, #tpu.memory_space<smem>>
    %645 = vector.broadcast %644 : f32 to vector<2x250xf32>
    %646 = arith.mulf %645, %572 : vector<2x250xf32>
    %647 = arith.addf %643, %646 : vector<2x250xf32>
    %c172 = arith.constant 172 : index
    %648 = memref.load %arg1[%c172] : memref<192xf32, #tpu.memory_space<smem>>
    %649 = vector.broadcast %648 : f32 to vector<2x250xf32>
    %650 = arith.mulf %649, %575 : vector<2x250xf32>
    %651 = arith.addf %647, %650 : vector<2x250xf32>
    %cst_48 = arith.constant 0.000000e+00 : f32
    %652 = vector.broadcast %cst_48 : f32 to vector<2x2xf32>
    %653 = vector.extract_strided_slice %553 {offsets = [0, 0], sizes = [2, 248], strides = [1, 1]} : vector<2x250xf32> to vector<2x248xf32>
    %654 = tpu.concatenate %652, %653 in 1 : vector<2x2xf32>, vector<2x248xf32> -> vector<2x250xf32>
    %cst_49 = arith.constant 0.000000e+00 : f32
    %655 = vector.broadcast %cst_49 : f32 to vector<2x1xf32>
    %656 = vector.extract_strided_slice %553 {offsets = [0, 0], sizes = [2, 249], strides = [1, 1]} : vector<2x250xf32> to vector<2x249xf32>
    %657 = tpu.concatenate %655, %656 in 1 : vector<2x1xf32>, vector<2x249xf32> -> vector<2x250xf32>
    %658 = vector.extract_strided_slice %553 {offsets = [0, 1], sizes = [2, 249], strides = [1, 1]} : vector<2x250xf32> to vector<2x249xf32>
    %cst_50 = arith.constant 0.000000e+00 : f32
    %659 = vector.broadcast %cst_50 : f32 to vector<2x1xf32>
    %660 = tpu.concatenate %658, %659 in 1 : vector<2x249xf32>, vector<2x1xf32> -> vector<2x250xf32>
    %661 = vector.extract_strided_slice %553 {offsets = [0, 2], sizes = [2, 248], strides = [1, 1]} : vector<2x250xf32> to vector<2x248xf32>
    %cst_51 = arith.constant 0.000000e+00 : f32
    %662 = vector.broadcast %cst_51 : f32 to vector<2x2xf32>
    %663 = tpu.concatenate %661, %662 in 1 : vector<2x248xf32>, vector<2x2xf32> -> vector<2x250xf32>
    %c113 = arith.constant 113 : index
    %664 = memref.load %arg1[%c113] : memref<192xf32, #tpu.memory_space<smem>>
    %665 = vector.broadcast %664 : f32 to vector<2x250xf32>
    %666 = arith.mulf %665, %654 : vector<2x250xf32>
    %c114 = arith.constant 114 : index
    %667 = memref.load %arg1[%c114] : memref<192xf32, #tpu.memory_space<smem>>
    %668 = vector.broadcast %667 : f32 to vector<2x250xf32>
    %669 = arith.mulf %668, %657 : vector<2x250xf32>
    %670 = arith.addf %666, %669 : vector<2x250xf32>
    %c115 = arith.constant 115 : index
    %671 = memref.load %arg1[%c115] : memref<192xf32, #tpu.memory_space<smem>>
    %672 = vector.broadcast %671 : f32 to vector<2x250xf32>
    %673 = arith.mulf %672, %553 : vector<2x250xf32>
    %674 = arith.addf %670, %673 : vector<2x250xf32>
    %c116 = arith.constant 116 : index
    %675 = memref.load %arg1[%c116] : memref<192xf32, #tpu.memory_space<smem>>
    %676 = vector.broadcast %675 : f32 to vector<2x250xf32>
    %677 = arith.mulf %676, %660 : vector<2x250xf32>
    %678 = arith.addf %674, %677 : vector<2x250xf32>
    %c117 = arith.constant 117 : index
    %679 = memref.load %arg1[%c117] : memref<192xf32, #tpu.memory_space<smem>>
    %680 = vector.broadcast %679 : f32 to vector<2x250xf32>
    %681 = arith.mulf %680, %663 : vector<2x250xf32>
    %682 = arith.addf %678, %681 : vector<2x250xf32>
    %683 = arith.addf %594, %682 : vector<2x250xf32>
    %c133 = arith.constant 133 : index
    %684 = memref.load %arg1[%c133] : memref<192xf32, #tpu.memory_space<smem>>
    %685 = vector.broadcast %684 : f32 to vector<2x250xf32>
    %686 = arith.mulf %685, %654 : vector<2x250xf32>
    %c134 = arith.constant 134 : index
    %687 = memref.load %arg1[%c134] : memref<192xf32, #tpu.memory_space<smem>>
    %688 = vector.broadcast %687 : f32 to vector<2x250xf32>
    %689 = arith.mulf %688, %657 : vector<2x250xf32>
    %690 = arith.addf %686, %689 : vector<2x250xf32>
    %c135 = arith.constant 135 : index
    %691 = memref.load %arg1[%c135] : memref<192xf32, #tpu.memory_space<smem>>
    %692 = vector.broadcast %691 : f32 to vector<2x250xf32>
    %693 = arith.mulf %692, %553 : vector<2x250xf32>
    %694 = arith.addf %690, %693 : vector<2x250xf32>
    %c136 = arith.constant 136 : index
    %695 = memref.load %arg1[%c136] : memref<192xf32, #tpu.memory_space<smem>>
    %696 = vector.broadcast %695 : f32 to vector<2x250xf32>
    %697 = arith.mulf %696, %660 : vector<2x250xf32>
    %698 = arith.addf %694, %697 : vector<2x250xf32>
    %c137 = arith.constant 137 : index
    %699 = memref.load %arg1[%c137] : memref<192xf32, #tpu.memory_space<smem>>
    %700 = vector.broadcast %699 : f32 to vector<2x250xf32>
    %701 = arith.mulf %700, %663 : vector<2x250xf32>
    %702 = arith.addf %698, %701 : vector<2x250xf32>
    %703 = arith.addf %613, %702 : vector<2x250xf32>
    %c153 = arith.constant 153 : index
    %704 = memref.load %arg1[%c153] : memref<192xf32, #tpu.memory_space<smem>>
    %705 = vector.broadcast %704 : f32 to vector<2x250xf32>
    %706 = arith.mulf %705, %654 : vector<2x250xf32>
    %c154 = arith.constant 154 : index
    %707 = memref.load %arg1[%c154] : memref<192xf32, #tpu.memory_space<smem>>
    %708 = vector.broadcast %707 : f32 to vector<2x250xf32>
    %709 = arith.mulf %708, %657 : vector<2x250xf32>
    %710 = arith.addf %706, %709 : vector<2x250xf32>
    %c155 = arith.constant 155 : index
    %711 = memref.load %arg1[%c155] : memref<192xf32, #tpu.memory_space<smem>>
    %712 = vector.broadcast %711 : f32 to vector<2x250xf32>
    %713 = arith.mulf %712, %553 : vector<2x250xf32>
    %714 = arith.addf %710, %713 : vector<2x250xf32>
    %c156 = arith.constant 156 : index
    %715 = memref.load %arg1[%c156] : memref<192xf32, #tpu.memory_space<smem>>
    %716 = vector.broadcast %715 : f32 to vector<2x250xf32>
    %717 = arith.mulf %716, %660 : vector<2x250xf32>
    %718 = arith.addf %714, %717 : vector<2x250xf32>
    %c157 = arith.constant 157 : index
    %719 = memref.load %arg1[%c157] : memref<192xf32, #tpu.memory_space<smem>>
    %720 = vector.broadcast %719 : f32 to vector<2x250xf32>
    %721 = arith.mulf %720, %663 : vector<2x250xf32>
    %722 = arith.addf %718, %721 : vector<2x250xf32>
    %723 = arith.addf %632, %722 : vector<2x250xf32>
    %c173 = arith.constant 173 : index
    %724 = memref.load %arg1[%c173] : memref<192xf32, #tpu.memory_space<smem>>
    %725 = vector.broadcast %724 : f32 to vector<2x250xf32>
    %726 = arith.mulf %725, %654 : vector<2x250xf32>
    %c174 = arith.constant 174 : index
    %727 = memref.load %arg1[%c174] : memref<192xf32, #tpu.memory_space<smem>>
    %728 = vector.broadcast %727 : f32 to vector<2x250xf32>
    %729 = arith.mulf %728, %657 : vector<2x250xf32>
    %730 = arith.addf %726, %729 : vector<2x250xf32>
    %c175 = arith.constant 175 : index
    %731 = memref.load %arg1[%c175] : memref<192xf32, #tpu.memory_space<smem>>
    %732 = vector.broadcast %731 : f32 to vector<2x250xf32>
    %733 = arith.mulf %732, %553 : vector<2x250xf32>
    %734 = arith.addf %730, %733 : vector<2x250xf32>
    %c176 = arith.constant 176 : index
    %735 = memref.load %arg1[%c176] : memref<192xf32, #tpu.memory_space<smem>>
    %736 = vector.broadcast %735 : f32 to vector<2x250xf32>
    %737 = arith.mulf %736, %660 : vector<2x250xf32>
    %738 = arith.addf %734, %737 : vector<2x250xf32>
    %c177 = arith.constant 177 : index
    %739 = memref.load %arg1[%c177] : memref<192xf32, #tpu.memory_space<smem>>
    %740 = vector.broadcast %739 : f32 to vector<2x250xf32>
    %741 = arith.mulf %740, %663 : vector<2x250xf32>
    %742 = arith.addf %738, %741 : vector<2x250xf32>
    %743 = arith.addf %651, %742 : vector<2x250xf32>
    %cst_52 = arith.constant 0.000000e+00 : f32
    %744 = vector.broadcast %cst_52 : f32 to vector<2x2xf32>
    %745 = vector.extract_strided_slice %558 {offsets = [0, 0], sizes = [2, 248], strides = [1, 1]} : vector<2x250xf32> to vector<2x248xf32>
    %746 = tpu.concatenate %744, %745 in 1 : vector<2x2xf32>, vector<2x248xf32> -> vector<2x250xf32>
    %cst_53 = arith.constant 0.000000e+00 : f32
    %747 = vector.broadcast %cst_53 : f32 to vector<2x1xf32>
    %748 = vector.extract_strided_slice %558 {offsets = [0, 0], sizes = [2, 249], strides = [1, 1]} : vector<2x250xf32> to vector<2x249xf32>
    %749 = tpu.concatenate %747, %748 in 1 : vector<2x1xf32>, vector<2x249xf32> -> vector<2x250xf32>
    %750 = vector.extract_strided_slice %558 {offsets = [0, 1], sizes = [2, 249], strides = [1, 1]} : vector<2x250xf32> to vector<2x249xf32>
    %cst_54 = arith.constant 0.000000e+00 : f32
    %751 = vector.broadcast %cst_54 : f32 to vector<2x1xf32>
    %752 = tpu.concatenate %750, %751 in 1 : vector<2x249xf32>, vector<2x1xf32> -> vector<2x250xf32>
    %753 = vector.extract_strided_slice %558 {offsets = [0, 2], sizes = [2, 248], strides = [1, 1]} : vector<2x250xf32> to vector<2x248xf32>
    %cst_55 = arith.constant 0.000000e+00 : f32
    %754 = vector.broadcast %cst_55 : f32 to vector<2x2xf32>
    %755 = tpu.concatenate %753, %754 in 1 : vector<2x248xf32>, vector<2x2xf32> -> vector<2x250xf32>
    %c118 = arith.constant 118 : index
    %756 = memref.load %arg1[%c118] : memref<192xf32, #tpu.memory_space<smem>>
    %757 = vector.broadcast %756 : f32 to vector<2x250xf32>
    %758 = arith.mulf %757, %746 : vector<2x250xf32>
    %c119 = arith.constant 119 : index
    %759 = memref.load %arg1[%c119] : memref<192xf32, #tpu.memory_space<smem>>
    %760 = vector.broadcast %759 : f32 to vector<2x250xf32>
    %761 = arith.mulf %760, %749 : vector<2x250xf32>
    %762 = arith.addf %758, %761 : vector<2x250xf32>
    %c120 = arith.constant 120 : index
    %763 = memref.load %arg1[%c120] : memref<192xf32, #tpu.memory_space<smem>>
    %764 = vector.broadcast %763 : f32 to vector<2x250xf32>
    %765 = arith.mulf %764, %558 : vector<2x250xf32>
    %766 = arith.addf %762, %765 : vector<2x250xf32>
    %c121 = arith.constant 121 : index
    %767 = memref.load %arg1[%c121] : memref<192xf32, #tpu.memory_space<smem>>
    %768 = vector.broadcast %767 : f32 to vector<2x250xf32>
    %769 = arith.mulf %768, %752 : vector<2x250xf32>
    %770 = arith.addf %766, %769 : vector<2x250xf32>
    %c122 = arith.constant 122 : index
    %771 = memref.load %arg1[%c122] : memref<192xf32, #tpu.memory_space<smem>>
    %772 = vector.broadcast %771 : f32 to vector<2x250xf32>
    %773 = arith.mulf %772, %755 : vector<2x250xf32>
    %774 = arith.addf %770, %773 : vector<2x250xf32>
    %775 = arith.addf %683, %774 : vector<2x250xf32>
    %c138 = arith.constant 138 : index
    %776 = memref.load %arg1[%c138] : memref<192xf32, #tpu.memory_space<smem>>
    %777 = vector.broadcast %776 : f32 to vector<2x250xf32>
    %778 = arith.mulf %777, %746 : vector<2x250xf32>
    %c139 = arith.constant 139 : index
    %779 = memref.load %arg1[%c139] : memref<192xf32, #tpu.memory_space<smem>>
    %780 = vector.broadcast %779 : f32 to vector<2x250xf32>
    %781 = arith.mulf %780, %749 : vector<2x250xf32>
    %782 = arith.addf %778, %781 : vector<2x250xf32>
    %c140 = arith.constant 140 : index
    %783 = memref.load %arg1[%c140] : memref<192xf32, #tpu.memory_space<smem>>
    %784 = vector.broadcast %783 : f32 to vector<2x250xf32>
    %785 = arith.mulf %784, %558 : vector<2x250xf32>
    %786 = arith.addf %782, %785 : vector<2x250xf32>
    %c141 = arith.constant 141 : index
    %787 = memref.load %arg1[%c141] : memref<192xf32, #tpu.memory_space<smem>>
    %788 = vector.broadcast %787 : f32 to vector<2x250xf32>
    %789 = arith.mulf %788, %752 : vector<2x250xf32>
    %790 = arith.addf %786, %789 : vector<2x250xf32>
    %c142 = arith.constant 142 : index
    %791 = memref.load %arg1[%c142] : memref<192xf32, #tpu.memory_space<smem>>
    %792 = vector.broadcast %791 : f32 to vector<2x250xf32>
    %793 = arith.mulf %792, %755 : vector<2x250xf32>
    %794 = arith.addf %790, %793 : vector<2x250xf32>
    %795 = arith.addf %703, %794 : vector<2x250xf32>
    %c158 = arith.constant 158 : index
    %796 = memref.load %arg1[%c158] : memref<192xf32, #tpu.memory_space<smem>>
    %797 = vector.broadcast %796 : f32 to vector<2x250xf32>
    %798 = arith.mulf %797, %746 : vector<2x250xf32>
    %c159 = arith.constant 159 : index
    %799 = memref.load %arg1[%c159] : memref<192xf32, #tpu.memory_space<smem>>
    %800 = vector.broadcast %799 : f32 to vector<2x250xf32>
    %801 = arith.mulf %800, %749 : vector<2x250xf32>
    %802 = arith.addf %798, %801 : vector<2x250xf32>
    %c160 = arith.constant 160 : index
    %803 = memref.load %arg1[%c160] : memref<192xf32, #tpu.memory_space<smem>>
    %804 = vector.broadcast %803 : f32 to vector<2x250xf32>
    %805 = arith.mulf %804, %558 : vector<2x250xf32>
    %806 = arith.addf %802, %805 : vector<2x250xf32>
    %c161 = arith.constant 161 : index
    %807 = memref.load %arg1[%c161] : memref<192xf32, #tpu.memory_space<smem>>
    %808 = vector.broadcast %807 : f32 to vector<2x250xf32>
    %809 = arith.mulf %808, %752 : vector<2x250xf32>
    %810 = arith.addf %806, %809 : vector<2x250xf32>
    %c162 = arith.constant 162 : index
    %811 = memref.load %arg1[%c162] : memref<192xf32, #tpu.memory_space<smem>>
    %812 = vector.broadcast %811 : f32 to vector<2x250xf32>
    %813 = arith.mulf %812, %755 : vector<2x250xf32>
    %814 = arith.addf %810, %813 : vector<2x250xf32>
    %815 = arith.addf %723, %814 : vector<2x250xf32>
    %c178 = arith.constant 178 : index
    %816 = memref.load %arg1[%c178] : memref<192xf32, #tpu.memory_space<smem>>
    %817 = vector.broadcast %816 : f32 to vector<2x250xf32>
    %818 = arith.mulf %817, %746 : vector<2x250xf32>
    %c179 = arith.constant 179 : index
    %819 = memref.load %arg1[%c179] : memref<192xf32, #tpu.memory_space<smem>>
    %820 = vector.broadcast %819 : f32 to vector<2x250xf32>
    %821 = arith.mulf %820, %749 : vector<2x250xf32>
    %822 = arith.addf %818, %821 : vector<2x250xf32>
    %c180 = arith.constant 180 : index
    %823 = memref.load %arg1[%c180] : memref<192xf32, #tpu.memory_space<smem>>
    %824 = vector.broadcast %823 : f32 to vector<2x250xf32>
    %825 = arith.mulf %824, %558 : vector<2x250xf32>
    %826 = arith.addf %822, %825 : vector<2x250xf32>
    %c181 = arith.constant 181 : index
    %827 = memref.load %arg1[%c181] : memref<192xf32, #tpu.memory_space<smem>>
    %828 = vector.broadcast %827 : f32 to vector<2x250xf32>
    %829 = arith.mulf %828, %752 : vector<2x250xf32>
    %830 = arith.addf %826, %829 : vector<2x250xf32>
    %c182 = arith.constant 182 : index
    %831 = memref.load %arg1[%c182] : memref<192xf32, #tpu.memory_space<smem>>
    %832 = vector.broadcast %831 : f32 to vector<2x250xf32>
    %833 = arith.mulf %832, %755 : vector<2x250xf32>
    %834 = arith.addf %830, %833 : vector<2x250xf32>
    %835 = arith.addf %743, %834 : vector<2x250xf32>
    %cst_56 = arith.constant 0.000000e+00 : f32
    %836 = vector.broadcast %cst_56 : f32 to vector<2x2xf32>
    %837 = vector.extract_strided_slice %563 {offsets = [0, 0], sizes = [2, 248], strides = [1, 1]} : vector<2x250xf32> to vector<2x248xf32>
    %838 = tpu.concatenate %836, %837 in 1 : vector<2x2xf32>, vector<2x248xf32> -> vector<2x250xf32>
    %cst_57 = arith.constant 0.000000e+00 : f32
    %839 = vector.broadcast %cst_57 : f32 to vector<2x1xf32>
    %840 = vector.extract_strided_slice %563 {offsets = [0, 0], sizes = [2, 249], strides = [1, 1]} : vector<2x250xf32> to vector<2x249xf32>
    %841 = tpu.concatenate %839, %840 in 1 : vector<2x1xf32>, vector<2x249xf32> -> vector<2x250xf32>
    %842 = vector.extract_strided_slice %563 {offsets = [0, 1], sizes = [2, 249], strides = [1, 1]} : vector<2x250xf32> to vector<2x249xf32>
    %cst_58 = arith.constant 0.000000e+00 : f32
    %843 = vector.broadcast %cst_58 : f32 to vector<2x1xf32>
    %844 = tpu.concatenate %842, %843 in 1 : vector<2x249xf32>, vector<2x1xf32> -> vector<2x250xf32>
    %845 = vector.extract_strided_slice %563 {offsets = [0, 2], sizes = [2, 248], strides = [1, 1]} : vector<2x250xf32> to vector<2x248xf32>
    %cst_59 = arith.constant 0.000000e+00 : f32
    %846 = vector.broadcast %cst_59 : f32 to vector<2x2xf32>
    %847 = tpu.concatenate %845, %846 in 1 : vector<2x248xf32>, vector<2x2xf32> -> vector<2x250xf32>
    %c123 = arith.constant 123 : index
    %848 = memref.load %arg1[%c123] : memref<192xf32, #tpu.memory_space<smem>>
    %849 = vector.broadcast %848 : f32 to vector<2x250xf32>
    %850 = arith.mulf %849, %838 : vector<2x250xf32>
    %c124 = arith.constant 124 : index
    %851 = memref.load %arg1[%c124] : memref<192xf32, #tpu.memory_space<smem>>
    %852 = vector.broadcast %851 : f32 to vector<2x250xf32>
    %853 = arith.mulf %852, %841 : vector<2x250xf32>
    %854 = arith.addf %850, %853 : vector<2x250xf32>
    %c125 = arith.constant 125 : index
    %855 = memref.load %arg1[%c125] : memref<192xf32, #tpu.memory_space<smem>>
    %856 = vector.broadcast %855 : f32 to vector<2x250xf32>
    %857 = arith.mulf %856, %563 : vector<2x250xf32>
    %858 = arith.addf %854, %857 : vector<2x250xf32>
    %c126 = arith.constant 126 : index
    %859 = memref.load %arg1[%c126] : memref<192xf32, #tpu.memory_space<smem>>
    %860 = vector.broadcast %859 : f32 to vector<2x250xf32>
    %861 = arith.mulf %860, %844 : vector<2x250xf32>
    %862 = arith.addf %858, %861 : vector<2x250xf32>
    %c127 = arith.constant 127 : index
    %863 = memref.load %arg1[%c127] : memref<192xf32, #tpu.memory_space<smem>>
    %864 = vector.broadcast %863 : f32 to vector<2x250xf32>
    %865 = arith.mulf %864, %847 : vector<2x250xf32>
    %866 = arith.addf %862, %865 : vector<2x250xf32>
    %867 = arith.addf %775, %866 : vector<2x250xf32>
    %c143 = arith.constant 143 : index
    %868 = memref.load %arg1[%c143] : memref<192xf32, #tpu.memory_space<smem>>
    %869 = vector.broadcast %868 : f32 to vector<2x250xf32>
    %870 = arith.mulf %869, %838 : vector<2x250xf32>
    %c144 = arith.constant 144 : index
    %871 = memref.load %arg1[%c144] : memref<192xf32, #tpu.memory_space<smem>>
    %872 = vector.broadcast %871 : f32 to vector<2x250xf32>
    %873 = arith.mulf %872, %841 : vector<2x250xf32>
    %874 = arith.addf %870, %873 : vector<2x250xf32>
    %c145 = arith.constant 145 : index
    %875 = memref.load %arg1[%c145] : memref<192xf32, #tpu.memory_space<smem>>
    %876 = vector.broadcast %875 : f32 to vector<2x250xf32>
    %877 = arith.mulf %876, %563 : vector<2x250xf32>
    %878 = arith.addf %874, %877 : vector<2x250xf32>
    %c146 = arith.constant 146 : index
    %879 = memref.load %arg1[%c146] : memref<192xf32, #tpu.memory_space<smem>>
    %880 = vector.broadcast %879 : f32 to vector<2x250xf32>
    %881 = arith.mulf %880, %844 : vector<2x250xf32>
    %882 = arith.addf %878, %881 : vector<2x250xf32>
    %c147 = arith.constant 147 : index
    %883 = memref.load %arg1[%c147] : memref<192xf32, #tpu.memory_space<smem>>
    %884 = vector.broadcast %883 : f32 to vector<2x250xf32>
    %885 = arith.mulf %884, %847 : vector<2x250xf32>
    %886 = arith.addf %882, %885 : vector<2x250xf32>
    %887 = arith.addf %795, %886 : vector<2x250xf32>
    %c163 = arith.constant 163 : index
    %888 = memref.load %arg1[%c163] : memref<192xf32, #tpu.memory_space<smem>>
    %889 = vector.broadcast %888 : f32 to vector<2x250xf32>
    %890 = arith.mulf %889, %838 : vector<2x250xf32>
    %c164 = arith.constant 164 : index
    %891 = memref.load %arg1[%c164] : memref<192xf32, #tpu.memory_space<smem>>
    %892 = vector.broadcast %891 : f32 to vector<2x250xf32>
    %893 = arith.mulf %892, %841 : vector<2x250xf32>
    %894 = arith.addf %890, %893 : vector<2x250xf32>
    %c165 = arith.constant 165 : index
    %895 = memref.load %arg1[%c165] : memref<192xf32, #tpu.memory_space<smem>>
    %896 = vector.broadcast %895 : f32 to vector<2x250xf32>
    %897 = arith.mulf %896, %563 : vector<2x250xf32>
    %898 = arith.addf %894, %897 : vector<2x250xf32>
    %c166 = arith.constant 166 : index
    %899 = memref.load %arg1[%c166] : memref<192xf32, #tpu.memory_space<smem>>
    %900 = vector.broadcast %899 : f32 to vector<2x250xf32>
    %901 = arith.mulf %900, %844 : vector<2x250xf32>
    %902 = arith.addf %898, %901 : vector<2x250xf32>
    %c167 = arith.constant 167 : index
    %903 = memref.load %arg1[%c167] : memref<192xf32, #tpu.memory_space<smem>>
    %904 = vector.broadcast %903 : f32 to vector<2x250xf32>
    %905 = arith.mulf %904, %847 : vector<2x250xf32>
    %906 = arith.addf %902, %905 : vector<2x250xf32>
    %907 = arith.addf %815, %906 : vector<2x250xf32>
    %c183 = arith.constant 183 : index
    %908 = memref.load %arg1[%c183] : memref<192xf32, #tpu.memory_space<smem>>
    %909 = vector.broadcast %908 : f32 to vector<2x250xf32>
    %910 = arith.mulf %909, %838 : vector<2x250xf32>
    %c184 = arith.constant 184 : index
    %911 = memref.load %arg1[%c184] : memref<192xf32, #tpu.memory_space<smem>>
    %912 = vector.broadcast %911 : f32 to vector<2x250xf32>
    %913 = arith.mulf %912, %841 : vector<2x250xf32>
    %914 = arith.addf %910, %913 : vector<2x250xf32>
    %c185 = arith.constant 185 : index
    %915 = memref.load %arg1[%c185] : memref<192xf32, #tpu.memory_space<smem>>
    %916 = vector.broadcast %915 : f32 to vector<2x250xf32>
    %917 = arith.mulf %916, %563 : vector<2x250xf32>
    %918 = arith.addf %914, %917 : vector<2x250xf32>
    %c186 = arith.constant 186 : index
    %919 = memref.load %arg1[%c186] : memref<192xf32, #tpu.memory_space<smem>>
    %920 = vector.broadcast %919 : f32 to vector<2x250xf32>
    %921 = arith.mulf %920, %844 : vector<2x250xf32>
    %922 = arith.addf %918, %921 : vector<2x250xf32>
    %c187 = arith.constant 187 : index
    %923 = memref.load %arg1[%c187] : memref<192xf32, #tpu.memory_space<smem>>
    %924 = vector.broadcast %923 : f32 to vector<2x250xf32>
    %925 = arith.mulf %924, %847 : vector<2x250xf32>
    %926 = arith.addf %922, %925 : vector<2x250xf32>
    %927 = arith.addf %835, %926 : vector<2x250xf32>
    %c188 = arith.constant 188 : index
    %928 = memref.load %arg1[%c188] : memref<192xf32, #tpu.memory_space<smem>>
    %929 = vector.broadcast %928 : f32 to vector<2x250xf32>
    %930 = arith.addf %867, %929 : vector<2x250xf32>
    %cst_60 = arith.constant 0.000000e+00 : f32
    %931 = vector.broadcast %cst_60 : f32 to vector<2x250xf32>
    %932 = arith.maximumf %930, %931 : vector<2x250xf32>
    %933 = arith.truncf %932 : vector<2x250xf32> to vector<2x250xbf16>
    %c189 = arith.constant 189 : index
    %934 = memref.load %arg1[%c189] : memref<192xf32, #tpu.memory_space<smem>>
    %935 = vector.broadcast %934 : f32 to vector<2x250xf32>
    %936 = arith.addf %887, %935 : vector<2x250xf32>
    %cst_61 = arith.constant 0.000000e+00 : f32
    %937 = vector.broadcast %cst_61 : f32 to vector<2x250xf32>
    %938 = arith.maximumf %936, %937 : vector<2x250xf32>
    %939 = arith.truncf %938 : vector<2x250xf32> to vector<2x250xbf16>
    %c190 = arith.constant 190 : index
    %940 = memref.load %arg1[%c190] : memref<192xf32, #tpu.memory_space<smem>>
    %941 = vector.broadcast %940 : f32 to vector<2x250xf32>
    %942 = arith.addf %907, %941 : vector<2x250xf32>
    %cst_62 = arith.constant 0.000000e+00 : f32
    %943 = vector.broadcast %cst_62 : f32 to vector<2x250xf32>
    %944 = arith.maximumf %942, %943 : vector<2x250xf32>
    %945 = arith.truncf %944 : vector<2x250xf32> to vector<2x250xbf16>
    %c191 = arith.constant 191 : index
    %946 = memref.load %arg1[%c191] : memref<192xf32, #tpu.memory_space<smem>>
    %947 = vector.broadcast %946 : f32 to vector<2x250xf32>
    %948 = arith.addf %927, %947 : vector<2x250xf32>
    %cst_63 = arith.constant 0.000000e+00 : f32
    %949 = vector.broadcast %cst_63 : f32 to vector<2x250xf32>
    %950 = arith.maximumf %948, %949 : vector<2x250xf32>
    %951 = arith.truncf %950 : vector<2x250xf32> to vector<2x250xbf16>
    %c0_i32_64 = arith.constant 0 : i32
    %952 = tpu.memref_slice %arg14[%c0_i32_64] : memref<5x!tpu.dma_semaphore, #tpu.memory_space<semaphore_mem>> -> memref<1x!tpu.dma_semaphore, #tpu.memory_space<semaphore_mem>>
    %953 = tpu.memref_squeeze %952 : memref<1x!tpu.dma_semaphore, #tpu.memory_space<semaphore_mem>> -> memref<!tpu.dma_semaphore, #tpu.memory_space<semaphore_mem>>
    tpu.wait_dma2 semaphore(%953 : memref<!tpu.dma_semaphore, #tpu.memory_space<semaphore_mem>>) src(%arg3 : memref<4x250x512xbf16, #tpu.memory_space<any>>) dst(%arg9 : memref<4x250x512xbf16, #tpu.memory_space<vmem>>)
    %c0_65 = arith.constant 0 : index
    %c0_66 = arith.constant 0 : index
    %c0_67 = arith.constant 0 : index
    %954 = vector.load %arg9[%c0_65, %c0_66, %c0_67] : memref<4x250x512xbf16, #tpu.memory_space<vmem>>, vector<1x250x512xbf16>
    %955 = vector.shape_cast %954 : vector<1x250x512xbf16> to vector<250x512xbf16>
    %cst_68 = arith.constant dense<0.000000e+00> : vector<2x512xf32>
    %956 = tpu.matmul %933, %955, %cst_68 {dimension_numbers = #tpu.dot_dimension_numbers<[1], [0], [0], [1], [0, 0, 1, 1], [], []>} : vector<2x250xbf16>, vector<250x512xbf16>, vector<2x512xf32> -> vector<2x512xf32>
    %c1_69 = arith.constant 1 : index
    %c0_70 = arith.constant 0 : index
    %c0_71 = arith.constant 0 : index
    %957 = vector.load %arg9[%c1_69, %c0_70, %c0_71] : memref<4x250x512xbf16, #tpu.memory_space<vmem>>, vector<1x250x512xbf16>
    %958 = vector.shape_cast %957 : vector<1x250x512xbf16> to vector<250x512xbf16>
    %cst_72 = arith.constant dense<0.000000e+00> : vector<2x512xf32>
    %959 = tpu.matmul %939, %958, %cst_72 {dimension_numbers = #tpu.dot_dimension_numbers<[1], [0], [0], [1], [0, 0, 1, 1], [], []>} : vector<2x250xbf16>, vector<250x512xbf16>, vector<2x512xf32> -> vector<2x512xf32>
    %960 = arith.addf %956, %959 : vector<2x512xf32>
    %c2_73 = arith.constant 2 : index
    %c0_74 = arith.constant 0 : index
    %c0_75 = arith.constant 0 : index
    %961 = vector.load %arg9[%c2_73, %c0_74, %c0_75] : memref<4x250x512xbf16, #tpu.memory_space<vmem>>, vector<1x250x512xbf16>
    %962 = vector.shape_cast %961 : vector<1x250x512xbf16> to vector<250x512xbf16>
    %cst_76 = arith.constant dense<0.000000e+00> : vector<2x512xf32>
    %963 = tpu.matmul %945, %962, %cst_76 {dimension_numbers = #tpu.dot_dimension_numbers<[1], [0], [0], [1], [0, 0, 1, 1], [], []>} : vector<2x250xbf16>, vector<250x512xbf16>, vector<2x512xf32> -> vector<2x512xf32>
    %964 = arith.addf %960, %963 : vector<2x512xf32>
    %c3_77 = arith.constant 3 : index
    %c0_78 = arith.constant 0 : index
    %c0_79 = arith.constant 0 : index
    %965 = vector.load %arg9[%c3_77, %c0_78, %c0_79] : memref<4x250x512xbf16, #tpu.memory_space<vmem>>, vector<1x250x512xbf16>
    %966 = vector.shape_cast %965 : vector<1x250x512xbf16> to vector<250x512xbf16>
    %cst_80 = arith.constant dense<0.000000e+00> : vector<2x512xf32>
    %967 = tpu.matmul %951, %966, %cst_80 {dimension_numbers = #tpu.dot_dimension_numbers<[1], [0], [0], [1], [0, 0, 1, 1], [], []>} : vector<2x250xbf16>, vector<250x512xbf16>, vector<2x512xf32> -> vector<2x512xf32>
    %968 = arith.addf %964, %967 : vector<2x512xf32>
    %c0_81 = arith.constant 0 : index
    %c0_82 = arith.constant 0 : index
    %969 = vector.load %arg2[%c0_81, %c0_82] : memref<8x512xf32, #tpu.memory_space<vmem>>, vector<1x512xf32>
    %970 = vector.broadcast %969 : vector<1x512xf32> to vector<2x512xf32>
    %971 = arith.addf %968, %970 : vector<2x512xf32>
    %cst_83 = arith.constant 0.000000e+00 : f32
    %972 = vector.broadcast %cst_83 : f32 to vector<2x512xf32>
    %973 = arith.maximumf %971, %972 : vector<2x512xf32>
    %c1_i32_84 = arith.constant 1 : i32
    %974 = tpu.memref_slice %arg14[%c1_i32_84] : memref<5x!tpu.dma_semaphore, #tpu.memory_space<semaphore_mem>> -> memref<1x!tpu.dma_semaphore, #tpu.memory_space<semaphore_mem>>
    %975 = tpu.memref_squeeze %974 : memref<1x!tpu.dma_semaphore, #tpu.memory_space<semaphore_mem>> -> memref<!tpu.dma_semaphore, #tpu.memory_space<semaphore_mem>>
    tpu.wait_dma2 semaphore(%975 : memref<!tpu.dma_semaphore, #tpu.memory_space<semaphore_mem>>) src(%arg4 : memref<512x512xbf16, #tpu.memory_space<any>>) dst(%arg10 : memref<512x512xbf16, #tpu.memory_space<vmem>>)
    %976 = arith.truncf %973 : vector<2x512xf32> to vector<2x512xbf16>
    %c0_85 = arith.constant 0 : index
    %c0_86 = arith.constant 0 : index
    %977 = vector.load %arg10[%c0_85, %c0_86] : memref<512x512xbf16, #tpu.memory_space<vmem>>, vector<512x512xbf16>
    %cst_87 = arith.constant dense<0.000000e+00> : vector<2x512xf32>
    %978 = tpu.matmul %976, %977, %cst_87 {dimension_numbers = #tpu.dot_dimension_numbers<[1], [0], [0], [1], [0, 0, 1, 1], [], []>} : vector<2x512xbf16>, vector<512x512xbf16>, vector<2x512xf32> -> vector<2x512xf32>
    %c1_88 = arith.constant 1 : index
    %c0_89 = arith.constant 0 : index
    %979 = vector.load %arg2[%c1_88, %c0_89] : memref<8x512xf32, #tpu.memory_space<vmem>>, vector<1x512xf32>
    %980 = vector.broadcast %979 : vector<1x512xf32> to vector<2x512xf32>
    %981 = arith.addf %978, %980 : vector<2x512xf32>
    %cst_90 = arith.constant 0.000000e+00 : f32
    %982 = vector.broadcast %cst_90 : f32 to vector<2x512xf32>
    %983 = arith.maximumf %981, %982 : vector<2x512xf32>
    %c2_i32_91 = arith.constant 2 : i32
    %984 = tpu.memref_slice %arg14[%c2_i32_91] : memref<5x!tpu.dma_semaphore, #tpu.memory_space<semaphore_mem>> -> memref<1x!tpu.dma_semaphore, #tpu.memory_space<semaphore_mem>>
    %985 = tpu.memref_squeeze %984 : memref<1x!tpu.dma_semaphore, #tpu.memory_space<semaphore_mem>> -> memref<!tpu.dma_semaphore, #tpu.memory_space<semaphore_mem>>
    tpu.wait_dma2 semaphore(%985 : memref<!tpu.dma_semaphore, #tpu.memory_space<semaphore_mem>>) src(%arg5 : memref<512x256xbf16, #tpu.memory_space<any>>) dst(%arg11 : memref<512x256xbf16, #tpu.memory_space<vmem>>)
    %986 = arith.truncf %983 : vector<2x512xf32> to vector<2x512xbf16>
    %c0_92 = arith.constant 0 : index
    %c0_93 = arith.constant 0 : index
    %987 = vector.load %arg11[%c0_92, %c0_93] : memref<512x256xbf16, #tpu.memory_space<vmem>>, vector<512x256xbf16>
    %cst_94 = arith.constant dense<0.000000e+00> : vector<2x256xf32>
    %988 = tpu.matmul %986, %987, %cst_94 {dimension_numbers = #tpu.dot_dimension_numbers<[1], [0], [0], [1], [0, 0, 1, 1], [], []>} : vector<2x512xbf16>, vector<512x256xbf16>, vector<2x256xf32> -> vector<2x256xf32>
    %c2_95 = arith.constant 2 : index
    %c0_96 = arith.constant 0 : index
    %989 = vector.load %arg2[%c2_95, %c0_96] : memref<8x512xf32, #tpu.memory_space<vmem>>, vector<1x256xf32>
    %990 = vector.broadcast %989 : vector<1x256xf32> to vector<2x256xf32>
    %991 = arith.addf %988, %990 : vector<2x256xf32>
    %cst_97 = arith.constant 0.000000e+00 : f32
    %992 = vector.broadcast %cst_97 : f32 to vector<2x256xf32>
    %993 = arith.maximumf %991, %992 : vector<2x256xf32>
    %c3_i32_98 = arith.constant 3 : i32
    %994 = tpu.memref_slice %arg14[%c3_i32_98] : memref<5x!tpu.dma_semaphore, #tpu.memory_space<semaphore_mem>> -> memref<1x!tpu.dma_semaphore, #tpu.memory_space<semaphore_mem>>
    %995 = tpu.memref_squeeze %994 : memref<1x!tpu.dma_semaphore, #tpu.memory_space<semaphore_mem>> -> memref<!tpu.dma_semaphore, #tpu.memory_space<semaphore_mem>>
    tpu.wait_dma2 semaphore(%995 : memref<!tpu.dma_semaphore, #tpu.memory_space<semaphore_mem>>) src(%arg6 : memref<256x128xbf16, #tpu.memory_space<any>>) dst(%arg12 : memref<256x128xbf16, #tpu.memory_space<vmem>>)
    %996 = arith.truncf %993 : vector<2x256xf32> to vector<2x256xbf16>
    %c0_99 = arith.constant 0 : index
    %c0_100 = arith.constant 0 : index
    %997 = vector.load %arg12[%c0_99, %c0_100] : memref<256x128xbf16, #tpu.memory_space<vmem>>, vector<256x128xbf16>
    %cst_101 = arith.constant dense<0.000000e+00> : vector<2x128xf32>
    %998 = tpu.matmul %996, %997, %cst_101 {dimension_numbers = #tpu.dot_dimension_numbers<[1], [0], [0], [1], [0, 0, 1, 1], [], []>} : vector<2x256xbf16>, vector<256x128xbf16>, vector<2x128xf32> -> vector<2x128xf32>
    %c3_102 = arith.constant 3 : index
    %c0_103 = arith.constant 0 : index
    %999 = vector.load %arg2[%c3_102, %c0_103] : memref<8x512xf32, #tpu.memory_space<vmem>>, vector<1x128xf32>
    %1000 = vector.broadcast %999 : vector<1x128xf32> to vector<2x128xf32>
    %1001 = arith.addf %998, %1000 : vector<2x128xf32>
    %cst_104 = arith.constant 0.000000e+00 : f32
    %1002 = vector.broadcast %cst_104 : f32 to vector<2x128xf32>
    %1003 = arith.maximumf %1001, %1002 : vector<2x128xf32>
    %c4_i32_105 = arith.constant 4 : i32
    %1004 = tpu.memref_slice %arg14[%c4_i32_105] : memref<5x!tpu.dma_semaphore, #tpu.memory_space<semaphore_mem>> -> memref<1x!tpu.dma_semaphore, #tpu.memory_space<semaphore_mem>>
    %1005 = tpu.memref_squeeze %1004 : memref<1x!tpu.dma_semaphore, #tpu.memory_space<semaphore_mem>> -> memref<!tpu.dma_semaphore, #tpu.memory_space<semaphore_mem>>
    tpu.wait_dma2 semaphore(%1005 : memref<!tpu.dma_semaphore, #tpu.memory_space<semaphore_mem>>) src(%arg7 : memref<128x64xbf16, #tpu.memory_space<any>>) dst(%arg13 : memref<128x64xbf16, #tpu.memory_space<vmem>>)
    %1006 = arith.truncf %1003 : vector<2x128xf32> to vector<2x128xbf16>
    %c0_106 = arith.constant 0 : index
    %c0_107 = arith.constant 0 : index
    %1007 = vector.load %arg13[%c0_106, %c0_107] : memref<128x64xbf16, #tpu.memory_space<vmem>>, vector<128x64xbf16>
    %cst_108 = arith.constant dense<0.000000e+00> : vector<2x64xf32>
    %1008 = tpu.matmul %1006, %1007, %cst_108 {dimension_numbers = #tpu.dot_dimension_numbers<[1], [0], [0], [1], [0, 0, 1, 1], [], []>} : vector<2x128xbf16>, vector<128x64xbf16>, vector<2x64xf32> -> vector<2x64xf32>
    %c4_109 = arith.constant 4 : index
    %c0_110 = arith.constant 0 : index
    %1009 = vector.load %arg2[%c4_109, %c0_110] : memref<8x512xf32, #tpu.memory_space<vmem>>, vector<1x64xf32>
    %1010 = vector.broadcast %1009 : vector<1x64xf32> to vector<2x64xf32>
    %1011 = arith.addf %1008, %1010 : vector<2x64xf32>
    %cst_111 = arith.constant 0.000000e+00 : f32
    %1012 = vector.broadcast %cst_111 : f32 to vector<2x64xf32>
    %1013 = arith.maximumf %1011, %1012 : vector<2x64xf32>
    %c6_112 = arith.constant 6 : index
    %c0_113 = arith.constant 0 : index
    %1014 = vector.load %arg2[%c6_112, %c0_113] : memref<8x512xf32, #tpu.memory_space<vmem>>, vector<1x64xf32>
    %c5_114 = arith.constant 5 : index
    %c0_115 = arith.constant 0 : index
    %1015 = vector.load %arg2[%c5_114, %c0_115] : memref<8x512xf32, #tpu.memory_space<vmem>>, vector<1x1xf32>
    %1016 = vector.broadcast %1014 : vector<1x64xf32> to vector<2x64xf32>
    %1017 = arith.mulf %1013, %1016 : vector<2x64xf32>
    %cst_116 = arith.constant dense<0.000000e+00> : vector<2xf32>
    %1018 = vector.multi_reduction <add>, %1017, %cst_116 [1] : vector<2x64xf32> to vector<2xf32>
    %1019 = vector.shape_cast %1018 : vector<2xf32> to vector<2x1xf32>
    %1020 = vector.broadcast %1015 : vector<1x1xf32> to vector<2x1xf32>
    %1021 = arith.addf %1019, %1020 : vector<2x1xf32>
    %cst_117 = arith.constant 0.000000e+00 : f32
    %1022 = vector.broadcast %cst_117 : f32 to vector<2x1xf32>
    %1023 = arith.maximumf %1021, %1022 : vector<2x1xf32>
    %c0_118 = arith.constant 0 : index
    %c0_119 = arith.constant 0 : index
    %1024 = vector.load %arg8[%c0_118, %c0_119] : memref<2x1xf32, #tpu.memory_space<vmem>>, vector<2x1xf32>
    tpu.vector_store %arg8[%c0_118, %c0_119], %1023 {strides = array<i32>} : memref<2x1xf32, #tpu.memory_space<vmem>>, vector<2x1xf32>,
    return
  }
}

</mosaic_0001>

<llo_original>
// kernel: model_forward.1
$region0: #{model_forward.1}
  #allocation0 [shape = 'u32[]', space=smem, size = 0x4, offset = 0x4, fixed_abs, tag = 'smem constant byte address 0x4 - core index']
  #allocation1 [shape = 'u32[144,128]{1,0:T(1,128)}', space=vmem, size = 0x12000, scoped, tag = 'internal scratch']
  #allocation2 [shape = 'bf16[4,250,512]{2,1,0:T(8,128)(2,1)}', space=vmem, size = 0x100000, scoped, tag = 'scratch operand']
  #allocation3 [shape = 'bf16[512,512]{1,0:T(16,128)(2,1)}', space=vmem, size = 0x80000, scoped, tag = 'scratch operand']
  #allocation4 [shape = 'bf16[512,256]{1,0:T(16,128)(2,1)}', space=vmem, size = 0x40000, scoped, tag = 'scratch operand']
  #allocation5 [shape = 'bf16[256,128]{1,0:T(16,128)(2,1)}', space=vmem, size = 0x10000, scoped, tag = 'scratch operand']
  #allocation6 [shape = 'bf16[128,64]{1,0:T(16,128)(2,1)}', space=vmem, size = 0x8000, scoped, tag = 'scratch operand']
  #allocation7 [shape = 's32[5]{0}', space=sflag, size = 0x14, scoped, tag = 'scratch operand']
  #allocation10 [shape = 's32[]', space=sflag, size = 0x4, offset = 0, fixed_abs, tag = 'sflag constant byte address 0x0 - dummy sync flag']
  #allocation11 [shape = 's32[]', space=sflag, size = 0x4, offset = 0, fixed_abs, tag = 'sflag constant byte address 0x0 - dummy sync flag']
  #allocation12 [shape = 's32[]', space=sflag, size = 0x4, offset = 0, fixed_abs, tag = 'sflag constant byte address 0x0 - dummy sync flag']
  #allocation13 [shape = 's32[]', space=sflag, size = 0x4, offset = 0, fixed_abs, tag = 'sflag constant byte address 0x0 - dummy sync flag']
  #allocation14 [shape = 's32[]', space=sflag, size = 0x4, offset = 0, fixed_abs, tag = 'sflag constant byte address 0x0 - dummy sync flag']
  %s0 = inlined_call_operand.vmem [shape: f32[7,2,250], index: 0, kind: input, shape index: {}]
  %s1 = inlined_call_operand.vmem [shape: f32[192], index: 1, kind: input, shape index: {}]
  %s2 = inlined_call_operand.vmem [shape: f32[8,512], index: 2, kind: input, shape index: {}]
  %s3 = inlined_call_operand.vmem [shape: bf16[4,250,512], index: 3, kind: input, shape index: {}]
  %s4 = inlined_call_operand.vmem [shape: bf16[512,512], index: 4, kind: input, shape index: {}]
  %s5 = inlined_call_operand.vmem [shape: bf16[512,256], index: 5, kind: input, shape index: {}]
  %s6 = inlined_call_operand.vmem [shape: bf16[256,128], index: 6, kind: input, shape index: {}]
  %s7 = inlined_call_operand.vmem [shape: bf16[128,64], index: 7, kind: input, shape index: {}]
  %s8 = inlined_call_operand.vmem [shape: f32[2,1], index: 8, kind: output, shape index: {}]
  %s9 = sld [smem:[#allocation0]]
  $region202: #{model_forward.1} parent=0
    _
  %s11 = ssub.s32 1, %s9
  %s12 = scalar_select 0, %s11, %s9
  $region1: #{model_forward.1} parent=0
    #allocation8 [shape = 'u8[1024]{0}', space=smem, size = 0x400, scoped, tag = 'input window, operand 1, single buffered']
    #allocation9 [shape = 's32[1]{0}', space=sflag, size = 0x4, scoped, tag = 'scoped memory for model_forward.1']
    %13 = vsyncpa [#allocation9], 0
    // Predicated region
    $region2: #{model_forward.1} parent=1 // pred_check
      _
    $region3: #{model_forward.1} parent=1 // pred_check_branch
      %15 = sbr.rel (0) target = $region5
    $region4: #{model_forward.1} parent=1 // pred_region
      _
    $region5: #{model_forward.1} parent=1 // pred_fallthru
      _
    // Predicated region
    $region6: #{model_forward.1} parent=1 // pred_check
      _
    $region7: #{model_forward.1} parent=1 // pred_check_branch
      %17 = sbr.rel (0) target = $region9
    $region8: #{model_forward.1} parent=1 // pred_region
      %s19 = ssub.s32 32, 32
      %20 = vsyncadd [#allocation9], %s19
      %s22 = sshll.u32 %s1, 4
      %s23 = int_to_ptr.vmem [resolvable:$true] %s22
      %25 = dma.vmem_to_smem %s23, 32, [#allocation8], [#allocation9]
    $region9: #{model_forward.1} parent=1 // pred_fallthru
      _
    // Predicated region
    $region10: #{model_forward.1} parent=1 // pred_check
      _
    $region11: #{model_forward.1} parent=1 // pred_check_branch
      %27 = sbr.rel (0) target = $region13
    $region12: #{model_forward.1} parent=1 // pred_region
      _
    $region13: #{model_forward.1} parent=1 // pred_fallthru
      _
    // Predicated region
    $region14: #{model_forward.1} parent=1 // pred_check
      _
    $region15: #{model_forward.1} parent=1 // pred_check_branch
      %29 = sbr.rel (0) target = $region17
    $region16: #{model_forward.1} parent=1 // pred_region
      %30 = dma.done [#allocation9], 32
    $region17: #{model_forward.1} parent=1 // pred_fallthru
      _
    %31 = sfence
    %p34 = scmp.lt.u32.totalorder 2048, 8
    %p35 = pneg %p34
    // Predicated region
    $region18: #{model_forward.1} parent=1 // pred_check
      _
    $region19: #{model_forward.1} parent=1 // pred_check_branch
      %37 = sbr.rel (%p34) target = $region21
    $region20: #{model_forward.1} parent=1 // pred_region
      %s52 = sand.u32 2048, 7
      %p53 = scmp.eq.s32.totalorder %s52, 0
      // Predicated region
      $region33: #{model_forward.1} parent=20 // pred_check
        %p54 = pneg %p53
      $region34: #{model_forward.1} parent=20 // pred_check_branch
        %56 = sbr.rel (%p54) target = $region36
      $region35: #{model_forward.1} parent=20 // pred_region
        loop: start=0, step=1, limit=1
        $region37: #{model_forward.1} parent=35 // loop_pre_header
          _
        $region38: #{model_forward.1} parent=35 // loop_header
          %s58 = sphi 0, %s62
          %p59 = scmp.ge.s32.totalorder %s58, 1
          %s63 = sphi %s3, %s3
          %s64 = sphi [#allocation2], [#allocation2]
        $region39: #{model_forward.1} parent=35 // loop_header_branch
          %61 = sbr.rel (%p59) target = $region43
        $region40: #{model_forward.1} parent=35 // loop_body
          %v65 = vld [vmem:[%s63] sm:$0xff]
          %66 = vst [vmem:[%s64] sm:$0xff] %v65
          %v67 = vld [vmem:[%s63 + $0x8] sm:$0xff]
          %68 = vst [vmem:[%s64 + $0x8] sm:$0xff] %v67
          %v69 = vld [vmem:[%s63 + $0x10] sm:$0xff]
          %70 = vst [vmem:[%s64 + $0x10] sm:$0xff] %v69
          %v71 = vld [vmem:[%s63 + $0x18] sm:$0xff]
          %72 = vst [vmem:[%s64 + $0x18] sm:$0xff] %v71
          %v73 = vld [vmem:[%s63 + $0x20] sm:$0xff]
          %74 = vst [vmem:[%s64 + $0x20] sm:$0xff] %v73
          %v75 = vld [vmem:[%s63 + $0x28] sm:$0xff]
          %76 = vst [vmem:[%s64 + $0x28] sm:$0xff] %v75
          %v77 = vld [vmem:[%s63 + $0x30] sm:$0xff]
          %78 = vst [vmem:[%s64 + $0x30] sm:$0xff] %v77
          %v79 = vld [vmem:[%s63 + $0x38] sm:$0xff]
          %80 = vst [vmem:[%s64 + $0x38] sm:$0xff] %v79
          %v81 = vld [vmem:[%s63 + $0x40] sm:$0xff]
          %82 = vst [vmem:[%s64 + $0x40] sm:$0xff] %v81
          %v83 = vld [vmem:[%s63 + $0x48] sm:$0xff]
          %84 = vst [vmem:[%s64 + $0x48] sm:$0xff] %v83
          %v85 = vld [vmem:[%s63 + $0x50] sm:$0xff]
          %86 = vst [vmem:[%s64 + $0x50] sm:$0xff] %v85
          %v87 = vld [vmem:[%s63 + $0x58] sm:$0xff]
          %88 = vst [vmem:[%s64 + $0x58] sm:$0xff] %v87
          %v89 = vld [vmem:[%s63 + $0x60] sm:$0xff]
          %90 = vst [vmem:[%s64 + $0x60] sm:$0xff] %v89
          %v91 = vld [vmem:[%s63 + $0x68] sm:$0xff]
          %92 = vst [vmem:[%s64 + $0x68] sm:$0xff] %v91
          %v93 = vld [vmem:[%s63 + $0x70] sm:$0xff]
          %94 = vst [vmem:[%s64 + $0x70] sm:$0xff] %v93
          %v95 = vld [vmem:[%s63 + $0x78] sm:$0xff]
          %96 = vst [vmem:[%s64 + $0x78] sm:$0xff] %v95
          %v97 = vld [vmem:[%s63 + $0x80] sm:$0xff]
          %98 = vst [vmem:[%s64 + $0x80] sm:$0xff] %v97
          %v99 = vld [vmem:[%s63 + $0x88] sm:$0xff]
          %100 = vst [vmem:[%s64 + $0x88] sm:$0xff] %v99
          %v101 = vld [vmem:[%s63 + $0x90] sm:$0xff]
          %102 = vst [vmem:[%s64 + $0x90] sm:$0xff] %v101
          %v103 = vld [vmem:[%s63 + $0x98] sm:$0xff]
          %104 = vst [vmem:[%s64 + $0x98] sm:$0xff] %v103
          %v105 = vld [vmem:[%s63 + $0xa0] sm:$0xff]
          %106 = vst [vmem:[%s64 + $0xa0] sm:$0xff] %v105
          %v107 = vld [vmem:[%s63 + $0xa8] sm:$0xff]
          %108 = vst [vmem:[%s64 + $0xa8] sm:$0xff] %v107
          %v109 = vld [vmem:[%s63 + $0xb0] sm:$0xff]
          %110 = vst [vmem:[%s64 + $0xb0] sm:$0xff] %v109
          %v111 = vld [vmem:[%s63 + $0xb8] sm:$0xff]
          %112 = vst [vmem:[%s64 + $0xb8] sm:$0xff] %v111
          %v113 = vld [vmem:[%s63 + $0xc0] sm:$0xff]
          %114 = vst [vmem:[%s64 + $0xc0] sm:$0xff] %v113
          %v115 = vld [vmem:[%s63 + $0xc8] sm:$0xff]
          %116 = vst [vmem:[%s64 + $0xc8] sm:$0xff] %v115
          %v117 = vld [vmem:[%s63 + $0xd0] sm:$0xff]
          %118 = vst [vmem:[%s64 + $0xd0] sm:$0xff] %v117
          %v119 = vld [vmem:[%s63 + $0xd8] sm:$0xff]
          %120 = vst [vmem:[%s64 + $0xd8] sm:$0xff] %v119
          %v121 = vld [vmem:[%s63 + $0xe0] sm:$0xff]
          %122 = vst [vmem:[%s64 + $0xe0] sm:$0xff] %v121
          %v123 = vld [vmem:[%s63 + $0xe8] sm:$0xff]
          %124 = vst [vmem:[%s64 + $0xe8] sm:$0xff] %v123
          %v125 = vld [vmem:[%s63 + $0xf0] sm:$0xff]
          %126 = vst [vmem:[%s64 + $0xf0] sm:$0xff] %v125
          %v127 = vld [vmem:[%s63 + $0xf8] sm:$0xff]
          %128 = vst [vmem:[%s64 + $0xf8] sm:$0xff] %v127
          %v129 = vld [vmem:[%s63 + $0x100] sm:$0xff]
          %130 = vst [vmem:[%s64 + $0x100] sm:$0xff] %v129
          %v131 = vld [vmem:[%s63 + $0x108] sm:$0xff]
          %132 = vst [vmem:[%s64 + $0x108] sm:$0xff] %v131
          %v133 = vld [vmem:[%s63 + $0x110] sm:$0xff]
          %134 = vst [vmem:[%s64 + $0x110] sm:$0xff] %v133
          %v135 = vld [vmem:[%s63 + $0x118] sm:$0xff]
          %136 = vst [vmem:[%s64 + $0x118] sm:$0xff] %v135
          %v137 = vld [vmem:[%s63 + $0x120] sm:$0xff]
          %138 = vst [vmem:[%s64 + $0x120] sm:$0xff] %v137
          %v139 = vld [vmem:[%s63 + $0x128] sm:$0xff]
          %140 = vst [vmem:[%s64 + $0x128] sm:$0xff] %v139
          %v141 = vld [vmem:[%s63 + $0x130] sm:$0xff]
          %142 = vst [vmem:[%s64 + $0x130] sm:$0xff] %v141
          %v143 = vld [vmem:[%s63 + $0x138] sm:$0xff]
          %144 = vst [vmem:[%s64 + $0x138] sm:$0xff] %v143
          %v145 = vld [vmem:[%s63 + $0x140] sm:$0xff]
          %146 = vst [vmem:[%s64 + $0x140] sm:$0xff] %v145
          %v147 = vld [vmem:[%s63 + $0x148] sm:$0xff]
          %148 = vst [vmem:[%s64 + $0x148] sm:$0xff] %v147
          %v149 = vld [vmem:[%s63 + $0x150] sm:$0xff]
          %150 = vst [vmem:[%s64 + $0x150] sm:$0xff] %v149
          %v151 = vld [vmem:[%s63 + $0x158] sm:$0xff]
          %152 = vst [vmem:[%s64 + $0x158] sm:$0xff] %v151
          %v153 = vld [vmem:[%s63 + $0x160] sm:$0xff]
          %154 = vst [vmem:[%s64 + $0x160] sm:$0xff] %v153
          %v155 = vld [vmem:[%s63 + $0x168] sm:$0xff]
          %156 = vst [vmem:[%s64 + $0x168] sm:$0xff] %v155
          %v157 = vld [vmem:[%s63 + $0x170] sm:$0xff]
          %158 = vst [vmem:[%s64 + $0x170] sm:$0xff] %v157
          %v159 = vld [vmem:[%s63 + $0x178] sm:$0xff]
          %160 = vst [vmem:[%s64 + $0x178] sm:$0xff] %v159
          %v161 = vld [vmem:[%s63 + $0x180] sm:$0xff]
          %162 = vst [vmem:[%s64 + $0x180] sm:$0xff] %v161
          %v163 = vld [vmem:[%s63 + $0x188] sm:$0xff]
          %164 = vst [vmem:[%s64 + $0x188] sm:$0xff] %v163
          %v165 = vld [vmem:[%s63 + $0x190] sm:$0xff]
          %166 = vst [vmem:[%s64 + $0x190] sm:$0xff] %v165
          %v167 = vld [vmem:[%s63 + $0x198] sm:$0xff]
          %168 = vst [vmem:[%s64 + $0x198] sm:$0xff] %v167
          %v169 = vld [vmem:[%s63 + $0x1a0] sm:$0xff]
          %170 = vst [vmem:[%s64 + $0x1a0] sm:$0xff] %v169
          %v171 = vld [vmem:[%s63 + $0x1a8] sm:$0xff]
          %172 = vst [vmem:[%s64 + $0x1a8] sm:$0xff] %v171
          %v173 = vld [vmem:[%s63 + $0x1b0] sm:$0xff]
          %174 = vst [vmem:[%s64 + $0x1b0] sm:$0xff] %v173
          %v175 = vld [vmem:[%s63 + $0x1b8] sm:$0xff]
          %176 = vst [vmem:[%s64 + $0x1b8] sm:$0xff] %v175
          %v177 = vld [vmem:[%s63 + $0x1c0] sm:$0xff]
          %178 = vst [vmem:[%s64 + $0x1c0] sm:$0xff] %v177
          %v179 = vld [vmem:[%s63 + $0x1c8] sm:$0xff]
          %180 = vst [vmem:[%s64 + $0x1c8] sm:$0xff] %v179
          %v181 = vld [vmem:[%s63 + $0x1d0] sm:$0xff]
          %182 = vst [vmem:[%s64 + $0x1d0] sm:$0xff] %v181
          %v183 = vld [vmem:[%s63 + $0x1d8] sm:$0xff]
          %184 = vst [vmem:[%s64 + $0x1d8] sm:$0xff] %v183
          %v185 = vld [vmem:[%s63 + $0x1e0] sm:$0xff]
          %186 = vst [vmem:[%s64 + $0x1e0] sm:$0xff] %v185
          %v187 = vld [vmem:[%s63 + $0x1e8] sm:$0xff]
          %188 = vst [vmem:[%s64 + $0x1e8] sm:$0xff] %v187
          %v189 = vld [vmem:[%s63 + $0x1f0] sm:$0xff]
          %190 = vst [vmem:[%s64 + $0x1f0] sm:$0xff] %v189
          %v191 = vld [vmem:[%s63 + $0x1f8] sm:$0xff]
          %192 = vst [vmem:[%s64 + $0x1f8] sm:$0xff] %v191
          %v193 = vld [vmem:[%s63 + $0x200] sm:$0xff]
          %194 = vst [vmem:[%s64 + $0x200] sm:$0xff] %v193
          %v195 = vld [vmem:[%s63 + $0x208] sm:$0xff]
          %196 = vst [vmem:[%s64 + $0x208] sm:$0xff] %v195
          %v197 = vld [vmem:[%s63 + $0x210] sm:$0xff]
          %198 = vst [vmem:[%s64 + $0x210] sm:$0xff] %v197
          %v199 = vld [vmem:[%s63 + $0x218] sm:$0xff]
          %200 = vst [vmem:[%s64 + $0x218] sm:$0xff] %v199
          %v201 = vld [vmem:[%s63 + $0x220] sm:$0xff]
          %202 = vst [vmem:[%s64 + $0x220] sm:$0xff] %v201
          %v203 = vld [vmem:[%s63 + $0x228] sm:$0xff]
          %204 = vst [vmem:[%s64 + $0x228] sm:$0xff] %v203
          %v205 = vld [vmem:[%s63 + $0x230] sm:$0xff]
          %206 = vst [vmem:[%s64 + $0x230] sm:$0xff] %v205
          %v207 = vld [vmem:[%s63 + $0x238] sm:$0xff]
          %208 = vst [vmem:[%s64 + $0x238] sm:$0xff] %v207
          %v209 = vld [vmem:[%s63 + $0x240] sm:$0xff]
          %210 = vst [vmem:[%s64 + $0x240] sm:$0xff] %v209
          %v211 = vld [vmem:[%s63 + $0x248] sm:$0xff]
          %212 = vst [vmem:[%s64 + $0x248] sm:$0xff] %v211
          %v213 = vld [vmem:[%s63 + $0x250] sm:$0xff]
          %214 = vst [vmem:[%s64 + $0x250] sm:$0xff] %v213
          %v215 = vld [vmem:[%s63 + $0x258] sm:$0xff]
          %216 = vst [vmem:[%s64 + $0x258] sm:$0xff] %v215
          %v217 = vld [vmem:[%s63 + $0x260] sm:$0xff]
          %218 = vst [vmem:[%s64 + $0x260] sm:$0xff] %v217
          %v219 = vld [vmem:[%s63 + $0x268] sm:$0xff]
          %220 = vst [vmem:[%s64 + $0x268] sm:$0xff] %v219
          %v221 = vld [vmem:[%s63 + $0x270] sm:$0xff]
          %222 = vst [vmem:[%s64 + $0x270] sm:$0xff] %v221
          %v223 = vld [vmem:[%s63 + $0x278] sm:$0xff]
          %224 = vst [vmem:[%s64 + $0x278] sm:$0xff] %v223
          %v225 = vld [vmem:[%s63 + $0x280] sm:$0xff]
          %226 = vst [vmem:[%s64 + $0x280] sm:$0xff] %v225
          %v227 = vld [vmem:[%s63 + $0x288] sm:$0xff]
          %228 = vst [vmem:[%s64 + $0x288] sm:$0xff] %v227
          %v229 = vld [vmem:[%s63 + $0x290] sm:$0xff]
          %230 = vst [vmem:[%s64 + $0x290] sm:$0xff] %v229
          %v231 = vld [vmem:[%s63 + $0x298] sm:$0xff]
          %232 = vst [vmem:[%s64 + $0x298] sm:$0xff] %v231
          %v233 = vld [vmem:[%s63 + $0x2a0] sm:$0xff]
          %234 = vst [vmem:[%s64 + $0x2a0] sm:$0xff] %v233
          %v235 = vld [vmem:[%s63 + $0x2a8] sm:$0xff]
          %236 = vst [vmem:[%s64 + $0x2a8] sm:$0xff] %v235
          %v237 = vld [vmem:[%s63 + $0x2b0] sm:$0xff]
          %238 = vst [vmem:[%s64 + $0x2b0] sm:$0xff] %v237
          %v239 = vld [vmem:[%s63 + $0x2b8] sm:$0xff]
          %240 = vst [vmem:[%s64 + $0x2b8] sm:$0xff] %v239
          %v241 = vld [vmem:[%s63 + $0x2c0] sm:$0xff]
          %242 = vst [vmem:[%s64 + $0x2c0] sm:$0xff] %v241
          %v243 = vld [vmem:[%s63 + $0x2c8] sm:$0xff]
          %244 = vst [vmem:[%s64 + $0x2c8] sm:$0xff] %v243
          %v245 = vld [vmem:[%s63 + $0x2d0] sm:$0xff]
          %246 = vst [vmem:[%s64 + $0x2d0] sm:$0xff] %v245
          %v247 = vld [vmem:[%s63 + $0x2d8] sm:$0xff]
          %248 = vst [vmem:[%s64 + $0x2d8] sm:$0xff] %v247
          %v249 = vld [vmem:[%s63 + $0x2e0] sm:$0xff]
          %250 = vst [vmem:[%s64 + $0x2e0] sm:$0xff] %v249
          %v251 = vld [vmem:[%s63 + $0x2e8] sm:$0xff]
          %252 = vst [vmem:[%s64 + $0x2e8] sm:$0xff] %v251
          %v253 = vld [vmem:[%s63 + $0x2f0] sm:$0xff]
          %254 = vst [vmem:[%s64 + $0x2f0] sm:$0xff] %v253
          %v255 = vld [vmem:[%s63 + $0x2f8] sm:$0xff]
          %256 = vst [vmem:[%s64 + $0x2f8] sm:$0xff] %v255
          %v257 = vld [vmem:[%s63 + $0x300] sm:$0xff]
          %258 = vst [vmem:[%s64 + $0x300] sm:$0xff] %v257
          %v259 = vld [vmem:[%s63 + $0x308] sm:$0xff]
          %260 = vst [vmem:[%s64 + $0x308] sm:$0xff] %v259
          %v261 = vld [vmem:[%s63 + $0x310] sm:$0xff]
          %262 = vst [vmem:[%s64 + $0x310] sm:$0xff] %v261
          %v263 = vld [vmem:[%s63 + $0x318] sm:$0xff]
          %264 = vst [vmem:[%s64 + $0x318] sm:$0xff] %v263
          %v265 = vld [vmem:[%s63 + $0x320] sm:$0xff]
          %266 = vst [vmem:[%s64 + $0x320] sm:$0xff] %v265
          %v267 = vld [vmem:[%s63 + $0x328] sm:$0xff]
          %268 = vst [vmem:[%s64 + $0x328] sm:$0xff] %v267
          %v269 = vld [vmem:[%s63 + $0x330] sm:$0xff]
          %270 = vst [vmem:[%s64 + $0x330] sm:$0xff] %v269
          %v271 = vld [vmem:[%s63 + $0x338] sm:$0xff]
          %272 = vst [vmem:[%s64 + $0x338] sm:$0xff] %v271
          %v273 = vld [vmem:[%s63 + $0x340] sm:$0xff]
          %274 = vst [vmem:[%s64 + $0x340] sm:$0xff] %v273
          %v275 = vld [vmem:[%s63 + $0x348] sm:$0xff]
          %276 = vst [vmem:[%s64 + $0x348] sm:$0xff] %v275
          %v277 = vld [vmem:[%s63 + $0x350] sm:$0xff]
          %278 = vst [vmem:[%s64 + $0x350] sm:$0xff] %v277
          %v279 = vld [vmem:[%s63 + $0x358] sm:$0xff]
          %280 = vst [vmem:[%s64 + $0x358] sm:$0xff] %v279
          %v281 = vld [vmem:[%s63 + $0x360] sm:$0xff]
          %282 = vst [vmem:[%s64 + $0x360] sm:$0xff] %v281
          %v283 = vld [vmem:[%s63 + $0x368] sm:$0xff]
          %284 = vst [vmem:[%s64 + $0x368] sm:$0xff] %v283
          %v285 = vld [vmem:[%s63 + $0x370] sm:$0xff]
          %286 = vst [vmem:[%s64 + $0x370] sm:$0xff] %v285
          %v287 = vld [vmem:[%s63 + $0x378] sm:$0xff]
          %288 = vst [vmem:[%s64 + $0x378] sm:$0xff] %v287
          %v289 = vld [vmem:[%s63 + $0x380] sm:$0xff]
          %290 = vst [vmem:[%s64 + $0x380] sm:$0xff] %v289
          %v291 = vld [vmem:[%s63 + $0x388] sm:$0xff]
          %292 = vst [vmem:[%s64 + $0x388] sm:$0xff] %v291
          %v293 = vld [vmem:[%s63 + $0x390] sm:$0xff]
          %294 = vst [vmem:[%s64 + $0x390] sm:$0xff] %v293
          %v295 = vld [vmem:[%s63 + $0x398] sm:$0xff]
          %296 = vst [vmem:[%s64 + $0x398] sm:$0xff] %v295
          %v297 = vld [vmem:[%s63 + $0x3a0] sm:$0xff]
          %298 = vst [vmem:[%s64 + $0x3a0] sm:$0xff] %v297
          %v299 = vld [vmem:[%s63 + $0x3a8] sm:$0xff]
          %300 = vst [vmem:[%s64 + $0x3a8] sm:$0xff] %v299
          %v301 = vld [vmem:[%s63 + $0x3b0] sm:$0xff]
          %302 = vst [vmem:[%s64 + $0x3b0] sm:$0xff] %v301
          %v303 = vld [vmem:[%s63 + $0x3b8] sm:$0xff]
          %304 = vst [vmem:[%s64 + $0x3b8] sm:$0xff] %v303
          %v305 = vld [vmem:[%s63 + $0x3c0] sm:$0xff]
          %306 = vst [vmem:[%s64 + $0x3c0] sm:$0xff] %v305
          %v307 = vld [vmem:[%s63 + $0x3c8] sm:$0xff]
          %308 = vst [vmem:[%s64 + $0x3c8] sm:$0xff] %v307
          %v309 = vld [vmem:[%s63 + $0x3d0] sm:$0xff]
          %310 = vst [vmem:[%s64 + $0x3d0] sm:$0xff] %v309
          %v311 = vld [vmem:[%s63 + $0x3d8] sm:$0xff]
          %312 = vst [vmem:[%s64 + $0x3d8] sm:$0xff] %v311
          %v313 = vld [vmem:[%s63 + $0x3e0] sm:$0xff]
          %314 = vst [vmem:[%s64 + $0x3e0] sm:$0xff] %v313
          %v315 = vld [vmem:[%s63 + $0x3e8] sm:$0xff]
          %316 = vst [vmem:[%s64 + $0x3e8] sm:$0xff] %v315
          %v317 = vld [vmem:[%s63 + $0x3f0] sm:$0xff]
          %318 = vst [vmem:[%s64 + $0x3f0] sm:$0xff] %v317
          %v319 = vld [vmem:[%s63 + $0x3f8] sm:$0xff]
          %320 = vst [vmem:[%s64 + $0x3f8] sm:$0xff] %v319
          %v321 = vld [vmem:[%s63 + $0x400] sm:$0xff]
          %322 = vst [vmem:[%s64 + $0x400] sm:$0xff] %v321
          %v323 = vld [vmem:[%s63 + $0x408] sm:$0xff]
          %324 = vst [vmem:[%s64 + $0x408] sm:$0xff] %v323
          %v325 = vld [vmem:[%s63 + $0x410] sm:$0xff]
          %326 = vst [vmem:[%s64 + $0x410] sm:$0xff] %v325
          %v327 = vld [vmem:[%s63 + $0x418] sm:$0xff]
          %328 = vst [vmem:[%s64 + $0x418] sm:$0xff] %v327
          %v329 = vld [vmem:[%s63 + $0x420] sm:$0xff]
          %330 = vst [vmem:[%s64 + $0x420] sm:$0xff] %v329
          %v331 = vld [vmem:[%s63 + $0x428] sm:$0xff]
          %332 = vst [vmem:[%s64 + $0x428] sm:$0xff] %v331
          %v333 = vld [vmem:[%s63 + $0x430] sm:$0xff]
          %334 = vst [vmem:[%s64 + $0x430] sm:$0xff] %v333
          %v335 = vld [vmem:[%s63 + $0x438] sm:$0xff]
          %336 = vst [vmem:[%s64 + $0x438] sm:$0xff] %v335
          %v337 = vld [vmem:[%s63 + $0x440] sm:$0xff]
          %338 = vst [vmem:[%s64 + $0x440] sm:$0xff] %v337
          %v339 = vld [vmem:[%s63 + $0x448] sm:$0xff]
          %340 = vst [vmem:[%s64 + $0x448] sm:$0xff] %v339
          %v341 = vld [vmem:[%s63 + $0x450] sm:$0xff]
          %342 = vst [vmem:[%s64 + $0x450] sm:$0xff] %v341
          %v343 = vld [vmem:[%s63 + $0x458] sm:$0xff]
          %344 = vst [vmem:[%s64 + $0x458] sm:$0xff] %v343
          %v345 = vld [vmem:[%s63 + $0x460] sm:$0xff]
          %346 = vst [vmem:[%s64 + $0x460] sm:$0xff] %v345
          %v347 = vld [vmem:[%s63 + $0x468] sm:$0xff]
          %348 = vst [vmem:[%s64 + $0x468] sm:$0xff] %v347
          %v349 = vld [vmem:[%s63 + $0x470] sm:$0xff]
          %350 = vst [vmem:[%s64 + $0x470] sm:$0xff] %v349
          %v351 = vld [vmem:[%s63 + $0x478] sm:$0xff]
          %352 = vst [vmem:[%s64 + $0x478] sm:$0xff] %v351
          %v353 = vld [vmem:[%s63 + $0x480] sm:$0xff]
          %354 = vst [vmem:[%s64 + $0x480] sm:$0xff] %v353
          %v355 = vld [vmem:[%s63 + $0x488] sm:$0xff]
          %356 = vst [vmem:[%s64 + $0x488] sm:$0xff] %v355
          %v357 = vld [vmem:[%s63 + $0x490] sm:$0xff]
          %358 = vst [vmem:[%s64 + $0x490] sm:$0xff] %v357
          %v359 = vld [vmem:[%s63 + $0x498] sm:$0xff]
          %360 = vst [vmem:[%s64 + $0x498] sm:$0xff] %v359
          %v361 = vld [vmem:[%s63 + $0x4a0] sm:$0xff]
          %362 = vst [vmem:[%s64 + $0x4a0] sm:$0xff] %v361
          %v363 = vld [vmem:[%s63 + $0x4a8] sm:$0xff]
          %364 = vst [vmem:[%s64 + $0x4a8] sm:$0xff] %v363
          %v365 = vld [vmem:[%s63 + $0x4b0] sm:$0xff]
          %366 = vst [vmem:[%s64 + $0x4b0] sm:$0xff] %v365
          %v367 = vld [vmem:[%s63 + $0x4b8] sm:$0xff]
          %368 = vst [vmem:[%s64 + $0x4b8] sm:$0xff] %v367
          %v369 = vld [vmem:[%s63 + $0x4c0] sm:$0xff]
          %370 = vst [vmem:[%s64 + $0x4c0] sm:$0xff] %v369
          %v371 = vld [vmem:[%s63 + $0x4c8] sm:$0xff]
          %372 = vst [vmem:[%s64 + $0x4c8] sm:$0xff] %v371
          %v373 = vld [vmem:[%s63 + $0x4d0] sm:$0xff]
          %374 = vst [vmem:[%s64 + $0x4d0] sm:$0xff] %v373
          %v375 = vld [vmem:[%s63 + $0x4d8] sm:$0xff]
          %376 = vst [vmem:[%s64 + $0x4d8] sm:$0xff] %v375
          %v377 = vld [vmem:[%s63 + $0x4e0] sm:$0xff]
          %378 = vst [vmem:[%s64 + $0x4e0] sm:$0xff] %v377
          %v379 = vld [vmem:[%s63 + $0x4e8] sm:$0xff]
          %380 = vst [vmem:[%s64 + $0x4e8] sm:$0xff] %v379
          %v381 = vld [vmem:[%s63 + $0x4f0] sm:$0xff]
          %382 = vst [vmem:[%s64 + $0x4f0] sm:$0xff] %v381
          %v383 = vld [vmem:[%s63 + $0x4f8] sm:$0xff]
          %384 = vst [vmem:[%s64 + $0x4f8] sm:$0xff] %v383
          %v385 = vld [vmem:[%s63 + $0x500] sm:$0xff]
          %386 = vst [vmem:[%s64 + $0x500] sm:$0xff] %v385
          %v387 = vld [vmem:[%s63 + $0x508] sm:$0xff]
          %388 = vst [vmem:[%s64 + $0x508] sm:$0xff] %v387
          %v389 = vld [vmem:[%s63 + $0x510] sm:$0xff]
          %390 = vst [vmem:[%s64 + $0x510] sm:$0xff] %v389
          %v391 = vld [vmem:[%s63 + $0x518] sm:$0xff]
          %392 = vst [vmem:[%s64 + $0x518] sm:$0xff] %v391
          %v393 = vld [vmem:[%s63 + $0x520] sm:$0xff]
          %394 = vst [vmem:[%s64 + $0x520] sm:$0xff] %v393
          %v395 = vld [vmem:[%s63 + $0x528] sm:$0xff]
          %396 = vst [vmem:[%s64 + $0x528] sm:$0xff] %v395
          %v397 = vld [vmem:[%s63 + $0x530] sm:$0xff]
          %398 = vst [vmem:[%s64 + $0x530] sm:$0xff] %v397
          %v399 = vld [vmem:[%s63 + $0x538] sm:$0xff]
          %400 = vst [vmem:[%s64 + $0x538] sm:$0xff] %v399
          %v401 = vld [vmem:[%s63 + $0x540] sm:$0xff]
          %402 = vst [vmem:[%s64 + $0x540] sm:$0xff] %v401
          %v403 = vld [vmem:[%s63 + $0x548] sm:$0xff]
          %404 = vst [vmem:[%s64 + $0x548] sm:$0xff] %v403
          %v405 = vld [vmem:[%s63 + $0x550] sm:$0xff]
          %406 = vst [vmem:[%s64 + $0x550] sm:$0xff] %v405
          %v407 = vld [vmem:[%s63 + $0x558] sm:$0xff]
          %408 = vst [vmem:[%s64 + $0x558] sm:$0xff] %v407
          %v409 = vld [vmem:[%s63 + $0x560] sm:$0xff]
          %410 = vst [vmem:[%s64 + $0x560] sm:$0xff] %v409
          %v411 = vld [vmem:[%s63 + $0x568] sm:$0xff]
          %412 = vst [vmem:[%s64 + $0x568] sm:$0xff] %v411
          %v413 = vld [vmem:[%s63 + $0x570] sm:$0xff]
          %414 = vst [vmem:[%s64 + $0x570] sm:$0xff] %v413
          %v415 = vld [vmem:[%s63 + $0x578] sm:$0xff]
          %416 = vst [vmem:[%s64 + $0x578] sm:$0xff] %v415
          %v417 = vld [vmem:[%s63 + $0x580] sm:$0xff]
          %418 = vst [vmem:[%s64 + $0x580] sm:$0xff] %v417
          %v419 = vld [vmem:[%s63 + $0x588] sm:$0xff]
          %420 = vst [vmem:[%s64 + $0x588] sm:$0xff] %v419
          %v421 = vld [vmem:[%s63 + $0x590] sm:$0xff]
          %422 = vst [vmem:[%s64 + $0x590] sm:$0xff] %v421
          %v423 = vld [vmem:[%s63 + $0x598] sm:$0xff]
          %424 = vst [vmem:[%s64 + $0x598] sm:$0xff] %v423
          %v425 = vld [vmem:[%s63 + $0x5a0] sm:$0xff]
          %426 = vst [vmem:[%s64 + $0x5a0] sm:$0xff] %v425
          %v427 = vld [vmem:[%s63 + $0x5a8] sm:$0xff]
          %428 = vst [vmem:[%s64 + $0x5a8] sm:$0xff] %v427
          %v429 = vld [vmem:[%s63 + $0x5b0] sm:$0xff]
          %430 = vst [vmem:[%s64 + $0x5b0] sm:$0xff] %v429
          %v431 = vld [vmem:[%s63 + $0x5b8] sm:$0xff]
          %432 = vst [vmem:[%s64 + $0x5b8] sm:$0xff] %v431
          %v433 = vld [vmem:[%s63 + $0x5c0] sm:$0xff]
          %434 = vst [vmem:[%s64 + $0x5c0] sm:$0xff] %v433
          %v435 = vld [vmem:[%s63 + $0x5c8] sm:$0xff]
          %436 = vst [vmem:[%s64 + $0x5c8] sm:$0xff] %v435
          %v437 = vld [vmem:[%s63 + $0x5d0] sm:$0xff]
          %438 = vst [vmem:[%s64 + $0x5d0] sm:$0xff] %v437
          %v439 = vld [vmem:[%s63 + $0x5d8] sm:$0xff]
          %440 = vst [vmem:[%s64 + $0x5d8] sm:$0xff] %v439
          %v441 = vld [vmem:[%s63 + $0x5e0] sm:$0xff]
          %442 = vst [vmem:[%s64 + $0x5e0] sm:$0xff] %v441
          %v443 = vld [vmem:[%s63 + $0x5e8] sm:$0xff]
          %444 = vst [vmem:[%s64 + $0x5e8] sm:$0xff] %v443
          %v445 = vld [vmem:[%s63 + $0x5f0] sm:$0xff]
          %446 = vst [vmem:[%s64 + $0x5f0] sm:$0xff] %v445
          %v447 = vld [vmem:[%s63 + $0x5f8] sm:$0xff]
          %448 = vst [vmem:[%s64 + $0x5f8] sm:$0xff] %v447
          %v449 = vld [vmem:[%s63 + $0x600] sm:$0xff]
          %450 = vst [vmem:[%s64 + $0x600] sm:$0xff] %v449
          %v451 = vld [vmem:[%s63 + $0x608] sm:$0xff]
          %452 = vst [vmem:[%s64 + $0x608] sm:$0xff] %v451
          %v453 = vld [vmem:[%s63 + $0x610] sm:$0xff]
          %454 = vst [vmem:[%s64 + $0x610] sm:$0xff] %v453
          %v455 = vld [vmem:[%s63 + $0x618] sm:$0xff]
          %456 = vst [vmem:[%s64 + $0x618] sm:$0xff] %v455
          %v457 = vld [vmem:[%s63 + $0x620] sm:$0xff]
          %458 = vst [vmem:[%s64 + $0x620] sm:$0xff] %v457
          %v459 = vld [vmem:[%s63 + $0x628] sm:$0xff]
          %460 = vst [vmem:[%s64 + $0x628] sm:$0xff] %v459
          %v461 = vld [vmem:[%s63 + $0x630] sm:$0xff]
          %462 = vst [vmem:[%s64 + $0x630] sm:$0xff] %v461
          %v463 = vld [vmem:[%s63 + $0x638] sm:$0xff]
          %464 = vst [vmem:[%s64 + $0x638] sm:$0xff] %v463
          %v465 = vld [vmem:[%s63 + $0x640] sm:$0xff]
          %466 = vst [vmem:[%s64 + $0x640] sm:$0xff] %v465
          %v467 = vld [vmem:[%s63 + $0x648] sm:$0xff]
          %468 = vst [vmem:[%s64 + $0x648] sm:$0xff] %v467
          %v469 = vld [vmem:[%s63 + $0x650] sm:$0xff]
          %470 = vst [vmem:[%s64 + $0x650] sm:$0xff] %v469
          %v471 = vld [vmem:[%s63 + $0x658] sm:$0xff]
          %472 = vst [vmem:[%s64 + $0x658] sm:$0xff] %v471
          %v473 = vld [vmem:[%s63 + $0x660] sm:$0xff]
          %474 = vst [vmem:[%s64 + $0x660] sm:$0xff] %v473
          %v475 = vld [vmem:[%s63 + $0x668] sm:$0xff]
          %476 = vst [vmem:[%s64 + $0x668] sm:$0xff] %v475
          %v477 = vld [vmem:[%s63 + $0x670] sm:$0xff]
          %478 = vst [vmem:[%s64 + $0x670] sm:$0xff] %v477
          %v479 = vld [vmem:[%s63 + $0x678] sm:$0xff]
          %480 = vst [vmem:[%s64 + $0x678] sm:$0xff] %v479
          %v481 = vld [vmem:[%s63 + $0x680] sm:$0xff]
          %482 = vst [vmem:[%s64 + $0x680] sm:$0xff] %v481
          %v483 = vld [vmem:[%s63 + $0x688] sm:$0xff]
          %484 = vst [vmem:[%s64 + $0x688] sm:$0xff] %v483
          %v485 = vld [vmem:[%s63 + $0x690] sm:$0xff]
          %486 = vst [vmem:[%s64 + $0x690] sm:$0xff] %v485
          %v487 = vld [vmem:[%s63 + $0x698] sm:$0xff]
          %488 = vst [vmem:[%s64 + $0x698] sm:$0xff] %v487
          %v489 = vld [vmem:[%s63 + $0x6a0] sm:$0xff]
          %490 = vst [vmem:[%s64 + $0x6a0] sm:$0xff] %v489
          %v491 = vld [vmem:[%s63 + $0x6a8] sm:$0xff]
          %492 = vst [vmem:[%s64 + $0x6a8] sm:$0xff] %v491
          %v493 = vld [vmem:[%s63 + $0x6b0] sm:$0xff]
          %494 = vst [vmem:[%s64 + $0x6b0] sm:$0xff] %v493
          %v495 = vld [vmem:[%s63 + $0x6b8] sm:$0xff]
          %496 = vst [vmem:[%s64 + $0x6b8] sm:$0xff] %v495
          %v497 = vld [vmem:[%s63 + $0x6c0] sm:$0xff]
          %498 = vst [vmem:[%s64 + $0x6c0] sm:$0xff] %v497
          %v499 = vld [vmem:[%s63 + $0x6c8] sm:$0xff]
          %500 = vst [vmem:[%s64 + $0x6c8] sm:$0xff] %v499
          %v501 = vld [vmem:[%s63 + $0x6d0] sm:$0xff]
          %502 = vst [vmem:[%s64 + $0x6d0] sm:$0xff] %v501
          %v503 = vld [vmem:[%s63 + $0x6d8] sm:$0xff]
          %504 = vst [vmem:[%s64 + $0x6d8] sm:$0xff] %v503
          %v505 = vld [vmem:[%s63 + $0x6e0] sm:$0xff]
          %506 = vst [vmem:[%s64 + $0x6e0] sm:$0xff] %v505
          %v507 = vld [vmem:[%s63 + $0x6e8] sm:$0xff]
          %508 = vst [vmem:[%s64 + $0x6e8] sm:$0xff] %v507
          %v509 = vld [vmem:[%s63 + $0x6f0] sm:$0xff]
          %510 = vst [vmem:[%s64 + $0x6f0] sm:$0xff] %v509
          %v511 = vld [vmem:[%s63 + $0x6f8] sm:$0xff]
          %512 = vst [vmem:[%s64 + $0x6f8] sm:$0xff] %v511
          %v513 = vld [vmem:[%s63 + $0x700] sm:$0xff]
          %514 = vst [vmem:[%s64 + $0x700] sm:$0xff] %v513
          %v515 = vld [vmem:[%s63 + $0x708] sm:$0xff]
          %516 = vst [vmem:[%s64 + $0x708] sm:$0xff] %v515
          %v517 = vld [vmem:[%s63 + $0x710] sm:$0xff]
          %518 = vst [vmem:[%s64 + $0x710] sm:$0xff] %v517
          %v519 = vld [vmem:[%s63 + $0x718] sm:$0xff]
          %520 = vst [vmem:[%s64 + $0x718] sm:$0xff] %v519
          %v521 = vld [vmem:[%s63 + $0x720] sm:$0xff]
          %522 = vst [vmem:[%s64 + $0x720] sm:$0xff] %v521
          %v523 = vld [vmem:[%s63 + $0x728] sm:$0xff]
          %524 = vst [vmem:[%s64 + $0x728] sm:$0xff] %v523
          %v525 = vld [vmem:[%s63 + $0x730] sm:$0xff]
          %526 = vst [vmem:[%s64 + $0x730] sm:$0xff] %v525
          %v527 = vld [vmem:[%s63 + $0x738] sm:$0xff]
          %528 = vst [vmem:[%s64 + $0x738] sm:$0xff] %v527
          %v529 = vld [vmem:[%s63 + $0x740] sm:$0xff]
          %530 = vst [vmem:[%s64 + $0x740] sm:$0xff] %v529
          %v531 = vld [vmem:[%s63 + $0x748] sm:$0xff]
          %532 = vst [vmem:[%s64 + $0x748] sm:$0xff] %v531
          %v533 = vld [vmem:[%s63 + $0x750] sm:$0xff]
          %534 = vst [vmem:[%s64 + $0x750] sm:$0xff] %v533
          %v535 = vld [vmem:[%s63 + $0x758] sm:$0xff]
          %536 = vst [vmem:[%s64 + $0x758] sm:$0xff] %v535
          %v537 = vld [vmem:[%s63 + $0x760] sm:$0xff]
          %538 = vst [vmem:[%s64 + $0x760] sm:$0xff] %v537
          %v539 = vld [vmem:[%s63 + $0x768] sm:$0xff]
          %540 = vst [vmem:[%s64 + $0x768] sm:$0xff] %v539
          %v541 = vld [vmem:[%s63 + $0x770] sm:$0xff]
          %542 = vst [vmem:[%s64 + $0x770] sm:$0xff] %v541
          %v543 = vld [vmem:[%s63 + $0x778] sm:$0xff]
          %544 = vst [vmem:[%s64 + $0x778] sm:$0xff] %v543
          %v545 = vld [vmem:[%s63 + $0x780] sm:$0xff]
          %546 = vst [vmem:[%s64 + $0x780] sm:$0xff] %v545
          %v547 = vld [vmem:[%s63 + $0x788] sm:$0xff]
          %548 = vst [vmem:[%s64 + $0x788] sm:$0xff] %v547
          %v549 = vld [vmem:[%s63 + $0x790] sm:$0xff]
          %550 = vst [vmem:[%s64 + $0x790] sm:$0xff] %v549
          %v551 = vld [vmem:[%s63 + $0x798] sm:$0xff]
          %552 = vst [vmem:[%s64 + $0x798] sm:$0xff] %v551
          %v553 = vld [vmem:[%s63 + $0x7a0] sm:$0xff]
          %554 = vst [vmem:[%s64 + $0x7a0] sm:$0xff] %v553
          %v555 = vld [vmem:[%s63 + $0x7a8] sm:$0xff]
          %556 = vst [vmem:[%s64 + $0x7a8] sm:$0xff] %v555
          %v557 = vld [vmem:[%s63 + $0x7b0] sm:$0xff]
          %558 = vst [vmem:[%s64 + $0x7b0] sm:$0xff] %v557
          %v559 = vld [vmem:[%s63 + $0x7b8] sm:$0xff]
          %560 = vst [vmem:[%s64 + $0x7b8] sm:$0xff] %v559
          %v561 = vld [vmem:[%s63 + $0x7c0] sm:$0xff]
          %562 = vst [vmem:[%s64 + $0x7c0] sm:$0xff] %v561
          %v563 = vld [vmem:[%s63 + $0x7c8] sm:$0xff]
          %564 = vst [vmem:[%s64 + $0x7c8] sm:$0xff] %v563
          %v565 = vld [vmem:[%s63 + $0x7d0] sm:$0xff]
          %566 = vst [vmem:[%s64 + $0x7d0] sm:$0xff] %v565
          %v567 = vld [vmem:[%s63 + $0x7d8] sm:$0xff]
          %568 = vst [vmem:[%s64 + $0x7d8] sm:$0xff] %v567
          %v569 = vld [vmem:[%s63 + $0x7e0] sm:$0xff]
          %570 = vst [vmem:[%s64 + $0x7e0] sm:$0xff] %v569
          %v571 = vld [vmem:[%s63 + $0x7e8] sm:$0xff]
          %572 = vst [vmem:[%s64 + $0x7e8] sm:$0xff] %v571
          %v573 = vld [vmem:[%s63 + $0x7f0] sm:$0xff]
          %574 = vst [vmem:[%s64 + $0x7f0] sm:$0xff] %v573
          %v575 = vld [vmem:[%s63 + $0x7f8] sm:$0xff]
          %576 = vst [vmem:[%s64 + $0x7f8] sm:$0xff] %v575
        $region41: #{model_forward.1} parent=35 // loop_footer
          %s62 = sadd.s32 1, %s58
        $region42: #{model_forward.1} parent=35 // loop_footer_branch
          %57 = sbr.rel target = $region38
        $region43: #{model_forward.1} parent=35 // loop_exit
          _
      $region36: #{model_forward.1} parent=20 // pred_fallthru
        _
      %p577 = pneg %p53
      // Predicated region
      $region44: #{model_forward.1} parent=20 // pred_check
        _
      $region45: #{model_forward.1} parent=20 // pred_check_branch
        %579 = sbr.rel (%p53) target = $region47
      $region46: #{model_forward.1} parent=20 // pred_region
        %s580 = sand.u32 2048, 7
      $region47: #{model_forward.1} parent=20 // pred_fallthru
        _
    $region21: #{model_forward.1} parent=1 // pred_fallthru
      _
    // Predicated region
    $region22: #{model_forward.1} parent=1 // pred_check
      %p38 = pneg %p34
    $region23: #{model_forward.1} parent=1 // pred_check_branch
      %40 = sbr.rel (%p38) target = $region25
    $region24: #{model_forward.1} parent=1 // pred_region
      %s41 = sshllo.u32 0, 2048
      loop: start=0, step=1, limit=1
      $region26: #{model_forward.1} parent=24 // loop_pre_header
        _
      $region27: #{model_forward.1} parent=24 // loop_header
        %s43 = sphi 0, %s47
        %p44 = scmp.ge.s32.totalorder %s43, 1
        %s48 = sphi %s3, %s3
        %s49 = sphi [#allocation2], [#allocation2]
      $region28: #{model_forward.1} parent=24 // loop_header_branch
        %46 = sbr.rel (%p44) target = $region32
      $region29: #{model_forward.1} parent=24 // loop_body
        %v50 = vld [vmem:[%s48] sm:%s41]
        %51 = vst [vmem:[%s49] sm:%s41] %v50
      $region30: #{model_forward.1} parent=24 // loop_footer
        %s47 = sadd.s32 1, %s43
      $region31: #{model_forward.1} parent=24 // loop_footer_branch
        %42 = sbr.rel target = $region27
      $region32: #{model_forward.1} parent=24 // loop_exit
        _
    $region25: #{model_forward.1} parent=1 // pred_fallthru
      _
    // Predicated region
    $region48: #{model_forward.1} parent=1 // pred_check
      _
    $region49: #{model_forward.1} parent=1 // pred_check_branch
      %583 = sbr.rel (0) target = $region51
    $region50: #{model_forward.1} parent=1 // pred_region
      %584 = vsyncadd [#allocation7], 32768
    $region51: #{model_forward.1} parent=1 // pred_fallthru
      _
    %s585 = scalar_lea.sflag [#allocation7], 1
    %p587 = scmp.lt.u32.totalorder 4, 8
    %p588 = pneg %p587
    // Predicated region
    $region52: #{model_forward.1} parent=1 // pred_check
      _
    $region53: #{model_forward.1} parent=1 // pred_check_branch
      %590 = sbr.rel (%p587) target = $region55
    $region54: #{model_forward.1} parent=1 // pred_region
      %s1115 = sand.u32 4, 7
      %p1116 = scmp.eq.s32.totalorder %s1115, 0
      %p1117 = pneg %p1116
      // Predicated region
      $region67: #{model_forward.1} parent=54 // pred_check
        _
      $region68: #{model_forward.1} parent=54 // pred_check_branch
        %1119 = sbr.rel (%p1116) target = $region70
      $region69: #{model_forward.1} parent=54 // pred_region
        %s1120 = sand.u32 4, 7
        %s1121 = ssub.s32 4, %s1120
        %s1122 = scalar_lea.vmem %s4, %s1121
        %s1123 = ssub.s32 4, %s1120
        %s1124 = scalar_lea.vmem [#allocation3], %s1123
        loop: start=0, step=1, limit=1
        $region71: #{model_forward.1} parent=69 // loop_pre_header
          _
        $region72: #{model_forward.1} parent=69 // loop_header
          %s1126 = sphi 0, %s1130
          %p1127 = scmp.ge.s32.totalorder %s1126, 1
          %s1131 = sphi %s4, %s4
          %s1132 = sphi [#allocation3], [#allocation3]
        $region73: #{model_forward.1} parent=69 // loop_header_branch
          %1129 = sbr.rel (%p1127) target = $region77
        $region74: #{model_forward.1} parent=69 // loop_body
          _
        $region75: #{model_forward.1} parent=69 // loop_footer
          %s1130 = sadd.s32 1, %s1126
        $region76: #{model_forward.1} parent=69 // loop_footer_branch
          %1125 = sbr.rel target = $region72
        $region77: #{model_forward.1} parent=69 // loop_exit
          _
        %s1133 = sshllo.u32 0, %s1120
        loop: start=0, step=1, limit=1
        $region78: #{model_forward.1} parent=69 // loop_pre_header
          _
        $region79: #{model_forward.1} parent=69 // loop_header
          %s1135 = sphi 0, %s1139
          %p1136 = scmp.ge.s32.totalorder %s1135, 1
          %s1140 = sphi %s1122, %s1122
          %s1141 = sphi %s1124, %s1124
        $region80: #{model_forward.1} parent=69 // loop_header_branch
          %1138 = sbr.rel (%p1136) target = $region84
        $region81: #{model_forward.1} parent=69 // loop_body
          %v1142 = vld [vmem:[%s1140] sm:%s1133]
          %1143 = vst [vmem:[%s1141] sm:%s1133] %v1142
          %v1144 = vld [vmem:[%s1140 + $0x10] sm:%s1133]
          %1145 = vst [vmem:[%s1141 + $0x4] sm:%s1133] %v1144
          %v1146 = vld [vmem:[%s1140 + $0x4] sm:%s1133]
          %1147 = vst [vmem:[%s1141 + $0x8] sm:%s1133] %v1146
          %v1148 = vld [vmem:[%s1140 + $0x14] sm:%s1133]
          %1149 = vst [vmem:[%s1141 + $0xc] sm:%s1133] %v1148
          %v1150 = vld [vmem:[%s1140 + $0x8] sm:%s1133]
          %1151 = vst [vmem:[%s1141 + $0x10] sm:%s1133] %v1150
          %v1152 = vld [vmem:[%s1140 + $0x18] sm:%s1133]
          %1153 = vst [vmem:[%s1141 + $0x14] sm:%s1133] %v1152
          %v1154 = vld [vmem:[%s1140 + $0xc] sm:%s1133]
          %1155 = vst [vmem:[%s1141 + $0x18] sm:%s1133] %v1154
          %v1156 = vld [vmem:[%s1140 + $0x1c] sm:%s1133]
          %1157 = vst [vmem:[%s1141 + $0x1c] sm:%s1133] %v1156
          %v1158 = vld [vmem:[%s1140 + $0x20] sm:%s1133]
          %1159 = vst [vmem:[%s1141 + $0x20] sm:%s1133] %v1158
          %v1160 = vld [vmem:[%s1140 + $0x30] sm:%s1133]
          %1161 = vst [vmem:[%s1141 + $0x24] sm:%s1133] %v1160
          %v1162 = vld [vmem:[%s1140 + $0x24] sm:%s1133]
          %1163 = vst [vmem:[%s1141 + $0x28] sm:%s1133] %v1162
          %v1164 = vld [vmem:[%s1140 + $0x34] sm:%s1133]
          %1165 = vst [vmem:[%s1141 + $0x2c] sm:%s1133] %v1164
          %v1166 = vld [vmem:[%s1140 + $0x28] sm:%s1133]
          %1167 = vst [vmem:[%s1141 + $0x30] sm:%s1133] %v1166
          %v1168 = vld [vmem:[%s1140 + $0x38] sm:%s1133]
          %1169 = vst [vmem:[%s1141 + $0x34] sm:%s1133] %v1168
          %v1170 = vld [vmem:[%s1140 + $0x2c] sm:%s1133]
          %1171 = vst [vmem:[%s1141 + $0x38] sm:%s1133] %v1170
          %v1172 = vld [vmem:[%s1140 + $0x3c] sm:%s1133]
          %1173 = vst [vmem:[%s1141 + $0x3c] sm:%s1133] %v1172
          %v1174 = vld [vmem:[%s1140 + $0x40] sm:%s1133]
          %1175 = vst [vmem:[%s1141 + $0x40] sm:%s1133] %v1174
          %v1176 = vld [vmem:[%s1140 + $0x50] sm:%s1133]
          %1177 = vst [vmem:[%s1141 + $0x44] sm:%s1133] %v1176
          %v1178 = vld [vmem:[%s1140 + $0x44] sm:%s1133]
          %1179 = vst [vmem:[%s1141 + $0x48] sm:%s1133] %v1178
          %v1180 = vld [vmem:[%s1140 + $0x54] sm:%s1133]
          %1181 = vst [vmem:[%s1141 + $0x4c] sm:%s1133] %v1180
          %v1182 = vld [vmem:[%s1140 + $0x48] sm:%s1133]
          %1183 = vst [vmem:[%s1141 + $0x50] sm:%s1133] %v1182
          %v1184 = vld [vmem:[%s1140 + $0x58] sm:%s1133]
          %1185 = vst [vmem:[%s1141 + $0x54] sm:%s1133] %v1184
          %v1186 = vld [vmem:[%s1140 + $0x4c] sm:%s1133]
          %1187 = vst [vmem:[%s1141 + $0x58] sm:%s1133] %v1186
          %v1188 = vld [vmem:[%s1140 + $0x5c] sm:%s1133]
          %1189 = vst [vmem:[%s1141 + $0x5c] sm:%s1133] %v1188
          %v1190 = vld [vmem:[%s1140 + $0x60] sm:%s1133]
          %1191 = vst [vmem:[%s1141 + $0x60] sm:%s1133] %v1190
          %v1192 = vld [vmem:[%s1140 + $0x70] sm:%s1133]
          %1193 = vst [vmem:[%s1141 + $0x64] sm:%s1133] %v1192
          %v1194 = vld [vmem:[%s1140 + $0x64] sm:%s1133]
          %1195 = vst [vmem:[%s1141 + $0x68] sm:%s1133] %v1194
          %v1196 = vld [vmem:[%s1140 + $0x74] sm:%s1133]
          %1197 = vst [vmem:[%s1141 + $0x6c] sm:%s1133] %v1196
          %v1198 = vld [vmem:[%s1140 + $0x68] sm:%s1133]
          %1199 = vst [vmem:[%s1141 + $0x70] sm:%s1133] %v1198
          %v1200 = vld [vmem:[%s1140 + $0x78] sm:%s1133]
          %1201 = vst [vmem:[%s1141 + $0x74] sm:%s1133] %v1200
          %v1202 = vld [vmem:[%s1140 + $0x6c] sm:%s1133]
          %1203 = vst [vmem:[%s1141 + $0x78] sm:%s1133] %v1202
          %v1204 = vld [vmem:[%s1140 + $0x7c] sm:%s1133]
          %1205 = vst [vmem:[%s1141 + $0x7c] sm:%s1133] %v1204
          %v1206 = vld [vmem:[%s1140 + $0x80] sm:%s1133]
          %1207 = vst [vmem:[%s1141 + $0x80] sm:%s1133] %v1206
          %v1208 = vld [vmem:[%s1140 + $0x90] sm:%s1133]
          %1209 = vst [vmem:[%s1141 + $0x84] sm:%s1133] %v1208
          %v1210 = vld [vmem:[%s1140 + $0x84] sm:%s1133]
          %1211 = vst [vmem:[%s1141 + $0x88] sm:%s1133] %v1210
          %v1212 = vld [vmem:[%s1140 + $0x94] sm:%s1133]
          %1213 = vst [vmem:[%s1141 + $0x8c] sm:%s1133] %v1212
          %v1214 = vld [vmem:[%s1140 + $0x88] sm:%s1133]
          %1215 = vst [vmem:[%s1141 + $0x90] sm:%s1133] %v1214
          %v1216 = vld [vmem:[%s1140 + $0x98] sm:%s1133]
          %1217 = vst [vmem:[%s1141 + $0x94] sm:%s1133] %v1216
          %v1218 = vld [vmem:[%s1140 + $0x8c] sm:%s1133]
          %1219 = vst [vmem:[%s1141 + $0x98] sm:%s1133] %v1218
          %v1220 = vld [vmem:[%s1140 + $0x9c] sm:%s1133]
          %1221 = vst [vmem:[%s1141 + $0x9c] sm:%s1133] %v1220
          %v1222 = vld [vmem:[%s1140 + $0xa0] sm:%s1133]
          %1223 = vst [vmem:[%s1141 + $0xa0] sm:%s1133] %v1222
          %v1224 = vld [vmem:[%s1140 + $0xb0] sm:%s1133]
          %1225 = vst [vmem:[%s1141 + $0xa4] sm:%s1133] %v1224
          %v1226 = vld [vmem:[%s1140 + $0xa4] sm:%s1133]
          %1227 = vst [vmem:[%s1141 + $0xa8] sm:%s1133] %v1226
          %v1228 = vld [vmem:[%s1140 + $0xb4] sm:%s1133]
          %1229 = vst [vmem:[%s1141 + $0xac] sm:%s1133] %v1228
          %v1230 = vld [vmem:[%s1140 + $0xa8] sm:%s1133]
          %1231 = vst [vmem:[%s1141 + $0xb0] sm:%s1133] %v1230
          %v1232 = vld [vmem:[%s1140 + $0xb8] sm:%s1133]
          %1233 = vst [vmem:[%s1141 + $0xb4] sm:%s1133] %v1232
          %v1234 = vld [vmem:[%s1140 + $0xac] sm:%s1133]
          %1235 = vst [vmem:[%s1141 + $0xb8] sm:%s1133] %v1234
          %v1236 = vld [vmem:[%s1140 + $0xbc] sm:%s1133]
          %1237 = vst [vmem:[%s1141 + $0xbc] sm:%s1133] %v1236
          %v1238 = vld [vmem:[%s1140 + $0xc0] sm:%s1133]
          %1239 = vst [vmem:[%s1141 + $0xc0] sm:%s1133] %v1238
          %v1240 = vld [vmem:[%s1140 + $0xd0] sm:%s1133]
          %1241 = vst [vmem:[%s1141 + $0xc4] sm:%s1133] %v1240
          %v1242 = vld [vmem:[%s1140 + $0xc4] sm:%s1133]
          %1243 = vst [vmem:[%s1141 + $0xc8] sm:%s1133] %v1242
          %v1244 = vld [vmem:[%s1140 + $0xd4] sm:%s1133]
          %1245 = vst [vmem:[%s1141 + $0xcc] sm:%s1133] %v1244
          %v1246 = vld [vmem:[%s1140 + $0xc8] sm:%s1133]
          %1247 = vst [vmem:[%s1141 + $0xd0] sm:%s1133] %v1246
          %v1248 = vld [vmem:[%s1140 + $0xd8] sm:%s1133]
          %1249 = vst [vmem:[%s1141 + $0xd4] sm:%s1133] %v1248
          %v1250 = vld [vmem:[%s1140 + $0xcc] sm:%s1133]
          %1251 = vst [vmem:[%s1141 + $0xd8] sm:%s1133] %v1250
          %v1252 = vld [vmem:[%s1140 + $0xdc] sm:%s1133]
          %1253 = vst [vmem:[%s1141 + $0xdc] sm:%s1133] %v1252
          %v1254 = vld [vmem:[%s1140 + $0xe0] sm:%s1133]
          %1255 = vst [vmem:[%s1141 + $0xe0] sm:%s1133] %v1254
          %v1256 = vld [vmem:[%s1140 + $0xf0] sm:%s1133]
          %1257 = vst [vmem:[%s1141 + $0xe4] sm:%s1133] %v1256
          %v1258 = vld [vmem:[%s1140 + $0xe4] sm:%s1133]
          %1259 = vst [vmem:[%s1141 + $0xe8] sm:%s1133] %v1258
          %v1260 = vld [vmem:[%s1140 + $0xf4] sm:%s1133]
          %1261 = vst [vmem:[%s1141 + $0xec] sm:%s1133] %v1260
          %v1262 = vld [vmem:[%s1140 + $0xe8] sm:%s1133]
          %1263 = vst [vmem:[%s1141 + $0xf0] sm:%s1133] %v1262
          %v1264 = vld [vmem:[%s1140 + $0xf8] sm:%s1133]
          %1265 = vst [vmem:[%s1141 + $0xf4] sm:%s1133] %v1264
          %v1266 = vld [vmem:[%s1140 + $0xec] sm:%s1133]
          %1267 = vst [vmem:[%s1141 + $0xf8] sm:%s1133] %v1266
          %v1268 = vld [vmem:[%s1140 + $0xfc] sm:%s1133]
          %1269 = vst [vmem:[%s1141 + $0xfc] sm:%s1133] %v1268
          %v1270 = vld [vmem:[%s1140 + $0x100] sm:%s1133]
          %1271 = vst [vmem:[%s1141 + $0x100] sm:%s1133] %v1270
          %v1272 = vld [vmem:[%s1140 + $0x110] sm:%s1133]
          %1273 = vst [vmem:[%s1141 + $0x104] sm:%s1133] %v1272
          %v1274 = vld [vmem:[%s1140 + $0x104] sm:%s1133]
          %1275 = vst [vmem:[%s1141 + $0x108] sm:%s1133] %v1274
          %v1276 = vld [vmem:[%s1140 + $0x114] sm:%s1133]
          %1277 = vst [vmem:[%s1141 + $0x10c] sm:%s1133] %v1276
          %v1278 = vld [vmem:[%s1140 + $0x108] sm:%s1133]
          %1279 = vst [vmem:[%s1141 + $0x110] sm:%s1133] %v1278
          %v1280 = vld [vmem:[%s1140 + $0x118] sm:%s1133]
          %1281 = vst [vmem:[%s1141 + $0x114] sm:%s1133] %v1280
          %v1282 = vld [vmem:[%s1140 + $0x10c] sm:%s1133]
          %1283 = vst [vmem:[%s1141 + $0x118] sm:%s1133] %v1282
          %v1284 = vld [vmem:[%s1140 + $0x11c] sm:%s1133]
          %1285 = vst [vmem:[%s1141 + $0x11c] sm:%s1133] %v1284
          %v1286 = vld [vmem:[%s1140 + $0x120] sm:%s1133]
          %1287 = vst [vmem:[%s1141 + $0x120] sm:%s1133] %v1286
          %v1288 = vld [vmem:[%s1140 + $0x130] sm:%s1133]
          %1289 = vst [vmem:[%s1141 + $0x124] sm:%s1133] %v1288
          %v1290 = vld [vmem:[%s1140 + $0x124] sm:%s1133]
          %1291 = vst [vmem:[%s1141 + $0x128] sm:%s1133] %v1290
          %v1292 = vld [vmem:[%s1140 + $0x134] sm:%s1133]
          %1293 = vst [vmem:[%s1141 + $0x12c] sm:%s1133] %v1292
          %v1294 = vld [vmem:[%s1140 + $0x128] sm:%s1133]
          %1295 = vst [vmem:[%s1141 + $0x130] sm:%s1133] %v1294
          %v1296 = vld [vmem:[%s1140 + $0x138] sm:%s1133]
          %1297 = vst [vmem:[%s1141 + $0x134] sm:%s1133] %v1296
          %v1298 = vld [vmem:[%s1140 + $0x12c] sm:%s1133]
          %1299 = vst [vmem:[%s1141 + $0x138] sm:%s1133] %v1298
          %v1300 = vld [vmem:[%s1140 + $0x13c] sm:%s1133]
          %1301 = vst [vmem:[%s1141 + $0x13c] sm:%s1133] %v1300
          %v1302 = vld [vmem:[%s1140 + $0x140] sm:%s1133]
          %1303 = vst [vmem:[%s1141 + $0x140] sm:%s1133] %v1302
          %v1304 = vld [vmem:[%s1140 + $0x150] sm:%s1133]
          %1305 = vst [vmem:[%s1141 + $0x144] sm:%s1133] %v1304
          %v1306 = vld [vmem:[%s1140 + $0x144] sm:%s1133]
          %1307 = vst [vmem:[%s1141 + $0x148] sm:%s1133] %v1306
          %v1308 = vld [vmem:[%s1140 + $0x154] sm:%s1133]
          %1309 = vst [vmem:[%s1141 + $0x14c] sm:%s1133] %v1308
          %v1310 = vld [vmem:[%s1140 + $0x148] sm:%s1133]
          %1311 = vst [vmem:[%s1141 + $0x150] sm:%s1133] %v1310
          %v1312 = vld [vmem:[%s1140 + $0x158] sm:%s1133]
          %1313 = vst [vmem:[%s1141 + $0x154] sm:%s1133] %v1312
          %v1314 = vld [vmem:[%s1140 + $0x14c] sm:%s1133]
          %1315 = vst [vmem:[%s1141 + $0x158] sm:%s1133] %v1314
          %v1316 = vld [vmem:[%s1140 + $0x15c] sm:%s1133]
          %1317 = vst [vmem:[%s1141 + $0x15c] sm:%s1133] %v1316
          %v1318 = vld [vmem:[%s1140 + $0x160] sm:%s1133]
          %1319 = vst [vmem:[%s1141 + $0x160] sm:%s1133] %v1318
          %v1320 = vld [vmem:[%s1140 + $0x170] sm:%s1133]
          %1321 = vst [vmem:[%s1141 + $0x164] sm:%s1133] %v1320
          %v1322 = vld [vmem:[%s1140 + $0x164] sm:%s1133]
          %1323 = vst [vmem:[%s1141 + $0x168] sm:%s1133] %v1322
          %v1324 = vld [vmem:[%s1140 + $0x174] sm:%s1133]
          %1325 = vst [vmem:[%s1141 + $0x16c] sm:%s1133] %v1324
          %v1326 = vld [vmem:[%s1140 + $0x168] sm:%s1133]
          %1327 = vst [vmem:[%s1141 + $0x170] sm:%s1133] %v1326
          %v1328 = vld [vmem:[%s1140 + $0x178] sm:%s1133]
          %1329 = vst [vmem:[%s1141 + $0x174] sm:%s1133] %v1328
          %v1330 = vld [vmem:[%s1140 + $0x16c] sm:%s1133]
          %1331 = vst [vmem:[%s1141 + $0x178] sm:%s1133] %v1330
          %v1332 = vld [vmem:[%s1140 + $0x17c] sm:%s1133]
          %1333 = vst [vmem:[%s1141 + $0x17c] sm:%s1133] %v1332
          %v1334 = vld [vmem:[%s1140 + $0x180] sm:%s1133]
          %1335 = vst [vmem:[%s1141 + $0x180] sm:%s1133] %v1334
          %v1336 = vld [vmem:[%s1140 + $0x190] sm:%s1133]
          %1337 = vst [vmem:[%s1141 + $0x184] sm:%s1133] %v1336
          %v1338 = vld [vmem:[%s1140 + $0x184] sm:%s1133]
          %1339 = vst [vmem:[%s1141 + $0x188] sm:%s1133] %v1338
          %v1340 = vld [vmem:[%s1140 + $0x194] sm:%s1133]
          %1341 = vst [vmem:[%s1141 + $0x18c] sm:%s1133] %v1340
          %v1342 = vld [vmem:[%s1140 + $0x188] sm:%s1133]
          %1343 = vst [vmem:[%s1141 + $0x190] sm:%s1133] %v1342
          %v1344 = vld [vmem:[%s1140 + $0x198] sm:%s1133]
          %1345 = vst [vmem:[%s1141 + $0x194] sm:%s1133] %v1344
          %v1346 = vld [vmem:[%s1140 + $0x18c] sm:%s1133]
          %1347 = vst [vmem:[%s1141 + $0x198] sm:%s1133] %v1346
          %v1348 = vld [vmem:[%s1140 + $0x19c] sm:%s1133]
          %1349 = vst [vmem:[%s1141 + $0x19c] sm:%s1133] %v1348
          %v1350 = vld [vmem:[%s1140 + $0x1a0] sm:%s1133]
          %1351 = vst [vmem:[%s1141 + $0x1a0] sm:%s1133] %v1350
          %v1352 = vld [vmem:[%s1140 + $0x1b0] sm:%s1133]
          %1353 = vst [vmem:[%s1141 + $0x1a4] sm:%s1133] %v1352
          %v1354 = vld [vmem:[%s1140 + $0x1a4] sm:%s1133]
          %1355 = vst [vmem:[%s1141 + $0x1a8] sm:%s1133] %v1354
          %v1356 = vld [vmem:[%s1140 + $0x1b4] sm:%s1133]
          %1357 = vst [vmem:[%s1141 + $0x1ac] sm:%s1133] %v1356
          %v1358 = vld [vmem:[%s1140 + $0x1a8] sm:%s1133]
          %1359 = vst [vmem:[%s1141 + $0x1b0] sm:%s1133] %v1358
          %v1360 = vld [vmem:[%s1140 + $0x1b8] sm:%s1133]
          %1361 = vst [vmem:[%s1141 + $0x1b4] sm:%s1133] %v1360
          %v1362 = vld [vmem:[%s1140 + $0x1ac] sm:%s1133]
          %1363 = vst [vmem:[%s1141 + $0x1b8] sm:%s1133] %v1362
          %v1364 = vld [vmem:[%s1140 + $0x1bc] sm:%s1133]
          %1365 = vst [vmem:[%s1141 + $0x1bc] sm:%s1133] %v1364
          %v1366 = vld [vmem:[%s1140 + $0x1c0] sm:%s1133]
          %1367 = vst [vmem:[%s1141 + $0x1c0] sm:%s1133] %v1366
          %v1368 = vld [vmem:[%s1140 + $0x1d0] sm:%s1133]
          %1369 = vst [vmem:[%s1141 + $0x1c4] sm:%s1133] %v1368
          %v1370 = vld [vmem:[%s1140 + $0x1c4] sm:%s1133]
          %1371 = vst [vmem:[%s1141 + $0x1c8] sm:%s1133] %v1370
          %v1372 = vld [vmem:[%s1140 + $0x1d4] sm:%s1133]
          %1373 = vst [vmem:[%s1141 + $0x1cc] sm:%s1133] %v1372
          %v1374 = vld [vmem:[%s1140 + $0x1c8] sm:%s1133]
          %1375 = vst [vmem:[%s1141 + $0x1d0] sm:%s1133] %v1374
          %v1376 = vld [vmem:[%s1140 + $0x1d8] sm:%s1133]
          %1377 = vst [vmem:[%s1141 + $0x1d4] sm:%s1133] %v1376
          %v1378 = vld [vmem:[%s1140 + $0x1cc] sm:%s1133]
          %1379 = vst [vmem:[%s1141 + $0x1d8] sm:%s1133] %v1378
          %v1380 = vld [vmem:[%s1140 + $0x1dc] sm:%s1133]
          %1381 = vst [vmem:[%s1141 + $0x1dc] sm:%s1133] %v1380
          %v1382 = vld [vmem:[%s1140 + $0x1e0] sm:%s1133]
          %1383 = vst [vmem:[%s1141 + $0x1e0] sm:%s1133] %v1382
          %v1384 = vld [vmem:[%s1140 + $0x1f0] sm:%s1133]
          %1385 = vst [vmem:[%s1141 + $0x1e4] sm:%s1133] %v1384
          %v1386 = vld [vmem:[%s1140 + $0x1e4] sm:%s1133]
          %1387 = vst [vmem:[%s1141 + $0x1e8] sm:%s1133] %v1386
          %v1388 = vld [vmem:[%s1140 + $0x1f4] sm:%s1133]
          %1389 = vst [vmem:[%s1141 + $0x1ec] sm:%s1133] %v1388
          %v1390 = vld [vmem:[%s1140 + $0x1e8] sm:%s1133]
          %1391 = vst [vmem:[%s1141 + $0x1f0] sm:%s1133] %v1390
          %v1392 = vld [vmem:[%s1140 + $0x1f8] sm:%s1133]
          %1393 = vst [vmem:[%s1141 + $0x1f4] sm:%s1133] %v1392
          %v1394 = vld [vmem:[%s1140 + $0x1ec] sm:%s1133]
          %1395 = vst [vmem:[%s1141 + $0x1f8] sm:%s1133] %v1394
          %v1396 = vld [vmem:[%s1140 + $0x1fc] sm:%s1133]
          %1397 = vst [vmem:[%s1141 + $0x1fc] sm:%s1133] %v1396
          %v1398 = vld [vmem:[%s1140 + $0x200] sm:%s1133]
          %1399 = vst [vmem:[%s1141 + $0x200] sm:%s1133] %v1398
          %v1400 = vld [vmem:[%s1140 + $0x210] sm:%s1133]
          %1401 = vst [vmem:[%s1141 + $0x204] sm:%s1133] %v1400
          %v1402 = vld [vmem:[%s1140 + $0x204] sm:%s1133]
          %1403 = vst [vmem:[%s1141 + $0x208] sm:%s1133] %v1402
          %v1404 = vld [vmem:[%s1140 + $0x214] sm:%s1133]
          %1405 = vst [vmem:[%s1141 + $0x20c] sm:%s1133] %v1404
          %v1406 = vld [vmem:[%s1140 + $0x208] sm:%s1133]
          %1407 = vst [vmem:[%s1141 + $0x210] sm:%s1133] %v1406
          %v1408 = vld [vmem:[%s1140 + $0x218] sm:%s1133]
          %1409 = vst [vmem:[%s1141 + $0x214] sm:%s1133] %v1408
          %v1410 = vld [vmem:[%s1140 + $0x20c] sm:%s1133]
          %1411 = vst [vmem:[%s1141 + $0x218] sm:%s1133] %v1410
          %v1412 = vld [vmem:[%s1140 + $0x21c] sm:%s1133]
          %1413 = vst [vmem:[%s1141 + $0x21c] sm:%s1133] %v1412
          %v1414 = vld [vmem:[%s1140 + $0x220] sm:%s1133]
          %1415 = vst [vmem:[%s1141 + $0x220] sm:%s1133] %v1414
          %v1416 = vld [vmem:[%s1140 + $0x230] sm:%s1133]
          %1417 = vst [vmem:[%s1141 + $0x224] sm:%s1133] %v1416
          %v1418 = vld [vmem:[%s1140 + $0x224] sm:%s1133]
          %1419 = vst [vmem:[%s1141 + $0x228] sm:%s1133] %v1418
          %v1420 = vld [vmem:[%s1140 + $0x234] sm:%s1133]
          %1421 = vst [vmem:[%s1141 + $0x22c] sm:%s1133] %v1420
          %v1422 = vld [vmem:[%s1140 + $0x228] sm:%s1133]
          %1423 = vst [vmem:[%s1141 + $0x230] sm:%s1133] %v1422
          %v1424 = vld [vmem:[%s1140 + $0x238] sm:%s1133]
          %1425 = vst [vmem:[%s1141 + $0x234] sm:%s1133] %v1424
          %v1426 = vld [vmem:[%s1140 + $0x22c] sm:%s1133]
          %1427 = vst [vmem:[%s1141 + $0x238] sm:%s1133] %v1426
          %v1428 = vld [vmem:[%s1140 + $0x23c] sm:%s1133]
          %1429 = vst [vmem:[%s1141 + $0x23c] sm:%s1133] %v1428
          %v1430 = vld [vmem:[%s1140 + $0x240] sm:%s1133]
          %1431 = vst [vmem:[%s1141 + $0x240] sm:%s1133] %v1430
          %v1432 = vld [vmem:[%s1140 + $0x250] sm:%s1133]
          %1433 = vst [vmem:[%s1141 + $0x244] sm:%s1133] %v1432
          %v1434 = vld [vmem:[%s1140 + $0x244] sm:%s1133]
          %1435 = vst [vmem:[%s1141 + $0x248] sm:%s1133] %v1434
          %v1436 = vld [vmem:[%s1140 + $0x254] sm:%s1133]
          %1437 = vst [vmem:[%s1141 + $0x24c] sm:%s1133] %v1436
          %v1438 = vld [vmem:[%s1140 + $0x248] sm:%s1133]
          %1439 = vst [vmem:[%s1141 + $0x250] sm:%s1133] %v1438
          %v1440 = vld [vmem:[%s1140 + $0x258] sm:%s1133]
          %1441 = vst [vmem:[%s1141 + $0x254] sm:%s1133] %v1440
          %v1442 = vld [vmem:[%s1140 + $0x24c] sm:%s1133]
          %1443 = vst [vmem:[%s1141 + $0x258] sm:%s1133] %v1442
          %v1444 = vld [vmem:[%s1140 + $0x25c] sm:%s1133]
          %1445 = vst [vmem:[%s1141 + $0x25c] sm:%s1133] %v1444
          %v1446 = vld [vmem:[%s1140 + $0x260] sm:%s1133]
          %1447 = vst [vmem:[%s1141 + $0x260] sm:%s1133] %v1446
          %v1448 = vld [vmem:[%s1140 + $0x270] sm:%s1133]
          %1449 = vst [vmem:[%s1141 + $0x264] sm:%s1133] %v1448
          %v1450 = vld [vmem:[%s1140 + $0x264] sm:%s1133]
          %1451 = vst [vmem:[%s1141 + $0x268] sm:%s1133] %v1450
          %v1452 = vld [vmem:[%s1140 + $0x274] sm:%s1133]
          %1453 = vst [vmem:[%s1141 + $0x26c] sm:%s1133] %v1452
          %v1454 = vld [vmem:[%s1140 + $0x268] sm:%s1133]
          %1455 = vst [vmem:[%s1141 + $0x270] sm:%s1133] %v1454
          %v1456 = vld [vmem:[%s1140 + $0x278] sm:%s1133]
          %1457 = vst [vmem:[%s1141 + $0x274] sm:%s1133] %v1456
          %v1458 = vld [vmem:[%s1140 + $0x26c] sm:%s1133]
          %1459 = vst [vmem:[%s1141 + $0x278] sm:%s1133] %v1458
          %v1460 = vld [vmem:[%s1140 + $0x27c] sm:%s1133]
          %1461 = vst [vmem:[%s1141 + $0x27c] sm:%s1133] %v1460
          %v1462 = vld [vmem:[%s1140 + $0x280] sm:%s1133]
          %1463 = vst [vmem:[%s1141 + $0x280] sm:%s1133] %v1462
          %v1464 = vld [vmem:[%s1140 + $0x290] sm:%s1133]
          %1465 = vst [vmem:[%s1141 + $0x284] sm:%s1133] %v1464
          %v1466 = vld [vmem:[%s1140 + $0x284] sm:%s1133]
          %1467 = vst [vmem:[%s1141 + $0x288] sm:%s1133] %v1466
          %v1468 = vld [vmem:[%s1140 + $0x294] sm:%s1133]
          %1469 = vst [vmem:[%s1141 + $0x28c] sm:%s1133] %v1468
          %v1470 = vld [vmem:[%s1140 + $0x288] sm:%s1133]
          %1471 = vst [vmem:[%s1141 + $0x290] sm:%s1133] %v1470
          %v1472 = vld [vmem:[%s1140 + $0x298] sm:%s1133]
          %1473 = vst [vmem:[%s1141 + $0x294] sm:%s1133] %v1472
          %v1474 = vld [vmem:[%s1140 + $0x28c] sm:%s1133]
          %1475 = vst [vmem:[%s1141 + $0x298] sm:%s1133] %v1474
          %v1476 = vld [vmem:[%s1140 + $0x29c] sm:%s1133]
          %1477 = vst [vmem:[%s1141 + $0x29c] sm:%s1133] %v1476
          %v1478 = vld [vmem:[%s1140 + $0x2a0] sm:%s1133]
          %1479 = vst [vmem:[%s1141 + $0x2a0] sm:%s1133] %v1478
          %v1480 = vld [vmem:[%s1140 + $0x2b0] sm:%s1133]
          %1481 = vst [vmem:[%s1141 + $0x2a4] sm:%s1133] %v1480
          %v1482 = vld [vmem:[%s1140 + $0x2a4] sm:%s1133]
          %1483 = vst [vmem:[%s1141 + $0x2a8] sm:%s1133] %v1482
          %v1484 = vld [vmem:[%s1140 + $0x2b4] sm:%s1133]
          %1485 = vst [vmem:[%s1141 + $0x2ac] sm:%s1133] %v1484
          %v1486 = vld [vmem:[%s1140 + $0x2a8] sm:%s1133]
          %1487 = vst [vmem:[%s1141 + $0x2b0] sm:%s1133] %v1486
          %v1488 = vld [vmem:[%s1140 + $0x2b8] sm:%s1133]
          %1489 = vst [vmem:[%s1141 + $0x2b4] sm:%s1133] %v1488
          %v1490 = vld [vmem:[%s1140 + $0x2ac] sm:%s1133]
          %1491 = vst [vmem:[%s1141 + $0x2b8] sm:%s1133] %v1490
          %v1492 = vld [vmem:[%s1140 + $0x2bc] sm:%s1133]
          %1493 = vst [vmem:[%s1141 + $0x2bc] sm:%s1133] %v1492
          %v1494 = vld [vmem:[%s1140 + $0x2c0] sm:%s1133]
          %1495 = vst [vmem:[%s1141 + $0x2c0] sm:%s1133] %v1494
          %v1496 = vld [vmem:[%s1140 + $0x2d0] sm:%s1133]
          %1497 = vst [vmem:[%s1141 + $0x2c4] sm:%s1133] %v1496
          %v1498 = vld [vmem:[%s1140 + $0x2c4] sm:%s1133]
          %1499 = vst [vmem:[%s1141 + $0x2c8] sm:%s1133] %v1498
          %v1500 = vld [vmem:[%s1140 + $0x2d4] sm:%s1133]
          %1501 = vst [vmem:[%s1141 + $0x2cc] sm:%s1133] %v1500
          %v1502 = vld [vmem:[%s1140 + $0x2c8] sm:%s1133]
          %1503 = vst [vmem:[%s1141 + $0x2d0] sm:%s1133] %v1502
          %v1504 = vld [vmem:[%s1140 + $0x2d8] sm:%s1133]
          %1505 = vst [vmem:[%s1141 + $0x2d4] sm:%s1133] %v1504
          %v1506 = vld [vmem:[%s1140 + $0x2cc] sm:%s1133]
          %1507 = vst [vmem:[%s1141 + $0x2d8] sm:%s1133] %v1506
          %v1508 = vld [vmem:[%s1140 + $0x2dc] sm:%s1133]
          %1509 = vst [vmem:[%s1141 + $0x2dc] sm:%s1133] %v1508
          %v1510 = vld [vmem:[%s1140 + $0x2e0] sm:%s1133]
          %1511 = vst [vmem:[%s1141 + $0x2e0] sm:%s1133] %v1510
          %v1512 = vld [vmem:[%s1140 + $0x2f0] sm:%s1133]
          %1513 = vst [vmem:[%s1141 + $0x2e4] sm:%s1133] %v1512
          %v1514 = vld [vmem:[%s1140 + $0x2e4] sm:%s1133]
          %1515 = vst [vmem:[%s1141 + $0x2e8] sm:%s1133] %v1514
          %v1516 = vld [vmem:[%s1140 + $0x2f4] sm:%s1133]
          %1517 = vst [vmem:[%s1141 + $0x2ec] sm:%s1133] %v1516
          %v1518 = vld [vmem:[%s1140 + $0x2e8] sm:%s1133]
          %1519 = vst [vmem:[%s1141 + $0x2f0] sm:%s1133] %v1518
          %v1520 = vld [vmem:[%s1140 + $0x2f8] sm:%s1133]
          %1521 = vst [vmem:[%s1141 + $0x2f4] sm:%s1133] %v1520
          %v1522 = vld [vmem:[%s1140 + $0x2ec] sm:%s1133]
          %1523 = vst [vmem:[%s1141 + $0x2f8] sm:%s1133] %v1522
          %v1524 = vld [vmem:[%s1140 + $0x2fc] sm:%s1133]
          %1525 = vst [vmem:[%s1141 + $0x2fc] sm:%s1133] %v1524
          %v1526 = vld [vmem:[%s1140 + $0x300] sm:%s1133]
          %1527 = vst [vmem:[%s1141 + $0x300] sm:%s1133] %v1526
          %v1528 = vld [vmem:[%s1140 + $0x310] sm:%s1133]
          %1529 = vst [vmem:[%s1141 + $0x304] sm:%s1133] %v1528
          %v1530 = vld [vmem:[%s1140 + $0x304] sm:%s1133]
          %1531 = vst [vmem:[%s1141 + $0x308] sm:%s1133] %v1530
          %v1532 = vld [vmem:[%s1140 + $0x314] sm:%s1133]
          %1533 = vst [vmem:[%s1141 + $0x30c] sm:%s1133] %v1532
          %v1534 = vld [vmem:[%s1140 + $0x308] sm:%s1133]
          %1535 = vst [vmem:[%s1141 + $0x310] sm:%s1133] %v1534
          %v1536 = vld [vmem:[%s1140 + $0x318] sm:%s1133]
          %1537 = vst [vmem:[%s1141 + $0x314] sm:%s1133] %v1536
          %v1538 = vld [vmem:[%s1140 + $0x30c] sm:%s1133]
          %1539 = vst [vmem:[%s1141 + $0x318] sm:%s1133] %v1538
          %v1540 = vld [vmem:[%s1140 + $0x31c] sm:%s1133]
          %1541 = vst [vmem:[%s1141 + $0x31c] sm:%s1133] %v1540
          %v1542 = vld [vmem:[%s1140 + $0x320] sm:%s1133]
          %1543 = vst [vmem:[%s1141 + $0x320] sm:%s1133] %v1542
          %v1544 = vld [vmem:[%s1140 + $0x330] sm:%s1133]
          %1545 = vst [vmem:[%s1141 + $0x324] sm:%s1133] %v1544
          %v1546 = vld [vmem:[%s1140 + $0x324] sm:%s1133]
          %1547 = vst [vmem:[%s1141 + $0x328] sm:%s1133] %v1546
          %v1548 = vld [vmem:[%s1140 + $0x334] sm:%s1133]
          %1549 = vst [vmem:[%s1141 + $0x32c] sm:%s1133] %v1548
          %v1550 = vld [vmem:[%s1140 + $0x328] sm:%s1133]
          %1551 = vst [vmem:[%s1141 + $0x330] sm:%s1133] %v1550
          %v1552 = vld [vmem:[%s1140 + $0x338] sm:%s1133]
          %1553 = vst [vmem:[%s1141 + $0x334] sm:%s1133] %v1552
          %v1554 = vld [vmem:[%s1140 + $0x32c] sm:%s1133]
          %1555 = vst [vmem:[%s1141 + $0x338] sm:%s1133] %v1554
          %v1556 = vld [vmem:[%s1140 + $0x33c] sm:%s1133]
          %1557 = vst [vmem:[%s1141 + $0x33c] sm:%s1133] %v1556
          %v1558 = vld [vmem:[%s1140 + $0x340] sm:%s1133]
          %1559 = vst [vmem:[%s1141 + $0x340] sm:%s1133] %v1558
          %v1560 = vld [vmem:[%s1140 + $0x350] sm:%s1133]
          %1561 = vst [vmem:[%s1141 + $0x344] sm:%s1133] %v1560
          %v1562 = vld [vmem:[%s1140 + $0x344] sm:%s1133]
          %1563 = vst [vmem:[%s1141 + $0x348] sm:%s1133] %v1562
          %v1564 = vld [vmem:[%s1140 + $0x354] sm:%s1133]
          %1565 = vst [vmem:[%s1141 + $0x34c] sm:%s1133] %v1564
          %v1566 = vld [vmem:[%s1140 + $0x348] sm:%s1133]
          %1567 = vst [vmem:[%s1141 + $0x350] sm:%s1133] %v1566
          %v1568 = vld [vmem:[%s1140 + $0x358] sm:%s1133]
          %1569 = vst [vmem:[%s1141 + $0x354] sm:%s1133] %v1568
          %v1570 = vld [vmem:[%s1140 + $0x34c] sm:%s1133]
          %1571 = vst [vmem:[%s1141 + $0x358] sm:%s1133] %v1570
          %v1572 = vld [vmem:[%s1140 + $0x35c] sm:%s1133]
          %1573 = vst [vmem:[%s1141 + $0x35c] sm:%s1133] %v1572
          %v1574 = vld [vmem:[%s1140 + $0x360] sm:%s1133]
          %1575 = vst [vmem:[%s1141 + $0x360] sm:%s1133] %v1574
          %v1576 = vld [vmem:[%s1140 + $0x370] sm:%s1133]
          %1577 = vst [vmem:[%s1141 + $0x364] sm:%s1133] %v1576
          %v1578 = vld [vmem:[%s1140 + $0x364] sm:%s1133]
          %1579 = vst [vmem:[%s1141 + $0x368] sm:%s1133] %v1578
          %v1580 = vld [vmem:[%s1140 + $0x374] sm:%s1133]
          %1581 = vst [vmem:[%s1141 + $0x36c] sm:%s1133] %v1580
          %v1582 = vld [vmem:[%s1140 + $0x368] sm:%s1133]
          %1583 = vst [vmem:[%s1141 + $0x370] sm:%s1133] %v1582
          %v1584 = vld [vmem:[%s1140 + $0x378] sm:%s1133]
          %1585 = vst [vmem:[%s1141 + $0x374] sm:%s1133] %v1584
          %v1586 = vld [vmem:[%s1140 + $0x36c] sm:%s1133]
          %1587 = vst [vmem:[%s1141 + $0x378] sm:%s1133] %v1586
          %v1588 = vld [vmem:[%s1140 + $0x37c] sm:%s1133]
          %1589 = vst [vmem:[%s1141 + $0x37c] sm:%s1133] %v1588
          %v1590 = vld [vmem:[%s1140 + $0x380] sm:%s1133]
          %1591 = vst [vmem:[%s1141 + $0x380] sm:%s1133] %v1590
          %v1592 = vld [vmem:[%s1140 + $0x390] sm:%s1133]
          %1593 = vst [vmem:[%s1141 + $0x384] sm:%s1133] %v1592
          %v1594 = vld [vmem:[%s1140 + $0x384] sm:%s1133]
          %1595 = vst [vmem:[%s1141 + $0x388] sm:%s1133] %v1594
          %v1596 = vld [vmem:[%s1140 + $0x394] sm:%s1133]
          %1597 = vst [vmem:[%s1141 + $0x38c] sm:%s1133] %v1596
          %v1598 = vld [vmem:[%s1140 + $0x388] sm:%s1133]
          %1599 = vst [vmem:[%s1141 + $0x390] sm:%s1133] %v1598
          %v1600 = vld [vmem:[%s1140 + $0x398] sm:%s1133]
          %1601 = vst [vmem:[%s1141 + $0x394] sm:%s1133] %v1600
          %v1602 = vld [vmem:[%s1140 + $0x38c] sm:%s1133]
          %1603 = vst [vmem:[%s1141 + $0x398] sm:%s1133] %v1602
          %v1604 = vld [vmem:[%s1140 + $0x39c] sm:%s1133]
          %1605 = vst [vmem:[%s1141 + $0x39c] sm:%s1133] %v1604
          %v1606 = vld [vmem:[%s1140 + $0x3a0] sm:%s1133]
          %1607 = vst [vmem:[%s1141 + $0x3a0] sm:%s1133] %v1606
          %v1608 = vld [vmem:[%s1140 + $0x3b0] sm:%s1133]
          %1609 = vst [vmem:[%s1141 + $0x3a4] sm:%s1133] %v1608
          %v1610 = vld [vmem:[%s1140 + $0x3a4] sm:%s1133]
          %1611 = vst [vmem:[%s1141 + $0x3a8] sm:%s1133] %v1610
          %v1612 = vld [vmem:[%s1140 + $0x3b4] sm:%s1133]
          %1613 = vst [vmem:[%s1141 + $0x3ac] sm:%s1133] %v1612
          %v1614 = vld [vmem:[%s1140 + $0x3a8] sm:%s1133]
          %1615 = vst [vmem:[%s1141 + $0x3b0] sm:%s1133] %v1614
          %v1616 = vld [vmem:[%s1140 + $0x3b8] sm:%s1133]
          %1617 = vst [vmem:[%s1141 + $0x3b4] sm:%s1133] %v1616
          %v1618 = vld [vmem:[%s1140 + $0x3ac] sm:%s1133]
          %1619 = vst [vmem:[%s1141 + $0x3b8] sm:%s1133] %v1618
          %v1620 = vld [vmem:[%s1140 + $0x3bc] sm:%s1133]
          %1621 = vst [vmem:[%s1141 + $0x3bc] sm:%s1133] %v1620
          %v1622 = vld [vmem:[%s1140 + $0x3c0] sm:%s1133]
          %1623 = vst [vmem:[%s1141 + $0x3c0] sm:%s1133] %v1622
          %v1624 = vld [vmem:[%s1140 + $0x3d0] sm:%s1133]
          %1625 = vst [vmem:[%s1141 + $0x3c4] sm:%s1133] %v1624
          %v1626 = vld [vmem:[%s1140 + $0x3c4] sm:%s1133]
          %1627 = vst [vmem:[%s1141 + $0x3c8] sm:%s1133] %v1626
          %v1628 = vld [vmem:[%s1140 + $0x3d4] sm:%s1133]
          %1629 = vst [vmem:[%s1141 + $0x3cc] sm:%s1133] %v1628
          %v1630 = vld [vmem:[%s1140 + $0x3c8] sm:%s1133]
          %1631 = vst [vmem:[%s1141 + $0x3d0] sm:%s1133] %v1630
          %v1632 = vld [vmem:[%s1140 + $0x3d8] sm:%s1133]
          %1633 = vst [vmem:[%s1141 + $0x3d4] sm:%s1133] %v1632
          %v1634 = vld [vmem:[%s1140 + $0x3cc] sm:%s1133]
          %1635 = vst [vmem:[%s1141 + $0x3d8] sm:%s1133] %v1634
          %v1636 = vld [vmem:[%s1140 + $0x3dc] sm:%s1133]
          %1637 = vst [vmem:[%s1141 + $0x3dc] sm:%s1133] %v1636
          %v1638 = vld [vmem:[%s1140 + $0x3e0] sm:%s1133]
          %1639 = vst [vmem:[%s1141 + $0x3e0] sm:%s1133] %v1638
          %v1640 = vld [vmem:[%s1140 + $0x3f0] sm:%s1133]
          %1641 = vst [vmem:[%s1141 + $0x3e4] sm:%s1133] %v1640
          %v1642 = vld [vmem:[%s1140 + $0x3e4] sm:%s1133]
          %1643 = vst [vmem:[%s1141 + $0x3e8] sm:%s1133] %v1642
          %v1644 = vld [vmem:[%s1140 + $0x3f4] sm:%s1133]
          %1645 = vst [vmem:[%s1141 + $0x3ec] sm:%s1133] %v1644
          %v1646 = vld [vmem:[%s1140 + $0x3e8] sm:%s1133]
          %1647 = vst [vmem:[%s1141 + $0x3f0] sm:%s1133] %v1646
          %v1648 = vld [vmem:[%s1140 + $0x3f8] sm:%s1133]
          %1649 = vst [vmem:[%s1141 + $0x3f4] sm:%s1133] %v1648
          %v1650 = vld [vmem:[%s1140 + $0x3ec] sm:%s1133]
          %1651 = vst [vmem:[%s1141 + $0x3f8] sm:%s1133] %v1650
          %v1652 = vld [vmem:[%s1140 + $0x3fc] sm:%s1133]
          %1653 = vst [vmem:[%s1141 + $0x3fc] sm:%s1133] %v1652
        $region82: #{model_forward.1} parent=69 // loop_footer
          %s1139 = sadd.s32 1, %s1135
        $region83: #{model_forward.1} parent=69 // loop_footer_branch
          %1134 = sbr.rel target = $region79
        $region84: #{model_forward.1} parent=69 // loop_exit
          _
      $region70: #{model_forward.1} parent=54 // pred_fallthru
        _
    $region55: #{model_forward.1} parent=1 // pred_fallthru
      _
    // Predicated region
    $region56: #{model_forward.1} parent=1 // pred_check
      %p591 = pneg %p587
    $region57: #{model_forward.1} parent=1 // pred_check_branch
      %593 = sbr.rel (%p591) target = $region59
    $region58: #{model_forward.1} parent=1 // pred_region
      %s594 = sshllo.u32 0, 4
      loop: start=0, step=1, limit=1
      $region60: #{model_forward.1} parent=58 // loop_pre_header
        _
      $region61: #{model_forward.1} parent=58 // loop_header
        %s596 = sphi 0, %s600
        %p597 = scmp.ge.s32.totalorder %s596, 1
        %s601 = sphi %s4, %s4
        %s602 = sphi [#allocation3], [#allocation3]
      $region62: #{model_forward.1} parent=58 // loop_header_branch
        %599 = sbr.rel (%p597) target = $region66
      $region63: #{model_forward.1} parent=58 // loop_body
        %v603 = vld [vmem:[%s601] sm:%s594]
        %604 = vst [vmem:[%s602] sm:%s594] %v603
        %v605 = vld [vmem:[%s601 + $0x10] sm:%s594]
        %606 = vst [vmem:[%s602 + $0x4] sm:%s594] %v605
        %v607 = vld [vmem:[%s601 + $0x4] sm:%s594]
        %608 = vst [vmem:[%s602 + $0x8] sm:%s594] %v607
        %v609 = vld [vmem:[%s601 + $0x14] sm:%s594]
        %610 = vst [vmem:[%s602 + $0xc] sm:%s594] %v609
        %v611 = vld [vmem:[%s601 + $0x8] sm:%s594]
        %612 = vst [vmem:[%s602 + $0x10] sm:%s594] %v611
        %v613 = vld [vmem:[%s601 + $0x18] sm:%s594]
        %614 = vst [vmem:[%s602 + $0x14] sm:%s594] %v613
        %v615 = vld [vmem:[%s601 + $0xc] sm:%s594]
        %616 = vst [vmem:[%s602 + $0x18] sm:%s594] %v615
        %v617 = vld [vmem:[%s601 + $0x1c] sm:%s594]
        %618 = vst [vmem:[%s602 + $0x1c] sm:%s594] %v617
        %v619 = vld [vmem:[%s601 + $0x20] sm:%s594]
        %620 = vst [vmem:[%s602 + $0x20] sm:%s594] %v619
        %v621 = vld [vmem:[%s601 + $0x30] sm:%s594]
        %622 = vst [vmem:[%s602 + $0x24] sm:%s594] %v621
        %v623 = vld [vmem:[%s601 + $0x24] sm:%s594]
        %624 = vst [vmem:[%s602 + $0x28] sm:%s594] %v623
        %v625 = vld [vmem:[%s601 + $0x34] sm:%s594]
        %626 = vst [vmem:[%s602 + $0x2c] sm:%s594] %v625
        %v627 = vld [vmem:[%s601 + $0x28] sm:%s594]
        %628 = vst [vmem:[%s602 + $0x30] sm:%s594] %v627
        %v629 = vld [vmem:[%s601 + $0x38] sm:%s594]
        %630 = vst [vmem:[%s602 + $0x34] sm:%s594] %v629
        %v631 = vld [vmem:[%s601 + $0x2c] sm:%s594]
        %632 = vst [vmem:[%s602 + $0x38] sm:%s594] %v631
        %v633 = vld [vmem:[%s601 + $0x3c] sm:%s594]
        %634 = vst [vmem:[%s602 + $0x3c] sm:%s594] %v633
        %v635 = vld [vmem:[%s601 + $0x40] sm:%s594]
        %636 = vst [vmem:[%s602 + $0x40] sm:%s594] %v635
        %v637 = vld [vmem:[%s601 + $0x50] sm:%s594]
        %638 = vst [vmem:[%s602 + $0x44] sm:%s594] %v637
        %v639 = vld [vmem:[%s601 + $0x44] sm:%s594]
        %640 = vst [vmem:[%s602 + $0x48] sm:%s594] %v639
        %v641 = vld [vmem:[%s601 + $0x54] sm:%s594]
        %642 = vst [vmem:[%s602 + $0x4c] sm:%s594] %v641
        %v643 = vld [vmem:[%s601 + $0x48] sm:%s594]
        %644 = vst [vmem:[%s602 + $0x50] sm:%s594] %v643
        %v645 = vld [vmem:[%s601 + $0x58] sm:%s594]
        %646 = vst [vmem:[%s602 + $0x54] sm:%s594] %v645
        %v647 = vld [vmem:[%s601 + $0x4c] sm:%s594]
        %648 = vst [vmem:[%s602 + $0x58] sm:%s594] %v647
        %v649 = vld [vmem:[%s601 + $0x5c] sm:%s594]
        %650 = vst [vmem:[%s602 + $0x5c] sm:%s594] %v649
        %v651 = vld [vmem:[%s601 + $0x60] sm:%s594]
        %652 = vst [vmem:[%s602 + $0x60] sm:%s594] %v651
        %v653 = vld [vmem:[%s601 + $0x70] sm:%s594]
        %654 = vst [vmem:[%s602 + $0x64] sm:%s594] %v653
        %v655 = vld [vmem:[%s601 + $0x64] sm:%s594]
        %656 = vst [vmem:[%s602 + $0x68] sm:%s594] %v655
        %v657 = vld [vmem:[%s601 + $0x74] sm:%s594]
        %658 = vst [vmem:[%s602 + $0x6c] sm:%s594] %v657
        %v659 = vld [vmem:[%s601 + $0x68] sm:%s594]
        %660 = vst [vmem:[%s602 + $0x70] sm:%s594] %v659
        %v661 = vld [vmem:[%s601 + $0x78] sm:%s594]
        %662 = vst [vmem:[%s602 + $0x74] sm:%s594] %v661
        %v663 = vld [vmem:[%s601 + $0x6c] sm:%s594]
        %664 = vst [vmem:[%s602 + $0x78] sm:%s594] %v663
        %v665 = vld [vmem:[%s601 + $0x7c] sm:%s594]
        %666 = vst [vmem:[%s602 + $0x7c] sm:%s594] %v665
        %v667 = vld [vmem:[%s601 + $0x80] sm:%s594]
        %668 = vst [vmem:[%s602 + $0x80] sm:%s594] %v667
        %v669 = vld [vmem:[%s601 + $0x90] sm:%s594]
        %670 = vst [vmem:[%s602 + $0x84] sm:%s594] %v669
        %v671 = vld [vmem:[%s601 + $0x84] sm:%s594]
        %672 = vst [vmem:[%s602 + $0x88] sm:%s594] %v671
        %v673 = vld [vmem:[%s601 + $0x94] sm:%s594]
        %674 = vst [vmem:[%s602 + $0x8c] sm:%s594] %v673
        %v675 = vld [vmem:[%s601 + $0x88] sm:%s594]
        %676 = vst [vmem:[%s602 + $0x90] sm:%s594] %v675
        %v677 = vld [vmem:[%s601 + $0x98] sm:%s594]
        %678 = vst [vmem:[%s602 + $0x94] sm:%s594] %v677
        %v679 = vld [vmem:[%s601 + $0x8c] sm:%s594]
        %680 = vst [vmem:[%s602 + $0x98] sm:%s594] %v679
        %v681 = vld [vmem:[%s601 + $0x9c] sm:%s594]
        %682 = vst [vmem:[%s602 + $0x9c] sm:%s594] %v681
        %v683 = vld [vmem:[%s601 + $0xa0] sm:%s594]
        %684 = vst [vmem:[%s602 + $0xa0] sm:%s594] %v683
        %v685 = vld [vmem:[%s601 + $0xb0] sm:%s594]
        %686 = vst [vmem:[%s602 + $0xa4] sm:%s594] %v685
        %v687 = vld [vmem:[%s601 + $0xa4] sm:%s594]
        %688 = vst [vmem:[%s602 + $0xa8] sm:%s594] %v687
        %v689 = vld [vmem:[%s601 + $0xb4] sm:%s594]
        %690 = vst [vmem:[%s602 + $0xac] sm:%s594] %v689
        %v691 = vld [vmem:[%s601 + $0xa8] sm:%s594]
        %692 = vst [vmem:[%s602 + $0xb0] sm:%s594] %v691
        %v693 = vld [vmem:[%s601 + $0xb8] sm:%s594]
        %694 = vst [vmem:[%s602 + $0xb4] sm:%s594] %v693
        %v695 = vld [vmem:[%s601 + $0xac] sm:%s594]
        %696 = vst [vmem:[%s602 + $0xb8] sm:%s594] %v695
        %v697 = vld [vmem:[%s601 + $0xbc] sm:%s594]
        %698 = vst [vmem:[%s602 + $0xbc] sm:%s594] %v697
        %v699 = vld [vmem:[%s601 + $0xc0] sm:%s594]
        %700 = vst [vmem:[%s602 + $0xc0] sm:%s594] %v699
        %v701 = vld [vmem:[%s601 + $0xd0] sm:%s594]
        %702 = vst [vmem:[%s602 + $0xc4] sm:%s594] %v701
        %v703 = vld [vmem:[%s601 + $0xc4] sm:%s594]
        %704 = vst [vmem:[%s602 + $0xc8] sm:%s594] %v703
        %v705 = vld [vmem:[%s601 + $0xd4] sm:%s594]
        %706 = vst [vmem:[%s602 + $0xcc] sm:%s594] %v705
        %v707 = vld [vmem:[%s601 + $0xc8] sm:%s594]
        %708 = vst [vmem:[%s602 + $0xd0] sm:%s594] %v707
        %v709 = vld [vmem:[%s601 + $0xd8] sm:%s594]
        %710 = vst [vmem:[%s602 + $0xd4] sm:%s594] %v709
        %v711 = vld [vmem:[%s601 + $0xcc] sm:%s594]
        %712 = vst [vmem:[%s602 + $0xd8] sm:%s594] %v711
        %v713 = vld [vmem:[%s601 + $0xdc] sm:%s594]
        %714 = vst [vmem:[%s602 + $0xdc] sm:%s594] %v713
        %v715 = vld [vmem:[%s601 + $0xe0] sm:%s594]
        %716 = vst [vmem:[%s602 + $0xe0] sm:%s594] %v715
        %v717 = vld [vmem:[%s601 + $0xf0] sm:%s594]
        %718 = vst [vmem:[%s602 + $0xe4] sm:%s594] %v717
        %v719 = vld [vmem:[%s601 + $0xe4] sm:%s594]
        %720 = vst [vmem:[%s602 + $0xe8] sm:%s594] %v719
        %v721 = vld [vmem:[%s601 + $0xf4] sm:%s594]
        %722 = vst [vmem:[%s602 + $0xec] sm:%s594] %v721
        %v723 = vld [vmem:[%s601 + $0xe8] sm:%s594]
        %724 = vst [vmem:[%s602 + $0xf0] sm:%s594] %v723
        %v725 = vld [vmem:[%s601 + $0xf8] sm:%s594]
        %726 = vst [vmem:[%s602 + $0xf4] sm:%s594] %v725
        %v727 = vld [vmem:[%s601 + $0xec] sm:%s594]
        %728 = vst [vmem:[%s602 + $0xf8] sm:%s594] %v727
        %v729 = vld [vmem:[%s601 + $0xfc] sm:%s594]
        %730 = vst [vmem:[%s602 + $0xfc] sm:%s594] %v729
        %v731 = vld [vmem:[%s601 + $0x100] sm:%s594]
        %732 = vst [vmem:[%s602 + $0x100] sm:%s594] %v731
        %v733 = vld [vmem:[%s601 + $0x110] sm:%s594]
        %734 = vst [vmem:[%s602 + $0x104] sm:%s594] %v733
        %v735 = vld [vmem:[%s601 + $0x104] sm:%s594]
        %736 = vst [vmem:[%s602 + $0x108] sm:%s594] %v735
        %v737 = vld [vmem:[%s601 + $0x114] sm:%s594]
        %738 = vst [vmem:[%s602 + $0x10c] sm:%s594] %v737
        %v739 = vld [vmem:[%s601 + $0x108] sm:%s594]
        %740 = vst [vmem:[%s602 + $0x110] sm:%s594] %v739
        %v741 = vld [vmem:[%s601 + $0x118] sm:%s594]
        %742 = vst [vmem:[%s602 + $0x114] sm:%s594] %v741
        %v743 = vld [vmem:[%s601 + $0x10c] sm:%s594]
        %744 = vst [vmem:[%s602 + $0x118] sm:%s594] %v743
        %v745 = vld [vmem:[%s601 + $0x11c] sm:%s594]
        %746 = vst [vmem:[%s602 + $0x11c] sm:%s594] %v745
        %v747 = vld [vmem:[%s601 + $0x120] sm:%s594]
        %748 = vst [vmem:[%s602 + $0x120] sm:%s594] %v747
        %v749 = vld [vmem:[%s601 + $0x130] sm:%s594]
        %750 = vst [vmem:[%s602 + $0x124] sm:%s594] %v749
        %v751 = vld [vmem:[%s601 + $0x124] sm:%s594]
        %752 = vst [vmem:[%s602 + $0x128] sm:%s594] %v751
        %v753 = vld [vmem:[%s601 + $0x134] sm:%s594]
        %754 = vst [vmem:[%s602 + $0x12c] sm:%s594] %v753
        %v755 = vld [vmem:[%s601 + $0x128] sm:%s594]
        %756 = vst [vmem:[%s602 + $0x130] sm:%s594] %v755
        %v757 = vld [vmem:[%s601 + $0x138] sm:%s594]
        %758 = vst [vmem:[%s602 + $0x134] sm:%s594] %v757
        %v759 = vld [vmem:[%s601 + $0x12c] sm:%s594]
        %760 = vst [vmem:[%s602 + $0x138] sm:%s594] %v759
        %v761 = vld [vmem:[%s601 + $0x13c] sm:%s594]
        %762 = vst [vmem:[%s602 + $0x13c] sm:%s594] %v761
        %v763 = vld [vmem:[%s601 + $0x140] sm:%s594]
        %764 = vst [vmem:[%s602 + $0x140] sm:%s594] %v763
        %v765 = vld [vmem:[%s601 + $0x150] sm:%s594]
        %766 = vst [vmem:[%s602 + $0x144] sm:%s594] %v765
        %v767 = vld [vmem:[%s601 + $0x144] sm:%s594]
        %768 = vst [vmem:[%s602 + $0x148] sm:%s594] %v767
        %v769 = vld [vmem:[%s601 + $0x154] sm:%s594]
        %770 = vst [vmem:[%s602 + $0x14c] sm:%s594] %v769
        %v771 = vld [vmem:[%s601 + $0x148] sm:%s594]
        %772 = vst [vmem:[%s602 + $0x150] sm:%s594] %v771
        %v773 = vld [vmem:[%s601 + $0x158] sm:%s594]
        %774 = vst [vmem:[%s602 + $0x154] sm:%s594] %v773
        %v775 = vld [vmem:[%s601 + $0x14c] sm:%s594]
        %776 = vst [vmem:[%s602 + $0x158] sm:%s594] %v775
        %v777 = vld [vmem:[%s601 + $0x15c] sm:%s594]
        %778 = vst [vmem:[%s602 + $0x15c] sm:%s594] %v777
        %v779 = vld [vmem:[%s601 + $0x160] sm:%s594]
        %780 = vst [vmem:[%s602 + $0x160] sm:%s594] %v779
        %v781 = vld [vmem:[%s601 + $0x170] sm:%s594]
        %782 = vst [vmem:[%s602 + $0x164] sm:%s594] %v781
        %v783 = vld [vmem:[%s601 + $0x164] sm:%s594]
        %784 = vst [vmem:[%s602 + $0x168] sm:%s594] %v783
        %v785 = vld [vmem:[%s601 + $0x174] sm:%s594]
        %786 = vst [vmem:[%s602 + $0x16c] sm:%s594] %v785
        %v787 = vld [vmem:[%s601 + $0x168] sm:%s594]
        %788 = vst [vmem:[%s602 + $0x170] sm:%s594] %v787
        %v789 = vld [vmem:[%s601 + $0x178] sm:%s594]
        %790 = vst [vmem:[%s602 + $0x174] sm:%s594] %v789
        %v791 = vld [vmem:[%s601 + $0x16c] sm:%s594]
        %792 = vst [vmem:[%s602 + $0x178] sm:%s594] %v791
        %v793 = vld [vmem:[%s601 + $0x17c] sm:%s594]
        %794 = vst [vmem:[%s602 + $0x17c] sm:%s594] %v793
        %v795 = vld [vmem:[%s601 + $0x180] sm:%s594]
        %796 = vst [vmem:[%s602 + $0x180] sm:%s594] %v795
        %v797 = vld [vmem:[%s601 + $0x190] sm:%s594]
        %798 = vst [vmem:[%s602 + $0x184] sm:%s594] %v797
        %v799 = vld [vmem:[%s601 + $0x184] sm:%s594]
        %800 = vst [vmem:[%s602 + $0x188] sm:%s594] %v799
        %v801 = vld [vmem:[%s601 + $0x194] sm:%s594]
        %802 = vst [vmem:[%s602 + $0x18c] sm:%s594] %v801
        %v803 = vld [vmem:[%s601 + $0x188] sm:%s594]
        %804 = vst [vmem:[%s602 + $0x190] sm:%s594] %v803
        %v805 = vld [vmem:[%s601 + $0x198] sm:%s594]
        %806 = vst [vmem:[%s602 + $0x194] sm:%s594] %v805
        %v807 = vld [vmem:[%s601 + $0x18c] sm:%s594]
        %808 = vst [vmem:[%s602 + $0x198] sm:%s594] %v807
        %v809 = vld [vmem:[%s601 + $0x19c] sm:%s594]
        %810 = vst [vmem:[%s602 + $0x19c] sm:%s594] %v809
        %v811 = vld [vmem:[%s601 + $0x1a0] sm:%s594]
        %812 = vst [vmem:[%s602 + $0x1a0] sm:%s594] %v811
        %v813 = vld [vmem:[%s601 + $0x1b0] sm:%s594]
        %814 = vst [vmem:[%s602 + $0x1a4] sm:%s594] %v813
        %v815 = vld [vmem:[%s601 + $0x1a4] sm:%s594]
        %816 = vst [vmem:[%s602 + $0x1a8] sm:%s594] %v815
        %v817 = vld [vmem:[%s601 + $0x1b4] sm:%s594]
        %818 = vst [vmem:[%s602 + $0x1ac] sm:%s594] %v817
        %v819 = vld [vmem:[%s601 + $0x1a8] sm:%s594]
        %820 = vst [vmem:[%s602 + $0x1b0] sm:%s594] %v819
        %v821 = vld [vmem:[%s601 + $0x1b8] sm:%s594]
        %822 = vst [vmem:[%s602 + $0x1b4] sm:%s594] %v821
        %v823 = vld [vmem:[%s601 + $0x1ac] sm:%s594]
        %824 = vst [vmem:[%s602 + $0x1b8] sm:%s594] %v823
        %v825 = vld [vmem:[%s601 + $0x1bc] sm:%s594]
        %826 = vst [vmem:[%s602 + $0x1bc] sm:%s594] %v825
        %v827 = vld [vmem:[%s601 + $0x1c0] sm:%s594]
        %828 = vst [vmem:[%s602 + $0x1c0] sm:%s594] %v827
        %v829 = vld [vmem:[%s601 + $0x1d0] sm:%s594]
        %830 = vst [vmem:[%s602 + $0x1c4] sm:%s594] %v829
        %v831 = vld [vmem:[%s601 + $0x1c4] sm:%s594]
        %832 = vst [vmem:[%s602 + $0x1c8] sm:%s594] %v831
        %v833 = vld [vmem:[%s601 + $0x1d4] sm:%s594]
        %834 = vst [vmem:[%s602 + $0x1cc] sm:%s594] %v833
        %v835 = vld [vmem:[%s601 + $0x1c8] sm:%s594]
        %836 = vst [vmem:[%s602 + $0x1d0] sm:%s594] %v835
        %v837 = vld [vmem:[%s601 + $0x1d8] sm:%s594]
        %838 = vst [vmem:[%s602 + $0x1d4] sm:%s594] %v837
        %v839 = vld [vmem:[%s601 + $0x1cc] sm:%s594]
        %840 = vst [vmem:[%s602 + $0x1d8] sm:%s594] %v839
        %v841 = vld [vmem:[%s601 + $0x1dc] sm:%s594]
        %842 = vst [vmem:[%s602 + $0x1dc] sm:%s594] %v841
        %v843 = vld [vmem:[%s601 + $0x1e0] sm:%s594]
        %844 = vst [vmem:[%s602 + $0x1e0] sm:%s594] %v843
        %v845 = vld [vmem:[%s601 + $0x1f0] sm:%s594]
        %846 = vst [vmem:[%s602 + $0x1e4] sm:%s594] %v845
        %v847 = vld [vmem:[%s601 + $0x1e4] sm:%s594]
        %848 = vst [vmem:[%s602 + $0x1e8] sm:%s594] %v847
        %v849 = vld [vmem:[%s601 + $0x1f4] sm:%s594]
        %850 = vst [vmem:[%s602 + $0x1ec] sm:%s594] %v849
        %v851 = vld [vmem:[%s601 + $0x1e8] sm:%s594]
        %852 = vst [vmem:[%s602 + $0x1f0] sm:%s594] %v851
        %v853 = vld [vmem:[%s601 + $0x1f8] sm:%s594]
        %854 = vst [vmem:[%s602 + $0x1f4] sm:%s594] %v853
        %v855 = vld [vmem:[%s601 + $0x1ec] sm:%s594]
        %856 = vst [vmem:[%s602 + $0x1f8] sm:%s594] %v855
        %v857 = vld [vmem:[%s601 + $0x1fc] sm:%s594]
        %858 = vst [vmem:[%s602 + $0x1fc] sm:%s594] %v857
        %v859 = vld [vmem:[%s601 + $0x200] sm:%s594]
        %860 = vst [vmem:[%s602 + $0x200] sm:%s594] %v859
        %v861 = vld [vmem:[%s601 + $0x210] sm:%s594]
        %862 = vst [vmem:[%s602 + $0x204] sm:%s594] %v861
        %v863 = vld [vmem:[%s601 + $0x204] sm:%s594]
        %864 = vst [vmem:[%s602 + $0x208] sm:%s594] %v863
        %v865 = vld [vmem:[%s601 + $0x214] sm:%s594]
        %866 = vst [vmem:[%s602 + $0x20c] sm:%s594] %v865
        %v867 = vld [vmem:[%s601 + $0x208] sm:%s594]
        %868 = vst [vmem:[%s602 + $0x210] sm:%s594] %v867
        %v869 = vld [vmem:[%s601 + $0x218] sm:%s594]
        %870 = vst [vmem:[%s602 + $0x214] sm:%s594] %v869
        %v871 = vld [vmem:[%s601 + $0x20c] sm:%s594]
        %872 = vst [vmem:[%s602 + $0x218] sm:%s594] %v871
        %v873 = vld [vmem:[%s601 + $0x21c] sm:%s594]
        %874 = vst [vmem:[%s602 + $0x21c] sm:%s594] %v873
        %v875 = vld [vmem:[%s601 + $0x220] sm:%s594]
        %876 = vst [vmem:[%s602 + $0x220] sm:%s594] %v875
        %v877 = vld [vmem:[%s601 + $0x230] sm:%s594]
        %878 = vst [vmem:[%s602 + $0x224] sm:%s594] %v877
        %v879 = vld [vmem:[%s601 + $0x224] sm:%s594]
        %880 = vst [vmem:[%s602 + $0x228] sm:%s594] %v879
        %v881 = vld [vmem:[%s601 + $0x234] sm:%s594]
        %882 = vst [vmem:[%s602 + $0x22c] sm:%s594] %v881
        %v883 = vld [vmem:[%s601 + $0x228] sm:%s594]
        %884 = vst [vmem:[%s602 + $0x230] sm:%s594] %v883
        %v885 = vld [vmem:[%s601 + $0x238] sm:%s594]
        %886 = vst [vmem:[%s602 + $0x234] sm:%s594] %v885
        %v887 = vld [vmem:[%s601 + $0x22c] sm:%s594]
        %888 = vst [vmem:[%s602 + $0x238] sm:%s594] %v887
        %v889 = vld [vmem:[%s601 + $0x23c] sm:%s594]
        %890 = vst [vmem:[%s602 + $0x23c] sm:%s594] %v889
        %v891 = vld [vmem:[%s601 + $0x240] sm:%s594]
        %892 = vst [vmem:[%s602 + $0x240] sm:%s594] %v891
        %v893 = vld [vmem:[%s601 + $0x250] sm:%s594]
        %894 = vst [vmem:[%s602 + $0x244] sm:%s594] %v893
        %v895 = vld [vmem:[%s601 + $0x244] sm:%s594]
        %896 = vst [vmem:[%s602 + $0x248] sm:%s594] %v895
        %v897 = vld [vmem:[%s601 + $0x254] sm:%s594]
        %898 = vst [vmem:[%s602 + $0x24c] sm:%s594] %v897
        %v899 = vld [vmem:[%s601 + $0x248] sm:%s594]
        %900 = vst [vmem:[%s602 + $0x250] sm:%s594] %v899
        %v901 = vld [vmem:[%s601 + $0x258] sm:%s594]
        %902 = vst [vmem:[%s602 + $0x254] sm:%s594] %v901
        %v903 = vld [vmem:[%s601 + $0x24c] sm:%s594]
        %904 = vst [vmem:[%s602 + $0x258] sm:%s594] %v903
        %v905 = vld [vmem:[%s601 + $0x25c] sm:%s594]
        %906 = vst [vmem:[%s602 + $0x25c] sm:%s594] %v905
        %v907 = vld [vmem:[%s601 + $0x260] sm:%s594]
        %908 = vst [vmem:[%s602 + $0x260] sm:%s594] %v907
        %v909 = vld [vmem:[%s601 + $0x270] sm:%s594]
        %910 = vst [vmem:[%s602 + $0x264] sm:%s594] %v909
        %v911 = vld [vmem:[%s601 + $0x264] sm:%s594]
        %912 = vst [vmem:[%s602 + $0x268] sm:%s594] %v911
        %v913 = vld [vmem:[%s601 + $0x274] sm:%s594]
        %914 = vst [vmem:[%s602 + $0x26c] sm:%s594] %v913
        %v915 = vld [vmem:[%s601 + $0x268] sm:%s594]
        %916 = vst [vmem:[%s602 + $0x270] sm:%s594] %v915
        %v917 = vld [vmem:[%s601 + $0x278] sm:%s594]
        %918 = vst [vmem:[%s602 + $0x274] sm:%s594] %v917
        %v919 = vld [vmem:[%s601 + $0x26c] sm:%s594]
        %920 = vst [vmem:[%s602 + $0x278] sm:%s594] %v919
        %v921 = vld [vmem:[%s601 + $0x27c] sm:%s594]
        %922 = vst [vmem:[%s602 + $0x27c] sm:%s594] %v921
        %v923 = vld [vmem:[%s601 + $0x280] sm:%s594]
        %924 = vst [vmem:[%s602 + $0x280] sm:%s594] %v923
        %v925 = vld [vmem:[%s601 + $0x290] sm:%s594]
        %926 = vst [vmem:[%s602 + $0x284] sm:%s594] %v925
        %v927 = vld [vmem:[%s601 + $0x284] sm:%s594]
        %928 = vst [vmem:[%s602 + $0x288] sm:%s594] %v927
        %v929 = vld [vmem:[%s601 + $0x294] sm:%s594]
        %930 = vst [vmem:[%s602 + $0x28c] sm:%s594] %v929
        %v931 = vld [vmem:[%s601 + $0x288] sm:%s594]
        %932 = vst [vmem:[%s602 + $0x290] sm:%s594] %v931
        %v933 = vld [vmem:[%s601 + $0x298] sm:%s594]
        %934 = vst [vmem:[%s602 + $0x294] sm:%s594] %v933
        %v935 = vld [vmem:[%s601 + $0x28c] sm:%s594]
        %936 = vst [vmem:[%s602 + $0x298] sm:%s594] %v935
        %v937 = vld [vmem:[%s601 + $0x29c] sm:%s594]
        %938 = vst [vmem:[%s602 + $0x29c] sm:%s594] %v937
        %v939 = vld [vmem:[%s601 + $0x2a0] sm:%s594]
        %940 = vst [vmem:[%s602 + $0x2a0] sm:%s594] %v939
        %v941 = vld [vmem:[%s601 + $0x2b0] sm:%s594]
        %942 = vst [vmem:[%s602 + $0x2a4] sm:%s594] %v941
        %v943 = vld [vmem:[%s601 + $0x2a4] sm:%s594]
        %944 = vst [vmem:[%s602 + $0x2a8] sm:%s594] %v943
        %v945 = vld [vmem:[%s601 + $0x2b4] sm:%s594]
        %946 = vst [vmem:[%s602 + $0x2ac] sm:%s594] %v945
        %v947 = vld [vmem:[%s601 + $0x2a8] sm:%s594]
        %948 = vst [vmem:[%s602 + $0x2b0] sm:%s594] %v947
        %v949 = vld [vmem:[%s601 + $0x2b8] sm:%s594]
        %950 = vst [vmem:[%s602 + $0x2b4] sm:%s594] %v949
        %v951 = vld [vmem:[%s601 + $0x2ac] sm:%s594]
        %952 = vst [vmem:[%s602 + $0x2b8] sm:%s594] %v951
        %v953 = vld [vmem:[%s601 + $0x2bc] sm:%s594]
        %954 = vst [vmem:[%s602 + $0x2bc] sm:%s594] %v953
        %v955 = vld [vmem:[%s601 + $0x2c0] sm:%s594]
        %956 = vst [vmem:[%s602 + $0x2c0] sm:%s594] %v955
        %v957 = vld [vmem:[%s601 + $0x2d0] sm:%s594]
        %958 = vst [vmem:[%s602 + $0x2c4] sm:%s594] %v957
        %v959 = vld [vmem:[%s601 + $0x2c4] sm:%s594]
        %960 = vst [vmem:[%s602 + $0x2c8] sm:%s594] %v959
        %v961 = vld [vmem:[%s601 + $0x2d4] sm:%s594]
        %962 = vst [vmem:[%s602 + $0x2cc] sm:%s594] %v961
        %v963 = vld [vmem:[%s601 + $0x2c8] sm:%s594]
        %964 = vst [vmem:[%s602 + $0x2d0] sm:%s594] %v963
        %v965 = vld [vmem:[%s601 + $0x2d8] sm:%s594]
        %966 = vst [vmem:[%s602 + $0x2d4] sm:%s594] %v965
        %v967 = vld [vmem:[%s601 + $0x2cc] sm:%s594]
        %968 = vst [vmem:[%s602 + $0x2d8] sm:%s594] %v967
        %v969 = vld [vmem:[%s601 + $0x2dc] sm:%s594]
        %970 = vst [vmem:[%s602 + $0x2dc] sm:%s594] %v969
        %v971 = vld [vmem:[%s601 + $0x2e0] sm:%s594]
        %972 = vst [vmem:[%s602 + $0x2e0] sm:%s594] %v971
        %v973 = vld [vmem:[%s601 + $0x2f0] sm:%s594]
        %974 = vst [vmem:[%s602 + $0x2e4] sm:%s594] %v973
        %v975 = vld [vmem:[%s601 + $0x2e4] sm:%s594]
        %976 = vst [vmem:[%s602 + $0x2e8] sm:%s594] %v975
        %v977 = vld [vmem:[%s601 + $0x2f4] sm:%s594]
        %978 = vst [vmem:[%s602 + $0x2ec] sm:%s594] %v977
        %v979 = vld [vmem:[%s601 + $0x2e8] sm:%s594]
        %980 = vst [vmem:[%s602 + $0x2f0] sm:%s594] %v979
        %v981 = vld [vmem:[%s601 + $0x2f8] sm:%s594]
        %982 = vst [vmem:[%s602 + $0x2f4] sm:%s594] %v981
        %v983 = vld [vmem:[%s601 + $0x2ec] sm:%s594]
        %984 = vst [vmem:[%s602 + $0x2f8] sm:%s594] %v983
        %v985 = vld [vmem:[%s601 + $0x2fc] sm:%s594]
        %986 = vst [vmem:[%s602 + $0x2fc] sm:%s594] %v985
        %v987 = vld [vmem:[%s601 + $0x300] sm:%s594]
        %988 = vst [vmem:[%s602 + $0x300] sm:%s594] %v987
        %v989 = vld [vmem:[%s601 + $0x310] sm:%s594]
        %990 = vst [vmem:[%s602 + $0x304] sm:%s594] %v989
        %v991 = vld [vmem:[%s601 + $0x304] sm:%s594]
        %992 = vst [vmem:[%s602 + $0x308] sm:%s594] %v991
        %v993 = vld [vmem:[%s601 + $0x314] sm:%s594]
        %994 = vst [vmem:[%s602 + $0x30c] sm:%s594] %v993
        %v995 = vld [vmem:[%s601 + $0x308] sm:%s594]
        %996 = vst [vmem:[%s602 + $0x310] sm:%s594] %v995
        %v997 = vld [vmem:[%s601 + $0x318] sm:%s594]
        %998 = vst [vmem:[%s602 + $0x314] sm:%s594] %v997
        %v999 = vld [vmem:[%s601 + $0x30c] sm:%s594]
        %1000 = vst [vmem:[%s602 + $0x318] sm:%s594] %v999
        %v1001 = vld [vmem:[%s601 + $0x31c] sm:%s594]
        %1002 = vst [vmem:[%s602 + $0x31c] sm:%s594] %v1001
        %v1003 = vld [vmem:[%s601 + $0x320] sm:%s594]
        %1004 = vst [vmem:[%s602 + $0x320] sm:%s594] %v1003
        %v1005 = vld [vmem:[%s601 + $0x330] sm:%s594]
        %1006 = vst [vmem:[%s602 + $0x324] sm:%s594] %v1005
        %v1007 = vld [vmem:[%s601 + $0x324] sm:%s594]
        %1008 = vst [vmem:[%s602 + $0x328] sm:%s594] %v1007
        %v1009 = vld [vmem:[%s601 + $0x334] sm:%s594]
        %1010 = vst [vmem:[%s602 + $0x32c] sm:%s594] %v1009
        %v1011 = vld [vmem:[%s601 + $0x328] sm:%s594]
        %1012 = vst [vmem:[%s602 + $0x330] sm:%s594] %v1011
        %v1013 = vld [vmem:[%s601 + $0x338] sm:%s594]
        %1014 = vst [vmem:[%s602 + $0x334] sm:%s594] %v1013
        %v1015 = vld [vmem:[%s601 + $0x32c] sm:%s594]
        %1016 = vst [vmem:[%s602 + $0x338] sm:%s594] %v1015
        %v1017 = vld [vmem:[%s601 + $0x33c] sm:%s594]
        %1018 = vst [vmem:[%s602 + $0x33c] sm:%s594] %v1017
        %v1019 = vld [vmem:[%s601 + $0x340] sm:%s594]
        %1020 = vst [vmem:[%s602 + $0x340] sm:%s594] %v1019
        %v1021 = vld [vmem:[%s601 + $0x350] sm:%s594]
        %1022 = vst [vmem:[%s602 + $0x344] sm:%s594] %v1021
        %v1023 = vld [vmem:[%s601 + $0x344] sm:%s594]
        %1024 = vst [vmem:[%s602 + $0x348] sm:%s594] %v1023
        %v1025 = vld [vmem:[%s601 + $0x354] sm:%s594]
        %1026 = vst [vmem:[%s602 + $0x34c] sm:%s594] %v1025
        %v1027 = vld [vmem:[%s601 + $0x348] sm:%s594]
        %1028 = vst [vmem:[%s602 + $0x350] sm:%s594] %v1027
        %v1029 = vld [vmem:[%s601 + $0x358] sm:%s594]
        %1030 = vst [vmem:[%s602 + $0x354] sm:%s594] %v1029
        %v1031 = vld [vmem:[%s601 + $0x34c] sm:%s594]
        %1032 = vst [vmem:[%s602 + $0x358] sm:%s594] %v1031
        %v1033 = vld [vmem:[%s601 + $0x35c] sm:%s594]
        %1034 = vst [vmem:[%s602 + $0x35c] sm:%s594] %v1033
        %v1035 = vld [vmem:[%s601 + $0x360] sm:%s594]
        %1036 = vst [vmem:[%s602 + $0x360] sm:%s594] %v1035
        %v1037 = vld [vmem:[%s601 + $0x370] sm:%s594]
        %1038 = vst [vmem:[%s602 + $0x364] sm:%s594] %v1037
        %v1039 = vld [vmem:[%s601 + $0x364] sm:%s594]
        %1040 = vst [vmem:[%s602 + $0x368] sm:%s594] %v1039
        %v1041 = vld [vmem:[%s601 + $0x374] sm:%s594]
        %1042 = vst [vmem:[%s602 + $0x36c] sm:%s594] %v1041
        %v1043 = vld [vmem:[%s601 + $0x368] sm:%s594]
        %1044 = vst [vmem:[%s602 + $0x370] sm:%s594] %v1043
        %v1045 = vld [vmem:[%s601 + $0x378] sm:%s594]
        %1046 = vst [vmem:[%s602 + $0x374] sm:%s594] %v1045
        %v1047 = vld [vmem:[%s601 + $0x36c] sm:%s594]
        %1048 = vst [vmem:[%s602 + $0x378] sm:%s594] %v1047
        %v1049 = vld [vmem:[%s601 + $0x37c] sm:%s594]
        %1050 = vst [vmem:[%s602 + $0x37c] sm:%s594] %v1049
        %v1051 = vld [vmem:[%s601 + $0x380] sm:%s594]
        %1052 = vst [vmem:[%s602 + $0x380] sm:%s594] %v1051
        %v1053 = vld [vmem:[%s601 + $0x390] sm:%s594]
        %1054 = vst [vmem:[%s602 + $0x384] sm:%s594] %v1053
        %v1055 = vld [vmem:[%s601 + $0x384] sm:%s594]
        %1056 = vst [vmem:[%s602 + $0x388] sm:%s594] %v1055
        %v1057 = vld [vmem:[%s601 + $0x394] sm:%s594]
        %1058 = vst [vmem:[%s602 + $0x38c] sm:%s594] %v1057
        %v1059 = vld [vmem:[%s601 + $0x388] sm:%s594]
        %1060 = vst [vmem:[%s602 + $0x390] sm:%s594] %v1059
        %v1061 = vld [vmem:[%s601 + $0x398] sm:%s594]
        %1062 = vst [vmem:[%s602 + $0x394] sm:%s594] %v1061
        %v1063 = vld [vmem:[%s601 + $0x38c] sm:%s594]
        %1064 = vst [vmem:[%s602 + $0x398] sm:%s594] %v1063
        %v1065 = vld [vmem:[%s601 + $0x39c] sm:%s594]
        %1066 = vst [vmem:[%s602 + $0x39c] sm:%s594] %v1065
        %v1067 = vld [vmem:[%s601 + $0x3a0] sm:%s594]
        %1068 = vst [vmem:[%s602 + $0x3a0] sm:%s594] %v1067
        %v1069 = vld [vmem:[%s601 + $0x3b0] sm:%s594]
        %1070 = vst [vmem:[%s602 + $0x3a4] sm:%s594] %v1069
        %v1071 = vld [vmem:[%s601 + $0x3a4] sm:%s594]
        %1072 = vst [vmem:[%s602 + $0x3a8] sm:%s594] %v1071
        %v1073 = vld [vmem:[%s601 + $0x3b4] sm:%s594]
        %1074 = vst [vmem:[%s602 + $0x3ac] sm:%s594] %v1073
        %v1075 = vld [vmem:[%s601 + $0x3a8] sm:%s594]
        %1076 = vst [vmem:[%s602 + $0x3b0] sm:%s594] %v1075
        %v1077 = vld [vmem:[%s601 + $0x3b8] sm:%s594]
        %1078 = vst [vmem:[%s602 + $0x3b4] sm:%s594] %v1077
        %v1079 = vld [vmem:[%s601 + $0x3ac] sm:%s594]
        %1080 = vst [vmem:[%s602 + $0x3b8] sm:%s594] %v1079
        %v1081 = vld [vmem:[%s601 + $0x3bc] sm:%s594]
        %1082 = vst [vmem:[%s602 + $0x3bc] sm:%s594] %v1081
        %v1083 = vld [vmem:[%s601 + $0x3c0] sm:%s594]
        %1084 = vst [vmem:[%s602 + $0x3c0] sm:%s594] %v1083
        %v1085 = vld [vmem:[%s601 + $0x3d0] sm:%s594]
        %1086 = vst [vmem:[%s602 + $0x3c4] sm:%s594] %v1085
        %v1087 = vld [vmem:[%s601 + $0x3c4] sm:%s594]
        %1088 = vst [vmem:[%s602 + $0x3c8] sm:%s594] %v1087
        %v1089 = vld [vmem:[%s601 + $0x3d4] sm:%s594]
        %1090 = vst [vmem:[%s602 + $0x3cc] sm:%s594] %v1089
        %v1091 = vld [vmem:[%s601 + $0x3c8] sm:%s594]
        %1092 = vst [vmem:[%s602 + $0x3d0] sm:%s594] %v1091
        %v1093 = vld [vmem:[%s601 + $0x3d8] sm:%s594]
        %1094 = vst [vmem:[%s602 + $0x3d4] sm:%s594] %v1093
        %v1095 = vld [vmem:[%s601 + $0x3cc] sm:%s594]
        %1096 = vst [vmem:[%s602 + $0x3d8] sm:%s594] %v1095
        %v1097 = vld [vmem:[%s601 + $0x3dc] sm:%s594]
        %1098 = vst [vmem:[%s602 + $0x3dc] sm:%s594] %v1097
        %v1099 = vld [vmem:[%s601 + $0x3e0] sm:%s594]
        %1100 = vst [vmem:[%s602 + $0x3e0] sm:%s594] %v1099
        %v1101 = vld [vmem:[%s601 + $0x3f0] sm:%s594]
        %1102 = vst [vmem:[%s602 + $0x3e4] sm:%s594] %v1101
        %v1103 = vld [vmem:[%s601 + $0x3e4] sm:%s594]
        %1104 = vst [vmem:[%s602 + $0x3e8] sm:%s594] %v1103
        %v1105 = vld [vmem:[%s601 + $0x3f4] sm:%s594]
        %1106 = vst [vmem:[%s602 + $0x3ec] sm:%s594] %v1105
        %v1107 = vld [vmem:[%s601 + $0x3e8] sm:%s594]
        %1108 = vst [vmem:[%s602 + $0x3f0] sm:%s594] %v1107
        %v1109 = vld [vmem:[%s601 + $0x3f8] sm:%s594]
        %1110 = vst [vmem:[%s602 + $0x3f4] sm:%s594] %v1109
        %v1111 = vld [vmem:[%s601 + $0x3ec] sm:%s594]
        %1112 = vst [vmem:[%s602 + $0x3f8] sm:%s594] %v1111
        %v1113 = vld [vmem:[%s601 + $0x3fc] sm:%s594]
        %1114 = vst [vmem:[%s602 + $0x3fc] sm:%s594] %v1113
      $region64: #{model_forward.1} parent=58 // loop_footer
        %s600 = sadd.s32 1, %s596
      $region65: #{model_forward.1} parent=58 // loop_footer_branch
        %595 = sbr.rel target = $region61
      $region66: #{model_forward.1} parent=58 // loop_exit
        _
    $region59: #{model_forward.1} parent=1 // pred_fallthru
      _
    // Predicated region
    $region85: #{model_forward.1} parent=1 // pred_check
      _
    $region86: #{model_forward.1} parent=1 // pred_check_branch
      %1656 = sbr.rel (0) target = $region88
    $region87: #{model_forward.1} parent=1 // pred_region
      %1657 = vsyncadd %s585, 16384
    $region88: #{model_forward.1} parent=1 // pred_fallthru
      _
    %s1658 = scalar_lea.sflag [#allocation7], 2
    %p1660 = scmp.lt.u32.totalorder 4, 8
    %p1661 = pneg %p1660
    // Predicated region
    $region89: #{model_forward.1} parent=1 // pred_check
      _
    $region90: #{model_forward.1} parent=1 // pred_check_branch
      %1663 = sbr.rel (%p1660) target = $region92
    $region91: #{model_forward.1} parent=1 // pred_region
      %s1932 = sand.u32 4, 7
      %p1933 = scmp.eq.s32.totalorder %s1932, 0
      %p1934 = pneg %p1933
      // Predicated region
      $region104: #{model_forward.1} parent=91 // pred_check
        _
      $region105: #{model_forward.1} parent=91 // pred_check_branch
        %1936 = sbr.rel (%p1933) target = $region107
      $region106: #{model_forward.1} parent=91 // pred_region
        %s1937 = sand.u32 4, 7
        %s1938 = ssub.s32 4, %s1937
        %s1939 = scalar_lea.vmem %s5, %s1938
        %s1940 = ssub.s32 4, %s1937
        %s1941 = scalar_lea.vmem [#allocation4], %s1940
        loop: start=0, step=1, limit=1
        $region108: #{model_forward.1} parent=106 // loop_pre_header
          _
        $region109: #{model_forward.1} parent=106 // loop_header
          %s1943 = sphi 0, %s1947
          %p1944 = scmp.ge.s32.totalorder %s1943, 1
          %s1948 = sphi %s5, %s5
          %s1949 = sphi [#allocation4], [#allocation4]
        $region110: #{model_forward.1} parent=106 // loop_header_branch
          %1946 = sbr.rel (%p1944) target = $region114
        $region111: #{model_forward.1} parent=106 // loop_body
          _
        $region112: #{model_forward.1} parent=106 // loop_footer
          %s1947 = sadd.s32 1, %s1943
        $region113: #{model_forward.1} parent=106 // loop_footer_branch
          %1942 = sbr.rel target = $region109
        $region114: #{model_forward.1} parent=106 // loop_exit
          _
        %s1950 = sshllo.u32 0, %s1937
        loop: start=0, step=1, limit=1
        $region115: #{model_forward.1} parent=106 // loop_pre_header
          _
        $region116: #{model_forward.1} parent=106 // loop_header
          %s1952 = sphi 0, %s1956
          %p1953 = scmp.ge.s32.totalorder %s1952, 1
          %s1957 = sphi %s1939, %s1939
          %s1958 = sphi %s1941, %s1941
        $region117: #{model_forward.1} parent=106 // loop_header_branch
          %1955 = sbr.rel (%p1953) target = $region121
        $region118: #{model_forward.1} parent=106 // loop_body
          %v1959 = vld [vmem:[%s1957] sm:%s1950]
          %1960 = vst [vmem:[%s1958] sm:%s1950] %v1959
          %v1961 = vld [vmem:[%s1957 + $0x8] sm:%s1950]
          %1962 = vst [vmem:[%s1958 + $0x4] sm:%s1950] %v1961
          %v1963 = vld [vmem:[%s1957 + $0x4] sm:%s1950]
          %1964 = vst [vmem:[%s1958 + $0x8] sm:%s1950] %v1963
          %v1965 = vld [vmem:[%s1957 + $0xc] sm:%s1950]
          %1966 = vst [vmem:[%s1958 + $0xc] sm:%s1950] %v1965
          %v1967 = vld [vmem:[%s1957 + $0x10] sm:%s1950]
          %1968 = vst [vmem:[%s1958 + $0x10] sm:%s1950] %v1967
          %v1969 = vld [vmem:[%s1957 + $0x18] sm:%s1950]
          %1970 = vst [vmem:[%s1958 + $0x14] sm:%s1950] %v1969
          %v1971 = vld [vmem:[%s1957 + $0x14] sm:%s1950]
          %1972 = vst [vmem:[%s1958 + $0x18] sm:%s1950] %v1971
          %v1973 = vld [vmem:[%s1957 + $0x1c] sm:%s1950]
          %1974 = vst [vmem:[%s1958 + $0x1c] sm:%s1950] %v1973
          %v1975 = vld [vmem:[%s1957 + $0x20] sm:%s1950]
          %1976 = vst [vmem:[%s1958 + $0x20] sm:%s1950] %v1975
          %v1977 = vld [vmem:[%s1957 + $0x28] sm:%s1950]
          %1978 = vst [vmem:[%s1958 + $0x24] sm:%s1950] %v1977
          %v1979 = vld [vmem:[%s1957 + $0x24] sm:%s1950]
          %1980 = vst [vmem:[%s1958 + $0x28] sm:%s1950] %v1979
          %v1981 = vld [vmem:[%s1957 + $0x2c] sm:%s1950]
          %1982 = vst [vmem:[%s1958 + $0x2c] sm:%s1950] %v1981
          %v1983 = vld [vmem:[%s1957 + $0x30] sm:%s1950]
          %1984 = vst [vmem:[%s1958 + $0x30] sm:%s1950] %v1983
          %v1985 = vld [vmem:[%s1957 + $0x38] sm:%s1950]
          %1986 = vst [vmem:[%s1958 + $0x34] sm:%s1950] %v1985
          %v1987 = vld [vmem:[%s1957 + $0x34] sm:%s1950]
          %1988 = vst [vmem:[%s1958 + $0x38] sm:%s1950] %v1987
          %v1989 = vld [vmem:[%s1957 + $0x3c] sm:%s1950]
          %1990 = vst [vmem:[%s1958 + $0x3c] sm:%s1950] %v1989
          %v1991 = vld [vmem:[%s1957 + $0x40] sm:%s1950]
          %1992 = vst [vmem:[%s1958 + $0x40] sm:%s1950] %v1991
          %v1993 = vld [vmem:[%s1957 + $0x48] sm:%s1950]
          %1994 = vst [vmem:[%s1958 + $0x44] sm:%s1950] %v1993
          %v1995 = vld [vmem:[%s1957 + $0x44] sm:%s1950]
          %1996 = vst [vmem:[%s1958 + $0x48] sm:%s1950] %v1995
          %v1997 = vld [vmem:[%s1957 + $0x4c] sm:%s1950]
          %1998 = vst [vmem:[%s1958 + $0x4c] sm:%s1950] %v1997
          %v1999 = vld [vmem:[%s1957 + $0x50] sm:%s1950]
          %2000 = vst [vmem:[%s1958 + $0x50] sm:%s1950] %v1999
          %v2001 = vld [vmem:[%s1957 + $0x58] sm:%s1950]
          %2002 = vst [vmem:[%s1958 + $0x54] sm:%s1950] %v2001
          %v2003 = vld [vmem:[%s1957 + $0x54] sm:%s1950]
          %2004 = vst [vmem:[%s1958 + $0x58] sm:%s1950] %v2003
          %v2005 = vld [vmem:[%s1957 + $0x5c] sm:%s1950]
          %2006 = vst [vmem:[%s1958 + $0x5c] sm:%s1950] %v2005
          %v2007 = vld [vmem:[%s1957 + $0x60] sm:%s1950]
          %2008 = vst [vmem:[%s1958 + $0x60] sm:%s1950] %v2007
          %v2009 = vld [vmem:[%s1957 + $0x68] sm:%s1950]
          %2010 = vst [vmem:[%s1958 + $0x64] sm:%s1950] %v2009
          %v2011 = vld [vmem:[%s1957 + $0x64] sm:%s1950]
          %2012 = vst [vmem:[%s1958 + $0x68] sm:%s1950] %v2011
          %v2013 = vld [vmem:[%s1957 + $0x6c] sm:%s1950]
          %2014 = vst [vmem:[%s1958 + $0x6c] sm:%s1950] %v2013
          %v2015 = vld [vmem:[%s1957 + $0x70] sm:%s1950]
          %2016 = vst [vmem:[%s1958 + $0x70] sm:%s1950] %v2015
          %v2017 = vld [vmem:[%s1957 + $0x78] sm:%s1950]
          %2018 = vst [vmem:[%s1958 + $0x74] sm:%s1950] %v2017
          %v2019 = vld [vmem:[%s1957 + $0x74] sm:%s1950]
          %2020 = vst [vmem:[%s1958 + $0x78] sm:%s1950] %v2019
          %v2021 = vld [vmem:[%s1957 + $0x7c] sm:%s1950]
          %2022 = vst [vmem:[%s1958 + $0x7c] sm:%s1950] %v2021
          %v2023 = vld [vmem:[%s1957 + $0x80] sm:%s1950]
          %2024 = vst [vmem:[%s1958 + $0x80] sm:%s1950] %v2023
          %v2025 = vld [vmem:[%s1957 + $0x88] sm:%s1950]
          %2026 = vst [vmem:[%s1958 + $0x84] sm:%s1950] %v2025
          %v2027 = vld [vmem:[%s1957 + $0x84] sm:%s1950]
          %2028 = vst [vmem:[%s1958 + $0x88] sm:%s1950] %v2027
          %v2029 = vld [vmem:[%s1957 + $0x8c] sm:%s1950]
          %2030 = vst [vmem:[%s1958 + $0x8c] sm:%s1950] %v2029
          %v2031 = vld [vmem:[%s1957 + $0x90] sm:%s1950]
          %2032 = vst [vmem:[%s1958 + $0x90] sm:%s1950] %v2031
          %v2033 = vld [vmem:[%s1957 + $0x98] sm:%s1950]
          %2034 = vst [vmem:[%s1958 + $0x94] sm:%s1950] %v2033
          %v2035 = vld [vmem:[%s1957 + $0x94] sm:%s1950]
          %2036 = vst [vmem:[%s1958 + $0x98] sm:%s1950] %v2035
          %v2037 = vld [vmem:[%s1957 + $0x9c] sm:%s1950]
          %2038 = vst [vmem:[%s1958 + $0x9c] sm:%s1950] %v2037
          %v2039 = vld [vmem:[%s1957 + $0xa0] sm:%s1950]
          %2040 = vst [vmem:[%s1958 + $0xa0] sm:%s1950] %v2039
          %v2041 = vld [vmem:[%s1957 + $0xa8] sm:%s1950]
          %2042 = vst [vmem:[%s1958 + $0xa4] sm:%s1950] %v2041
          %v2043 = vld [vmem:[%s1957 + $0xa4] sm:%s1950]
          %2044 = vst [vmem:[%s1958 + $0xa8] sm:%s1950] %v2043
          %v2045 = vld [vmem:[%s1957 + $0xac] sm:%s1950]
          %2046 = vst [vmem:[%s1958 + $0xac] sm:%s1950] %v2045
          %v2047 = vld [vmem:[%s1957 + $0xb0] sm:%s1950]
          %2048 = vst [vmem:[%s1958 + $0xb0] sm:%s1950] %v2047
          %v2049 = vld [vmem:[%s1957 + $0xb8] sm:%s1950]
          %2050 = vst [vmem:[%s1958 + $0xb4] sm:%s1950] %v2049
          %v2051 = vld [vmem:[%s1957 + $0xb4] sm:%s1950]
          %2052 = vst [vmem:[%s1958 + $0xb8] sm:%s1950] %v2051
          %v2053 = vld [vmem:[%s1957 + $0xbc] sm:%s1950]
          %2054 = vst [vmem:[%s1958 + $0xbc] sm:%s1950] %v2053
          %v2055 = vld [vmem:[%s1957 + $0xc0] sm:%s1950]
          %2056 = vst [vmem:[%s1958 + $0xc0] sm:%s1950] %v2055
          %v2057 = vld [vmem:[%s1957 + $0xc8] sm:%s1950]
          %2058 = vst [vmem:[%s1958 + $0xc4] sm:%s1950] %v2057
          %v2059 = vld [vmem:[%s1957 + $0xc4] sm:%s1950]
          %2060 = vst [vmem:[%s1958 + $0xc8] sm:%s1950] %v2059
          %v2061 = vld [vmem:[%s1957 + $0xcc] sm:%s1950]
          %2062 = vst [vmem:[%s1958 + $0xcc] sm:%s1950] %v2061
          %v2063 = vld [vmem:[%s1957 + $0xd0] sm:%s1950]
          %2064 = vst [vmem:[%s1958 + $0xd0] sm:%s1950] %v2063
          %v2065 = vld [vmem:[%s1957 + $0xd8] sm:%s1950]
          %2066 = vst [vmem:[%s1958 + $0xd4] sm:%s1950] %v2065
          %v2067 = vld [vmem:[%s1957 + $0xd4] sm:%s1950]
          %2068 = vst [vmem:[%s1958 + $0xd8] sm:%s1950] %v2067
          %v2069 = vld [vmem:[%s1957 + $0xdc] sm:%s1950]
          %2070 = vst [vmem:[%s1958 + $0xdc] sm:%s1950] %v2069
          %v2071 = vld [vmem:[%s1957 + $0xe0] sm:%s1950]
          %2072 = vst [vmem:[%s1958 + $0xe0] sm:%s1950] %v2071
          %v2073 = vld [vmem:[%s1957 + $0xe8] sm:%s1950]
          %2074 = vst [vmem:[%s1958 + $0xe4] sm:%s1950] %v2073
          %v2075 = vld [vmem:[%s1957 + $0xe4] sm:%s1950]
          %2076 = vst [vmem:[%s1958 + $0xe8] sm:%s1950] %v2075
          %v2077 = vld [vmem:[%s1957 + $0xec] sm:%s1950]
          %2078 = vst [vmem:[%s1958 + $0xec] sm:%s1950] %v2077
          %v2079 = vld [vmem:[%s1957 + $0xf0] sm:%s1950]
          %2080 = vst [vmem:[%s1958 + $0xf0] sm:%s1950] %v2079
          %v2081 = vld [vmem:[%s1957 + $0xf8] sm:%s1950]
          %2082 = vst [vmem:[%s1958 + $0xf4] sm:%s1950] %v2081
          %v2083 = vld [vmem:[%s1957 + $0xf4] sm:%s1950]
          %2084 = vst [vmem:[%s1958 + $0xf8] sm:%s1950] %v2083
          %v2085 = vld [vmem:[%s1957 + $0xfc] sm:%s1950]
          %2086 = vst [vmem:[%s1958 + $0xfc] sm:%s1950] %v2085
          %v2087 = vld [vmem:[%s1957 + $0x100] sm:%s1950]
          %2088 = vst [vmem:[%s1958 + $0x100] sm:%s1950] %v2087
          %v2089 = vld [vmem:[%s1957 + $0x108] sm:%s1950]
          %2090 = vst [vmem:[%s1958 + $0x104] sm:%s1950] %v2089
          %v2091 = vld [vmem:[%s1957 + $0x104] sm:%s1950]
          %2092 = vst [vmem:[%s1958 + $0x108] sm:%s1950] %v2091
          %v2093 = vld [vmem:[%s1957 + $0x10c] sm:%s1950]
          %2094 = vst [vmem:[%s1958 + $0x10c] sm:%s1950] %v2093
          %v2095 = vld [vmem:[%s1957 + $0x110] sm:%s1950]
          %2096 = vst [vmem:[%s1958 + $0x110] sm:%s1950] %v2095
          %v2097 = vld [vmem:[%s1957 + $0x118] sm:%s1950]
          %2098 = vst [vmem:[%s1958 + $0x114] sm:%s1950] %v2097
          %v2099 = vld [vmem:[%s1957 + $0x114] sm:%s1950]
          %2100 = vst [vmem:[%s1958 + $0x118] sm:%s1950] %v2099
          %v2101 = vld [vmem:[%s1957 + $0x11c] sm:%s1950]
          %2102 = vst [vmem:[%s1958 + $0x11c] sm:%s1950] %v2101
          %v2103 = vld [vmem:[%s1957 + $0x120] sm:%s1950]
          %2104 = vst [vmem:[%s1958 + $0x120] sm:%s1950] %v2103
          %v2105 = vld [vmem:[%s1957 + $0x128] sm:%s1950]
          %2106 = vst [vmem:[%s1958 + $0x124] sm:%s1950] %v2105
          %v2107 = vld [vmem:[%s1957 + $0x124] sm:%s1950]
          %2108 = vst [vmem:[%s1958 + $0x128] sm:%s1950] %v2107
          %v2109 = vld [vmem:[%s1957 + $0x12c] sm:%s1950]
          %2110 = vst [vmem:[%s1958 + $0x12c] sm:%s1950] %v2109
          %v2111 = vld [vmem:[%s1957 + $0x130] sm:%s1950]
          %2112 = vst [vmem:[%s1958 + $0x130] sm:%s1950] %v2111
          %v2113 = vld [vmem:[%s1957 + $0x138] sm:%s1950]
          %2114 = vst [vmem:[%s1958 + $0x134] sm:%s1950] %v2113
          %v2115 = vld [vmem:[%s1957 + $0x134] sm:%s1950]
          %2116 = vst [vmem:[%s1958 + $0x138] sm:%s1950] %v2115
          %v2117 = vld [vmem:[%s1957 + $0x13c] sm:%s1950]
          %2118 = vst [vmem:[%s1958 + $0x13c] sm:%s1950] %v2117
          %v2119 = vld [vmem:[%s1957 + $0x140] sm:%s1950]
          %2120 = vst [vmem:[%s1958 + $0x140] sm:%s1950] %v2119
          %v2121 = vld [vmem:[%s1957 + $0x148] sm:%s1950]
          %2122 = vst [vmem:[%s1958 + $0x144] sm:%s1950] %v2121
          %v2123 = vld [vmem:[%s1957 + $0x144] sm:%s1950]
          %2124 = vst [vmem:[%s1958 + $0x148] sm:%s1950] %v2123
          %v2125 = vld [vmem:[%s1957 + $0x14c] sm:%s1950]
          %2126 = vst [vmem:[%s1958 + $0x14c] sm:%s1950] %v2125
          %v2127 = vld [vmem:[%s1957 + $0x150] sm:%s1950]
          %2128 = vst [vmem:[%s1958 + $0x150] sm:%s1950] %v2127
          %v2129 = vld [vmem:[%s1957 + $0x158] sm:%s1950]
          %2130 = vst [vmem:[%s1958 + $0x154] sm:%s1950] %v2129
          %v2131 = vld [vmem:[%s1957 + $0x154] sm:%s1950]
          %2132 = vst [vmem:[%s1958 + $0x158] sm:%s1950] %v2131
          %v2133 = vld [vmem:[%s1957 + $0x15c] sm:%s1950]
          %2134 = vst [vmem:[%s1958 + $0x15c] sm:%s1950] %v2133
          %v2135 = vld [vmem:[%s1957 + $0x160] sm:%s1950]
          %2136 = vst [vmem:[%s1958 + $0x160] sm:%s1950] %v2135
          %v2137 = vld [vmem:[%s1957 + $0x168] sm:%s1950]
          %2138 = vst [vmem:[%s1958 + $0x164] sm:%s1950] %v2137
          %v2139 = vld [vmem:[%s1957 + $0x164] sm:%s1950]
          %2140 = vst [vmem:[%s1958 + $0x168] sm:%s1950] %v2139
          %v2141 = vld [vmem:[%s1957 + $0x16c] sm:%s1950]
          %2142 = vst [vmem:[%s1958 + $0x16c] sm:%s1950] %v2141
          %v2143 = vld [vmem:[%s1957 + $0x170] sm:%s1950]
          %2144 = vst [vmem:[%s1958 + $0x170] sm:%s1950] %v2143
          %v2145 = vld [vmem:[%s1957 + $0x178] sm:%s1950]
          %2146 = vst [vmem:[%s1958 + $0x174] sm:%s1950] %v2145
          %v2147 = vld [vmem:[%s1957 + $0x174] sm:%s1950]
          %2148 = vst [vmem:[%s1958 + $0x178] sm:%s1950] %v2147
          %v2149 = vld [vmem:[%s1957 + $0x17c] sm:%s1950]
          %2150 = vst [vmem:[%s1958 + $0x17c] sm:%s1950] %v2149
          %v2151 = vld [vmem:[%s1957 + $0x180] sm:%s1950]
          %2152 = vst [vmem:[%s1958 + $0x180] sm:%s1950] %v2151
          %v2153 = vld [vmem:[%s1957 + $0x188] sm:%s1950]
          %2154 = vst [vmem:[%s1958 + $0x184] sm:%s1950] %v2153
          %v2155 = vld [vmem:[%s1957 + $0x184] sm:%s1950]
          %2156 = vst [vmem:[%s1958 + $0x188] sm:%s1950] %v2155
          %v2157 = vld [vmem:[%s1957 + $0x18c] sm:%s1950]
          %2158 = vst [vmem:[%s1958 + $0x18c] sm:%s1950] %v2157
          %v2159 = vld [vmem:[%s1957 + $0x190] sm:%s1950]
          %2160 = vst [vmem:[%s1958 + $0x190] sm:%s1950] %v2159
          %v2161 = vld [vmem:[%s1957 + $0x198] sm:%s1950]
          %2162 = vst [vmem:[%s1958 + $0x194] sm:%s1950] %v2161
          %v2163 = vld [vmem:[%s1957 + $0x194] sm:%s1950]
          %2164 = vst [vmem:[%s1958 + $0x198] sm:%s1950] %v2163
          %v2165 = vld [vmem:[%s1957 + $0x19c] sm:%s1950]
          %2166 = vst [vmem:[%s1958 + $0x19c] sm:%s1950] %v2165
          %v2167 = vld [vmem:[%s1957 + $0x1a0] sm:%s1950]
          %2168 = vst [vmem:[%s1958 + $0x1a0] sm:%s1950] %v2167
          %v2169 = vld [vmem:[%s1957 + $0x1a8] sm:%s1950]
          %2170 = vst [vmem:[%s1958 + $0x1a4] sm:%s1950] %v2169
          %v2171 = vld [vmem:[%s1957 + $0x1a4] sm:%s1950]
          %2172 = vst [vmem:[%s1958 + $0x1a8] sm:%s1950] %v2171
          %v2173 = vld [vmem:[%s1957 + $0x1ac] sm:%s1950]
          %2174 = vst [vmem:[%s1958 + $0x1ac] sm:%s1950] %v2173
          %v2175 = vld [vmem:[%s1957 + $0x1b0] sm:%s1950]
          %2176 = vst [vmem:[%s1958 + $0x1b0] sm:%s1950] %v2175
          %v2177 = vld [vmem:[%s1957 + $0x1b8] sm:%s1950]
          %2178 = vst [vmem:[%s1958 + $0x1b4] sm:%s1950] %v2177
          %v2179 = vld [vmem:[%s1957 + $0x1b4] sm:%s1950]
          %2180 = vst [vmem:[%s1958 + $0x1b8] sm:%s1950] %v2179
          %v2181 = vld [vmem:[%s1957 + $0x1bc] sm:%s1950]
          %2182 = vst [vmem:[%s1958 + $0x1bc] sm:%s1950] %v2181
          %v2183 = vld [vmem:[%s1957 + $0x1c0] sm:%s1950]
          %2184 = vst [vmem:[%s1958 + $0x1c0] sm:%s1950] %v2183
          %v2185 = vld [vmem:[%s1957 + $0x1c8] sm:%s1950]
          %2186 = vst [vmem:[%s1958 + $0x1c4] sm:%s1950] %v2185
          %v2187 = vld [vmem:[%s1957 + $0x1c4] sm:%s1950]
          %2188 = vst [vmem:[%s1958 + $0x1c8] sm:%s1950] %v2187
          %v2189 = vld [vmem:[%s1957 + $0x1cc] sm:%s1950]
          %2190 = vst [vmem:[%s1958 + $0x1cc] sm:%s1950] %v2189
          %v2191 = vld [vmem:[%s1957 + $0x1d0] sm:%s1950]
          %2192 = vst [vmem:[%s1958 + $0x1d0] sm:%s1950] %v2191
          %v2193 = vld [vmem:[%s1957 + $0x1d8] sm:%s1950]
          %2194 = vst [vmem:[%s1958 + $0x1d4] sm:%s1950] %v2193
          %v2195 = vld [vmem:[%s1957 + $0x1d4] sm:%s1950]
          %2196 = vst [vmem:[%s1958 + $0x1d8] sm:%s1950] %v2195
          %v2197 = vld [vmem:[%s1957 + $0x1dc] sm:%s1950]
          %2198 = vst [vmem:[%s1958 + $0x1dc] sm:%s1950] %v2197
          %v2199 = vld [vmem:[%s1957 + $0x1e0] sm:%s1950]
          %2200 = vst [vmem:[%s1958 + $0x1e0] sm:%s1950] %v2199
          %v2201 = vld [vmem:[%s1957 + $0x1e8] sm:%s1950]
          %2202 = vst [vmem:[%s1958 + $0x1e4] sm:%s1950] %v2201
          %v2203 = vld [vmem:[%s1957 + $0x1e4] sm:%s1950]
          %2204 = vst [vmem:[%s1958 + $0x1e8] sm:%s1950] %v2203
          %v2205 = vld [vmem:[%s1957 + $0x1ec] sm:%s1950]
          %2206 = vst [vmem:[%s1958 + $0x1ec] sm:%s1950] %v2205
          %v2207 = vld [vmem:[%s1957 + $0x1f0] sm:%s1950]
          %2208 = vst [vmem:[%s1958 + $0x1f0] sm:%s1950] %v2207
          %v2209 = vld [vmem:[%s1957 + $0x1f8] sm:%s1950]
          %2210 = vst [vmem:[%s1958 + $0x1f4] sm:%s1950] %v2209
          %v2211 = vld [vmem:[%s1957 + $0x1f4] sm:%s1950]
          %2212 = vst [vmem:[%s1958 + $0x1f8] sm:%s1950] %v2211
          %v2213 = vld [vmem:[%s1957 + $0x1fc] sm:%s1950]
          %2214 = vst [vmem:[%s1958 + $0x1fc] sm:%s1950] %v2213
        $region119: #{model_forward.1} parent=106 // loop_footer
          %s1956 = sadd.s32 1, %s1952
        $region120: #{model_forward.1} parent=106 // loop_footer_branch
          %1951 = sbr.rel target = $region116
        $region121: #{model_forward.1} parent=106 // loop_exit
          _
      $region107: #{model_forward.1} parent=91 // pred_fallthru
        _
    $region92: #{model_forward.1} parent=1 // pred_fallthru
      _
    // Predicated region
    $region93: #{model_forward.1} parent=1 // pred_check
      %p1664 = pneg %p1660
    $region94: #{model_forward.1} parent=1 // pred_check_branch
      %1666 = sbr.rel (%p1664) target = $region96
    $region95: #{model_forward.1} parent=1 // pred_region
      %s1667 = sshllo.u32 0, 4
      loop: start=0, step=1, limit=1
      $region97: #{model_forward.1} parent=95 // loop_pre_header
        _
      $region98: #{model_forward.1} parent=95 // loop_header
        %s1669 = sphi 0, %s1673
        %p1670 = scmp.ge.s32.totalorder %s1669, 1
        %s1674 = sphi %s5, %s5
        %s1675 = sphi [#allocation4], [#allocation4]
      $region99: #{model_forward.1} parent=95 // loop_header_branch
        %1672 = sbr.rel (%p1670) target = $region103
      $region100: #{model_forward.1} parent=95 // loop_body
        %v1676 = vld [vmem:[%s1674] sm:%s1667]
        %1677 = vst [vmem:[%s1675] sm:%s1667] %v1676
        %v1678 = vld [vmem:[%s1674 + $0x8] sm:%s1667]
        %1679 = vst [vmem:[%s1675 + $0x4] sm:%s1667] %v1678
        %v1680 = vld [vmem:[%s1674 + $0x4] sm:%s1667]
        %1681 = vst [vmem:[%s1675 + $0x8] sm:%s1667] %v1680
        %v1682 = vld [vmem:[%s1674 + $0xc] sm:%s1667]
        %1683 = vst [vmem:[%s1675 + $0xc] sm:%s1667] %v1682
        %v1684 = vld [vmem:[%s1674 + $0x10] sm:%s1667]
        %1685 = vst [vmem:[%s1675 + $0x10] sm:%s1667] %v1684
        %v1686 = vld [vmem:[%s1674 + $0x18] sm:%s1667]
        %1687 = vst [vmem:[%s1675 + $0x14] sm:%s1667] %v1686
        %v1688 = vld [vmem:[%s1674 + $0x14] sm:%s1667]
        %1689 = vst [vmem:[%s1675 + $0x18] sm:%s1667] %v1688
        %v1690 = vld [vmem:[%s1674 + $0x1c] sm:%s1667]
        %1691 = vst [vmem:[%s1675 + $0x1c] sm:%s1667] %v1690
        %v1692 = vld [vmem:[%s1674 + $0x20] sm:%s1667]
        %1693 = vst [vmem:[%s1675 + $0x20] sm:%s1667] %v1692
        %v1694 = vld [vmem:[%s1674 + $0x28] sm:%s1667]
        %1695 = vst [vmem:[%s1675 + $0x24] sm:%s1667] %v1694
        %v1696 = vld [vmem:[%s1674 + $0x24] sm:%s1667]
        %1697 = vst [vmem:[%s1675 + $0x28] sm:%s1667] %v1696
        %v1698 = vld [vmem:[%s1674 + $0x2c] sm:%s1667]
        %1699 = vst [vmem:[%s1675 + $0x2c] sm:%s1667] %v1698
        %v1700 = vld [vmem:[%s1674 + $0x30] sm:%s1667]
        %1701 = vst [vmem:[%s1675 + $0x30] sm:%s1667] %v1700
        %v1702 = vld [vmem:[%s1674 + $0x38] sm:%s1667]
        %1703 = vst [vmem:[%s1675 + $0x34] sm:%s1667] %v1702
        %v1704 = vld [vmem:[%s1674 + $0x34] sm:%s1667]
        %1705 = vst [vmem:[%s1675 + $0x38] sm:%s1667] %v1704
        %v1706 = vld [vmem:[%s1674 + $0x3c] sm:%s1667]
        %1707 = vst [vmem:[%s1675 + $0x3c] sm:%s1667] %v1706
        %v1708 = vld [vmem:[%s1674 + $0x40] sm:%s1667]
        %1709 = vst [vmem:[%s1675 + $0x40] sm:%s1667] %v1708
        %v1710 = vld [vmem:[%s1674 + $0x48] sm:%s1667]
        %1711 = vst [vmem:[%s1675 + $0x44] sm:%s1667] %v1710
        %v1712 = vld [vmem:[%s1674 + $0x44] sm:%s1667]
        %1713 = vst [vmem:[%s1675 + $0x48] sm:%s1667] %v1712
        %v1714 = vld [vmem:[%s1674 + $0x4c] sm:%s1667]
        %1715 = vst [vmem:[%s1675 + $0x4c] sm:%s1667] %v1714
        %v1716 = vld [vmem:[%s1674 + $0x50] sm:%s1667]
        %1717 = vst [vmem:[%s1675 + $0x50] sm:%s1667] %v1716
        %v1718 = vld [vmem:[%s1674 + $0x58] sm:%s1667]
        %1719 = vst [vmem:[%s1675 + $0x54] sm:%s1667] %v1718
        %v1720 = vld [vmem:[%s1674 + $0x54] sm:%s1667]
        %1721 = vst [vmem:[%s1675 + $0x58] sm:%s1667] %v1720
        %v1722 = vld [vmem:[%s1674 + $0x5c] sm:%s1667]
        %1723 = vst [vmem:[%s1675 + $0x5c] sm:%s1667] %v1722
        %v1724 = vld [vmem:[%s1674 + $0x60] sm:%s1667]
        %1725 = vst [vmem:[%s1675 + $0x60] sm:%s1667] %v1724
        %v1726 = vld [vmem:[%s1674 + $0x68] sm:%s1667]
        %1727 = vst [vmem:[%s1675 + $0x64] sm:%s1667] %v1726
        %v1728 = vld [vmem:[%s1674 + $0x64] sm:%s1667]
        %1729 = vst [vmem:[%s1675 + $0x68] sm:%s1667] %v1728
        %v1730 = vld [vmem:[%s1674 + $0x6c] sm:%s1667]
        %1731 = vst [vmem:[%s1675 + $0x6c] sm:%s1667] %v1730
        %v1732 = vld [vmem:[%s1674 + $0x70] sm:%s1667]
        %1733 = vst [vmem:[%s1675 + $0x70] sm:%s1667] %v1732
        %v1734 = vld [vmem:[%s1674 + $0x78] sm:%s1667]
        %1735 = vst [vmem:[%s1675 + $0x74] sm:%s1667] %v1734
        %v1736 = vld [vmem:[%s1674 + $0x74] sm:%s1667]
        %1737 = vst [vmem:[%s1675 + $0x78] sm:%s1667] %v1736
        %v1738 = vld [vmem:[%s1674 + $0x7c] sm:%s1667]
        %1739 = vst [vmem:[%s1675 + $0x7c] sm:%s1667] %v1738
        %v1740 = vld [vmem:[%s1674 + $0x80] sm:%s1667]
        %1741 = vst [vmem:[%s1675 + $0x80] sm:%s1667] %v1740
        %v1742 = vld [vmem:[%s1674 + $0x88] sm:%s1667]
        %1743 = vst [vmem:[%s1675 + $0x84] sm:%s1667] %v1742
        %v1744 = vld [vmem:[%s1674 + $0x84] sm:%s1667]
        %1745 = vst [vmem:[%s1675 + $0x88] sm:%s1667] %v1744
        %v1746 = vld [vmem:[%s1674 + $0x8c] sm:%s1667]
        %1747 = vst [vmem:[%s1675 + $0x8c] sm:%s1667] %v1746
        %v1748 = vld [vmem:[%s1674 + $0x90] sm:%s1667]
        %1749 = vst [vmem:[%s1675 + $0x90] sm:%s1667] %v1748
        %v1750 = vld [vmem:[%s1674 + $0x98] sm:%s1667]
        %1751 = vst [vmem:[%s1675 + $0x94] sm:%s1667] %v1750
        %v1752 = vld [vmem:[%s1674 + $0x94] sm:%s1667]
        %1753 = vst [vmem:[%s1675 + $0x98] sm:%s1667] %v1752
        %v1754 = vld [vmem:[%s1674 + $0x9c] sm:%s1667]
        %1755 = vst [vmem:[%s1675 + $0x9c] sm:%s1667] %v1754
        %v1756 = vld [vmem:[%s1674 + $0xa0] sm:%s1667]
        %1757 = vst [vmem:[%s1675 + $0xa0] sm:%s1667] %v1756
        %v1758 = vld [vmem:[%s1674 + $0xa8] sm:%s1667]
        %1759 = vst [vmem:[%s1675 + $0xa4] sm:%s1667] %v1758
        %v1760 = vld [vmem:[%s1674 + $0xa4] sm:%s1667]
        %1761 = vst [vmem:[%s1675 + $0xa8] sm:%s1667] %v1760
        %v1762 = vld [vmem:[%s1674 + $0xac] sm:%s1667]
        %1763 = vst [vmem:[%s1675 + $0xac] sm:%s1667] %v1762
        %v1764 = vld [vmem:[%s1674 + $0xb0] sm:%s1667]
        %1765 = vst [vmem:[%s1675 + $0xb0] sm:%s1667] %v1764
        %v1766 = vld [vmem:[%s1674 + $0xb8] sm:%s1667]
        %1767 = vst [vmem:[%s1675 + $0xb4] sm:%s1667] %v1766
        %v1768 = vld [vmem:[%s1674 + $0xb4] sm:%s1667]
        %1769 = vst [vmem:[%s1675 + $0xb8] sm:%s1667] %v1768
        %v1770 = vld [vmem:[%s1674 + $0xbc] sm:%s1667]
        %1771 = vst [vmem:[%s1675 + $0xbc] sm:%s1667] %v1770
        %v1772 = vld [vmem:[%s1674 + $0xc0] sm:%s1667]
        %1773 = vst [vmem:[%s1675 + $0xc0] sm:%s1667] %v1772
        %v1774 = vld [vmem:[%s1674 + $0xc8] sm:%s1667]
        %1775 = vst [vmem:[%s1675 + $0xc4] sm:%s1667] %v1774
        %v1776 = vld [vmem:[%s1674 + $0xc4] sm:%s1667]
        %1777 = vst [vmem:[%s1675 + $0xc8] sm:%s1667] %v1776
        %v1778 = vld [vmem:[%s1674 + $0xcc] sm:%s1667]
        %1779 = vst [vmem:[%s1675 + $0xcc] sm:%s1667] %v1778
        %v1780 = vld [vmem:[%s1674 + $0xd0] sm:%s1667]
        %1781 = vst [vmem:[%s1675 + $0xd0] sm:%s1667] %v1780
        %v1782 = vld [vmem:[%s1674 + $0xd8] sm:%s1667]
        %1783 = vst [vmem:[%s1675 + $0xd4] sm:%s1667] %v1782
        %v1784 = vld [vmem:[%s1674 + $0xd4] sm:%s1667]
        %1785 = vst [vmem:[%s1675 + $0xd8] sm:%s1667] %v1784
        %v1786 = vld [vmem:[%s1674 + $0xdc] sm:%s1667]
        %1787 = vst [vmem:[%s1675 + $0xdc] sm:%s1667] %v1786
        %v1788 = vld [vmem:[%s1674 + $0xe0] sm:%s1667]
        %1789 = vst [vmem:[%s1675 + $0xe0] sm:%s1667] %v1788
        %v1790 = vld [vmem:[%s1674 + $0xe8] sm:%s1667]
        %1791 = vst [vmem:[%s1675 + $0xe4] sm:%s1667] %v1790
        %v1792 = vld [vmem:[%s1674 + $0xe4] sm:%s1667]
        %1793 = vst [vmem:[%s1675 + $0xe8] sm:%s1667] %v1792
        %v1794 = vld [vmem:[%s1674 + $0xec] sm:%s1667]
        %1795 = vst [vmem:[%s1675 + $0xec] sm:%s1667] %v1794
        %v1796 = vld [vmem:[%s1674 + $0xf0] sm:%s1667]
        %1797 = vst [vmem:[%s1675 + $0xf0] sm:%s1667] %v1796
        %v1798 = vld [vmem:[%s1674 + $0xf8] sm:%s1667]
        %1799 = vst [vmem:[%s1675 + $0xf4] sm:%s1667] %v1798
        %v1800 = vld [vmem:[%s1674 + $0xf4] sm:%s1667]
        %1801 = vst [vmem:[%s1675 + $0xf8] sm:%s1667] %v1800
        %v1802 = vld [vmem:[%s1674 + $0xfc] sm:%s1667]
        %1803 = vst [vmem:[%s1675 + $0xfc] sm:%s1667] %v1802
        %v1804 = vld [vmem:[%s1674 + $0x100] sm:%s1667]
        %1805 = vst [vmem:[%s1675 + $0x100] sm:%s1667] %v1804
        %v1806 = vld [vmem:[%s1674 + $0x108] sm:%s1667]
        %1807 = vst [vmem:[%s1675 + $0x104] sm:%s1667] %v1806
        %v1808 = vld [vmem:[%s1674 + $0x104] sm:%s1667]
        %1809 = vst [vmem:[%s1675 + $0x108] sm:%s1667] %v1808
        %v1810 = vld [vmem:[%s1674 + $0x10c] sm:%s1667]
        %1811 = vst [vmem:[%s1675 + $0x10c] sm:%s1667] %v1810
        %v1812 = vld [vmem:[%s1674 + $0x110] sm:%s1667]
        %1813 = vst [vmem:[%s1675 + $0x110] sm:%s1667] %v1812
        %v1814 = vld [vmem:[%s1674 + $0x118] sm:%s1667]
        %1815 = vst [vmem:[%s1675 + $0x114] sm:%s1667] %v1814
        %v1816 = vld [vmem:[%s1674 + $0x114] sm:%s1667]
        %1817 = vst [vmem:[%s1675 + $0x118] sm:%s1667] %v1816
        %v1818 = vld [vmem:[%s1674 + $0x11c] sm:%s1667]
        %1819 = vst [vmem:[%s1675 + $0x11c] sm:%s1667] %v1818
        %v1820 = vld [vmem:[%s1674 + $0x120] sm:%s1667]
        %1821 = vst [vmem:[%s1675 + $0x120] sm:%s1667] %v1820
        %v1822 = vld [vmem:[%s1674 + $0x128] sm:%s1667]
        %1823 = vst [vmem:[%s1675 + $0x124] sm:%s1667] %v1822
        %v1824 = vld [vmem:[%s1674 + $0x124] sm:%s1667]
        %1825 = vst [vmem:[%s1675 + $0x128] sm:%s1667] %v1824
        %v1826 = vld [vmem:[%s1674 + $0x12c] sm:%s1667]
        %1827 = vst [vmem:[%s1675 + $0x12c] sm:%s1667] %v1826
        %v1828 = vld [vmem:[%s1674 + $0x130] sm:%s1667]
        %1829 = vst [vmem:[%s1675 + $0x130] sm:%s1667] %v1828
        %v1830 = vld [vmem:[%s1674 + $0x138] sm:%s1667]
        %1831 = vst [vmem:[%s1675 + $0x134] sm:%s1667] %v1830
        %v1832 = vld [vmem:[%s1674 + $0x134] sm:%s1667]
        %1833 = vst [vmem:[%s1675 + $0x138] sm:%s1667] %v1832
        %v1834 = vld [vmem:[%s1674 + $0x13c] sm:%s1667]
        %1835 = vst [vmem:[%s1675 + $0x13c] sm:%s1667] %v1834
        %v1836 = vld [vmem:[%s1674 + $0x140] sm:%s1667]
        %1837 = vst [vmem:[%s1675 + $0x140] sm:%s1667] %v1836
        %v1838 = vld [vmem:[%s1674 + $0x148] sm:%s1667]
        %1839 = vst [vmem:[%s1675 + $0x144] sm:%s1667] %v1838
        %v1840 = vld [vmem:[%s1674 + $0x144] sm:%s1667]
        %1841 = vst [vmem:[%s1675 + $0x148] sm:%s1667] %v1840
        %v1842 = vld [vmem:[%s1674 + $0x14c] sm:%s1667]
        %1843 = vst [vmem:[%s1675 + $0x14c] sm:%s1667] %v1842
        %v1844 = vld [vmem:[%s1674 + $0x150] sm:%s1667]
        %1845 = vst [vmem:[%s1675 + $0x150] sm:%s1667] %v1844
        %v1846 = vld [vmem:[%s1674 + $0x158] sm:%s1667]
        %1847 = vst [vmem:[%s1675 + $0x154] sm:%s1667] %v1846
        %v1848 = vld [vmem:[%s1674 + $0x154] sm:%s1667]
        %1849 = vst [vmem:[%s1675 + $0x158] sm:%s1667] %v1848
        %v1850 = vld [vmem:[%s1674 + $0x15c] sm:%s1667]
        %1851 = vst [vmem:[%s1675 + $0x15c] sm:%s1667] %v1850
        %v1852 = vld [vmem:[%s1674 + $0x160] sm:%s1667]
        %1853 = vst [vmem:[%s1675 + $0x160] sm:%s1667] %v1852
        %v1854 = vld [vmem:[%s1674 + $0x168] sm:%s1667]
        %1855 = vst [vmem:[%s1675 + $0x164] sm:%s1667] %v1854
        %v1856 = vld [vmem:[%s1674 + $0x164] sm:%s1667]
        %1857 = vst [vmem:[%s1675 + $0x168] sm:%s1667] %v1856
        %v1858 = vld [vmem:[%s1674 + $0x16c] sm:%s1667]
        %1859 = vst [vmem:[%s1675 + $0x16c] sm:%s1667] %v1858
        %v1860 = vld [vmem:[%s1674 + $0x170] sm:%s1667]
        %1861 = vst [vmem:[%s1675 + $0x170] sm:%s1667] %v1860
        %v1862 = vld [vmem:[%s1674 + $0x178] sm:%s1667]
        %1863 = vst [vmem:[%s1675 + $0x174] sm:%s1667] %v1862
        %v1864 = vld [vmem:[%s1674 + $0x174] sm:%s1667]
        %1865 = vst [vmem:[%s1675 + $0x178] sm:%s1667] %v1864
        %v1866 = vld [vmem:[%s1674 + $0x17c] sm:%s1667]
        %1867 = vst [vmem:[%s1675 + $0x17c] sm:%s1667] %v1866
        %v1868 = vld [vmem:[%s1674 + $0x180] sm:%s1667]
        %1869 = vst [vmem:[%s1675 + $0x180] sm:%s1667] %v1868
        %v1870 = vld [vmem:[%s1674 + $0x188] sm:%s1667]
        %1871 = vst [vmem:[%s1675 + $0x184] sm:%s1667] %v1870
        %v1872 = vld [vmem:[%s1674 + $0x184] sm:%s1667]
        %1873 = vst [vmem:[%s1675 + $0x188] sm:%s1667] %v1872
        %v1874 = vld [vmem:[%s1674 + $0x18c] sm:%s1667]
        %1875 = vst [vmem:[%s1675 + $0x18c] sm:%s1667] %v1874
        %v1876 = vld [vmem:[%s1674 + $0x190] sm:%s1667]
        %1877 = vst [vmem:[%s1675 + $0x190] sm:%s1667] %v1876
        %v1878 = vld [vmem:[%s1674 + $0x198] sm:%s1667]
        %1879 = vst [vmem:[%s1675 + $0x194] sm:%s1667] %v1878
        %v1880 = vld [vmem:[%s1674 + $0x194] sm:%s1667]
        %1881 = vst [vmem:[%s1675 + $0x198] sm:%s1667] %v1880
        %v1882 = vld [vmem:[%s1674 + $0x19c] sm:%s1667]
        %1883 = vst [vmem:[%s1675 + $0x19c] sm:%s1667] %v1882
        %v1884 = vld [vmem:[%s1674 + $0x1a0] sm:%s1667]
        %1885 = vst [vmem:[%s1675 + $0x1a0] sm:%s1667] %v1884
        %v1886 = vld [vmem:[%s1674 + $0x1a8] sm:%s1667]
        %1887 = vst [vmem:[%s1675 + $0x1a4] sm:%s1667] %v1886
        %v1888 = vld [vmem:[%s1674 + $0x1a4] sm:%s1667]
        %1889 = vst [vmem:[%s1675 + $0x1a8] sm:%s1667] %v1888
        %v1890 = vld [vmem:[%s1674 + $0x1ac] sm:%s1667]
        %1891 = vst [vmem:[%s1675 + $0x1ac] sm:%s1667] %v1890
        %v1892 = vld [vmem:[%s1674 + $0x1b0] sm:%s1667]
        %1893 = vst [vmem:[%s1675 + $0x1b0] sm:%s1667] %v1892
        %v1894 = vld [vmem:[%s1674 + $0x1b8] sm:%s1667]
        %1895 = vst [vmem:[%s1675 + $0x1b4] sm:%s1667] %v1894
        %v1896 = vld [vmem:[%s1674 + $0x1b4] sm:%s1667]
        %1897 = vst [vmem:[%s1675 + $0x1b8] sm:%s1667] %v1896
        %v1898 = vld [vmem:[%s1674 + $0x1bc] sm:%s1667]
        %1899 = vst [vmem:[%s1675 + $0x1bc] sm:%s1667] %v1898
        %v1900 = vld [vmem:[%s1674 + $0x1c0] sm:%s1667]
        %1901 = vst [vmem:[%s1675 + $0x1c0] sm:%s1667] %v1900
        %v1902 = vld [vmem:[%s1674 + $0x1c8] sm:%s1667]
        %1903 = vst [vmem:[%s1675 + $0x1c4] sm:%s1667] %v1902
        %v1904 = vld [vmem:[%s1674 + $0x1c4] sm:%s1667]
        %1905 = vst [vmem:[%s1675 + $0x1c8] sm:%s1667] %v1904
        %v1906 = vld [vmem:[%s1674 + $0x1cc] sm:%s1667]
        %1907 = vst [vmem:[%s1675 + $0x1cc] sm:%s1667] %v1906
        %v1908 = vld [vmem:[%s1674 + $0x1d0] sm:%s1667]
        %1909 = vst [vmem:[%s1675 + $0x1d0] sm:%s1667] %v1908
        %v1910 = vld [vmem:[%s1674 + $0x1d8] sm:%s1667]
        %1911 = vst [vmem:[%s1675 + $0x1d4] sm:%s1667] %v1910
        %v1912 = vld [vmem:[%s1674 + $0x1d4] sm:%s1667]
        %1913 = vst [vmem:[%s1675 + $0x1d8] sm:%s1667] %v1912
        %v1914 = vld [vmem:[%s1674 + $0x1dc] sm:%s1667]
        %1915 = vst [vmem:[%s1675 + $0x1dc] sm:%s1667] %v1914
        %v1916 = vld [vmem:[%s1674 + $0x1e0] sm:%s1667]
        %1917 = vst [vmem:[%s1675 + $0x1e0] sm:%s1667] %v1916
        %v1918 = vld [vmem:[%s1674 + $0x1e8] sm:%s1667]
        %1919 = vst [vmem:[%s1675 + $0x1e4] sm:%s1667] %v1918
        %v1920 = vld [vmem:[%s1674 + $0x1e4] sm:%s1667]
        %1921 = vst [vmem:[%s1675 + $0x1e8] sm:%s1667] %v1920
        %v1922 = vld [vmem:[%s1674 + $0x1ec] sm:%s1667]
        %1923 = vst [vmem:[%s1675 + $0x1ec] sm:%s1667] %v1922
        %v1924 = vld [vmem:[%s1674 + $0x1f0] sm:%s1667]
        %1925 = vst [vmem:[%s1675 + $0x1f0] sm:%s1667] %v1924
        %v1926 = vld [vmem:[%s1674 + $0x1f8] sm:%s1667]
        %1927 = vst [vmem:[%s1675 + $0x1f4] sm:%s1667] %v1926
        %v1928 = vld [vmem:[%s1674 + $0x1f4] sm:%s1667]
        %1929 = vst [vmem:[%s1675 + $0x1f8] sm:%s1667] %v1928
        %v1930 = vld [vmem:[%s1674 + $0x1fc] sm:%s1667]
        %1931 = vst [vmem:[%s1675 + $0x1fc] sm:%s1667] %v1930
      $region101: #{model_forward.1} parent=95 // loop_footer
        %s1673 = sadd.s32 1, %s1669
      $region102: #{model_forward.1} parent=95 // loop_footer_branch
        %1668 = sbr.rel target = $region98
      $region103: #{model_forward.1} parent=95 // loop_exit
        _
    $region96: #{model_forward.1} parent=1 // pred_fallthru
      _
    // Predicated region
    $region122: #{model_forward.1} parent=1 // pred_check
      _
    $region123: #{model_forward.1} parent=1 // pred_check_branch
      %2217 = sbr.rel (0) target = $region125
    $region124: #{model_forward.1} parent=1 // pred_region
      %2218 = vsyncadd %s1658, 8192
    $region125: #{model_forward.1} parent=1 // pred_fallthru
      _
    %s2219 = scalar_lea.sflag [#allocation7], 3
    %p2221 = scmp.lt.u32.totalorder 128, 8
    %p2222 = pneg %p2221
    // Predicated region
    $region126: #{model_forward.1} parent=1 // pred_check
      _
    $region127: #{model_forward.1} parent=1 // pred_check_branch
      %2224 = sbr.rel (%p2221) target = $region129
    $region128: #{model_forward.1} parent=1 // pred_region
      %s2239 = sand.u32 128, 7
      %p2240 = scmp.eq.s32.totalorder %s2239, 0
      // Predicated region
      $region141: #{model_forward.1} parent=128 // pred_check
        %p2241 = pneg %p2240
      $region142: #{model_forward.1} parent=128 // pred_check_branch
        %2243 = sbr.rel (%p2241) target = $region144
      $region143: #{model_forward.1} parent=128 // pred_region
        loop: start=0, step=1, limit=1
        $region145: #{model_forward.1} parent=143 // loop_pre_header
          _
        $region146: #{model_forward.1} parent=143 // loop_header
          %s2245 = sphi 0, %s2249
          %p2246 = scmp.ge.s32.totalorder %s2245, 1
          %s2250 = sphi %s6, %s6
          %s2251 = sphi [#allocation5], [#allocation5]
        $region147: #{model_forward.1} parent=143 // loop_header_branch
          %2248 = sbr.rel (%p2246) target = $region151
        $region148: #{model_forward.1} parent=143 // loop_body
          %v2252 = vld [vmem:[%s2250] sm:$0xff]
          %2253 = vst [vmem:[%s2251] sm:$0xff] %v2252
          %v2254 = vld [vmem:[%s2250 + $0x8] sm:$0xff]
          %2255 = vst [vmem:[%s2251 + $0x8] sm:$0xff] %v2254
          %v2256 = vld [vmem:[%s2250 + $0x10] sm:$0xff]
          %2257 = vst [vmem:[%s2251 + $0x10] sm:$0xff] %v2256
          %v2258 = vld [vmem:[%s2250 + $0x18] sm:$0xff]
          %2259 = vst [vmem:[%s2251 + $0x18] sm:$0xff] %v2258
          %v2260 = vld [vmem:[%s2250 + $0x20] sm:$0xff]
          %2261 = vst [vmem:[%s2251 + $0x20] sm:$0xff] %v2260
          %v2262 = vld [vmem:[%s2250 + $0x28] sm:$0xff]
          %2263 = vst [vmem:[%s2251 + $0x28] sm:$0xff] %v2262
          %v2264 = vld [vmem:[%s2250 + $0x30] sm:$0xff]
          %2265 = vst [vmem:[%s2251 + $0x30] sm:$0xff] %v2264
          %v2266 = vld [vmem:[%s2250 + $0x38] sm:$0xff]
          %2267 = vst [vmem:[%s2251 + $0x38] sm:$0xff] %v2266
          %v2268 = vld [vmem:[%s2250 + $0x40] sm:$0xff]
          %2269 = vst [vmem:[%s2251 + $0x40] sm:$0xff] %v2268
          %v2270 = vld [vmem:[%s2250 + $0x48] sm:$0xff]
          %2271 = vst [vmem:[%s2251 + $0x48] sm:$0xff] %v2270
          %v2272 = vld [vmem:[%s2250 + $0x50] sm:$0xff]
          %2273 = vst [vmem:[%s2251 + $0x50] sm:$0xff] %v2272
          %v2274 = vld [vmem:[%s2250 + $0x58] sm:$0xff]
          %2275 = vst [vmem:[%s2251 + $0x58] sm:$0xff] %v2274
          %v2276 = vld [vmem:[%s2250 + $0x60] sm:$0xff]
          %2277 = vst [vmem:[%s2251 + $0x60] sm:$0xff] %v2276
          %v2278 = vld [vmem:[%s2250 + $0x68] sm:$0xff]
          %2279 = vst [vmem:[%s2251 + $0x68] sm:$0xff] %v2278
          %v2280 = vld [vmem:[%s2250 + $0x70] sm:$0xff]
          %2281 = vst [vmem:[%s2251 + $0x70] sm:$0xff] %v2280
          %v2282 = vld [vmem:[%s2250 + $0x78] sm:$0xff]
          %2283 = vst [vmem:[%s2251 + $0x78] sm:$0xff] %v2282
        $region149: #{model_forward.1} parent=143 // loop_footer
          %s2249 = sadd.s32 1, %s2245
        $region150: #{model_forward.1} parent=143 // loop_footer_branch
          %2244 = sbr.rel target = $region146
        $region151: #{model_forward.1} parent=143 // loop_exit
          _
      $region144: #{model_forward.1} parent=128 // pred_fallthru
        _
      %p2284 = pneg %p2240
      // Predicated region
      $region152: #{model_forward.1} parent=128 // pred_check
        _
      $region153: #{model_forward.1} parent=128 // pred_check_branch
        %2286 = sbr.rel (%p2240) target = $region155
      $region154: #{model_forward.1} parent=128 // pred_region
        %s2287 = sand.u32 128, 7
      $region155: #{model_forward.1} parent=128 // pred_fallthru
        _
    $region129: #{model_forward.1} parent=1 // pred_fallthru
      _
    // Predicated region
    $region130: #{model_forward.1} parent=1 // pred_check
      %p2225 = pneg %p2221
    $region131: #{model_forward.1} parent=1 // pred_check_branch
      %2227 = sbr.rel (%p2225) target = $region133
    $region132: #{model_forward.1} parent=1 // pred_region
      %s2228 = sshllo.u32 0, 128
      loop: start=0, step=1, limit=1
      $region134: #{model_forward.1} parent=132 // loop_pre_header
        _
      $region135: #{model_forward.1} parent=132 // loop_header
        %s2230 = sphi 0, %s2234
        %p2231 = scmp.ge.s32.totalorder %s2230, 1
        %s2235 = sphi %s6, %s6
        %s2236 = sphi [#allocation5], [#allocation5]
      $region136: #{model_forward.1} parent=132 // loop_header_branch
        %2233 = sbr.rel (%p2231) target = $region140
      $region137: #{model_forward.1} parent=132 // loop_body
        %v2237 = vld [vmem:[%s2235] sm:%s2228]
        %2238 = vst [vmem:[%s2236] sm:%s2228] %v2237
      $region138: #{model_forward.1} parent=132 // loop_footer
        %s2234 = sadd.s32 1, %s2230
      $region139: #{model_forward.1} parent=132 // loop_footer_branch
        %2229 = sbr.rel target = $region135
      $region140: #{model_forward.1} parent=132 // loop_exit
        _
    $region133: #{model_forward.1} parent=1 // pred_fallthru
      _
    // Predicated region
    $region156: #{model_forward.1} parent=1 // pred_check
      _
    $region157: #{model_forward.1} parent=1 // pred_check_branch
      %2290 = sbr.rel (0) target = $region159
    $region158: #{model_forward.1} parent=1 // pred_region
      %2291 = vsyncadd %s2219, 2048
    $region159: #{model_forward.1} parent=1 // pred_fallthru
      _
    %s2292 = scalar_lea.sflag [#allocation7], 4
    %p2294 = scmp.lt.u32.totalorder 64, 8
    %p2295 = pneg %p2294
    // Predicated region
    $region160: #{model_forward.1} parent=1 // pred_check
      _
    $region161: #{model_forward.1} parent=1 // pred_check_branch
      %2297 = sbr.rel (%p2294) target = $region163
    $region162: #{model_forward.1} parent=1 // pred_region
      %s2312 = sand.u32 64, 7
      %p2313 = scmp.eq.s32.totalorder %s2312, 0
      // Predicated region
      $region175: #{model_forward.1} parent=162 // pred_check
        %p2314 = pneg %p2313
      $region176: #{model_forward.1} parent=162 // pred_check_branch
        %2316 = sbr.rel (%p2314) target = $region178
      $region177: #{model_forward.1} parent=162 // pred_region
        loop: start=0, step=1, limit=1
        $region179: #{model_forward.1} parent=177 // loop_pre_header
          _
        $region180: #{model_forward.1} parent=177 // loop_header
          %s2318 = sphi 0, %s2322
          %p2319 = scmp.ge.s32.totalorder %s2318, 1
          %s2323 = sphi %s7, %s7
          %s2324 = sphi [#allocation6], [#allocation6]
        $region181: #{model_forward.1} parent=177 // loop_header_branch
          %2321 = sbr.rel (%p2319) target = $region185
        $region182: #{model_forward.1} parent=177 // loop_body
          %v2325 = vld [vmem:[%s2323] sm:$0xff]
          %2326 = vst [vmem:[%s2324] sm:$0xff] %v2325
          %v2327 = vld [vmem:[%s2323 + $0x8] sm:$0xff]
          %2328 = vst [vmem:[%s2324 + $0x8] sm:$0xff] %v2327
          %v2329 = vld [vmem:[%s2323 + $0x10] sm:$0xff]
          %2330 = vst [vmem:[%s2324 + $0x10] sm:$0xff] %v2329
          %v2331 = vld [vmem:[%s2323 + $0x18] sm:$0xff]
          %2332 = vst [vmem:[%s2324 + $0x18] sm:$0xff] %v2331
          %v2333 = vld [vmem:[%s2323 + $0x20] sm:$0xff]
          %2334 = vst [vmem:[%s2324 + $0x20] sm:$0xff] %v2333
          %v2335 = vld [vmem:[%s2323 + $0x28] sm:$0xff]
          %2336 = vst [vmem:[%s2324 + $0x28] sm:$0xff] %v2335
          %v2337 = vld [vmem:[%s2323 + $0x30] sm:$0xff]
          %2338 = vst [vmem:[%s2324 + $0x30] sm:$0xff] %v2337
          %v2339 = vld [vmem:[%s2323 + $0x38] sm:$0xff]
          %2340 = vst [vmem:[%s2324 + $0x38] sm:$0xff] %v2339
        $region183: #{model_forward.1} parent=177 // loop_footer
          %s2322 = sadd.s32 1, %s2318
        $region184: #{model_forward.1} parent=177 // loop_footer_branch
          %2317 = sbr.rel target = $region180
        $region185: #{model_forward.1} parent=177 // loop_exit
          _
      $region178: #{model_forward.1} parent=162 // pred_fallthru
        _
      %p2341 = pneg %p2313
      // Predicated region
      $region186: #{model_forward.1} parent=162 // pred_check
        _
      $region187: #{model_forward.1} parent=162 // pred_check_branch
        %2343 = sbr.rel (%p2313) target = $region189
      $region188: #{model_forward.1} parent=162 // pred_region
        %s2344 = sand.u32 64, 7
      $region189: #{model_forward.1} parent=162 // pred_fallthru
        _
    $region163: #{model_forward.1} parent=1 // pred_fallthru
      _
    // Predicated region
    $region164: #{model_forward.1} parent=1 // pred_check
      %p2298 = pneg %p2294
    $region165: #{model_forward.1} parent=1 // pred_check_branch
      %2300 = sbr.rel (%p2298) target = $region167
    $region166: #{model_forward.1} parent=1 // pred_region
      %s2301 = sshllo.u32 0, 64
      loop: start=0, step=1, limit=1
      $region168: #{model_forward.1} parent=166 // loop_pre_header
        _
      $region169: #{model_forward.1} parent=166 // loop_header
        %s2303 = sphi 0, %s2307
        %p2304 = scmp.ge.s32.totalorder %s2303, 1
        %s2308 = sphi %s7, %s7
        %s2309 = sphi [#allocation6], [#allocation6]
      $region170: #{model_forward.1} parent=166 // loop_header_branch
        %2306 = sbr.rel (%p2304) target = $region174
      $region171: #{model_forward.1} parent=166 // loop_body
        %v2310 = vld [vmem:[%s2308] sm:%s2301]
        %2311 = vst [vmem:[%s2309] sm:%s2301] %v2310
      $region172: #{model_forward.1} parent=166 // loop_footer
        %s2307 = sadd.s32 1, %s2303
      $region173: #{model_forward.1} parent=166 // loop_footer_branch
        %2302 = sbr.rel target = $region169
      $region174: #{model_forward.1} parent=166 // loop_exit
        _
    $region167: #{model_forward.1} parent=1 // pred_fallthru
      _
    // Predicated region
    $region190: #{model_forward.1} parent=1 // pred_check
      _
    $region191: #{model_forward.1} parent=1 // pred_check_branch
      %2347 = sbr.rel (0) target = $region193
    $region192: #{model_forward.1} parent=1 // pred_region
      %2348 = vsyncadd %s2292, 1024
    $region193: #{model_forward.1} parent=1 // pred_fallthru
      _
    %v2349 = vld [vmem:[%s0] sm:$0xf]
    %s2350 = scalar_lea.vmem %s0, 4
    %v2351 = vld [vmem:[%s2350] sm:$0xf]
    %s2352 = scalar_lea.vmem %s0, 8
    %v2353 = vld [vmem:[%s2352] sm:$0xf]
    %s2354 = scalar_lea.vmem %s0, 12
    %v2355 = vld [vmem:[%s2354] sm:$0xf]
    %s2356 = scalar_lea.vmem %s0, 16
    %v2357 = vld [vmem:[%s2356] sm:$0xf]
    %s2358 = scalar_lea.vmem %s0, 20
    %v2359 = vld [vmem:[%s2358] sm:$0xf]
    %s2360 = scalar_lea.vmem %s0, 24
    %v2361 = vld [vmem:[%s2360] sm:$0xf]
    %s2362 = sld [smem:[#allocation8]]
    %v2363 = vstv %s2362
    %v2364 = vmul.f32 %v2363, %v2349
    %v2365 = vmul.f32 %v2363, %v2353
    %s2366 = sld [smem:[#allocation8 + $0x1]]
    %v2367 = vstv %s2366
    %v2368 = vmul.f32 %v2367, %v2351
    %v2369 = vadd.f32 %v2364, %v2368
    %v2370 = vmul.f32 %v2367, %v2355
    %v2371 = vadd.f32 %v2365, %v2370
    %s2372 = sld [smem:[#allocation8 + $0x2]]
    %v2373 = vstv %s2372
    %v2374 = vmul.f32 %v2373, %v2353
    %v2375 = vadd.f32 %v2369, %v2374
    %v2376 = vmul.f32 %v2373, %v2357
    %v2377 = vadd.f32 %v2371, %v2376
    %s2378 = sld [smem:[#allocation8 + $0x3]]
    %v2379 = vstv %s2378
    %v2380 = vmul.f32 %v2379, %v2355
    %v2381 = vadd.f32 %v2375, %v2380
    %v2382 = vmul.f32 %v2379, %v2359
    %v2383 = vadd.f32 %v2377, %v2382
    %s2384 = sld [smem:[#allocation8 + $0x4]]
    %v2385 = vstv %s2384
    %v2386 = vmul.f32 %v2385, %v2357
    %v2387 = vadd.f32 %v2381, %v2386
    %v2388 = vmul.f32 %v2385, %v2361
    %v2389 = vadd.f32 %v2383, %v2388
    %s2390 = sld [smem:[#allocation8 + $0x14]]
    %v2391 = vstv %s2390
    %v2392 = vadd.f32 %v2387, %v2391
    %v2393 = vmax.f32 %v2392, 0.0
    %v2394 = vadd.f32 %v2389, %v2391
    %v2395 = vmax.f32 %v2394, 0.0
    %s2396 = sld [smem:[#allocation8 + $0x5]]
    %v2397 = vstv %s2396
    %v2398 = vmul.f32 %v2397, %v2349
    %v2399 = vmul.f32 %v2397, %v2353
    %s2400 = sld [smem:[#allocation8 + $0x6]]
    %v2401 = vstv %s2400
    %v2402 = vmul.f32 %v2401, %v2351
    %v2403 = vadd.f32 %v2398, %v2402
    %v2404 = vmul.f32 %v2401, %v2355
    %v2405 = vadd.f32 %v2399, %v2404
    %s2406 = sld [smem:[#allocation8 + $0x7]]
    %v2407 = vstv %s2406
    %v2408 = vmul.f32 %v2407, %v2353
    %v2409 = vadd.f32 %v2403, %v2408
    %v2410 = vmul.f32 %v2407, %v2357
    %v2411 = vadd.f32 %v2405, %v2410
    %s2412 = sld [smem:[#allocation8 + $0x8]]
    %v2413 = vstv %s2412
    %v2414 = vmul.f32 %v2413, %v2355
    %v2415 = vadd.f32 %v2409, %v2414
    %v2416 = vmul.f32 %v2413, %v2359
    %v2417 = vadd.f32 %v2411, %v2416
    %s2418 = sld [smem:[#allocation8 + $0x9]]
    %v2419 = vstv %s2418
    %v2420 = vmul.f32 %v2419, %v2357
    %v2421 = vadd.f32 %v2415, %v2420
    %v2422 = vmul.f32 %v2419, %v2361
    %v2423 = vadd.f32 %v2417, %v2422
    %s2424 = sld [smem:[#allocation8 + $0x15]]
    %v2425 = vstv %s2424
    %v2426 = vadd.f32 %v2421, %v2425
    %v2427 = vmax.f32 %v2426, 0.0
    %v2428 = vadd.f32 %v2423, %v2425
    %v2429 = vmax.f32 %v2428, 0.0
    %s2430 = sld [smem:[#allocation8 + $0xa]]
    %v2431 = vstv %s2430
    %v2432 = vmul.f32 %v2431, %v2349
    %v2433 = vmul.f32 %v2431, %v2353
    %s2434 = sld [smem:[#allocation8 + $0xb]]
    %v2435 = vstv %s2434
    %v2436 = vmul.f32 %v2435, %v2351
    %v2437 = vadd.f32 %v2432, %v2436
    %v2438 = vmul.f32 %v2435, %v2355
    %v2439 = vadd.f32 %v2433, %v2438
    %s2440 = sld [smem:[#allocation8 + $0xc]]
    %v2441 = vstv %s2440
    %v2442 = vmul.f32 %v2441, %v2353
    %v2443 = vadd.f32 %v2437, %v2442
    %v2444 = vmul.f32 %v2441, %v2357
    %v2445 = vadd.f32 %v2439, %v2444
    %s2446 = sld [smem:[#allocation8 + $0xd]]
    %v2447 = vstv %s2446
    %v2448 = vmul.f32 %v2447, %v2355
    %v2449 = vadd.f32 %v2443, %v2448
    %v2450 = vmul.f32 %v2447, %v2359
    %v2451 = vadd.f32 %v2445, %v2450
    %s2452 = sld [smem:[#allocation8 + $0xe]]
    %v2453 = vstv %s2452
    %v2454 = vmul.f32 %v2453, %v2357
    %v2455 = vadd.f32 %v2449, %v2454
    %v2456 = vmul.f32 %v2453, %v2361
    %v2457 = vadd.f32 %v2451, %v2456
    %s2458 = sld [smem:[#allocation8 + $0x16]]
    %v2459 = vstv %s2458
    %v2460 = vadd.f32 %v2455, %v2459
    %v2461 = vmax.f32 %v2460, 0.0
    %v2462 = vadd.f32 %v2457, %v2459
    %v2463 = vmax.f32 %v2462, 0.0
    %s2464 = sld [smem:[#allocation8 + $0xf]]
    %v2465 = vstv %s2464
    %v2466 = vmul.f32 %v2465, %v2349
    %v2467 = vmul.f32 %v2465, %v2353
    %s2468 = sld [smem:[#allocation8 + $0x10]]
    %v2469 = vstv %s2468
    %v2470 = vmul.f32 %v2469, %v2351
    %v2471 = vadd.f32 %v2466, %v2470
    %v2472 = vmul.f32 %v2469, %v2355
    %v2473 = vadd.f32 %v2467, %v2472
    %s2474 = sld [smem:[#allocation8 + $0x11]]
    %v2475 = vstv %s2474
    %v2476 = vmul.f32 %v2475, %v2353
    %v2477 = vadd.f32 %v2471, %v2476
    %v2478 = vmul.f32 %v2475, %v2357
    %v2479 = vadd.f32 %v2473, %v2478
    %s2480 = sld [smem:[#allocation8 + $0x12]]
    %v2481 = vstv %s2480
    %v2482 = vmul.f32 %v2481, %v2355
    %v2483 = vadd.f32 %v2477, %v2482
    %v2484 = vmul.f32 %v2481, %v2359
    %v2485 = vadd.f32 %v2479, %v2484
    %s2486 = sld [smem:[#allocation8 + $0x13]]
    %v2487 = vstv %s2486
    %v2488 = vmul.f32 %v2487, %v2357
    %v2489 = vadd.f32 %v2483, %v2488
    %v2490 = vmul.f32 %v2487, %v2361
    %v2491 = vadd.f32 %v2485, %v2490
    %s2492 = sld [smem:[#allocation8 + $0x17]]
    %v2493 = vstv %s2492
    %v2494 = vadd.f32 %v2489, %v2493
    %v2495 = vmax.f32 %v2494, 0.0
    %v2496 = vadd.f32 %v2491, %v2493
    %v2497 = vmax.f32 %v2496, 0.0
    %v2500 = vunpack.c.l.s4 1983009808
    %v2501 = vunpack.c.0.s8 %v2500
    %v2502 = vlaneseq
    %v2503 = vshrl.u32 %v2502, 7
    %v2504 = vsub.s32 %v2501, %v2503
    %v2505 = vrot.slane %v2393, %v2504
    %v2506 = vcombine.high %v2505, %v2505
    %2507 = vrot.lane.b32.xlu0 %v2505, 1
    %v2508 = vpop.permute.xlu0 %2507
    %2509 = vrot.lane.b32.xlu0 %v2506, 1
    %v2510 = vpop.permute.xlu0 %2509
    %vm2511 = vcmask 7168
    %v2512 = vsel %vm2511, %v2508, %v2510
    %v2515 = vsel %vm2511, 0.0, %v2508
    %v2518 = vunpack.c.l.s4 1983009808
    %v2519 = vunpack.c.0.s8 %v2518
    %v2520 = vlaneseq
    %v2521 = vshrl.u32 %v2520, 7
    %v2522 = vsub.s32 %v2519, %v2521
    %v2523 = vrot.slane %v2395, %v2522
    %v2524 = vcombine.high %v2523, %v2523
    %2525 = vrot.lane.b32.xlu0 %v2523, 1
    %v2526 = vpop.permute.xlu0 %2525
    %2527 = vrot.lane.b32.xlu0 %v2524, 1
    %v2528 = vpop.permute.xlu0 %2527
    %v2529 = vsel %vm2511, %v2526, %v2528
    %v2532 = vsel %vm2511, 0.0, %v2526
    %2533 = vrot.lane.b32.xlu0 %v2505, 127
    %v2534 = vpop.permute.xlu0 %2533
    %2535 = vrot.lane.b32.xlu0 %v2506, 127
    %v2536 = vpop.permute.xlu0 %2535
    %vm2537 = vcmask 1039360
    %v2538 = vsel %vm2537, %v2534, %v2536
    %vm2541 = vcmask 990208
    %v2542 = vsel %vm2541, %v2536, 0.0
    %s2543 = sld [smem:[#allocation8 + $0x18]]
    %v2544 = vstv %s2543
    %v2545 = vmul.f32 %v2544, %v2515
    %v2546 = vmul.f32 %v2544, %v2512
    %s2547 = sld [smem:[#allocation8 + $0x19]]
    %v2548 = vstv %s2547
    %v2549 = vmul.f32 %v2548, %v2532
    %v2550 = vmul.f32 %v2548, %v2529
    %v2551 = vadd.f32 %v2545, %v2549
    %v2552 = vadd.f32 %v2546, %v2550
    %s2553 = sld [smem:[#allocation8 + $0x1a]]
    %v2554 = vstv %s2553
    %v2555 = vmul.f32 %v2554, %v2393
    %v2558 = vunpack.c.l.s4 1983009808
    %v2559 = vunpack.c.0.s8 %v2558
    %v2560 = vlaneseq
    %v2561 = vshrl.u32 %v2560, 7
    %v2562 = vsub.s32 %v2559, %v2561
    %v2563 = vrot.slane %v2555, %v2562
    %v2564 = vcombine.high %v2563, %v2563
    %v2567 = vadd.f32 %v2551, %v2563
    %v2568 = vadd.f32 %v2552, %v2564
    %s2569 = sld [smem:[#allocation8 + $0x1b]]
    %v2570 = vstv %s2569
    %v2571 = vmul.f32 %v2570, %v2395
    %v2574 = vunpack.c.l.s4 1983009808
    %v2575 = vunpack.c.0.s8 %v2574
    %v2576 = vlaneseq
    %v2577 = vshrl.u32 %v2576, 7
    %v2578 = vsub.s32 %v2575, %v2577
    %v2579 = vrot.slane %v2571, %v2578
    %v2580 = vcombine.high %v2579, %v2579
    %v2583 = vadd.f32 %v2567, %v2579
    %v2584 = vadd.f32 %v2568, %v2580
    %s2585 = sld [smem:[#allocation8 + $0x1c]]
    %v2586 = vstv %s2585
    %v2587 = vmul.f32 %v2586, %v2538
    %v2588 = vmul.f32 %v2586, %v2542
    %v2589 = vadd.f32 %v2583, %v2587
    %v2590 = vadd.f32 %v2584, %v2588
    %s2591 = sld [smem:[#allocation8 + $0x2c]]
    %v2592 = vstv %s2591
    %v2593 = vmul.f32 %v2592, %v2515
    %v2594 = vmul.f32 %v2592, %v2512
    %s2595 = sld [smem:[#allocation8 + $0x2d]]
    %v2596 = vstv %s2595
    %v2597 = vmul.f32 %v2596, %v2532
    %v2598 = vmul.f32 %v2596, %v2529
    %v2599 = vadd.f32 %v2593, %v2597
    %v2600 = vadd.f32 %v2594, %v2598
    %s2601 = sld [smem:[#allocation8 + $0x2e]]
    %v2602 = vstv %s2601
    %v2603 = vmul.f32 %v2602, %v2393
    %v2606 = vunpack.c.l.s4 1983009808
    %v2607 = vunpack.c.0.s8 %v2606
    %v2608 = vlaneseq
    %v2609 = vshrl.u32 %v2608, 7
    %v2610 = vsub.s32 %v2607, %v2609
    %v2611 = vrot.slane %v2603, %v2610
    %v2612 = vcombine.high %v2611, %v2611
    %v2615 = vadd.f32 %v2599, %v2611
    %v2616 = vadd.f32 %v2600, %v2612
    %s2617 = sld [smem:[#allocation8 + $0x2f]]
    %v2618 = vstv %s2617
    %v2619 = vmul.f32 %v2618, %v2395
    %v2622 = vunpack.c.l.s4 1983009808
    %v2623 = vunpack.c.0.s8 %v2622
    %v2624 = vlaneseq
    %v2625 = vshrl.u32 %v2624, 7
    %v2626 = vsub.s32 %v2623, %v2625
    %v2627 = vrot.slane %v2619, %v2626
    %v2628 = vcombine.high %v2627, %v2627
    %v2631 = vadd.f32 %v2615, %v2627
    %v2632 = vadd.f32 %v2616, %v2628
    %s2633 = sld [smem:[#allocation8 + $0x30]]
    %v2634 = vstv %s2633
    %v2635 = vmul.f32 %v2634, %v2538
    %v2636 = vmul.f32 %v2634, %v2542
    %v2637 = vadd.f32 %v2631, %v2635
    %v2638 = vadd.f32 %v2632, %v2636
    %s2639 = sld [smem:[#allocation8 + $0x40]]
    %v2640 = vstv %s2639
    %v2641 = vmul.f32 %v2640, %v2515
    %v2642 = vmul.f32 %v2640, %v2512
    %s2643 = sld [smem:[#allocation8 + $0x41]]
    %v2644 = vstv %s2643
    %v2645 = vmul.f32 %v2644, %v2532
    %v2646 = vmul.f32 %v2644, %v2529
    %v2647 = vadd.f32 %v2641, %v2645
    %v2648 = vadd.f32 %v2642, %v2646
    %s2649 = sld [smem:[#allocation8 + $0x42]]
    %v2650 = vstv %s2649
    %v2651 = vmul.f32 %v2650, %v2393
    %v2654 = vunpack.c.l.s4 1983009808
    %v2655 = vunpack.c.0.s8 %v2654
    %v2656 = vlaneseq
    %v2657 = vshrl.u32 %v2656, 7
    %v2658 = vsub.s32 %v2655, %v2657
    %v2659 = vrot.slane %v2651, %v2658
    %v2660 = vcombine.high %v2659, %v2659
    %v2663 = vadd.f32 %v2647, %v2659
    %v2664 = vadd.f32 %v2648, %v2660
    %s2665 = sld [smem:[#allocation8 + $0x43]]
    %v2666 = vstv %s2665
    %v2667 = vmul.f32 %v2666, %v2395
    %v2670 = vunpack.c.l.s4 1983009808
    %v2671 = vunpack.c.0.s8 %v2670
    %v2672 = vlaneseq
    %v2673 = vshrl.u32 %v2672, 7
    %v2674 = vsub.s32 %v2671, %v2673
    %v2675 = vrot.slane %v2667, %v2674
    %v2676 = vcombine.high %v2675, %v2675
    %v2679 = vadd.f32 %v2663, %v2675
    %v2680 = vadd.f32 %v2664, %v2676
    %s2681 = sld [smem:[#allocation8 + $0x44]]
    %v2682 = vstv %s2681
    %v2683 = vmul.f32 %v2682, %v2538
    %v2684 = vmul.f32 %v2682, %v2542
    %v2685 = vadd.f32 %v2679, %v2683
    %v2686 = vadd.f32 %v2680, %v2684
    %s2687 = sld [smem:[#allocation8 + $0x54]]
    %v2688 = vstv %s2687
    %v2689 = vmul.f32 %v2688, %v2515
    %v2690 = vmul.f32 %v2688, %v2512
    %s2691 = sld [smem:[#allocation8 + $0x55]]
    %v2692 = vstv %s2691
    %v2693 = vmul.f32 %v2692, %v2532
    %v2694 = vmul.f32 %v2692, %v2529
    %v2695 = vadd.f32 %v2689, %v2693
    %v2696 = vadd.f32 %v2690, %v2694
    %s2697 = sld [smem:[#allocation8 + $0x56]]
    %v2698 = vstv %s2697
    %v2699 = vmul.f32 %v2698, %v2393
    %v2702 = vunpack.c.l.s4 1983009808
    %v2703 = vunpack.c.0.s8 %v2702
    %v2704 = vlaneseq
    %v2705 = vshrl.u32 %v2704, 7
    %v2706 = vsub.s32 %v2703, %v2705
    %v2707 = vrot.slane %v2699, %v2706
    %v2708 = vcombine.high %v2707, %v2707
    %v2711 = vadd.f32 %v2695, %v2707
    %v2712 = vadd.f32 %v2696, %v2708
    %s2713 = sld [smem:[#allocation8 + $0x57]]
    %v2714 = vstv %s2713
    %v2715 = vmul.f32 %v2714, %v2395
    %v2718 = vunpack.c.l.s4 1983009808
    %v2719 = vunpack.c.0.s8 %v2718
    %v2720 = vlaneseq
    %v2721 = vshrl.u32 %v2720, 7
    %v2722 = vsub.s32 %v2719, %v2721
    %v2723 = vrot.slane %v2715, %v2722
    %v2724 = vcombine.high %v2723, %v2723
    %v2727 = vadd.f32 %v2711, %v2723
    %v2728 = vadd.f32 %v2712, %v2724
    %s2729 = sld [smem:[#allocation8 + $0x58]]
    %v2730 = vstv %s2729
    %v2731 = vmul.f32 %v2730, %v2538
    %v2732 = vmul.f32 %v2730, %v2542
    %v2733 = vadd.f32 %v2727, %v2731
    %v2734 = vadd.f32 %v2728, %v2732
    %v2737 = vunpack.c.l.s4 1983009808
    %v2738 = vunpack.c.0.s8 %v2737
    %v2739 = vlaneseq
    %v2740 = vshrl.u32 %v2739, 7
    %v2741 = vsub.s32 %v2738, %v2740
    %v2742 = vrot.slane %v2427, %v2741
    %v2743 = vcombine.high %v2742, %v2742
    %2744 = vrot.lane.b32.xlu0 %v2742, 1
    %v2745 = vpop.permute.xlu0 %2744
    %2746 = vrot.lane.b32.xlu0 %v2743, 1
    %v2747 = vpop.permute.xlu0 %2746
    %v2748 = vsel %vm2511, %v2745, %v2747
    %v2751 = vsel %vm2511, 0.0, %v2745
    %v2754 = vunpack.c.l.s4 1983009808
    %v2755 = vunpack.c.0.s8 %v2754
    %v2756 = vlaneseq
    %v2757 = vshrl.u32 %v2756, 7
    %v2758 = vsub.s32 %v2755, %v2757
    %v2759 = vrot.slane %v2429, %v2758
    %v2760 = vcombine.high %v2759, %v2759
    %2761 = vrot.lane.b32.xlu0 %v2759, 1
    %v2762 = vpop.permute.xlu0 %2761
    %2763 = vrot.lane.b32.xlu0 %v2760, 1
    %v2764 = vpop.permute.xlu0 %2763
    %v2765 = vsel %vm2511, %v2762, %v2764
    %v2768 = vsel %vm2511, 0.0, %v2762
    %2769 = vrot.lane.b32.xlu0 %v2742, 127
    %v2770 = vpop.permute.xlu0 %2769
    %2771 = vrot.lane.b32.xlu0 %v2743, 127
    %v2772 = vpop.permute.xlu0 %2771
    %v2773 = vsel %vm2537, %v2770, %v2772
    %v2776 = vsel %vm2541, %v2772, 0.0
    %s2777 = sld [smem:[#allocation8 + $0x1d]]
    %v2778 = vstv %s2777
    %v2779 = vmul.f32 %v2778, %v2751
    %v2780 = vmul.f32 %v2778, %v2748
    %s2781 = sld [smem:[#allocation8 + $0x1e]]
    %v2782 = vstv %s2781
    %v2783 = vmul.f32 %v2782, %v2768
    %v2784 = vmul.f32 %v2782, %v2765
    %v2785 = vadd.f32 %v2779, %v2783
    %v2786 = vadd.f32 %v2780, %v2784
    %s2787 = sld [smem:[#allocation8 + $0x1f]]
    %v2788 = vstv %s2787
    %v2789 = vmul.f32 %v2788, %v2427
    %v2792 = vunpack.c.l.s4 1983009808
    %v2793 = vunpack.c.0.s8 %v2792
    %v2794 = vlaneseq
    %v2795 = vshrl.u32 %v2794, 7
    %v2796 = vsub.s32 %v2793, %v2795
    %v2797 = vrot.slane %v2789, %v2796
    %v2798 = vcombine.high %v2797, %v2797
    %v2801 = vadd.f32 %v2785, %v2797
    %v2802 = vadd.f32 %v2786, %v2798
    %s2803 = sld [smem:[#allocation8 + $0x20]]
    %v2804 = vstv %s2803
    %v2805 = vmul.f32 %v2804, %v2429
    %v2808 = vunpack.c.l.s4 1983009808
    %v2809 = vunpack.c.0.s8 %v2808
    %v2810 = vlaneseq
    %v2811 = vshrl.u32 %v2810, 7
    %v2812 = vsub.s32 %v2809, %v2811
    %v2813 = vrot.slane %v2805, %v2812
    %v2814 = vcombine.high %v2813, %v2813
    %v2817 = vadd.f32 %v2801, %v2813
    %v2818 = vadd.f32 %v2802, %v2814
    %s2819 = sld [smem:[#allocation8 + $0x21]]
    %v2820 = vstv %s2819
    %v2821 = vmul.f32 %v2820, %v2773
    %v2822 = vmul.f32 %v2820, %v2776
    %v2823 = vadd.f32 %v2817, %v2821
    %v2824 = vadd.f32 %v2818, %v2822
    %v2825 = vadd.f32 %v2589, %v2823
    %v2826 = vadd.f32 %v2590, %v2824
    %s2827 = sld [smem:[#allocation8 + $0x31]]
    %v2828 = vstv %s2827
    %v2829 = vmul.f32 %v2828, %v2751
    %v2830 = vmul.f32 %v2828, %v2748
    %s2831 = sld [smem:[#allocation8 + $0x32]]
    %v2832 = vstv %s2831
    %v2833 = vmul.f32 %v2832, %v2768
    %v2834 = vmul.f32 %v2832, %v2765
    %v2835 = vadd.f32 %v2829, %v2833
    %v2836 = vadd.f32 %v2830, %v2834
    %s2837 = sld [smem:[#allocation8 + $0x33]]
    %v2838 = vstv %s2837
    %v2839 = vmul.f32 %v2838, %v2427
    %v2842 = vunpack.c.l.s4 1983009808
    %v2843 = vunpack.c.0.s8 %v2842
    %v2844 = vlaneseq
    %v2845 = vshrl.u32 %v2844, 7
    %v2846 = vsub.s32 %v2843, %v2845
    %v2847 = vrot.slane %v2839, %v2846
    %v2848 = vcombine.high %v2847, %v2847
    %v2851 = vadd.f32 %v2835, %v2847
    %v2852 = vadd.f32 %v2836, %v2848
    %s2853 = sld [smem:[#allocation8 + $0x34]]
    %v2854 = vstv %s2853
    %v2855 = vmul.f32 %v2854, %v2429
    %v2858 = vunpack.c.l.s4 1983009808
    %v2859 = vunpack.c.0.s8 %v2858
    %v2860 = vlaneseq
    %v2861 = vshrl.u32 %v2860, 7
    %v2862 = vsub.s32 %v2859, %v2861
    %v2863 = vrot.slane %v2855, %v2862
    %v2864 = vcombine.high %v2863, %v2863
    %v2867 = vadd.f32 %v2851, %v2863
    %v2868 = vadd.f32 %v2852, %v2864
    %s2869 = sld [smem:[#allocation8 + $0x35]]
    %v2870 = vstv %s2869
    %v2871 = vmul.f32 %v2870, %v2773
    %v2872 = vmul.f32 %v2870, %v2776
    %v2873 = vadd.f32 %v2867, %v2871
    %v2874 = vadd.f32 %v2868, %v2872
    %v2875 = vadd.f32 %v2637, %v2873
    %v2876 = vadd.f32 %v2638, %v2874
    %s2877 = sld [smem:[#allocation8 + $0x45]]
    %v2878 = vstv %s2877
    %v2879 = vmul.f32 %v2878, %v2751
    %v2880 = vmul.f32 %v2878, %v2748
    %s2881 = sld [smem:[#allocation8 + $0x46]]
    %v2882 = vstv %s2881
    %v2883 = vmul.f32 %v2882, %v2768
    %v2884 = vmul.f32 %v2882, %v2765
    %v2885 = vadd.f32 %v2879, %v2883
    %v2886 = vadd.f32 %v2880, %v2884
    %s2887 = sld [smem:[#allocation8 + $0x47]]
    %v2888 = vstv %s2887
    %v2889 = vmul.f32 %v2888, %v2427
    %v2892 = vunpack.c.l.s4 1983009808
    %v2893 = vunpack.c.0.s8 %v2892
    %v2894 = vlaneseq
    %v2895 = vshrl.u32 %v2894, 7
    %v2896 = vsub.s32 %v2893, %v2895
    %v2897 = vrot.slane %v2889, %v2896
    %v2898 = vcombine.high %v2897, %v2897
    %v2901 = vadd.f32 %v2885, %v2897
    %v2902 = vadd.f32 %v2886, %v2898
    %s2903 = sld [smem:[#allocation8 + $0x48]]
    %v2904 = vstv %s2903
    %v2905 = vmul.f32 %v2904, %v2429
    %v2908 = vunpack.c.l.s4 1983009808
    %v2909 = vunpack.c.0.s8 %v2908
    %v2910 = vlaneseq
    %v2911 = vshrl.u32 %v2910, 7
    %v2912 = vsub.s32 %v2909, %v2911
    %v2913 = vrot.slane %v2905, %v2912
    %v2914 = vcombine.high %v2913, %v2913
    %v2917 = vadd.f32 %v2901, %v2913
    %v2918 = vadd.f32 %v2902, %v2914
    %s2919 = sld [smem:[#allocation8 + $0x49]]
    %v2920 = vstv %s2919
    %v2921 = vmul.f32 %v2920, %v2773
    %v2922 = vmul.f32 %v2920, %v2776
    %v2923 = vadd.f32 %v2917, %v2921
    %v2924 = vadd.f32 %v2918, %v2922
    %v2925 = vadd.f32 %v2685, %v2923
    %v2926 = vadd.f32 %v2686, %v2924
    %s2927 = sld [smem:[#allocation8 + $0x59]]
    %v2928 = vstv %s2927
    %v2929 = vmul.f32 %v2928, %v2751
    %v2930 = vmul.f32 %v2928, %v2748
    %s2931 = sld [smem:[#allocation8 + $0x5a]]
    %v2932 = vstv %s2931
    %v2933 = vmul.f32 %v2932, %v2768
    %v2934 = vmul.f32 %v2932, %v2765
    %v2935 = vadd.f32 %v2929, %v2933
    %v2936 = vadd.f32 %v2930, %v2934
    %s2937 = sld [smem:[#allocation8 + $0x5b]]
    %v2938 = vstv %s2937
    %v2939 = vmul.f32 %v2938, %v2427
    %v2942 = vunpack.c.l.s4 1983009808
    %v2943 = vunpack.c.0.s8 %v2942
    %v2944 = vlaneseq
    %v2945 = vshrl.u32 %v2944, 7
    %v2946 = vsub.s32 %v2943, %v2945
    %v2947 = vrot.slane %v2939, %v2946
    %v2948 = vcombine.high %v2947, %v2947
    %v2951 = vadd.f32 %v2935, %v2947
    %v2952 = vadd.f32 %v2936, %v2948
    %s2953 = sld [smem:[#allocation8 + $0x5c]]
    %v2954 = vstv %s2953
    %v2955 = vmul.f32 %v2954, %v2429
    %v2958 = vunpack.c.l.s4 1983009808
    %v2959 = vunpack.c.0.s8 %v2958
    %v2960 = vlaneseq
    %v2961 = vshrl.u32 %v2960, 7
    %v2962 = vsub.s32 %v2959, %v2961
    %v2963 = vrot.slane %v2955, %v2962
    %v2964 = vcombine.high %v2963, %v2963
    %v2967 = vadd.f32 %v2951, %v2963
    %v2968 = vadd.f32 %v2952, %v2964
    %s2969 = sld [smem:[#allocation8 + $0x5d]]
    %v2970 = vstv %s2969
    %v2971 = vmul.f32 %v2970, %v2773
    %v2972 = vmul.f32 %v2970, %v2776
    %v2973 = vadd.f32 %v2967, %v2971
    %v2974 = vadd.f32 %v2968, %v2972
    %v2975 = vadd.f32 %v2733, %v2973
    %v2976 = vadd.f32 %v2734, %v2974
    %v2979 = vunpack.c.l.s4 1983009808
    %v2980 = vunpack.c.0.s8 %v2979
    %v2981 = vlaneseq
    %v2982 = vshrl.u32 %v2981, 7
    %v2983 = vsub.s32 %v2980, %v2982
    %v2984 = vrot.slane %v2461, %v2983
    %v2985 = vcombine.high %v2984, %v2984
    %2986 = vrot.lane.b32.xlu0 %v2984, 1
    %v2987 = vpop.permute.xlu0 %2986
    %2988 = vrot.lane.b32.xlu0 %v2985, 1
    %v2989 = vpop.permute.xlu0 %2988
    %v2990 = vsel %vm2511, %v2987, %v2989
    %v2993 = vsel %vm2511, 0.0, %v2987
    %v2996 = vunpack.c.l.s4 1983009808
    %v2997 = vunpack.c.0.s8 %v2996
    %v2998 = vlaneseq
    %v2999 = vshrl.u32 %v2998, 7
    %v3000 = vsub.s32 %v2997, %v2999
    %v3001 = vrot.slane %v2463, %v3000
    %v3002 = vcombine.high %v3001, %v3001
    %3003 = vrot.lane.b32.xlu0 %v3001, 1
    %v3004 = vpop.permute.xlu0 %3003
    %3005 = vrot.lane.b32.xlu0 %v3002, 1
    %v3006 = vpop.permute.xlu0 %3005
    %v3007 = vsel %vm2511, %v3004, %v3006
    %v3010 = vsel %vm2511, 0.0, %v3004
    %3011 = vrot.lane.b32.xlu0 %v2984, 127
    %v3012 = vpop.permute.xlu0 %3011
    %3013 = vrot.lane.b32.xlu0 %v2985, 127
    %v3014 = vpop.permute.xlu0 %3013
    %v3015 = vsel %vm2537, %v3012, %v3014
    %v3018 = vsel %vm2541, %v3014, 0.0
    %s3019 = sld [smem:[#allocation8 + $0x22]]
    %v3020 = vstv %s3019
    %v3021 = vmul.f32 %v3020, %v2993
    %v3022 = vmul.f32 %v3020, %v2990
    %s3023 = sld [smem:[#allocation8 + $0x23]]
    %v3024 = vstv %s3023
    %v3025 = vmul.f32 %v3024, %v3010
    %v3026 = vmul.f32 %v3024, %v3007
    %v3027 = vadd.f32 %v3021, %v3025
    %v3028 = vadd.f32 %v3022, %v3026
    %s3029 = sld [smem:[#allocation8 + $0x24]]
    %v3030 = vstv %s3029
    %v3031 = vmul.f32 %v3030, %v2461
    %v3034 = vunpack.c.l.s4 1983009808
    %v3035 = vunpack.c.0.s8 %v3034
    %v3036 = vlaneseq
    %v3037 = vshrl.u32 %v3036, 7
    %v3038 = vsub.s32 %v3035, %v3037
    %v3039 = vrot.slane %v3031, %v3038
    %v3040 = vcombine.high %v3039, %v3039
    %v3043 = vadd.f32 %v3027, %v3039
    %v3044 = vadd.f32 %v3028, %v3040
    %s3045 = sld [smem:[#allocation8 + $0x25]]
    %v3046 = vstv %s3045
    %v3047 = vmul.f32 %v3046, %v2463
    %v3050 = vunpack.c.l.s4 1983009808
    %v3051 = vunpack.c.0.s8 %v3050
    %v3052 = vlaneseq
    %v3053 = vshrl.u32 %v3052, 7
    %v3054 = vsub.s32 %v3051, %v3053
    %v3055 = vrot.slane %v3047, %v3054
    %v3056 = vcombine.high %v3055, %v3055
    %v3059 = vadd.f32 %v3043, %v3055
    %v3060 = vadd.f32 %v3044, %v3056
    %s3061 = sld [smem:[#allocation8 + $0x26]]
    %v3062 = vstv %s3061
    %v3063 = vmul.f32 %v3062, %v3015
    %v3064 = vmul.f32 %v3062, %v3018
    %v3065 = vadd.f32 %v3059, %v3063
    %v3066 = vadd.f32 %v3060, %v3064
    %v3067 = vadd.f32 %v2825, %v3065
    %v3068 = vadd.f32 %v2826, %v3066
    %s3069 = sld [smem:[#allocation8 + $0x36]]
    %v3070 = vstv %s3069
    %v3071 = vmul.f32 %v3070, %v2993
    %v3072 = vmul.f32 %v3070, %v2990
    %s3073 = sld [smem:[#allocation8 + $0x37]]
    %v3074 = vstv %s3073
    %v3075 = vmul.f32 %v3074, %v3010
    %v3076 = vmul.f32 %v3074, %v3007
    %v3077 = vadd.f32 %v3071, %v3075
    %v3078 = vadd.f32 %v3072, %v3076
    %s3079 = sld [smem:[#allocation8 + $0x38]]
    %v3080 = vstv %s3079
    %v3081 = vmul.f32 %v3080, %v2461
    %v3084 = vunpack.c.l.s4 1983009808
    %v3085 = vunpack.c.0.s8 %v3084
    %v3086 = vlaneseq
    %v3087 = vshrl.u32 %v3086, 7
    %v3088 = vsub.s32 %v3085, %v3087
    %v3089 = vrot.slane %v3081, %v3088
    %v3090 = vcombine.high %v3089, %v3089
    %v3093 = vadd.f32 %v3077, %v3089
    %v3094 = vadd.f32 %v3078, %v3090
    %s3095 = sld [smem:[#allocation8 + $0x39]]
    %v3096 = vstv %s3095
    %v3097 = vmul.f32 %v3096, %v2463
    %v3100 = vunpack.c.l.s4 1983009808
    %v3101 = vunpack.c.0.s8 %v3100
    %v3102 = vlaneseq
    %v3103 = vshrl.u32 %v3102, 7
    %v3104 = vsub.s32 %v3101, %v3103
    %v3105 = vrot.slane %v3097, %v3104
    %v3106 = vcombine.high %v3105, %v3105
    %v3109 = vadd.f32 %v3093, %v3105
    %v3110 = vadd.f32 %v3094, %v3106
    %s3111 = sld [smem:[#allocation8 + $0x3a]]
    %v3112 = vstv %s3111
    %v3113 = vmul.f32 %v3112, %v3015
    %v3114 = vmul.f32 %v3112, %v3018
    %v3115 = vadd.f32 %v3109, %v3113
    %v3116 = vadd.f32 %v3110, %v3114
    %v3117 = vadd.f32 %v2875, %v3115
    %v3118 = vadd.f32 %v2876, %v3116
    %s3119 = sld [smem:[#allocation8 + $0x4a]]
    %v3120 = vstv %s3119
    %v3121 = vmul.f32 %v3120, %v2993
    %v3122 = vmul.f32 %v3120, %v2990
    %s3123 = sld [smem:[#allocation8 + $0x4b]]
    %v3124 = vstv %s3123
    %v3125 = vmul.f32 %v3124, %v3010
    %v3126 = vmul.f32 %v3124, %v3007
    %v3127 = vadd.f32 %v3121, %v3125
    %v3128 = vadd.f32 %v3122, %v3126
    %s3129 = sld [smem:[#allocation8 + $0x4c]]
    %v3130 = vstv %s3129
    %v3131 = vmul.f32 %v3130, %v2461
    %v3134 = vunpack.c.l.s4 1983009808
    %v3135 = vunpack.c.0.s8 %v3134
    %v3136 = vlaneseq
    %v3137 = vshrl.u32 %v3136, 7
    %v3138 = vsub.s32 %v3135, %v3137
    %v3139 = vrot.slane %v3131, %v3138
    %v3140 = vcombine.high %v3139, %v3139
    %v3143 = vadd.f32 %v3127, %v3139
    %v3144 = vadd.f32 %v3128, %v3140
    %s3145 = sld [smem:[#allocation8 + $0x4d]]
    %v3146 = vstv %s3145
    %v3147 = vmul.f32 %v3146, %v2463
    %v3150 = vunpack.c.l.s4 1983009808
    %v3151 = vunpack.c.0.s8 %v3150
    %v3152 = vlaneseq
    %v3153 = vshrl.u32 %v3152, 7
    %v3154 = vsub.s32 %v3151, %v3153
    %v3155 = vrot.slane %v3147, %v3154
    %v3156 = vcombine.high %v3155, %v3155
    %v3159 = vadd.f32 %v3143, %v3155
    %v3160 = vadd.f32 %v3144, %v3156
    %s3161 = sld [smem:[#allocation8 + $0x4e]]
    %v3162 = vstv %s3161
    %v3163 = vmul.f32 %v3162, %v3015
    %v3164 = vmul.f32 %v3162, %v3018
    %v3165 = vadd.f32 %v3159, %v3163
    %v3166 = vadd.f32 %v3160, %v3164
    %v3167 = vadd.f32 %v2925, %v3165
    %v3168 = vadd.f32 %v2926, %v3166
    %s3169 = sld [smem:[#allocation8 + $0x5e]]
    %v3170 = vstv %s3169
    %v3171 = vmul.f32 %v3170, %v2993
    %v3172 = vmul.f32 %v3170, %v2990
    %s3173 = sld [smem:[#allocation8 + $0x5f]]
    %v3174 = vstv %s3173
    %v3175 = vmul.f32 %v3174, %v3010
    %v3176 = vmul.f32 %v3174, %v3007
    %v3177 = vadd.f32 %v3171, %v3175
    %v3178 = vadd.f32 %v3172, %v3176
    %s3179 = sld [smem:[#allocation8 + $0x60]]
    %v3180 = vstv %s3179
    %v3181 = vmul.f32 %v3180, %v2461
    %v3184 = vunpack.c.l.s4 1983009808
    %v3185 = vunpack.c.0.s8 %v3184
    %v3186 = vlaneseq
    %v3187 = vshrl.u32 %v3186, 7
    %v3188 = vsub.s32 %v3185, %v3187
    %v3189 = vrot.slane %v3181, %v3188
    %v3190 = vcombine.high %v3189, %v3189
    %v3193 = vadd.f32 %v3177, %v3189
    %v3194 = vadd.f32 %v3178, %v3190
    %s3195 = sld [smem:[#allocation8 + $0x61]]
    %v3196 = vstv %s3195
    %v3197 = vmul.f32 %v3196, %v2463
    %v3200 = vunpack.c.l.s4 1983009808
    %v3201 = vunpack.c.0.s8 %v3200
    %v3202 = vlaneseq
    %v3203 = vshrl.u32 %v3202, 7
    %v3204 = vsub.s32 %v3201, %v3203
    %v3205 = vrot.slane %v3197, %v3204
    %v3206 = vcombine.high %v3205, %v3205
    %v3209 = vadd.f32 %v3193, %v3205
    %v3210 = vadd.f32 %v3194, %v3206
    %s3211 = sld [smem:[#allocation8 + $0x62]]
    %v3212 = vstv %s3211
    %v3213 = vmul.f32 %v3212, %v3015
    %v3214 = vmul.f32 %v3212, %v3018
    %v3215 = vadd.f32 %v3209, %v3213
    %v3216 = vadd.f32 %v3210, %v3214
    %v3217 = vadd.f32 %v2975, %v3215
    %v3218 = vadd.f32 %v2976, %v3216
    %v3221 = vunpack.c.l.s4 1983009808
    %v3222 = vunpack.c.0.s8 %v3221
    %v3223 = vlaneseq
    %v3224 = vshrl.u32 %v3223, 7
    %v3225 = vsub.s32 %v3222, %v3224
    %v3226 = vrot.slane %v2495, %v3225
    %v3227 = vcombine.high %v3226, %v3226
    %3228 = vrot.lane.b32.xlu0 %v3226, 1
    %v3229 = vpop.permute.xlu0 %3228
    %3230 = vrot.lane.b32.xlu0 %v3227, 1
    %v3231 = vpop.permute.xlu0 %3230
    %v3232 = vsel %vm2511, %v3229, %v3231
    %v3235 = vsel %vm2511, 0.0, %v3229
    %v3238 = vunpack.c.l.s4 1983009808
    %v3239 = vunpack.c.0.s8 %v3238
    %v3240 = vlaneseq
    %v3241 = vshrl.u32 %v3240, 7
    %v3242 = vsub.s32 %v3239, %v3241
    %v3243 = vrot.slane %v2497, %v3242
    %v3244 = vcombine.high %v3243, %v3243
    %3245 = vrot.lane.b32.xlu0 %v3243, 1
    %v3246 = vpop.permute.xlu0 %3245
    %3247 = vrot.lane.b32.xlu0 %v3244, 1
    %v3248 = vpop.permute.xlu0 %3247
    %v3249 = vsel %vm2511, %v3246, %v3248
    %v3252 = vsel %vm2511, 0.0, %v3246
    %3253 = vrot.lane.b32.xlu0 %v3226, 127
    %v3254 = vpop.permute.xlu0 %3253
    %3255 = vrot.lane.b32.xlu0 %v3227, 127
    %v3256 = vpop.permute.xlu0 %3255
    %v3257 = vsel %vm2537, %v3254, %v3256
    %v3260 = vsel %vm2541, %v3256, 0.0
    %s3261 = sld [smem:[#allocation8 + $0x27]]
    %v3262 = vstv %s3261
    %v3263 = vmul.f32 %v3262, %v3235
    %v3264 = vmul.f32 %v3262, %v3232
    %s3265 = sld [smem:[#allocation8 + $0x28]]
    %v3266 = vstv %s3265
    %v3267 = vmul.f32 %v3266, %v3252
    %v3268 = vmul.f32 %v3266, %v3249
    %v3269 = vadd.f32 %v3263, %v3267
    %v3270 = vadd.f32 %v3264, %v3268
    %s3271 = sld [smem:[#allocation8 + $0x29]]
    %v3272 = vstv %s3271
    %v3273 = vmul.f32 %v3272, %v2495
    %v3276 = vunpack.c.l.s4 1983009808
    %v3277 = vunpack.c.0.s8 %v3276
    %v3278 = vlaneseq
    %v3279 = vshrl.u32 %v3278, 7
    %v3280 = vsub.s32 %v3277, %v3279
    %v3281 = vrot.slane %v3273, %v3280
    %v3282 = vcombine.high %v3281, %v3281
    %v3285 = vadd.f32 %v3269, %v3281
    %v3286 = vadd.f32 %v3270, %v3282
    %s3287 = sld [smem:[#allocation8 + $0x2a]]
    %v3288 = vstv %s3287
    %v3289 = vmul.f32 %v3288, %v2497
    %v3292 = vunpack.c.l.s4 1983009808
    %v3293 = vunpack.c.0.s8 %v3292
    %v3294 = vlaneseq
    %v3295 = vshrl.u32 %v3294, 7
    %v3296 = vsub.s32 %v3293, %v3295
    %v3297 = vrot.slane %v3289, %v3296
    %v3298 = vcombine.high %v3297, %v3297
    %v3301 = vadd.f32 %v3285, %v3297
    %v3302 = vadd.f32 %v3286, %v3298
    %s3303 = sld [smem:[#allocation8 + $0x2b]]
    %v3304 = vstv %s3303
    %v3305 = vmul.f32 %v3304, %v3257
    %v3306 = vmul.f32 %v3304, %v3260
    %v3307 = vadd.f32 %v3301, %v3305
    %v3308 = vadd.f32 %v3302, %v3306
    %v3309 = vadd.f32 %v3067, %v3307
    %v3310 = vadd.f32 %v3068, %v3308
    %s3311 = sld [smem:[#allocation8 + $0x3b]]
    %v3312 = vstv %s3311
    %v3313 = vmul.f32 %v3312, %v3235
    %v3314 = vmul.f32 %v3312, %v3232
    %s3315 = sld [smem:[#allocation8 + $0x3c]]
    %v3316 = vstv %s3315
    %v3317 = vmul.f32 %v3316, %v3252
    %v3318 = vmul.f32 %v3316, %v3249
    %v3319 = vadd.f32 %v3313, %v3317
    %v3320 = vadd.f32 %v3314, %v3318
    %s3321 = sld [smem:[#allocation8 + $0x3d]]
    %v3322 = vstv %s3321
    %v3323 = vmul.f32 %v3322, %v2495
    %v3326 = vunpack.c.l.s4 1983009808
    %v3327 = vunpack.c.0.s8 %v3326
    %v3328 = vlaneseq
    %v3329 = vshrl.u32 %v3328, 7
    %v3330 = vsub.s32 %v3327, %v3329
    %v3331 = vrot.slane %v3323, %v3330
    %v3332 = vcombine.high %v3331, %v3331
    %v3335 = vadd.f32 %v3319, %v3331
    %v3336 = vadd.f32 %v3320, %v3332
    %s3337 = sld [smem:[#allocation8 + $0x3e]]
    %v3338 = vstv %s3337
    %v3339 = vmul.f32 %v3338, %v2497
    %v3342 = vunpack.c.l.s4 1983009808
    %v3343 = vunpack.c.0.s8 %v3342
    %v3344 = vlaneseq
    %v3345 = vshrl.u32 %v3344, 7
    %v3346 = vsub.s32 %v3343, %v3345
    %v3347 = vrot.slane %v3339, %v3346
    %v3348 = vcombine.high %v3347, %v3347
    %v3351 = vadd.f32 %v3335, %v3347
    %v3352 = vadd.f32 %v3336, %v3348
    %s3353 = sld [smem:[#allocation8 + $0x3f]]
    %v3354 = vstv %s3353
    %v3355 = vmul.f32 %v3354, %v3257
    %v3356 = vmul.f32 %v3354, %v3260
    %v3357 = vadd.f32 %v3351, %v3355
    %v3358 = vadd.f32 %v3352, %v3356
    %v3359 = vadd.f32 %v3117, %v3357
    %v3360 = vadd.f32 %v3118, %v3358
    %s3361 = sld [smem:[#allocation8 + $0x4f]]
    %v3362 = vstv %s3361
    %v3363 = vmul.f32 %v3362, %v3235
    %v3364 = vmul.f32 %v3362, %v3232
    %s3365 = sld [smem:[#allocation8 + $0x50]]
    %v3366 = vstv %s3365
    %v3367 = vmul.f32 %v3366, %v3252
    %v3368 = vmul.f32 %v3366, %v3249
    %v3369 = vadd.f32 %v3363, %v3367
    %v3370 = vadd.f32 %v3364, %v3368
    %s3371 = sld [smem:[#allocation8 + $0x51]]
    %v3372 = vstv %s3371
    %v3373 = vmul.f32 %v3372, %v2495
    %v3376 = vunpack.c.l.s4 1983009808
    %v3377 = vunpack.c.0.s8 %v3376
    %v3378 = vlaneseq
    %v3379 = vshrl.u32 %v3378, 7
    %v3380 = vsub.s32 %v3377, %v3379
    %v3381 = vrot.slane %v3373, %v3380
    %v3382 = vcombine.high %v3381, %v3381
    %v3385 = vadd.f32 %v3369, %v3381
    %v3386 = vadd.f32 %v3370, %v3382
    %s3387 = sld [smem:[#allocation8 + $0x52]]
    %v3388 = vstv %s3387
    %v3389 = vmul.f32 %v3388, %v2497
    %v3392 = vunpack.c.l.s4 1983009808
    %v3393 = vunpack.c.0.s8 %v3392
    %v3394 = vlaneseq
    %v3395 = vshrl.u32 %v3394, 7
    %v3396 = vsub.s32 %v3393, %v3395
    %v3397 = vrot.slane %v3389, %v3396
    %v3398 = vcombine.high %v3397, %v3397
    %v3401 = vadd.f32 %v3385, %v3397
    %v3402 = vadd.f32 %v3386, %v3398
    %s3403 = sld [smem:[#allocation8 + $0x53]]
    %v3404 = vstv %s3403
    %v3405 = vmul.f32 %v3404, %v3257
    %v3406 = vmul.f32 %v3404, %v3260
    %v3407 = vadd.f32 %v3401, %v3405
    %v3408 = vadd.f32 %v3402, %v3406
    %v3409 = vadd.f32 %v3167, %v3407
    %v3410 = vadd.f32 %v3168, %v3408
    %s3411 = sld [smem:[#allocation8 + $0x63]]
    %v3412 = vstv %s3411
    %v3413 = vmul.f32 %v3412, %v3235
    %v3414 = vmul.f32 %v3412, %v3232
    %s3415 = sld [smem:[#allocation8 + $0x64]]
    %v3416 = vstv %s3415
    %v3417 = vmul.f32 %v3416, %v3252
    %v3418 = vmul.f32 %v3416, %v3249
    %v3419 = vadd.f32 %v3413, %v3417
    %v3420 = vadd.f32 %v3414, %v3418
    %s3421 = sld [smem:[#allocation8 + $0x65]]
    %v3422 = vstv %s3421
    %v3423 = vmul.f32 %v3422, %v2495
    %v3426 = vunpack.c.l.s4 1983009808
    %v3427 = vunpack.c.0.s8 %v3426
    %v3428 = vlaneseq
    %v3429 = vshrl.u32 %v3428, 7
    %v3430 = vsub.s32 %v3427, %v3429
    %v3431 = vrot.slane %v3423, %v3430
    %v3432 = vcombine.high %v3431, %v3431
    %v3435 = vadd.f32 %v3419, %v3431
    %v3436 = vadd.f32 %v3420, %v3432
    %s3437 = sld [smem:[#allocation8 + $0x66]]
    %v3438 = vstv %s3437
    %v3439 = vmul.f32 %v3438, %v2497
    %v3442 = vunpack.c.l.s4 1983009808
    %v3443 = vunpack.c.0.s8 %v3442
    %v3444 = vlaneseq
    %v3445 = vshrl.u32 %v3444, 7
    %v3446 = vsub.s32 %v3443, %v3445
    %v3447 = vrot.slane %v3439, %v3446
    %v3448 = vcombine.high %v3447, %v3447
    %v3451 = vadd.f32 %v3435, %v3447
    %v3452 = vadd.f32 %v3436, %v3448
    %s3453 = sld [smem:[#allocation8 + $0x67]]
    %v3454 = vstv %s3453
    %v3455 = vmul.f32 %v3454, %v3257
    %v3456 = vmul.f32 %v3454, %v3260
    %v3457 = vadd.f32 %v3451, %v3455
    %v3458 = vadd.f32 %v3452, %v3456
    %v3459 = vadd.f32 %v3217, %v3457
    %v3460 = vadd.f32 %v3218, %v3458
    %s3461 = sld [smem:[#allocation8 + $0x68]]
    %v3462 = vstv %s3461
    %v3463 = vadd.f32 %v3309, %v3462
    %v3464 = vadd.f32 %v3310, %v3462
    %v3465 = vmax.f32 %v3463, 0.0
    %v3466 = vmax.f32 %v3464, 0.0
    %s3467 = sld [smem:[#allocation8 + $0x69]]
    %v3468 = vstv %s3467
    %v3469 = vadd.f32 %v3359, %v3468
    %v3470 = vadd.f32 %v3360, %v3468
    %v3471 = vmax.f32 %v3469, 0.0
    %v3472 = vmax.f32 %v3470, 0.0
    %s3473 = sld [smem:[#allocation8 + $0x6a]]
    %v3474 = vstv %s3473
    %v3475 = vadd.f32 %v3409, %v3474
    %v3476 = vadd.f32 %v3410, %v3474
    %v3477 = vmax.f32 %v3475, 0.0
    %v3478 = vmax.f32 %v3476, 0.0
    %s3479 = sld [smem:[#allocation8 + $0x6b]]
    %v3480 = vstv %s3479
    %v3481 = vadd.f32 %v3459, %v3480
    %v3482 = vadd.f32 %v3460, %v3480
    %v3483 = vmax.f32 %v3481, 0.0
    %v3484 = vmax.f32 %v3482, 0.0
    %3487 = vrot.lane.b32.xlu0 %v3465, 2
    %v3488 = vpop.permute.xlu0 %3487
    %3489 = vrot.lane.b32.xlu0 %v3466, 2
    %v3490 = vpop.permute.xlu0 %3489
    %vm3491 = vcmask 15360
    %v3492 = vsel %vm3491, %v3488, %v3490
    %v3495 = vsel %vm3491, 0.0, %v3488
    %3496 = vrot.lane.b32.xlu0 %v3465, 1
    %v3497 = vpop.permute.xlu0 %3496
    %3498 = vrot.lane.b32.xlu0 %v3466, 1
    %v3499 = vpop.permute.xlu0 %3498
    %v3500 = vsel %vm2511, %v3497, %v3499
    %v3503 = vsel %vm2511, 0.0, %v3497
    %3504 = vrot.lane.b32.xlu0 %v3465, 127
    %v3505 = vpop.permute.xlu0 %3504
    %3506 = vrot.lane.b32.xlu0 %v3466, 127
    %v3507 = vpop.permute.xlu0 %3506
    %v3508 = vsel %vm2537, %v3505, %v3507
    %v3511 = vsel %vm2541, %v3507, 0.0
    %3512 = vrot.lane.b32.xlu0 %v3465, 126
    %v3513 = vpop.permute.xlu0 %3512
    %3514 = vrot.lane.b32.xlu0 %v3466, 126
    %v3515 = vpop.permute.xlu0 %3514
    %vm3516 = vcmask 1031168
    %v3517 = vsel %vm3516, %v3513, %v3515
    %vm3520 = vcmask 982016
    %v3521 = vsel %vm3520, %v3515, 0.0
    %s3522 = sld [smem:[#allocation8 + $0x6c]]
    %v3523 = vstv %s3522
    %v3524 = vmul.f32 %v3523, %v3495
    %v3525 = vmul.f32 %v3523, %v3492
    %s3526 = sld [smem:[#allocation8 + $0x6d]]
    %v3527 = vstv %s3526
    %v3528 = vmul.f32 %v3527, %v3503
    %v3529 = vmul.f32 %v3527, %v3500
    %v3530 = vadd.f32 %v3524, %v3528
    %v3531 = vadd.f32 %v3525, %v3529
    %s3532 = sld [smem:[#allocation8 + $0x6e]]
    %v3533 = vstv %s3532
    %v3534 = vmul.f32 %v3533, %v3465
    %v3535 = vmul.f32 %v3533, %v3466
    %v3536 = vadd.f32 %v3530, %v3534
    %v3537 = vadd.f32 %v3531, %v3535
    %s3538 = sld [smem:[#allocation8 + $0x6f]]
    %v3539 = vstv %s3538
    %v3540 = vmul.f32 %v3539, %v3508
    %v3541 = vmul.f32 %v3539, %v3511
    %v3542 = vadd.f32 %v3536, %v3540
    %v3543 = vadd.f32 %v3537, %v3541
    %s3544 = sld [smem:[#allocation8 + $0x70]]
    %v3545 = vstv %s3544
    %v3546 = vmul.f32 %v3545, %v3517
    %v3547 = vmul.f32 %v3545, %v3521
    %v3548 = vadd.f32 %v3542, %v3546
    %v3549 = vadd.f32 %v3543, %v3547
    %s3550 = sld [smem:[#allocation8 + $0x80]]
    %v3551 = vstv %s3550
    %v3552 = vmul.f32 %v3551, %v3495
    %v3553 = vmul.f32 %v3551, %v3492
    %s3554 = sld [smem:[#allocation8 + $0x81]]
    %v3555 = vstv %s3554
    %v3556 = vmul.f32 %v3555, %v3503
    %v3557 = vmul.f32 %v3555, %v3500
    %v3558 = vadd.f32 %v3552, %v3556
    %v3559 = vadd.f32 %v3553, %v3557
    %s3560 = sld [smem:[#allocation8 + $0x82]]
    %v3561 = vstv %s3560
    %v3562 = vmul.f32 %v3561, %v3465
    %v3563 = vmul.f32 %v3561, %v3466
    %v3564 = vadd.f32 %v3558, %v3562
    %v3565 = vadd.f32 %v3559, %v3563
    %s3566 = sld [smem:[#allocation8 + $0x83]]
    %v3567 = vstv %s3566
    %v3568 = vmul.f32 %v3567, %v3508
    %v3569 = vmul.f32 %v3567, %v3511
    %v3570 = vadd.f32 %v3564, %v3568
    %v3571 = vadd.f32 %v3565, %v3569
    %s3572 = sld [smem:[#allocation8 + $0x84]]
    %v3573 = vstv %s3572
    %v3574 = vmul.f32 %v3573, %v3517
    %v3575 = vmul.f32 %v3573, %v3521
    %v3576 = vadd.f32 %v3570, %v3574
    %v3577 = vadd.f32 %v3571, %v3575
    %s3578 = sld [smem:[#allocation8 + $0x94]]
    %v3579 = vstv %s3578
    %v3580 = vmul.f32 %v3579, %v3495
    %v3581 = vmul.f32 %v3579, %v3492
    %s3582 = sld [smem:[#allocation8 + $0x95]]
    %v3583 = vstv %s3582
    %v3584 = vmul.f32 %v3583, %v3503
    %v3585 = vmul.f32 %v3583, %v3500
    %v3586 = vadd.f32 %v3580, %v3584
    %v3587 = vadd.f32 %v3581, %v3585
    %s3588 = sld [smem:[#allocation8 + $0x96]]
    %v3589 = vstv %s3588
    %v3590 = vmul.f32 %v3589, %v3465
    %v3591 = vmul.f32 %v3589, %v3466
    %v3592 = vadd.f32 %v3586, %v3590
    %v3593 = vadd.f32 %v3587, %v3591
    %s3594 = sld [smem:[#allocation8 + $0x97]]
    %v3595 = vstv %s3594
    %v3596 = vmul.f32 %v3595, %v3508
    %v3597 = vmul.f32 %v3595, %v3511
    %v3598 = vadd.f32 %v3592, %v3596
    %v3599 = vadd.f32 %v3593, %v3597
    %s3600 = sld [smem:[#allocation8 + $0x98]]
    %v3601 = vstv %s3600
    %v3602 = vmul.f32 %v3601, %v3517
    %v3603 = vmul.f32 %v3601, %v3521
    %v3604 = vadd.f32 %v3598, %v3602
    %v3605 = vadd.f32 %v3599, %v3603
    %s3606 = sld [smem:[#allocation8 + $0xa8]]
    %v3607 = vstv %s3606
    %v3608 = vmul.f32 %v3607, %v3495
    %v3609 = vmul.f32 %v3607, %v3492
    %s3610 = sld [smem:[#allocation8 + $0xa9]]
    %v3611 = vstv %s3610
    %v3612 = vmul.f32 %v3611, %v3503
    %v3613 = vmul.f32 %v3611, %v3500
    %v3614 = vadd.f32 %v3608, %v3612
    %v3615 = vadd.f32 %v3609, %v3613
    %s3616 = sld [smem:[#allocation8 + $0xaa]]
    %v3617 = vstv %s3616
    %v3618 = vmul.f32 %v3617, %v3465
    %v3619 = vmul.f32 %v3617, %v3466
    %v3620 = vadd.f32 %v3614, %v3618
    %v3621 = vadd.f32 %v3615, %v3619
    %s3622 = sld [smem:[#allocation8 + $0xab]]
    %v3623 = vstv %s3622
    %v3624 = vmul.f32 %v3623, %v3508
    %v3625 = vmul.f32 %v3623, %v3511
    %v3626 = vadd.f32 %v3620, %v3624
    %v3627 = vadd.f32 %v3621, %v3625
    %s3628 = sld [smem:[#allocation8 + $0xac]]
    %v3629 = vstv %s3628
    %v3630 = vmul.f32 %v3629, %v3517
    %v3631 = vmul.f32 %v3629, %v3521
    %v3632 = vadd.f32 %v3626, %v3630
    %v3633 = vadd.f32 %v3627, %v3631
    %3636 = vrot.lane.b32.xlu0 %v3471, 2
    %v3637 = vpop.permute.xlu0 %3636
    %3638 = vrot.lane.b32.xlu0 %v3472, 2
    %v3639 = vpop.permute.xlu0 %3638
    %v3640 = vsel %vm3491, %v3637, %v3639
    %v3643 = vsel %vm3491, 0.0, %v3637
    %3644 = vrot.lane.b32.xlu0 %v3471, 1
    %v3645 = vpop.permute.xlu0 %3644
    %3646 = vrot.lane.b32.xlu0 %v3472, 1
    %v3647 = vpop.permute.xlu0 %3646
    %v3648 = vsel %vm2511, %v3645, %v3647
    %v3651 = vsel %vm2511, 0.0, %v3645
    %3652 = vrot.lane.b32.xlu0 %v3471, 127
    %v3653 = vpop.permute.xlu0 %3652
    %3654 = vrot.lane.b32.xlu0 %v3472, 127
    %v3655 = vpop.permute.xlu0 %3654
    %v3656 = vsel %vm2537, %v3653, %v3655
    %v3659 = vsel %vm2541, %v3655, 0.0
    %3660 = vrot.lane.b32.xlu0 %v3471, 126
    %v3661 = vpop.permute.xlu0 %3660
    %3662 = vrot.lane.b32.xlu0 %v3472, 126
    %v3663 = vpop.permute.xlu0 %3662
    %v3664 = vsel %vm3516, %v3661, %v3663
    %v3667 = vsel %vm3520, %v3663, 0.0
    %s3668 = sld [smem:[#allocation8 + $0x71]]
    %v3669 = vstv %s3668
    %v3670 = vmul.f32 %v3669, %v3643
    %v3671 = vmul.f32 %v3669, %v3640
    %s3672 = sld [smem:[#allocation8 + $0x72]]
    %v3673 = vstv %s3672
    %v3674 = vmul.f32 %v3673, %v3651
    %v3675 = vmul.f32 %v3673, %v3648
    %v3676 = vadd.f32 %v3670, %v3674
    %v3677 = vadd.f32 %v3671, %v3675
    %s3678 = sld [smem:[#allocation8 + $0x73]]
    %v3679 = vstv %s3678
    %v3680 = vmul.f32 %v3679, %v3471
    %v3681 = vmul.f32 %v3679, %v3472
    %v3682 = vadd.f32 %v3676, %v3680
    %v3683 = vadd.f32 %v3677, %v3681
    %s3684 = sld [smem:[#allocation8 + $0x74]]
    %v3685 = vstv %s3684
    %v3686 = vmul.f32 %v3685, %v3656
    %v3687 = vmul.f32 %v3685, %v3659
    %v3688 = vadd.f32 %v3682, %v3686
    %v3689 = vadd.f32 %v3683, %v3687
    %s3690 = sld [smem:[#allocation8 + $0x75]]
    %v3691 = vstv %s3690
    %v3692 = vmul.f32 %v3691, %v3664
    %v3693 = vmul.f32 %v3691, %v3667
    %v3694 = vadd.f32 %v3688, %v3692
    %v3695 = vadd.f32 %v3689, %v3693
    %v3696 = vadd.f32 %v3548, %v3694
    %v3697 = vadd.f32 %v3549, %v3695
    %s3698 = sld [smem:[#allocation8 + $0x85]]
    %v3699 = vstv %s3698
    %v3700 = vmul.f32 %v3699, %v3643
    %v3701 = vmul.f32 %v3699, %v3640
    %s3702 = sld [smem:[#allocation8 + $0x86]]
    %v3703 = vstv %s3702
    %v3704 = vmul.f32 %v3703, %v3651
    %v3705 = vmul.f32 %v3703, %v3648
    %v3706 = vadd.f32 %v3700, %v3704
    %v3707 = vadd.f32 %v3701, %v3705
    %s3708 = sld [smem:[#allocation8 + $0x87]]
    %v3709 = vstv %s3708
    %v3710 = vmul.f32 %v3709, %v3471
    %v3711 = vmul.f32 %v3709, %v3472
    %v3712 = vadd.f32 %v3706, %v3710
    %v3713 = vadd.f32 %v3707, %v3711
    %s3714 = sld [smem:[#allocation8 + $0x88]]
    %v3715 = vstv %s3714
    %v3716 = vmul.f32 %v3715, %v3656
    %v3717 = vmul.f32 %v3715, %v3659
    %v3718 = vadd.f32 %v3712, %v3716
    %v3719 = vadd.f32 %v3713, %v3717
    %s3720 = sld [smem:[#allocation8 + $0x89]]
    %v3721 = vstv %s3720
    %v3722 = vmul.f32 %v3721, %v3664
    %v3723 = vmul.f32 %v3721, %v3667
    %v3724 = vadd.f32 %v3718, %v3722
    %v3725 = vadd.f32 %v3719, %v3723
    %v3726 = vadd.f32 %v3576, %v3724
    %v3727 = vadd.f32 %v3577, %v3725
    %s3728 = sld [smem:[#allocation8 + $0x99]]
    %v3729 = vstv %s3728
    %v3730 = vmul.f32 %v3729, %v3643
    %v3731 = vmul.f32 %v3729, %v3640
    %s3732 = sld [smem:[#allocation8 + $0x9a]]
    %v3733 = vstv %s3732
    %v3734 = vmul.f32 %v3733, %v3651
    %v3735 = vmul.f32 %v3733, %v3648
    %v3736 = vadd.f32 %v3730, %v3734
    %v3737 = vadd.f32 %v3731, %v3735
    %s3738 = sld [smem:[#allocation8 + $0x9b]]
    %v3739 = vstv %s3738
    %v3740 = vmul.f32 %v3739, %v3471
    %v3741 = vmul.f32 %v3739, %v3472
    %v3742 = vadd.f32 %v3736, %v3740
    %v3743 = vadd.f32 %v3737, %v3741
    %s3744 = sld [smem:[#allocation8 + $0x9c]]
    %v3745 = vstv %s3744
    %v3746 = vmul.f32 %v3745, %v3656
    %v3747 = vmul.f32 %v3745, %v3659
    %v3748 = vadd.f32 %v3742, %v3746
    %v3749 = vadd.f32 %v3743, %v3747
    %s3750 = sld [smem:[#allocation8 + $0x9d]]
    %v3751 = vstv %s3750
    %v3752 = vmul.f32 %v3751, %v3664
    %v3753 = vmul.f32 %v3751, %v3667
    %v3754 = vadd.f32 %v3748, %v3752
    %v3755 = vadd.f32 %v3749, %v3753
    %v3756 = vadd.f32 %v3604, %v3754
    %v3757 = vadd.f32 %v3605, %v3755
    %s3758 = sld [smem:[#allocation8 + $0xad]]
    %v3759 = vstv %s3758
    %v3760 = vmul.f32 %v3759, %v3643
    %v3761 = vmul.f32 %v3759, %v3640
    %s3762 = sld [smem:[#allocation8 + $0xae]]
    %v3763 = vstv %s3762
    %v3764 = vmul.f32 %v3763, %v3651
    %v3765 = vmul.f32 %v3763, %v3648
    %v3766 = vadd.f32 %v3760, %v3764
    %v3767 = vadd.f32 %v3761, %v3765
    %s3768 = sld [smem:[#allocation8 + $0xaf]]
    %v3769 = vstv %s3768
    %v3770 = vmul.f32 %v3769, %v3471
    %v3771 = vmul.f32 %v3769, %v3472
    %v3772 = vadd.f32 %v3766, %v3770
    %v3773 = vadd.f32 %v3767, %v3771
    %s3774 = sld [smem:[#allocation8 + $0xb0]]
    %v3775 = vstv %s3774
    %v3776 = vmul.f32 %v3775, %v3656
    %v3777 = vmul.f32 %v3775, %v3659
    %v3778 = vadd.f32 %v3772, %v3776
    %v3779 = vadd.f32 %v3773, %v3777
    %s3780 = sld [smem:[#allocation8 + $0xb1]]
    %v3781 = vstv %s3780
    %v3782 = vmul.f32 %v3781, %v3664
    %v3783 = vmul.f32 %v3781, %v3667
    %v3784 = vadd.f32 %v3778, %v3782
    %v3785 = vadd.f32 %v3779, %v3783
    %v3786 = vadd.f32 %v3632, %v3784
    %v3787 = vadd.f32 %v3633, %v3785
    %3790 = vrot.lane.b32.xlu0 %v3477, 2
    %v3791 = vpop.permute.xlu0 %3790
    %3792 = vrot.lane.b32.xlu0 %v3478, 2
    %v3793 = vpop.permute.xlu0 %3792
    %v3794 = vsel %vm3491, %v3791, %v3793
    %v3797 = vsel %vm3491, 0.0, %v3791
    %3798 = vrot.lane.b32.xlu0 %v3477, 1
    %v3799 = vpop.permute.xlu0 %3798
    %3800 = vrot.lane.b32.xlu0 %v3478, 1
    %v3801 = vpop.permute.xlu0 %3800
    %v3802 = vsel %vm2511, %v3799, %v3801
    %v3805 = vsel %vm2511, 0.0, %v3799
    %3806 = vrot.lane.b32.xlu0 %v3477, 127
    %v3807 = vpop.permute.xlu0 %3806
    %3808 = vrot.lane.b32.xlu0 %v3478, 127
    %v3809 = vpop.permute.xlu0 %3808
    %v3810 = vsel %vm2537, %v3807, %v3809
    %v3813 = vsel %vm2541, %v3809, 0.0
    %3814 = vrot.lane.b32.xlu0 %v3477, 126
    %v3815 = vpop.permute.xlu0 %3814
    %3816 = vrot.lane.b32.xlu0 %v3478, 126
    %v3817 = vpop.permute.xlu0 %3816
    %v3818 = vsel %vm3516, %v3815, %v3817
    %v3821 = vsel %vm3520, %v3817, 0.0
    %s3822 = sld [smem:[#allocation8 + $0x76]]
    %v3823 = vstv %s3822
    %v3824 = vmul.f32 %v3823, %v3797
    %v3825 = vmul.f32 %v3823, %v3794
    %s3826 = sld [smem:[#allocation8 + $0x77]]
    %v3827 = vstv %s3826
    %v3828 = vmul.f32 %v3827, %v3805
    %v3829 = vmul.f32 %v3827, %v3802
    %v3830 = vadd.f32 %v3824, %v3828
    %v3831 = vadd.f32 %v3825, %v3829
    %s3832 = sld [smem:[#allocation8 + $0x78]]
    %v3833 = vstv %s3832
    %v3834 = vmul.f32 %v3833, %v3477
    %v3835 = vmul.f32 %v3833, %v3478
    %v3836 = vadd.f32 %v3830, %v3834
    %v3837 = vadd.f32 %v3831, %v3835
    %s3838 = sld [smem:[#allocation8 + $0x79]]
    %v3839 = vstv %s3838
    %v3840 = vmul.f32 %v3839, %v3810
    %v3841 = vmul.f32 %v3839, %v3813
    %v3842 = vadd.f32 %v3836, %v3840
    %v3843 = vadd.f32 %v3837, %v3841
    %s3844 = sld [smem:[#allocation8 + $0x7a]]
    %v3845 = vstv %s3844
    %v3846 = vmul.f32 %v3845, %v3818
    %v3847 = vmul.f32 %v3845, %v3821
    %v3848 = vadd.f32 %v3842, %v3846
    %v3849 = vadd.f32 %v3843, %v3847
    %v3850 = vadd.f32 %v3696, %v3848
    %v3851 = vadd.f32 %v3697, %v3849
    %s3852 = sld [smem:[#allocation8 + $0x8a]]
    %v3853 = vstv %s3852
    %v3854 = vmul.f32 %v3853, %v3797
    %v3855 = vmul.f32 %v3853, %v3794
    %s3856 = sld [smem:[#allocation8 + $0x8b]]
    %v3857 = vstv %s3856
    %v3858 = vmul.f32 %v3857, %v3805
    %v3859 = vmul.f32 %v3857, %v3802
    %v3860 = vadd.f32 %v3854, %v3858
    %v3861 = vadd.f32 %v3855, %v3859
    %s3862 = sld [smem:[#allocation8 + $0x8c]]
    %v3863 = vstv %s3862
    %v3864 = vmul.f32 %v3863, %v3477
    %v3865 = vmul.f32 %v3863, %v3478
    %v3866 = vadd.f32 %v3860, %v3864
    %v3867 = vadd.f32 %v3861, %v3865
    %s3868 = sld [smem:[#allocation8 + $0x8d]]
    %v3869 = vstv %s3868
    %v3870 = vmul.f32 %v3869, %v3810
    %v3871 = vmul.f32 %v3869, %v3813
    %v3872 = vadd.f32 %v3866, %v3870
    %v3873 = vadd.f32 %v3867, %v3871
    %s3874 = sld [smem:[#allocation8 + $0x8e]]
    %v3875 = vstv %s3874
    %v3876 = vmul.f32 %v3875, %v3818
    %v3877 = vmul.f32 %v3875, %v3821
    %v3878 = vadd.f32 %v3872, %v3876
    %v3879 = vadd.f32 %v3873, %v3877
    %v3880 = vadd.f32 %v3726, %v3878
    %v3881 = vadd.f32 %v3727, %v3879
    %s3882 = sld [smem:[#allocation8 + $0x9e]]
    %v3883 = vstv %s3882
    %v3884 = vmul.f32 %v3883, %v3797
    %v3885 = vmul.f32 %v3883, %v3794
    %s3886 = sld [smem:[#allocation8 + $0x9f]]
    %v3887 = vstv %s3886
    %v3888 = vmul.f32 %v3887, %v3805
    %v3889 = vmul.f32 %v3887, %v3802
    %v3890 = vadd.f32 %v3884, %v3888
    %v3891 = vadd.f32 %v3885, %v3889
    %s3892 = sld [smem:[#allocation8 + $0xa0]]
    %v3893 = vstv %s3892
    %v3894 = vmul.f32 %v3893, %v3477
    %v3895 = vmul.f32 %v3893, %v3478
    %v3896 = vadd.f32 %v3890, %v3894
    %v3897 = vadd.f32 %v3891, %v3895
    %s3898 = sld [smem:[#allocation8 + $0xa1]]
    %v3899 = vstv %s3898
    %v3900 = vmul.f32 %v3899, %v3810
    %v3901 = vmul.f32 %v3899, %v3813
    %v3902 = vadd.f32 %v3896, %v3900
    %v3903 = vadd.f32 %v3897, %v3901
    %s3904 = sld [smem:[#allocation8 + $0xa2]]
    %v3905 = vstv %s3904
    %v3906 = vmul.f32 %v3905, %v3818
    %v3907 = vmul.f32 %v3905, %v3821
    %v3908 = vadd.f32 %v3902, %v3906
    %v3909 = vadd.f32 %v3903, %v3907
    %v3910 = vadd.f32 %v3756, %v3908
    %v3911 = vadd.f32 %v3757, %v3909
    %s3912 = sld [smem:[#allocation8 + $0xb2]]
    %v3913 = vstv %s3912
    %v3914 = vmul.f32 %v3913, %v3797
    %v3915 = vmul.f32 %v3913, %v3794
    %s3916 = sld [smem:[#allocation8 + $0xb3]]
    %v3917 = vstv %s3916
    %v3918 = vmul.f32 %v3917, %v3805
    %v3919 = vmul.f32 %v3917, %v3802
    %v3920 = vadd.f32 %v3914, %v3918
    %v3921 = vadd.f32 %v3915, %v3919
    %s3922 = sld [smem:[#allocation8 + $0xb4]]
    %v3923 = vstv %s3922
    %v3924 = vmul.f32 %v3923, %v3477
    %v3925 = vmul.f32 %v3923, %v3478
    %v3926 = vadd.f32 %v3920, %v3924
    %v3927 = vadd.f32 %v3921, %v3925
    %s3928 = sld [smem:[#allocation8 + $0xb5]]
    %v3929 = vstv %s3928
    %v3930 = vmul.f32 %v3929, %v3810
    %v3931 = vmul.f32 %v3929, %v3813
    %v3932 = vadd.f32 %v3926, %v3930
    %v3933 = vadd.f32 %v3927, %v3931
    %s3934 = sld [smem:[#allocation8 + $0xb6]]
    %v3935 = vstv %s3934
    %v3936 = vmul.f32 %v3935, %v3818
    %v3937 = vmul.f32 %v3935, %v3821
    %v3938 = vadd.f32 %v3932, %v3936
    %v3939 = vadd.f32 %v3933, %v3937
    %v3940 = vadd.f32 %v3786, %v3938
    %v3941 = vadd.f32 %v3787, %v3939
    %3944 = vrot.lane.b32.xlu0 %v3483, 2
    %v3945 = vpop.permute.xlu0 %3944
    %3946 = vrot.lane.b32.xlu0 %v3484, 2
    %v3947 = vpop.permute.xlu0 %3946
    %v3948 = vsel %vm3491, %v3945, %v3947
    %v3951 = vsel %vm3491, 0.0, %v3945
    %3952 = vrot.lane.b32.xlu0 %v3483, 1
    %v3953 = vpop.permute.xlu0 %3952
    %3954 = vrot.lane.b32.xlu0 %v3484, 1
    %v3955 = vpop.permute.xlu0 %3954
    %v3956 = vsel %vm2511, %v3953, %v3955
    %v3959 = vsel %vm2511, 0.0, %v3953
    %3960 = vrot.lane.b32.xlu0 %v3483, 127
    %v3961 = vpop.permute.xlu0 %3960
    %3962 = vrot.lane.b32.xlu0 %v3484, 127
    %v3963 = vpop.permute.xlu0 %3962
    %v3964 = vsel %vm2537, %v3961, %v3963
    %v3967 = vsel %vm2541, %v3963, 0.0
    %3968 = vrot.lane.b32.xlu0 %v3483, 126
    %v3969 = vpop.permute.xlu0 %3968
    %3970 = vrot.lane.b32.xlu0 %v3484, 126
    %v3971 = vpop.permute.xlu0 %3970
    %v3972 = vsel %vm3516, %v3969, %v3971
    %v3975 = vsel %vm3520, %v3971, 0.0
    %s3976 = sld [smem:[#allocation8 + $0x7b]]
    %v3977 = vstv %s3976
    %v3978 = vmul.f32 %v3977, %v3951
    %v3979 = vmul.f32 %v3977, %v3948
    %s3980 = sld [smem:[#allocation8 + $0x7c]]
    %v3981 = vstv %s3980
    %v3982 = vmul.f32 %v3981, %v3959
    %v3983 = vmul.f32 %v3981, %v3956
    %v3984 = vadd.f32 %v3978, %v3982
    %v3985 = vadd.f32 %v3979, %v3983
    %s3986 = sld [smem:[#allocation8 + $0x7d]]
    %v3987 = vstv %s3986
    %v3988 = vmul.f32 %v3987, %v3483
    %v3989 = vmul.f32 %v3987, %v3484
    %v3990 = vadd.f32 %v3984, %v3988
    %v3991 = vadd.f32 %v3985, %v3989
    %s3992 = sld [smem:[#allocation8 + $0x7e]]
    %v3993 = vstv %s3992
    %v3994 = vmul.f32 %v3993, %v3964
    %v3995 = vmul.f32 %v3993, %v3967
    %v3996 = vadd.f32 %v3990, %v3994
    %v3997 = vadd.f32 %v3991, %v3995
    %s3998 = sld [smem:[#allocation8 + $0x7f]]
    %v3999 = vstv %s3998
    %v4000 = vmul.f32 %v3999, %v3972
    %v4001 = vmul.f32 %v3999, %v3975
    %v4002 = vadd.f32 %v3996, %v4000
    %v4003 = vadd.f32 %v3997, %v4001
    %v4004 = vadd.f32 %v3850, %v4002
    %v4005 = vadd.f32 %v3851, %v4003
    %s4006 = sld [smem:[#allocation8 + $0x8f]]
    %v4007 = vstv %s4006
    %v4008 = vmul.f32 %v4007, %v3951
    %v4009 = vmul.f32 %v4007, %v3948
    %s4010 = sld [smem:[#allocation8 + $0x90]]
    %v4011 = vstv %s4010
    %v4012 = vmul.f32 %v4011, %v3959
    %v4013 = vmul.f32 %v4011, %v3956
    %v4014 = vadd.f32 %v4008, %v4012
    %v4015 = vadd.f32 %v4009, %v4013
    %s4016 = sld [smem:[#allocation8 + $0x91]]
    %v4017 = vstv %s4016
    %v4018 = vmul.f32 %v4017, %v3483
    %v4019 = vmul.f32 %v4017, %v3484
    %v4020 = vadd.f32 %v4014, %v4018
    %v4021 = vadd.f32 %v4015, %v4019
    %s4022 = sld [smem:[#allocation8 + $0x92]]
    %v4023 = vstv %s4022
    %v4024 = vmul.f32 %v4023, %v3964
    %v4025 = vmul.f32 %v4023, %v3967
    %v4026 = vadd.f32 %v4020, %v4024
    %v4027 = vadd.f32 %v4021, %v4025
    %s4028 = sld [smem:[#allocation8 + $0x93]]
    %v4029 = vstv %s4028
    %v4030 = vmul.f32 %v4029, %v3972
    %v4031 = vmul.f32 %v4029, %v3975
    %v4032 = vadd.f32 %v4026, %v4030
    %v4033 = vadd.f32 %v4027, %v4031
    %v4034 = vadd.f32 %v3880, %v4032
    %v4035 = vadd.f32 %v3881, %v4033
    %s4036 = sld [smem:[#allocation8 + $0xa3]]
    %v4037 = vstv %s4036
    %v4038 = vmul.f32 %v4037, %v3951
    %v4039 = vmul.f32 %v4037, %v3948
    %s4040 = sld [smem:[#allocation8 + $0xa4]]
    %v4041 = vstv %s4040
    %v4042 = vmul.f32 %v4041, %v3959
    %v4043 = vmul.f32 %v4041, %v3956
    %v4044 = vadd.f32 %v4038, %v4042
    %v4045 = vadd.f32 %v4039, %v4043
    %s4046 = sld [smem:[#allocation8 + $0xa5]]
    %v4047 = vstv %s4046
    %v4048 = vmul.f32 %v4047, %v3483
    %v4049 = vmul.f32 %v4047, %v3484
    %v4050 = vadd.f32 %v4044, %v4048
    %v4051 = vadd.f32 %v4045, %v4049
    %s4052 = sld [smem:[#allocation8 + $0xa6]]
    %v4053 = vstv %s4052
    %v4054 = vmul.f32 %v4053, %v3964
    %v4055 = vmul.f32 %v4053, %v3967
    %v4056 = vadd.f32 %v4050, %v4054
    %v4057 = vadd.f32 %v4051, %v4055
    %s4058 = sld [smem:[#allocation8 + $0xa7]]
    %v4059 = vstv %s4058
    %v4060 = vmul.f32 %v4059, %v3972
    %v4061 = vmul.f32 %v4059, %v3975
    %v4062 = vadd.f32 %v4056, %v4060
    %v4063 = vadd.f32 %v4057, %v4061
    %v4064 = vadd.f32 %v3910, %v4062
    %v4065 = vadd.f32 %v3911, %v4063
    %s4066 = sld [smem:[#allocation8 + $0xb7]]
    %v4067 = vstv %s4066
    %v4068 = vmul.f32 %v4067, %v3951
    %v4069 = vmul.f32 %v4067, %v3948
    %s4070 = sld [smem:[#allocation8 + $0xb8]]
    %v4071 = vstv %s4070
    %v4072 = vmul.f32 %v4071, %v3959
    %v4073 = vmul.f32 %v4071, %v3956
    %v4074 = vadd.f32 %v4068, %v4072
    %v4075 = vadd.f32 %v4069, %v4073
    %s4076 = sld [smem:[#allocation8 + $0xb9]]
    %v4077 = vstv %s4076
    %v4078 = vmul.f32 %v4077, %v3483
    %v4079 = vmul.f32 %v4077, %v3484
    %v4080 = vadd.f32 %v4074, %v4078
    %v4081 = vadd.f32 %v4075, %v4079
    %s4082 = sld [smem:[#allocation8 + $0xba]]
    %v4083 = vstv %s4082
    %v4084 = vmul.f32 %v4083, %v3964
    %v4085 = vmul.f32 %v4083, %v3967
    %v4086 = vadd.f32 %v4080, %v4084
    %v4087 = vadd.f32 %v4081, %v4085
    %s4088 = sld [smem:[#allocation8 + $0xbb]]
    %v4089 = vstv %s4088
    %v4090 = vmul.f32 %v4089, %v3972
    %v4091 = vmul.f32 %v4089, %v3975
    %v4092 = vadd.f32 %v4086, %v4090
    %v4093 = vadd.f32 %v4087, %v4091
    %v4094 = vadd.f32 %v3940, %v4092
    %v4095 = vadd.f32 %v3941, %v4093
    %s4096 = sld [smem:[#allocation8 + $0xbc]]
    %v4097 = vstv %s4096
    %v4098 = vadd.f32 %v4004, %v4097
    %v4099 = vadd.f32 %v4005, %v4097
    %v4100 = vmax.f32 %v4098, 0.0
    %v4101 = vmax.f32 %v4099, 0.0
    %v4102 = vpack.c.bf16 %v4100, %v4100
    %v4103 = vpack.c.bf16 %v4101, %v4101
    %s4104 = sld [smem:[#allocation8 + $0xbd]]
    %v4105 = vstv %s4104
    %v4106 = vadd.f32 %v4034, %v4105
    %v4107 = vadd.f32 %v4035, %v4105
    %v4108 = vmax.f32 %v4106, 0.0
    %v4109 = vmax.f32 %v4107, 0.0
    %v4110 = vpack.c.bf16 %v4108, %v4108
    %v4111 = vpack.c.bf16 %v4109, %v4109
    %s4112 = sld [smem:[#allocation8 + $0xbe]]
    %v4113 = vstv %s4112
    %v4114 = vadd.f32 %v4064, %v4113
    %v4115 = vadd.f32 %v4065, %v4113
    %v4116 = vmax.f32 %v4114, 0.0
    %v4117 = vmax.f32 %v4115, 0.0
    %v4118 = vpack.c.bf16 %v4116, %v4116
    %v4119 = vpack.c.bf16 %v4117, %v4117
    %s4120 = sld [smem:[#allocation8 + $0xbf]]
    %v4121 = vstv %s4120
    %v4122 = vadd.f32 %v4094, %v4121
    %v4123 = vadd.f32 %v4095, %v4121
    %v4124 = vmax.f32 %v4122, 0.0
    %v4125 = vmax.f32 %v4123, 0.0
    %v4126 = vpack.c.bf16 %v4124, %v4124
    %v4127 = vpack.c.bf16 %v4125, %v4125
    %s4128 = smul.u32 4, 4
    %s4129 = smul.u32 %s4128, 32
    %s4130 = smul.u32 %s4129, 4
    %s4131 = sshll.u32 %s4130, 4
    %4132 = dma.done [#allocation7], %s4131
    %v4133 = vld [vmem:[#allocation2] sm:$0xff]
    %v4134 = vld [vmem:[#allocation2 + $0x8] sm:$0xff]
    %v4135 = vld [vmem:[#allocation2 + $0x10] sm:$0xff]
    %v4136 = vld [vmem:[#allocation2 + $0x18] sm:$0xff]
    %v4137 = vld [vmem:[#allocation2 + $0x20] sm:$0xff]
    %v4138 = vld [vmem:[#allocation2 + $0x28] sm:$0xff]
    %v4139 = vld [vmem:[#allocation2 + $0x30] sm:$0xff]
    %v4140 = vld [vmem:[#allocation2 + $0x38] sm:$0xff]
    %v4141 = vld [vmem:[#allocation2 + $0x40] sm:$0xff]
    %v4142 = vld [vmem:[#allocation2 + $0x48] sm:$0xff]
    %v4143 = vld [vmem:[#allocation2 + $0x50] sm:$0xff]
    %v4144 = vld [vmem:[#allocation2 + $0x58] sm:$0xff]
    %v4145 = vld [vmem:[#allocation2 + $0x60] sm:$0xff]
    %v4146 = vld [vmem:[#allocation2 + $0x68] sm:$0xff]
    %v4147 = vld [vmem:[#allocation2 + $0x70] sm:$0xff]
    %v4148 = vld [vmem:[#allocation2 + $0x78] sm:$0xff]
    %v4149 = vld [vmem:[#allocation2 + $0x80] sm:$0xff]
    %v4150 = vld [vmem:[#allocation2 + $0x88] sm:$0xff]
    %v4151 = vld [vmem:[#allocation2 + $0x90] sm:$0xff]
    %v4152 = vld [vmem:[#allocation2 + $0x98] sm:$0xff]
    %v4153 = vld [vmem:[#allocation2 + $0xa0] sm:$0xff]
    %v4154 = vld [vmem:[#allocation2 + $0xa8] sm:$0xff]
    %v4155 = vld [vmem:[#allocation2 + $0xb0] sm:$0xff]
    %v4156 = vld [vmem:[#allocation2 + $0xb8] sm:$0xff]
    %v4157 = vld [vmem:[#allocation2 + $0xc0] sm:$0xff]
    %v4158 = vld [vmem:[#allocation2 + $0xc8] sm:$0xff]
    %v4159 = vld [vmem:[#allocation2 + $0xd0] sm:$0xff]
    %v4160 = vld [vmem:[#allocation2 + $0xd8] sm:$0xff]
    %v4161 = vld [vmem:[#allocation2 + $0xe0] sm:$0xff]
    %v4162 = vld [vmem:[#allocation2 + $0xe8] sm:$0xff]
    %v4163 = vld [vmem:[#allocation2 + $0xf0] sm:$0xff]
    %v4164 = vld [vmem:[#allocation2 + $0xf8] sm:$0xff]
    %v4165 = vld [vmem:[#allocation2 + $0x100] sm:$0xff]
    %v4166 = vld [vmem:[#allocation2 + $0x108] sm:$0xff]
    %v4167 = vld [vmem:[#allocation2 + $0x110] sm:$0xff]
    %v4168 = vld [vmem:[#allocation2 + $0x118] sm:$0xff]
    %v4169 = vld [vmem:[#allocation2 + $0x120] sm:$0xff]
    %v4170 = vld [vmem:[#allocation2 + $0x128] sm:$0xff]
    %v4171 = vld [vmem:[#allocation2 + $0x130] sm:$0xff]
    %v4172 = vld [vmem:[#allocation2 + $0x138] sm:$0xff]
    %v4173 = vld [vmem:[#allocation2 + $0x140] sm:$0xff]
    %v4174 = vld [vmem:[#allocation2 + $0x148] sm:$0xff]
    %v4175 = vld [vmem:[#allocation2 + $0x150] sm:$0xff]
    %v4176 = vld [vmem:[#allocation2 + $0x158] sm:$0xff]
    %v4177 = vld [vmem:[#allocation2 + $0x160] sm:$0xff]
    %v4178 = vld [vmem:[#allocation2 + $0x168] sm:$0xff]
    %v4179 = vld [vmem:[#allocation2 + $0x170] sm:$0xff]
    %v4180 = vld [vmem:[#allocation2 + $0x178] sm:$0xff]
    %v4181 = vld [vmem:[#allocation2 + $0x180] sm:$0xff]
    %v4182 = vld [vmem:[#allocation2 + $0x188] sm:$0xff]
    %v4183 = vld [vmem:[#allocation2 + $0x190] sm:$0xff]
    %v4184 = vld [vmem:[#allocation2 + $0x198] sm:$0xff]
    %v4185 = vld [vmem:[#allocation2 + $0x1a0] sm:$0xff]
    %v4186 = vld [vmem:[#allocation2 + $0x1a8] sm:$0xff]
    %v4187 = vld [vmem:[#allocation2 + $0x1b0] sm:$0xff]
    %v4188 = vld [vmem:[#allocation2 + $0x1b8] sm:$0xff]
    %v4189 = vld [vmem:[#allocation2 + $0x1c0] sm:$0xff]
    %v4190 = vld [vmem:[#allocation2 + $0x1c8] sm:$0xff]
    %v4191 = vld [vmem:[#allocation2 + $0x1d0] sm:$0xff]
    %v4192 = vld [vmem:[#allocation2 + $0x1d8] sm:$0xff]
    %v4193 = vld [vmem:[#allocation2 + $0x1e0] sm:$0xff]
    %v4194 = vld [vmem:[#allocation2 + $0x1e8] sm:$0xff]
    %v4195 = vld [vmem:[#allocation2 + $0x1f0] sm:$0x11]
    %v4196 = vld [vmem:[#allocation2 + $0x1f8] sm:$0x11]
    %s4197 = scalar_lea.vmem [#allocation2], 512
    %v4198 = vld [vmem:[%s4197] sm:$0xff]
    %v4199 = vld [vmem:[%s4197 + $0x8] sm:$0xff]
    %v4200 = vld [vmem:[%s4197 + $0x10] sm:$0xff]
    %v4201 = vld [vmem:[%s4197 + $0x18] sm:$0xff]
    %v4202 = vld [vmem:[%s4197 + $0x20] sm:$0xff]
    %v4203 = vld [vmem:[%s4197 + $0x28] sm:$0xff]
    %v4204 = vld [vmem:[%s4197 + $0x30] sm:$0xff]
    %v4205 = vld [vmem:[%s4197 + $0x38] sm:$0xff]
    %v4206 = vld [vmem:[%s4197 + $0x40] sm:$0xff]
    %v4207 = vld [vmem:[%s4197 + $0x48] sm:$0xff]
    %v4208 = vld [vmem:[%s4197 + $0x50] sm:$0xff]
    %v4209 = vld [vmem:[%s4197 + $0x58] sm:$0xff]
    %v4210 = vld [vmem:[%s4197 + $0x60] sm:$0xff]
    %v4211 = vld [vmem:[%s4197 + $0x68] sm:$0xff]
    %v4212 = vld [vmem:[%s4197 + $0x70] sm:$0xff]
    %v4213 = vld [vmem:[%s4197 + $0x78] sm:$0xff]
    %v4214 = vld [vmem:[%s4197 + $0x80] sm:$0xff]
    %v4215 = vld [vmem:[%s4197 + $0x88] sm:$0xff]
    %v4216 = vld [vmem:[%s4197 + $0x90] sm:$0xff]
    %v4217 = vld [vmem:[%s4197 + $0x98] sm:$0xff]
    %v4218 = vld [vmem:[%s4197 + $0xa0] sm:$0xff]
    %v4219 = vld [vmem:[%s4197 + $0xa8] sm:$0xff]
    %v4220 = vld [vmem:[%s4197 + $0xb0] sm:$0xff]
    %v4221 = vld [vmem:[%s4197 + $0xb8] sm:$0xff]
    %v4222 = vld [vmem:[%s4197 + $0xc0] sm:$0xff]
    %v4223 = vld [vmem:[%s4197 + $0xc8] sm:$0xff]
    %v4224 = vld [vmem:[%s4197 + $0xd0] sm:$0xff]
    %v4225 = vld [vmem:[%s4197 + $0xd8] sm:$0xff]
    %v4226 = vld [vmem:[%s4197 + $0xe0] sm:$0xff]
    %v4227 = vld [vmem:[%s4197 + $0xe8] sm:$0xff]
    %v4228 = vld [vmem:[%s4197 + $0xf0] sm:$0xff]
    %v4229 = vld [vmem:[%s4197 + $0xf8] sm:$0xff]
    %v4230 = vld [vmem:[%s4197 + $0x100] sm:$0xff]
    %v4231 = vld [vmem:[%s4197 + $0x108] sm:$0xff]
    %v4232 = vld [vmem:[%s4197 + $0x110] sm:$0xff]
    %v4233 = vld [vmem:[%s4197 + $0x118] sm:$0xff]
    %v4234 = vld [vmem:[%s4197 + $0x120] sm:$0xff]
    %v4235 = vld [vmem:[%s4197 + $0x128] sm:$0xff]
    %v4236 = vld [vmem:[%s4197 + $0x130] sm:$0xff]
    %v4237 = vld [vmem:[%s4197 + $0x138] sm:$0xff]
    %v4238 = vld [vmem:[%s4197 + $0x140] sm:$0xff]
    %v4239 = vld [vmem:[%s4197 + $0x148] sm:$0xff]
    %v4240 = vld [vmem:[%s4197 + $0x150] sm:$0xff]
    %v4241 = vld [vmem:[%s4197 + $0x158] sm:$0xff]
    %v4242 = vld [vmem:[%s4197 + $0x160] sm:$0xff]
    %v4243 = vld [vmem:[%s4197 + $0x168] sm:$0xff]
    %v4244 = vld [vmem:[%s4197 + $0x170] sm:$0xff]
    %v4245 = vld [vmem:[%s4197 + $0x178] sm:$0xff]
    %v4246 = vld [vmem:[%s4197 + $0x180] sm:$0xff]
    %v4247 = vld [vmem:[%s4197 + $0x188] sm:$0xff]
    %v4248 = vld [vmem:[%s4197 + $0x190] sm:$0xff]
    %v4249 = vld [vmem:[%s4197 + $0x198] sm:$0xff]
    %v4250 = vld [vmem:[%s4197 + $0x1a0] sm:$0xff]
    %v4251 = vld [vmem:[%s4197 + $0x1a8] sm:$0xff]
    %v4252 = vld [vmem:[%s4197 + $0x1b0] sm:$0xff]
    %v4253 = vld [vmem:[%s4197 + $0x1b8] sm:$0xff]
    %v4254 = vld [vmem:[%s4197 + $0x1c0] sm:$0xff]
    %v4255 = vld [vmem:[%s4197 + $0x1c8] sm:$0xff]
    %v4256 = vld [vmem:[%s4197 + $0x1d0] sm:$0xff]
    %v4257 = vld [vmem:[%s4197 + $0x1d8] sm:$0xff]
    %v4258 = vld [vmem:[%s4197 + $0x1e0] sm:$0xff]
    %v4259 = vld [vmem:[%s4197 + $0x1e8] sm:$0xff]
    %v4260 = vld [vmem:[%s4197 + $0x1f0] sm:$0x11]
    %v4261 = vld [vmem:[%s4197 + $0x1f8] sm:$0x11]
    %v4326 = vunpack.c.l.b16 %v4198
    %v4327 = vunpack.c.h.b16 %v4198
    %v4328 = vunpack.c.l.b16 %v4199
    %v4329 = vunpack.c.h.b16 %v4199
    %v4330 = vunpack.c.l.b16 %v4200
    %v4331 = vunpack.c.h.b16 %v4200
    %v4332 = vunpack.c.l.b16 %v4201
    %v4333 = vunpack.c.h.b16 %v4201
    %v4334 = vunpack.c.l.b16 %v4202
    %v4335 = vunpack.c.h.b16 %v4202
    %v4336 = vunpack.c.l.b16 %v4203
    %v4337 = vunpack.c.h.b16 %v4203
    %v4338 = vunpack.c.l.b16 %v4204
    %v4339 = vunpack.c.h.b16 %v4204
    %v4340 = vunpack.c.l.b16 %v4205
    %v4341 = vunpack.c.h.b16 %v4205
    %v4342 = vunpack.c.l.b16 %v4206
    %v4343 = vunpack.c.h.b16 %v4206
    %v4344 = vunpack.c.l.b16 %v4207
    %v4345 = vunpack.c.h.b16 %v4207
    %v4346 = vunpack.c.l.b16 %v4208
    %v4347 = vunpack.c.h.b16 %v4208
    %v4348 = vunpack.c.l.b16 %v4209
    %v4349 = vunpack.c.h.b16 %v4209
    %v4350 = vunpack.c.l.b16 %v4210
    %v4351 = vunpack.c.h.b16 %v4210
    %v4352 = vunpack.c.l.b16 %v4211
    %v4353 = vunpack.c.h.b16 %v4211
    %v4354 = vunpack.c.l.b16 %v4212
    %v4355 = vunpack.c.h.b16 %v4212
    %v4356 = vunpack.c.l.b16 %v4213
    %v4357 = vunpack.c.h.b16 %v4213
    %v4358 = vunpack.c.l.b16 %v4214
    %v4359 = vunpack.c.h.b16 %v4214
    %v4360 = vunpack.c.l.b16 %v4215
    %v4361 = vunpack.c.h.b16 %v4215
    %v4362 = vunpack.c.l.b16 %v4216
    %v4363 = vunpack.c.h.b16 %v4216
    %v4364 = vunpack.c.l.b16 %v4217
    %v4365 = vunpack.c.h.b16 %v4217
    %v4366 = vunpack.c.l.b16 %v4218
    %v4367 = vunpack.c.h.b16 %v4218
    %v4368 = vunpack.c.l.b16 %v4219
    %v4369 = vunpack.c.h.b16 %v4219
    %v4370 = vunpack.c.l.b16 %v4220
    %v4371 = vunpack.c.h.b16 %v4220
    %v4372 = vunpack.c.l.b16 %v4221
    %v4373 = vunpack.c.h.b16 %v4221
    %v4374 = vunpack.c.l.b16 %v4222
    %v4375 = vunpack.c.h.b16 %v4222
    %v4376 = vunpack.c.l.b16 %v4223
    %v4377 = vunpack.c.h.b16 %v4223
    %v4378 = vunpack.c.l.b16 %v4224
    %v4379 = vunpack.c.h.b16 %v4224
    %v4380 = vunpack.c.l.b16 %v4225
    %v4381 = vunpack.c.h.b16 %v4225
    %v4382 = vunpack.c.l.b16 %v4226
    %v4383 = vunpack.c.h.b16 %v4226
    %v4384 = vunpack.c.l.b16 %v4227
    %v4385 = vunpack.c.h.b16 %v4227
    %v4386 = vunpack.c.l.b16 %v4228
    %v4387 = vunpack.c.h.b16 %v4228
    %v4388 = vunpack.c.l.b16 %v4229
    %v4389 = vunpack.c.h.b16 %v4229
    %v4390 = vunpack.c.l.b16 %v4230
    %v4391 = vunpack.c.h.b16 %v4230
    %v4392 = vunpack.c.l.b16 %v4231
    %v4393 = vunpack.c.h.b16 %v4231
    %v4394 = vunpack.c.l.b16 %v4232
    %v4395 = vunpack.c.h.b16 %v4232
    %v4396 = vunpack.c.l.b16 %v4233
    %v4397 = vunpack.c.h.b16 %v4233
    %v4398 = vunpack.c.l.b16 %v4234
    %v4399 = vunpack.c.h.b16 %v4234
    %v4400 = vunpack.c.l.b16 %v4235
    %v4401 = vunpack.c.h.b16 %v4235
    %v4402 = vunpack.c.l.b16 %v4236
    %v4403 = vunpack.c.h.b16 %v4236
    %v4404 = vunpack.c.l.b16 %v4237
    %v4405 = vunpack.c.h.b16 %v4237
    %v4406 = vunpack.c.l.b16 %v4238
    %v4407 = vunpack.c.h.b16 %v4238
    %v4408 = vunpack.c.l.b16 %v4239
    %v4409 = vunpack.c.h.b16 %v4239
    %v4410 = vunpack.c.l.b16 %v4240
    %v4411 = vunpack.c.h.b16 %v4240
    %v4412 = vunpack.c.l.b16 %v4241
    %v4413 = vunpack.c.h.b16 %v4241
    %v4414 = vunpack.c.l.b16 %v4242
    %v4415 = vunpack.c.h.b16 %v4242
    %v4416 = vunpack.c.l.b16 %v4243
    %v4417 = vunpack.c.h.b16 %v4243
    %v4418 = vunpack.c.l.b16 %v4244
    %v4419 = vunpack.c.h.b16 %v4244
    %v4420 = vunpack.c.l.b16 %v4245
    %v4421 = vunpack.c.h.b16 %v4245
    %v4422 = vunpack.c.l.b16 %v4246
    %v4423 = vunpack.c.h.b16 %v4246
    %v4424 = vunpack.c.l.b16 %v4247
    %v4425 = vunpack.c.h.b16 %v4247
    %v4426 = vunpack.c.l.b16 %v4248
    %v4427 = vunpack.c.h.b16 %v4248
    %v4428 = vunpack.c.l.b16 %v4249
    %v4429 = vunpack.c.h.b16 %v4249
    %v4430 = vunpack.c.l.b16 %v4250
    %v4431 = vunpack.c.h.b16 %v4250
    %v4432 = vunpack.c.l.b16 %v4251
    %v4433 = vunpack.c.h.b16 %v4251
    %v4434 = vunpack.c.l.b16 %v4252
    %v4435 = vunpack.c.h.b16 %v4252
    %v4436 = vunpack.c.l.b16 %v4253
    %v4437 = vunpack.c.h.b16 %v4253
    %v4438 = vunpack.c.l.b16 %v4254
    %v4439 = vunpack.c.h.b16 %v4254
    %v4440 = vunpack.c.l.b16 %v4255
    %v4441 = vunpack.c.h.b16 %v4255
    %v4442 = vunpack.c.l.b16 %v4256
    %v4443 = vunpack.c.h.b16 %v4256
    %v4444 = vunpack.c.l.b16 %v4257
    %v4445 = vunpack.c.h.b16 %v4257
    %v4446 = vunpack.c.l.b16 %v4258
    %v4447 = vunpack.c.h.b16 %v4258
    %v4448 = vunpack.c.l.b16 %v4259
    %v4449 = vunpack.c.h.b16 %v4259
    %v4450 = vunpack.c.l.b16 %v4260
    %v4451 = vunpack.c.h.b16 %v4260
    %v4452 = vunpack.c.l.b16 %v4261
    %v4453 = vunpack.c.h.b16 %v4261
    %v4454 = vpack.c.b16 %v4330, %v4326
    %v4455 = vpack.c.b16 %v4331, %v4327
    %v4456 = vpack.c.b16 %v4332, %v4328
    %v4457 = vpack.c.b16 %v4333, %v4329
    %v4458 = vpack.c.b16 %v4338, %v4334
    %v4459 = vpack.c.b16 %v4339, %v4335
    %v4460 = vpack.c.b16 %v4340, %v4336
    %v4461 = vpack.c.b16 %v4341, %v4337
    %v4462 = vpack.c.b16 %v4346, %v4342
    %v4463 = vpack.c.b16 %v4347, %v4343
    %v4464 = vpack.c.b16 %v4348, %v4344
    %v4465 = vpack.c.b16 %v4349, %v4345
    %v4466 = vpack.c.b16 %v4354, %v4350
    %v4467 = vpack.c.b16 %v4355, %v4351
    %v4468 = vpack.c.b16 %v4356, %v4352
    %v4469 = vpack.c.b16 %v4357, %v4353
    %v4470 = vpack.c.b16 %v4362, %v4358
    %v4471 = vpack.c.b16 %v4363, %v4359
    %v4472 = vpack.c.b16 %v4364, %v4360
    %v4473 = vpack.c.b16 %v4365, %v4361
    %v4474 = vpack.c.b16 %v4370, %v4366
    %v4475 = vpack.c.b16 %v4371, %v4367
    %v4476 = vpack.c.b16 %v4372, %v4368
    %v4477 = vpack.c.b16 %v4373, %v4369
    %v4478 = vpack.c.b16 %v4378, %v4374
    %v4479 = vpack.c.b16 %v4379, %v4375
    %v4480 = vpack.c.b16 %v4380, %v4376
    %v4481 = vpack.c.b16 %v4381, %v4377
    %v4482 = vpack.c.b16 %v4386, %v4382
    %v4483 = vpack.c.b16 %v4387, %v4383
    %v4484 = vpack.c.b16 %v4388, %v4384
    %v4485 = vpack.c.b16 %v4389, %v4385
    %v4486 = vpack.c.b16 %v4394, %v4390
    %v4487 = vpack.c.b16 %v4395, %v4391
    %v4488 = vpack.c.b16 %v4396, %v4392
    %v4489 = vpack.c.b16 %v4397, %v4393
    %v4490 = vpack.c.b16 %v4402, %v4398
    %v4491 = vpack.c.b16 %v4403, %v4399
    %v4492 = vpack.c.b16 %v4404, %v4400
    %v4493 = vpack.c.b16 %v4405, %v4401
    %v4494 = vpack.c.b16 %v4410, %v4406
    %v4495 = vpack.c.b16 %v4411, %v4407
    %v4496 = vpack.c.b16 %v4412, %v4408
    %v4497 = vpack.c.b16 %v4413, %v4409
    %v4498 = vpack.c.b16 %v4418, %v4414
    %v4499 = vpack.c.b16 %v4419, %v4415
    %v4500 = vpack.c.b16 %v4420, %v4416
    %v4501 = vpack.c.b16 %v4421, %v4417
    %v4502 = vpack.c.b16 %v4426, %v4422
    %v4503 = vpack.c.b16 %v4427, %v4423
    %v4504 = vpack.c.b16 %v4428, %v4424
    %v4505 = vpack.c.b16 %v4429, %v4425
    %v4506 = vpack.c.b16 %v4434, %v4430
    %v4507 = vpack.c.b16 %v4435, %v4431
    %v4508 = vpack.c.b16 %v4436, %v4432
    %v4509 = vpack.c.b16 %v4437, %v4433
    %v4510 = vpack.c.b16 %v4442, %v4438
    %v4511 = vpack.c.b16 %v4443, %v4439
    %v4512 = vpack.c.b16 %v4444, %v4440
    %v4513 = vpack.c.b16 %v4445, %v4441
    %v4514 = vpack.c.b16 %v4450, %v4446
    %v4515 = vpack.c.b16 %v4451, %v4447
    %v4516 = vpack.c.b16 %v4452, %v4448
    %v4517 = vpack.c.b16 %v4453, %v4449
    %vm4578 = vcmask 998400
    %v4580 = vsel %vm4578, %v4111, 0
    %vm4582 = vcmask 1044480
    %v4584 = vsel %vm4582, %v4514, 0
    %v4587 = vsel %vm4582, %v4515, 0
    %v4590 = vsel %vm4582, %v4516, 0
    %v4593 = vsel %vm4582, %v4517, 0
    %4595 = vmatprep.subr.bf16.mxu0 %v4455
    %4596 = vmatpush1.bf16.msra.mxu0 %v4454
    %4597 = vmatprep.subr.bf16.mxu0 %v4459
    %4598 = vmatpush1.bf16.msra.mxu0 %v4458
    %4599 = vmatprep.subr.bf16.mxu0 %v4463
    %4600 = vmatpush1.bf16.msra.mxu0 %v4462
    %4601 = vmatprep.subr.bf16.mxu0 %v4467
    %4602 = vmatpush1.bf16.msra.mxu0 %v4466
    %4603 = vmatprep.subr.bf16.mxu0 %v4471
    %4604 = vmatpush1.bf16.msra.mxu0 %v4470
    %4605 = vmatprep.subr.bf16.mxu0 %v4475
    %4606 = vmatpush1.bf16.msra.mxu0 %v4474
    %4607 = vmatprep.subr.bf16.mxu0 %v4479
    %4608 = vmatpush1.bf16.msra.mxu0 %v4478
    %4609 = vmatprep.subr.bf16.mxu0 %v4483
    %4610 = vmatpush1.bf16.msra.mxu0 %v4482
    %4611 = vmatprep.subr.bf16.mxu0 %v4487
    %4612 = vmatpush1.bf16.msra.mxu0 %v4486
    %4613 = vmatprep.subr.bf16.mxu0 %v4491
    %4614 = vmatpush1.bf16.msra.mxu0 %v4490
    %4615 = vmatprep.subr.bf16.mxu0 %v4495
    %4616 = vmatpush1.bf16.msra.mxu0 %v4494
    %4617 = vmatprep.subr.bf16.mxu0 %v4499
    %4618 = vmatpush1.bf16.msra.mxu0 %v4498
    %4619 = vmatprep.subr.bf16.mxu0 %v4503
    %4620 = vmatpush1.bf16.msra.mxu0 %v4502
    %4621 = vmatprep.subr.bf16.mxu0 %v4507
    %4622 = vmatpush1.bf16.msra.mxu0 %v4506
    %4623 = vmatprep.subr.bf16.mxu0 %v4511
    %4624 = vmatpush1.bf16.msra.mxu0 %v4510
    %4625 = vmatprep.subr.bf16.mxu0 %v4587
    %4626 = vmatpush1.bf16.msra.mxu0 %v4584
    %4627 = vmatprep.mubr.bf16.mxu0 %v4580
    %4628 = vmatmul.mubr.bf16.gmra.mrb[0].mxu0 %v4110
    %v4629 = vpop.f32.mrb[0].mxu0
    %v4630 = vadd.f32 0.0, %v4629
    %v4631 = vpop.f32.mrb[0].mxu0
    %v4632 = vadd.f32 0.0, %v4631
    %v4633 = vpop.f32.mrb[0].mxu0
    %v4634 = vpop.f32.mrb[0].mxu0
    %4635 = vdwg.mxu0
    %4636 = vmatprep.subr.bf16.mxu0 %v4457
    %4637 = vmatpush1.bf16.msra.mxu0 %v4456
    %4638 = vmatprep.subr.bf16.mxu0 %v4461
    %4639 = vmatpush1.bf16.msra.mxu0 %v4460
    %4640 = vmatprep.subr.bf16.mxu0 %v4465
    %4641 = vmatpush1.bf16.msra.mxu0 %v4464
    %4642 = vmatprep.subr.bf16.mxu0 %v4469
    %4643 = vmatpush1.bf16.msra.mxu0 %v4468
    %4644 = vmatprep.subr.bf16.mxu0 %v4473
    %4645 = vmatpush1.bf16.msra.mxu0 %v4472
    %4646 = vmatprep.subr.bf16.mxu0 %v4477
    %4647 = vmatpush1.bf16.msra.mxu0 %v4476
    %4648 = vmatprep.subr.bf16.mxu0 %v4481
    %4649 = vmatpush1.bf16.msra.mxu0 %v4480
    %4650 = vmatprep.subr.bf16.mxu0 %v4485
    %4651 = vmatpush1.bf16.msra.mxu0 %v4484
    %4652 = vmatprep.subr.bf16.mxu0 %v4489
    %4653 = vmatpush1.bf16.msra.mxu0 %v4488
    %4654 = vmatprep.subr.bf16.mxu0 %v4493
    %4655 = vmatpush1.bf16.msra.mxu0 %v4492
    %4656 = vmatprep.subr.bf16.mxu0 %v4497
    %4657 = vmatpush1.bf16.msra.mxu0 %v4496
    %4658 = vmatprep.subr.bf16.mxu0 %v4501
    %4659 = vmatpush1.bf16.msra.mxu0 %v4500
    %4660 = vmatprep.subr.bf16.mxu0 %v4505
    %4661 = vmatpush1.bf16.msra.mxu0 %v4504
    %4662 = vmatprep.subr.bf16.mxu0 %v4509
    %4663 = vmatpush1.bf16.msra.mxu0 %v4508
    %4664 = vmatprep.subr.bf16.mxu0 %v4513
    %4665 = vmatpush1.bf16.msra.mxu0 %v4512
    %4666 = vmatprep.subr.bf16.mxu0 %v4593
    %4667 = vmatpush1.bf16.msra.mxu0 %v4590
    %4668 = vmatprep.mubr.bf16.mxu0 %v4580
    %4669 = vmatmul.mubr.bf16.gmra.mrb[0].mxu0 %v4110
    %v4670 = vpop.f32.mrb[0].mxu0
    %v4671 = vadd.f32 0.0, %v4670
    %v4672 = vpop.f32.mrb[0].mxu0
    %v4673 = vadd.f32 0.0, %v4672
    %v4674 = vpop.f32.mrb[0].mxu0
    %v4675 = vpop.f32.mrb[0].mxu0
    %4676 = vdwg.mxu0
    %v4741 = vunpack.c.l.b16 %v4133
    %v4742 = vunpack.c.h.b16 %v4133
    %v4743 = vunpack.c.l.b16 %v4134
    %v4744 = vunpack.c.h.b16 %v4134
    %v4745 = vunpack.c.l.b16 %v4135
    %v4746 = vunpack.c.h.b16 %v4135
    %v4747 = vunpack.c.l.b16 %v4136
    %v4748 = vunpack.c.h.b16 %v4136
    %v4749 = vunpack.c.l.b16 %v4137
    %v4750 = vunpack.c.h.b16 %v4137
    %v4751 = vunpack.c.l.b16 %v4138
    %v4752 = vunpack.c.h.b16 %v4138
    %v4753 = vunpack.c.l.b16 %v4139
    %v4754 = vunpack.c.h.b16 %v4139
    %v4755 = vunpack.c.l.b16 %v4140
    %v4756 = vunpack.c.h.b16 %v4140
    %v4757 = vunpack.c.l.b16 %v4141
    %v4758 = vunpack.c.h.b16 %v4141
    %v4759 = vunpack.c.l.b16 %v4142
    %v4760 = vunpack.c.h.b16 %v4142
    %v4761 = vunpack.c.l.b16 %v4143
    %v4762 = vunpack.c.h.b16 %v4143
    %v4763 = vunpack.c.l.b16 %v4144
    %v4764 = vunpack.c.h.b16 %v4144
    %v4765 = vunpack.c.l.b16 %v4145
    %v4766 = vunpack.c.h.b16 %v4145
    %v4767 = vunpack.c.l.b16 %v4146
    %v4768 = vunpack.c.h.b16 %v4146
    %v4769 = vunpack.c.l.b16 %v4147
    %v4770 = vunpack.c.h.b16 %v4147
    %v4771 = vunpack.c.l.b16 %v4148
    %v4772 = vunpack.c.h.b16 %v4148
    %v4773 = vunpack.c.l.b16 %v4149
    %v4774 = vunpack.c.h.b16 %v4149
    %v4775 = vunpack.c.l.b16 %v4150
    %v4776 = vunpack.c.h.b16 %v4150
    %v4777 = vunpack.c.l.b16 %v4151
    %v4778 = vunpack.c.h.b16 %v4151
    %v4779 = vunpack.c.l.b16 %v4152
    %v4780 = vunpack.c.h.b16 %v4152
    %v4781 = vunpack.c.l.b16 %v4153
    %v4782 = vunpack.c.h.b16 %v4153
    %v4783 = vunpack.c.l.b16 %v4154
    %v4784 = vunpack.c.h.b16 %v4154
    %v4785 = vunpack.c.l.b16 %v4155
    %v4786 = vunpack.c.h.b16 %v4155
    %v4787 = vunpack.c.l.b16 %v4156
    %v4788 = vunpack.c.h.b16 %v4156
    %v4789 = vunpack.c.l.b16 %v4157
    %v4790 = vunpack.c.h.b16 %v4157
    %v4791 = vunpack.c.l.b16 %v4158
    %v4792 = vunpack.c.h.b16 %v4158
    %v4793 = vunpack.c.l.b16 %v4159
    %v4794 = vunpack.c.h.b16 %v4159
    %v4795 = vunpack.c.l.b16 %v4160
    %v4796 = vunpack.c.h.b16 %v4160
    %v4797 = vunpack.c.l.b16 %v4161
    %v4798 = vunpack.c.h.b16 %v4161
    %v4799 = vunpack.c.l.b16 %v4162
    %v4800 = vunpack.c.h.b16 %v4162
    %v4801 = vunpack.c.l.b16 %v4163
    %v4802 = vunpack.c.h.b16 %v4163
    %v4803 = vunpack.c.l.b16 %v4164
    %v4804 = vunpack.c.h.b16 %v4164
    %v4805 = vunpack.c.l.b16 %v4165
    %v4806 = vunpack.c.h.b16 %v4165
    %v4807 = vunpack.c.l.b16 %v4166
    %v4808 = vunpack.c.h.b16 %v4166
    %v4809 = vunpack.c.l.b16 %v4167
    %v4810 = vunpack.c.h.b16 %v4167
    %v4811 = vunpack.c.l.b16 %v4168
    %v4812 = vunpack.c.h.b16 %v4168
    %v4813 = vunpack.c.l.b16 %v4169
    %v4814 = vunpack.c.h.b16 %v4169
    %v4815 = vunpack.c.l.b16 %v4170
    %v4816 = vunpack.c.h.b16 %v4170
    %v4817 = vunpack.c.l.b16 %v4171
    %v4818 = vunpack.c.h.b16 %v4171
    %v4819 = vunpack.c.l.b16 %v4172
    %v4820 = vunpack.c.h.b16 %v4172
    %v4821 = vunpack.c.l.b16 %v4173
    %v4822 = vunpack.c.h.b16 %v4173
    %v4823 = vunpack.c.l.b16 %v4174
    %v4824 = vunpack.c.h.b16 %v4174
    %v4825 = vunpack.c.l.b16 %v4175
    %v4826 = vunpack.c.h.b16 %v4175
    %v4827 = vunpack.c.l.b16 %v4176
    %v4828 = vunpack.c.h.b16 %v4176
    %v4829 = vunpack.c.l.b16 %v4177
    %v4830 = vunpack.c.h.b16 %v4177
    %v4831 = vunpack.c.l.b16 %v4178
    %v4832 = vunpack.c.h.b16 %v4178
    %v4833 = vunpack.c.l.b16 %v4179
    %v4834 = vunpack.c.h.b16 %v4179
    %v4835 = vunpack.c.l.b16 %v4180
    %v4836 = vunpack.c.h.b16 %v4180
    %v4837 = vunpack.c.l.b16 %v4181
    %v4838 = vunpack.c.h.b16 %v4181
    %v4839 = vunpack.c.l.b16 %v4182
    %v4840 = vunpack.c.h.b16 %v4182
    %v4841 = vunpack.c.l.b16 %v4183
    %v4842 = vunpack.c.h.b16 %v4183
    %v4843 = vunpack.c.l.b16 %v4184
    %v4844 = vunpack.c.h.b16 %v4184
    %v4845 = vunpack.c.l.b16 %v4185
    %v4846 = vunpack.c.h.b16 %v4185
    %v4847 = vunpack.c.l.b16 %v4186
    %v4848 = vunpack.c.h.b16 %v4186
    %v4849 = vunpack.c.l.b16 %v4187
    %v4850 = vunpack.c.h.b16 %v4187
    %v4851 = vunpack.c.l.b16 %v4188
    %v4852 = vunpack.c.h.b16 %v4188
    %v4853 = vunpack.c.l.b16 %v4189
    %v4854 = vunpack.c.h.b16 %v4189
    %v4855 = vunpack.c.l.b16 %v4190
    %v4856 = vunpack.c.h.b16 %v4190
    %v4857 = vunpack.c.l.b16 %v4191
    %v4858 = vunpack.c.h.b16 %v4191
    %v4859 = vunpack.c.l.b16 %v4192
    %v4860 = vunpack.c.h.b16 %v4192
    %v4861 = vunpack.c.l.b16 %v4193
    %v4862 = vunpack.c.h.b16 %v4193
    %v4863 = vunpack.c.l.b16 %v4194
    %v4864 = vunpack.c.h.b16 %v4194
    %v4865 = vunpack.c.l.b16 %v4195
    %v4866 = vunpack.c.h.b16 %v4195
    %v4867 = vunpack.c.l.b16 %v4196
    %v4868 = vunpack.c.h.b16 %v4196
    %v4869 = vpack.c.b16 %v4745, %v4741
    %v4870 = vpack.c.b16 %v4746, %v4742
    %v4871 = vpack.c.b16 %v4747, %v4743
    %v4872 = vpack.c.b16 %v4748, %v4744
    %v4873 = vpack.c.b16 %v4753, %v4749
    %v4874 = vpack.c.b16 %v4754, %v4750
    %v4875 = vpack.c.b16 %v4755, %v4751
    %v4876 = vpack.c.b16 %v4756, %v4752
    %v4877 = vpack.c.b16 %v4761, %v4757
    %v4878 = vpack.c.b16 %v4762, %v4758
    %v4879 = vpack.c.b16 %v4763, %v4759
    %v4880 = vpack.c.b16 %v4764, %v4760
    %v4881 = vpack.c.b16 %v4769, %v4765
    %v4882 = vpack.c.b16 %v4770, %v4766
    %v4883 = vpack.c.b16 %v4771, %v4767
    %v4884 = vpack.c.b16 %v4772, %v4768
    %v4885 = vpack.c.b16 %v4777, %v4773
    %v4886 = vpack.c.b16 %v4778, %v4774
    %v4887 = vpack.c.b16 %v4779, %v4775
    %v4888 = vpack.c.b16 %v4780, %v4776
    %v4889 = vpack.c.b16 %v4785, %v4781
    %v4890 = vpack.c.b16 %v4786, %v4782
    %v4891 = vpack.c.b16 %v4787, %v4783
    %v4892 = vpack.c.b16 %v4788, %v4784
    %v4893 = vpack.c.b16 %v4793, %v4789
    %v4894 = vpack.c.b16 %v4794, %v4790
    %v4895 = vpack.c.b16 %v4795, %v4791
    %v4896 = vpack.c.b16 %v4796, %v4792
    %v4897 = vpack.c.b16 %v4801, %v4797
    %v4898 = vpack.c.b16 %v4802, %v4798
    %v4899 = vpack.c.b16 %v4803, %v4799
    %v4900 = vpack.c.b16 %v4804, %v4800
    %v4901 = vpack.c.b16 %v4809, %v4805
    %v4902 = vpack.c.b16 %v4810, %v4806
    %v4903 = vpack.c.b16 %v4811, %v4807
    %v4904 = vpack.c.b16 %v4812, %v4808
    %v4905 = vpack.c.b16 %v4817, %v4813
    %v4906 = vpack.c.b16 %v4818, %v4814
    %v4907 = vpack.c.b16 %v4819, %v4815
    %v4908 = vpack.c.b16 %v4820, %v4816
    %v4909 = vpack.c.b16 %v4825, %v4821
    %v4910 = vpack.c.b16 %v4826, %v4822
    %v4911 = vpack.c.b16 %v4827, %v4823
    %v4912 = vpack.c.b16 %v4828, %v4824
    %v4913 = vpack.c.b16 %v4833, %v4829
    %v4914 = vpack.c.b16 %v4834, %v4830
    %v4915 = vpack.c.b16 %v4835, %v4831
    %v4916 = vpack.c.b16 %v4836, %v4832
    %v4917 = vpack.c.b16 %v4841, %v4837
    %v4918 = vpack.c.b16 %v4842, %v4838
    %v4919 = vpack.c.b16 %v4843, %v4839
    %v4920 = vpack.c.b16 %v4844, %v4840
    %v4921 = vpack.c.b16 %v4849, %v4845
    %v4922 = vpack.c.b16 %v4850, %v4846
    %v4923 = vpack.c.b16 %v4851, %v4847
    %v4924 = vpack.c.b16 %v4852, %v4848
    %v4925 = vpack.c.b16 %v4857, %v4853
    %v4926 = vpack.c.b16 %v4858, %v4854
    %v4927 = vpack.c.b16 %v4859, %v4855
    %v4928 = vpack.c.b16 %v4860, %v4856
    %v4929 = vpack.c.b16 %v4865, %v4861
    %v4930 = vpack.c.b16 %v4866, %v4862
    %v4931 = vpack.c.b16 %v4867, %v4863
    %v4932 = vpack.c.b16 %v4868, %v4864
    %v4994 = vsel %vm4578, %v4103, 0
    %v4997 = vsel %vm4582, %v4929, 0
    %v5000 = vsel %vm4582, %v4930, 0
    %v5003 = vsel %vm4582, %v4931, 0
    %v5006 = vsel %vm4582, %v4932, 0
    %5008 = vmatprep.subr.bf16.mxu0 %v4870
    %5009 = vmatpush1.bf16.msra.mxu0 %v4869
    %5010 = vmatprep.subr.bf16.mxu0 %v4874
    %5011 = vmatpush1.bf16.msra.mxu0 %v4873
    %5012 = vmatprep.subr.bf16.mxu0 %v4878
    %5013 = vmatpush1.bf16.msra.mxu0 %v4877
    %5014 = vmatprep.subr.bf16.mxu0 %v4882
    %5015 = vmatpush1.bf16.msra.mxu0 %v4881
    %5016 = vmatprep.subr.bf16.mxu0 %v4886
    %5017 = vmatpush1.bf16.msra.mxu0 %v4885
    %5018 = vmatprep.subr.bf16.mxu0 %v4890
    %5019 = vmatpush1.bf16.msra.mxu0 %v4889
    %5020 = vmatprep.subr.bf16.mxu0 %v4894
    %5021 = vmatpush1.bf16.msra.mxu0 %v4893
    %5022 = vmatprep.subr.bf16.mxu0 %v4898
    %5023 = vmatpush1.bf16.msra.mxu0 %v4897
    %5024 = vmatprep.subr.bf16.mxu0 %v4902
    %5025 = vmatpush1.bf16.msra.mxu0 %v4901
    %5026 = vmatprep.subr.bf16.mxu0 %v4906
    %5027 = vmatpush1.bf16.msra.mxu0 %v4905
    %5028 = vmatprep.subr.bf16.mxu0 %v4910
    %5029 = vmatpush1.bf16.msra.mxu0 %v4909
    %5030 = vmatprep.subr.bf16.mxu0 %v4914
    %5031 = vmatpush1.bf16.msra.mxu0 %v4913
    %5032 = vmatprep.subr.bf16.mxu0 %v4918
    %5033 = vmatpush1.bf16.msra.mxu0 %v4917
    %5034 = vmatprep.subr.bf16.mxu0 %v4922
    %5035 = vmatpush1.bf16.msra.mxu0 %v4921
    %5036 = vmatprep.subr.bf16.mxu0 %v4926
    %5037 = vmatpush1.bf16.msra.mxu0 %v4925
    %5038 = vmatprep.subr.bf16.mxu0 %v5000
    %5039 = vmatpush1.bf16.msra.mxu0 %v4997
    %5040 = vmatprep.mubr.bf16.mxu0 %v4994
    %5041 = vmatmul.mubr.bf16.gmra.mrb[0].mxu0 %v4102
    %v5042 = vpop.f32.mrb[0].mxu0
    %v5043 = vadd.f32 %v4630, %v5042
    %v5044 = vpop.f32.mrb[0].mxu0
    %v5045 = vadd.f32 %v4632, %v5044
    %v5046 = vpop.f32.mrb[0].mxu0
    %v5047 = vpop.f32.mrb[0].mxu0
    %5048 = vdwg.mxu0
    %5049 = vmatprep.subr.bf16.mxu0 %v4872
    %5050 = vmatpush1.bf16.msra.mxu0 %v4871
    %5051 = vmatprep.subr.bf16.mxu0 %v4876
    %5052 = vmatpush1.bf16.msra.mxu0 %v4875
    %5053 = vmatprep.subr.bf16.mxu0 %v4880
    %5054 = vmatpush1.bf16.msra.mxu0 %v4879
    %5055 = vmatprep.subr.bf16.mxu0 %v4884
    %5056 = vmatpush1.bf16.msra.mxu0 %v4883
    %5057 = vmatprep.subr.bf16.mxu0 %v4888
    %5058 = vmatpush1.bf16.msra.mxu0 %v4887
    %5059 = vmatprep.subr.bf16.mxu0 %v4892
    %5060 = vmatpush1.bf16.msra.mxu0 %v4891
    %5061 = vmatprep.subr.bf16.mxu0 %v4896
    %5062 = vmatpush1.bf16.msra.mxu0 %v4895
    %5063 = vmatprep.subr.bf16.mxu0 %v4900
    %5064 = vmatpush1.bf16.msra.mxu0 %v4899
    %5065 = vmatprep.subr.bf16.mxu0 %v4904
    %5066 = vmatpush1.bf16.msra.mxu0 %v4903
    %5067 = vmatprep.subr.bf16.mxu0 %v4908
    %5068 = vmatpush1.bf16.msra.mxu0 %v4907
    %5069 = vmatprep.subr.bf16.mxu0 %v4912
    %5070 = vmatpush1.bf16.msra.mxu0 %v4911
    %5071 = vmatprep.subr.bf16.mxu0 %v4916
    %5072 = vmatpush1.bf16.msra.mxu0 %v4915
    %5073 = vmatprep.subr.bf16.mxu0 %v4920
    %5074 = vmatpush1.bf16.msra.mxu0 %v4919
    %5075 = vmatprep.subr.bf16.mxu0 %v4924
    %5076 = vmatpush1.bf16.msra.mxu0 %v4923
    %5077 = vmatprep.subr.bf16.mxu0 %v4928
    %5078 = vmatpush1.bf16.msra.mxu0 %v4927
    %5079 = vmatprep.subr.bf16.mxu0 %v5006
    %5080 = vmatpush1.bf16.msra.mxu0 %v5003
    %5081 = vmatprep.mubr.bf16.mxu0 %v4994
    %5082 = vmatmul.mubr.bf16.gmra.mrb[0].mxu0 %v4102
    %v5083 = vpop.f32.mrb[0].mxu0
    %v5084 = vadd.f32 %v4671, %v5083
    %v5085 = vpop.f32.mrb[0].mxu0
    %v5086 = vadd.f32 %v4673, %v5085
    %v5087 = vpop.f32.mrb[0].mxu0
    %v5088 = vpop.f32.mrb[0].mxu0
    %5089 = vdwg.mxu0
    %s5090 = scalar_lea.vmem [#allocation2], 1024
    %v5091 = vld [vmem:[%s5090] sm:$0xff]
    %v5092 = vld [vmem:[%s5090 + $0x8] sm:$0xff]
    %v5093 = vld [vmem:[%s5090 + $0x10] sm:$0xff]
    %v5094 = vld [vmem:[%s5090 + $0x18] sm:$0xff]
    %v5095 = vld [vmem:[%s5090 + $0x20] sm:$0xff]
    %v5096 = vld [vmem:[%s5090 + $0x28] sm:$0xff]
    %v5097 = vld [vmem:[%s5090 + $0x30] sm:$0xff]
    %v5098 = vld [vmem:[%s5090 + $0x38] sm:$0xff]
    %v5099 = vld [vmem:[%s5090 + $0x40] sm:$0xff]
    %v5100 = vld [vmem:[%s5090 + $0x48] sm:$0xff]
    %v5101 = vld [vmem:[%s5090 + $0x50] sm:$0xff]
    %v5102 = vld [vmem:[%s5090 + $0x58] sm:$0xff]
    %v5103 = vld [vmem:[%s5090 + $0x60] sm:$0xff]
    %v5104 = vld [vmem:[%s5090 + $0x68] sm:$0xff]
    %v5105 = vld [vmem:[%s5090 + $0x70] sm:$0xff]
    %v5106 = vld [vmem:[%s5090 + $0x78] sm:$0xff]
    %v5107 = vld [vmem:[%s5090 + $0x80] sm:$0xff]
    %v5108 = vld [vmem:[%s5090 + $0x88] sm:$0xff]
    %v5109 = vld [vmem:[%s5090 + $0x90] sm:$0xff]
    %v5110 = vld [vmem:[%s5090 + $0x98] sm:$0xff]
    %v5111 = vld [vmem:[%s5090 + $0xa0] sm:$0xff]
    %v5112 = vld [vmem:[%s5090 + $0xa8] sm:$0xff]
    %v5113 = vld [vmem:[%s5090 + $0xb0] sm:$0xff]
    %v5114 = vld [vmem:[%s5090 + $0xb8] sm:$0xff]
    %v5115 = vld [vmem:[%s5090 + $0xc0] sm:$0xff]
    %v5116 = vld [vmem:[%s5090 + $0xc8] sm:$0xff]
    %v5117 = vld [vmem:[%s5090 + $0xd0] sm:$0xff]
    %v5118 = vld [vmem:[%s5090 + $0xd8] sm:$0xff]
    %v5119 = vld [vmem:[%s5090 + $0xe0] sm:$0xff]
    %v5120 = vld [vmem:[%s5090 + $0xe8] sm:$0xff]
    %v5121 = vld [vmem:[%s5090 + $0xf0] sm:$0xff]
    %v5122 = vld [vmem:[%s5090 + $0xf8] sm:$0xff]
    %v5123 = vld [vmem:[%s5090 + $0x100] sm:$0xff]
    %v5124 = vld [vmem:[%s5090 + $0x108] sm:$0xff]
    %v5125 = vld [vmem:[%s5090 + $0x110] sm:$0xff]
    %v5126 = vld [vmem:[%s5090 + $0x118] sm:$0xff]
    %v5127 = vld [vmem:[%s5090 + $0x120] sm:$0xff]
    %v5128 = vld [vmem:[%s5090 + $0x128] sm:$0xff]
    %v5129 = vld [vmem:[%s5090 + $0x130] sm:$0xff]
    %v5130 = vld [vmem:[%s5090 + $0x138] sm:$0xff]
    %v5131 = vld [vmem:[%s5090 + $0x140] sm:$0xff]
    %v5132 = vld [vmem:[%s5090 + $0x148] sm:$0xff]
    %v5133 = vld [vmem:[%s5090 + $0x150] sm:$0xff]
    %v5134 = vld [vmem:[%s5090 + $0x158] sm:$0xff]
    %v5135 = vld [vmem:[%s5090 + $0x160] sm:$0xff]
    %v5136 = vld [vmem:[%s5090 + $0x168] sm:$0xff]
    %v5137 = vld [vmem:[%s5090 + $0x170] sm:$0xff]
    %v5138 = vld [vmem:[%s5090 + $0x178] sm:$0xff]
    %v5139 = vld [vmem:[%s5090 + $0x180] sm:$0xff]
    %v5140 = vld [vmem:[%s5090 + $0x188] sm:$0xff]
    %v5141 = vld [vmem:[%s5090 + $0x190] sm:$0xff]
    %v5142 = vld [vmem:[%s5090 + $0x198] sm:$0xff]
    %v5143 = vld [vmem:[%s5090 + $0x1a0] sm:$0xff]
    %v5144 = vld [vmem:[%s5090 + $0x1a8] sm:$0xff]
    %v5145 = vld [vmem:[%s5090 + $0x1b0] sm:$0xff]
    %v5146 = vld [vmem:[%s5090 + $0x1b8] sm:$0xff]
    %v5147 = vld [vmem:[%s5090 + $0x1c0] sm:$0xff]
    %v5148 = vld [vmem:[%s5090 + $0x1c8] sm:$0xff]
    %v5149 = vld [vmem:[%s5090 + $0x1d0] sm:$0xff]
    %v5150 = vld [vmem:[%s5090 + $0x1d8] sm:$0xff]
    %v5151 = vld [vmem:[%s5090 + $0x1e0] sm:$0xff]
    %v5152 = vld [vmem:[%s5090 + $0x1e8] sm:$0xff]
    %v5153 = vld [vmem:[%s5090 + $0x1f0] sm:$0x11]
    %v5154 = vld [vmem:[%s5090 + $0x1f8] sm:$0x11]
    %v5219 = vunpack.c.l.b16 %v5091
    %v5220 = vunpack.c.h.b16 %v5091
    %v5221 = vunpack.c.l.b16 %v5092
    %v5222 = vunpack.c.h.b16 %v5092
    %v5223 = vunpack.c.l.b16 %v5093
    %v5224 = vunpack.c.h.b16 %v5093
    %v5225 = vunpack.c.l.b16 %v5094
    %v5226 = vunpack.c.h.b16 %v5094
    %v5227 = vunpack.c.l.b16 %v5095
    %v5228 = vunpack.c.h.b16 %v5095
    %v5229 = vunpack.c.l.b16 %v5096
    %v5230 = vunpack.c.h.b16 %v5096
    %v5231 = vunpack.c.l.b16 %v5097
    %v5232 = vunpack.c.h.b16 %v5097
    %v5233 = vunpack.c.l.b16 %v5098
    %v5234 = vunpack.c.h.b16 %v5098
    %v5235 = vunpack.c.l.b16 %v5099
    %v5236 = vunpack.c.h.b16 %v5099
    %v5237 = vunpack.c.l.b16 %v5100
    %v5238 = vunpack.c.h.b16 %v5100
    %v5239 = vunpack.c.l.b16 %v5101
    %v5240 = vunpack.c.h.b16 %v5101
    %v5241 = vunpack.c.l.b16 %v5102
    %v5242 = vunpack.c.h.b16 %v5102
    %v5243 = vunpack.c.l.b16 %v5103
    %v5244 = vunpack.c.h.b16 %v5103
    %v5245 = vunpack.c.l.b16 %v5104
    %v5246 = vunpack.c.h.b16 %v5104
    %v5247 = vunpack.c.l.b16 %v5105
    %v5248 = vunpack.c.h.b16 %v5105
    %v5249 = vunpack.c.l.b16 %v5106
    %v5250 = vunpack.c.h.b16 %v5106
    %v5251 = vunpack.c.l.b16 %v5107
    %v5252 = vunpack.c.h.b16 %v5107
    %v5253 = vunpack.c.l.b16 %v5108
    %v5254 = vunpack.c.h.b16 %v5108
    %v5255 = vunpack.c.l.b16 %v5109
    %v5256 = vunpack.c.h.b16 %v5109
    %v5257 = vunpack.c.l.b16 %v5110
    %v5258 = vunpack.c.h.b16 %v5110
    %v5259 = vunpack.c.l.b16 %v5111
    %v5260 = vunpack.c.h.b16 %v5111
    %v5261 = vunpack.c.l.b16 %v5112
    %v5262 = vunpack.c.h.b16 %v5112
    %v5263 = vunpack.c.l.b16 %v5113
    %v5264 = vunpack.c.h.b16 %v5113
    %v5265 = vunpack.c.l.b16 %v5114
    %v5266 = vunpack.c.h.b16 %v5114
    %v5267 = vunpack.c.l.b16 %v5115
    %v5268 = vunpack.c.h.b16 %v5115
    %v5269 = vunpack.c.l.b16 %v5116
    %v5270 = vunpack.c.h.b16 %v5116
    %v5271 = vunpack.c.l.b16 %v5117
    %v5272 = vunpack.c.h.b16 %v5117
    %v5273 = vunpack.c.l.b16 %v5118
    %v5274 = vunpack.c.h.b16 %v5118
    %v5275 = vunpack.c.l.b16 %v5119
    %v5276 = vunpack.c.h.b16 %v5119
    %v5277 = vunpack.c.l.b16 %v5120
    %v5278 = vunpack.c.h.b16 %v5120
    %v5279 = vunpack.c.l.b16 %v5121
    %v5280 = vunpack.c.h.b16 %v5121
    %v5281 = vunpack.c.l.b16 %v5122
    %v5282 = vunpack.c.h.b16 %v5122
    %v5283 = vunpack.c.l.b16 %v5123
    %v5284 = vunpack.c.h.b16 %v5123
    %v5285 = vunpack.c.l.b16 %v5124
    %v5286 = vunpack.c.h.b16 %v5124
    %v5287 = vunpack.c.l.b16 %v5125
    %v5288 = vunpack.c.h.b16 %v5125
    %v5289 = vunpack.c.l.b16 %v5126
    %v5290 = vunpack.c.h.b16 %v5126
    %v5291 = vunpack.c.l.b16 %v5127
    %v5292 = vunpack.c.h.b16 %v5127
    %v5293 = vunpack.c.l.b16 %v5128
    %v5294 = vunpack.c.h.b16 %v5128
    %v5295 = vunpack.c.l.b16 %v5129
    %v5296 = vunpack.c.h.b16 %v5129
    %v5297 = vunpack.c.l.b16 %v5130
    %v5298 = vunpack.c.h.b16 %v5130
    %v5299 = vunpack.c.l.b16 %v5131
    %v5300 = vunpack.c.h.b16 %v5131
    %v5301 = vunpack.c.l.b16 %v5132
    %v5302 = vunpack.c.h.b16 %v5132
    %v5303 = vunpack.c.l.b16 %v5133
    %v5304 = vunpack.c.h.b16 %v5133
    %v5305 = vunpack.c.l.b16 %v5134
    %v5306 = vunpack.c.h.b16 %v5134
    %v5307 = vunpack.c.l.b16 %v5135
    %v5308 = vunpack.c.h.b16 %v5135
    %v5309 = vunpack.c.l.b16 %v5136
    %v5310 = vunpack.c.h.b16 %v5136
    %v5311 = vunpack.c.l.b16 %v5137
    %v5312 = vunpack.c.h.b16 %v5137
    %v5313 = vunpack.c.l.b16 %v5138
    %v5314 = vunpack.c.h.b16 %v5138
    %v5315 = vunpack.c.l.b16 %v5139
    %v5316 = vunpack.c.h.b16 %v5139
    %v5317 = vunpack.c.l.b16 %v5140
    %v5318 = vunpack.c.h.b16 %v5140
    %v5319 = vunpack.c.l.b16 %v5141
    %v5320 = vunpack.c.h.b16 %v5141
    %v5321 = vunpack.c.l.b16 %v5142
    %v5322 = vunpack.c.h.b16 %v5142
    %v5323 = vunpack.c.l.b16 %v5143
    %v5324 = vunpack.c.h.b16 %v5143
    %v5325 = vunpack.c.l.b16 %v5144
    %v5326 = vunpack.c.h.b16 %v5144
    %v5327 = vunpack.c.l.b16 %v5145
    %v5328 = vunpack.c.h.b16 %v5145
    %v5329 = vunpack.c.l.b16 %v5146
    %v5330 = vunpack.c.h.b16 %v5146
    %v5331 = vunpack.c.l.b16 %v5147
    %v5332 = vunpack.c.h.b16 %v5147
    %v5333 = vunpack.c.l.b16 %v5148
    %v5334 = vunpack.c.h.b16 %v5148
    %v5335 = vunpack.c.l.b16 %v5149
    %v5336 = vunpack.c.h.b16 %v5149
    %v5337 = vunpack.c.l.b16 %v5150
    %v5338 = vunpack.c.h.b16 %v5150
    %v5339 = vunpack.c.l.b16 %v5151
    %v5340 = vunpack.c.h.b16 %v5151
    %v5341 = vunpack.c.l.b16 %v5152
    %v5342 = vunpack.c.h.b16 %v5152
    %v5343 = vunpack.c.l.b16 %v5153
    %v5344 = vunpack.c.h.b16 %v5153
    %v5345 = vunpack.c.l.b16 %v5154
    %v5346 = vunpack.c.h.b16 %v5154
    %v5347 = vpack.c.b16 %v5223, %v5219
    %v5348 = vpack.c.b16 %v5224, %v5220
    %v5349 = vpack.c.b16 %v5225, %v5221
    %v5350 = vpack.c.b16 %v5226, %v5222
    %v5351 = vpack.c.b16 %v5231, %v5227
    %v5352 = vpack.c.b16 %v5232, %v5228
    %v5353 = vpack.c.b16 %v5233, %v5229
    %v5354 = vpack.c.b16 %v5234, %v5230
    %v5355 = vpack.c.b16 %v5239, %v5235
    %v5356 = vpack.c.b16 %v5240, %v5236
    %v5357 = vpack.c.b16 %v5241, %v5237
    %v5358 = vpack.c.b16 %v5242, %v5238
    %v5359 = vpack.c.b16 %v5247, %v5243
    %v5360 = vpack.c.b16 %v5248, %v5244
    %v5361 = vpack.c.b16 %v5249, %v5245
    %v5362 = vpack.c.b16 %v5250, %v5246
    %v5363 = vpack.c.b16 %v5255, %v5251
    %v5364 = vpack.c.b16 %v5256, %v5252
    %v5365 = vpack.c.b16 %v5257, %v5253
    %v5366 = vpack.c.b16 %v5258, %v5254
    %v5367 = vpack.c.b16 %v5263, %v5259
    %v5368 = vpack.c.b16 %v5264, %v5260
    %v5369 = vpack.c.b16 %v5265, %v5261
    %v5370 = vpack.c.b16 %v5266, %v5262
    %v5371 = vpack.c.b16 %v5271, %v5267
    %v5372 = vpack.c.b16 %v5272, %v5268
    %v5373 = vpack.c.b16 %v5273, %v5269
    %v5374 = vpack.c.b16 %v5274, %v5270
    %v5375 = vpack.c.b16 %v5279, %v5275
    %v5376 = vpack.c.b16 %v5280, %v5276
    %v5377 = vpack.c.b16 %v5281, %v5277
    %v5378 = vpack.c.b16 %v5282, %v5278
    %v5379 = vpack.c.b16 %v5287, %v5283
    %v5380 = vpack.c.b16 %v5288, %v5284
    %v5381 = vpack.c.b16 %v5289, %v5285
    %v5382 = vpack.c.b16 %v5290, %v5286
    %v5383 = vpack.c.b16 %v5295, %v5291
    %v5384 = vpack.c.b16 %v5296, %v5292
    %v5385 = vpack.c.b16 %v5297, %v5293
    %v5386 = vpack.c.b16 %v5298, %v5294
    %v5387 = vpack.c.b16 %v5303, %v5299
    %v5388 = vpack.c.b16 %v5304, %v5300
    %v5389 = vpack.c.b16 %v5305, %v5301
    %v5390 = vpack.c.b16 %v5306, %v5302
    %v5391 = vpack.c.b16 %v5311, %v5307
    %v5392 = vpack.c.b16 %v5312, %v5308
    %v5393 = vpack.c.b16 %v5313, %v5309
    %v5394 = vpack.c.b16 %v5314, %v5310
    %v5395 = vpack.c.b16 %v5319, %v5315
    %v5396 = vpack.c.b16 %v5320, %v5316
    %v5397 = vpack.c.b16 %v5321, %v5317
    %v5398 = vpack.c.b16 %v5322, %v5318
    %v5399 = vpack.c.b16 %v5327, %v5323
    %v5400 = vpack.c.b16 %v5328, %v5324
    %v5401 = vpack.c.b16 %v5329, %v5325
    %v5402 = vpack.c.b16 %v5330, %v5326
    %v5403 = vpack.c.b16 %v5335, %v5331
    %v5404 = vpack.c.b16 %v5336, %v5332
    %v5405 = vpack.c.b16 %v5337, %v5333
    %v5406 = vpack.c.b16 %v5338, %v5334
    %v5407 = vpack.c.b16 %v5343, %v5339
    %v5408 = vpack.c.b16 %v5344, %v5340
    %v5409 = vpack.c.b16 %v5345, %v5341
    %v5410 = vpack.c.b16 %v5346, %v5342
    %v5472 = vsel %vm4578, %v4119, 0
    %v5475 = vsel %vm4582, %v5407, 0
    %v5478 = vsel %vm4582, %v5408, 0
    %v5481 = vsel %vm4582, %v5409, 0
    %v5484 = vsel %vm4582, %v5410, 0
    %5486 = vmatprep.subr.bf16.mxu0 %v5348
    %5487 = vmatpush1.bf16.msra.mxu0 %v5347
    %5488 = vmatprep.subr.bf16.mxu0 %v5352
    %5489 = vmatpush1.bf16.msra.mxu0 %v5351
    %5490 = vmatprep.subr.bf16.mxu0 %v5356
    %5491 = vmatpush1.bf16.msra.mxu0 %v5355
    %5492 = vmatprep.subr.bf16.mxu0 %v5360
    %5493 = vmatpush1.bf16.msra.mxu0 %v5359
    %5494 = vmatprep.subr.bf16.mxu0 %v5364
    %5495 = vmatpush1.bf16.msra.mxu0 %v5363
    %5496 = vmatprep.subr.bf16.mxu0 %v5368
    %5497 = vmatpush1.bf16.msra.mxu0 %v5367
    %5498 = vmatprep.subr.bf16.mxu0 %v5372
    %5499 = vmatpush1.bf16.msra.mxu0 %v5371
    %5500 = vmatprep.subr.bf16.mxu0 %v5376
    %5501 = vmatpush1.bf16.msra.mxu0 %v5375
    %5502 = vmatprep.subr.bf16.mxu0 %v5380
    %5503 = vmatpush1.bf16.msra.mxu0 %v5379
    %5504 = vmatprep.subr.bf16.mxu0 %v5384
    %5505 = vmatpush1.bf16.msra.mxu0 %v5383
    %5506 = vmatprep.subr.bf16.mxu0 %v5388
    %5507 = vmatpush1.bf16.msra.mxu0 %v5387
    %5508 = vmatprep.subr.bf16.mxu0 %v5392
    %5509 = vmatpush1.bf16.msra.mxu0 %v5391
    %5510 = vmatprep.subr.bf16.mxu0 %v5396
    %5511 = vmatpush1.bf16.msra.mxu0 %v5395
    %5512 = vmatprep.subr.bf16.mxu0 %v5400
    %5513 = vmatpush1.bf16.msra.mxu0 %v5399
    %5514 = vmatprep.subr.bf16.mxu0 %v5404
    %5515 = vmatpush1.bf16.msra.mxu0 %v5403
    %5516 = vmatprep.subr.bf16.mxu0 %v5478
    %5517 = vmatpush1.bf16.msra.mxu0 %v5475
    %5518 = vmatprep.mubr.bf16.mxu0 %v5472
    %5519 = vmatmul.mubr.bf16.gmra.mrb[0].mxu0 %v4118
    %v5520 = vpop.f32.mrb[0].mxu0
    %v5521 = vadd.f32 0.0, %v5520
    %v5522 = vpop.f32.mrb[0].mxu0
    %v5523 = vadd.f32 0.0, %v5522
    %v5524 = vpop.f32.mrb[0].mxu0
    %v5525 = vpop.f32.mrb[0].mxu0
    %5526 = vdwg.mxu0
    %5527 = vmatprep.subr.bf16.mxu0 %v5350
    %5528 = vmatpush1.bf16.msra.mxu0 %v5349
    %5529 = vmatprep.subr.bf16.mxu0 %v5354
    %5530 = vmatpush1.bf16.msra.mxu0 %v5353
    %5531 = vmatprep.subr.bf16.mxu0 %v5358
    %5532 = vmatpush1.bf16.msra.mxu0 %v5357
    %5533 = vmatprep.subr.bf16.mxu0 %v5362
    %5534 = vmatpush1.bf16.msra.mxu0 %v5361
    %5535 = vmatprep.subr.bf16.mxu0 %v5366
    %5536 = vmatpush1.bf16.msra.mxu0 %v5365
    %5537 = vmatprep.subr.bf16.mxu0 %v5370
    %5538 = vmatpush1.bf16.msra.mxu0 %v5369
    %5539 = vmatprep.subr.bf16.mxu0 %v5374
    %5540 = vmatpush1.bf16.msra.mxu0 %v5373
    %5541 = vmatprep.subr.bf16.mxu0 %v5378
    %5542 = vmatpush1.bf16.msra.mxu0 %v5377
    %5543 = vmatprep.subr.bf16.mxu0 %v5382
    %5544 = vmatpush1.bf16.msra.mxu0 %v5381
    %5545 = vmatprep.subr.bf16.mxu0 %v5386
    %5546 = vmatpush1.bf16.msra.mxu0 %v5385
    %5547 = vmatprep.subr.bf16.mxu0 %v5390
    %5548 = vmatpush1.bf16.msra.mxu0 %v5389
    %5549 = vmatprep.subr.bf16.mxu0 %v5394
    %5550 = vmatpush1.bf16.msra.mxu0 %v5393
    %5551 = vmatprep.subr.bf16.mxu0 %v5398
    %5552 = vmatpush1.bf16.msra.mxu0 %v5397
    %5553 = vmatprep.subr.bf16.mxu0 %v5402
    %5554 = vmatpush1.bf16.msra.mxu0 %v5401
    %5555 = vmatprep.subr.bf16.mxu0 %v5406
    %5556 = vmatpush1.bf16.msra.mxu0 %v5405
    %5557 = vmatprep.subr.bf16.mxu0 %v5484
    %5558 = vmatpush1.bf16.msra.mxu0 %v5481
    %5559 = vmatprep.mubr.bf16.mxu0 %v5472
    %5560 = vmatmul.mubr.bf16.gmra.mrb[0].mxu0 %v4118
    %v5561 = vpop.f32.mrb[0].mxu0
    %v5562 = vadd.f32 0.0, %v5561
    %v5563 = vpop.f32.mrb[0].mxu0
    %v5564 = vadd.f32 0.0, %v5563
    %v5565 = vpop.f32.mrb[0].mxu0
    %v5566 = vpop.f32.mrb[0].mxu0
    %5567 = vdwg.mxu0
    %v5568 = vadd.f32 %v5043, %v5521
    %v5569 = vadd.f32 %v5045, %v5523
    %v5570 = vadd.f32 %v5084, %v5562
    %v5571 = vadd.f32 %v5086, %v5564
    %s5572 = scalar_lea.vmem [#allocation2], 1536
    %v5573 = vld [vmem:[%s5572] sm:$0xff]
    %v5574 = vld [vmem:[%s5572 + $0x8] sm:$0xff]
    %v5575 = vld [vmem:[%s5572 + $0x10] sm:$0xff]
    %v5576 = vld [vmem:[%s5572 + $0x18] sm:$0xff]
    %v5577 = vld [vmem:[%s5572 + $0x20] sm:$0xff]
    %v5578 = vld [vmem:[%s5572 + $0x28] sm:$0xff]
    %v5579 = vld [vmem:[%s5572 + $0x30] sm:$0xff]
    %v5580 = vld [vmem:[%s5572 + $0x38] sm:$0xff]
    %v5581 = vld [vmem:[%s5572 + $0x40] sm:$0xff]
    %v5582 = vld [vmem:[%s5572 + $0x48] sm:$0xff]
    %v5583 = vld [vmem:[%s5572 + $0x50] sm:$0xff]
    %v5584 = vld [vmem:[%s5572 + $0x58] sm:$0xff]
    %v5585 = vld [vmem:[%s5572 + $0x60] sm:$0xff]
    %v5586 = vld [vmem:[%s5572 + $0x68] sm:$0xff]
    %v5587 = vld [vmem:[%s5572 + $0x70] sm:$0xff]
    %v5588 = vld [vmem:[%s5572 + $0x78] sm:$0xff]
    %v5589 = vld [vmem:[%s5572 + $0x80] sm:$0xff]
    %v5590 = vld [vmem:[%s5572 + $0x88] sm:$0xff]
    %v5591 = vld [vmem:[%s5572 + $0x90] sm:$0xff]
    %v5592 = vld [vmem:[%s5572 + $0x98] sm:$0xff]
    %v5593 = vld [vmem:[%s5572 + $0xa0] sm:$0xff]
    %v5594 = vld [vmem:[%s5572 + $0xa8] sm:$0xff]
    %v5595 = vld [vmem:[%s5572 + $0xb0] sm:$0xff]
    %v5596 = vld [vmem:[%s5572 + $0xb8] sm:$0xff]
    %v5597 = vld [vmem:[%s5572 + $0xc0] sm:$0xff]
    %v5598 = vld [vmem:[%s5572 + $0xc8] sm:$0xff]
    %v5599 = vld [vmem:[%s5572 + $0xd0] sm:$0xff]
    %v5600 = vld [vmem:[%s5572 + $0xd8] sm:$0xff]
    %v5601 = vld [vmem:[%s5572 + $0xe0] sm:$0xff]
    %v5602 = vld [vmem:[%s5572 + $0xe8] sm:$0xff]
    %v5603 = vld [vmem:[%s5572 + $0xf0] sm:$0xff]
    %v5604 = vld [vmem:[%s5572 + $0xf8] sm:$0xff]
    %v5605 = vld [vmem:[%s5572 + $0x100] sm:$0xff]
    %v5606 = vld [vmem:[%s5572 + $0x108] sm:$0xff]
    %v5607 = vld [vmem:[%s5572 + $0x110] sm:$0xff]
    %v5608 = vld [vmem:[%s5572 + $0x118] sm:$0xff]
    %v5609 = vld [vmem:[%s5572 + $0x120] sm:$0xff]
    %v5610 = vld [vmem:[%s5572 + $0x128] sm:$0xff]
    %v5611 = vld [vmem:[%s5572 + $0x130] sm:$0xff]
    %v5612 = vld [vmem:[%s5572 + $0x138] sm:$0xff]
    %v5613 = vld [vmem:[%s5572 + $0x140] sm:$0xff]
    %v5614 = vld [vmem:[%s5572 + $0x148] sm:$0xff]
    %v5615 = vld [vmem:[%s5572 + $0x150] sm:$0xff]
    %v5616 = vld [vmem:[%s5572 + $0x158] sm:$0xff]
    %v5617 = vld [vmem:[%s5572 + $0x160] sm:$0xff]
    %v5618 = vld [vmem:[%s5572 + $0x168] sm:$0xff]
    %v5619 = vld [vmem:[%s5572 + $0x170] sm:$0xff]
    %v5620 = vld [vmem:[%s5572 + $0x178] sm:$0xff]
    %v5621 = vld [vmem:[%s5572 + $0x180] sm:$0xff]
    %v5622 = vld [vmem:[%s5572 + $0x188] sm:$0xff]
    %v5623 = vld [vmem:[%s5572 + $0x190] sm:$0xff]
    %v5624 = vld [vmem:[%s5572 + $0x198] sm:$0xff]
    %v5625 = vld [vmem:[%s5572 + $0x1a0] sm:$0xff]
    %v5626 = vld [vmem:[%s5572 + $0x1a8] sm:$0xff]
    %v5627 = vld [vmem:[%s5572 + $0x1b0] sm:$0xff]
    %v5628 = vld [vmem:[%s5572 + $0x1b8] sm:$0xff]
    %v5629 = vld [vmem:[%s5572 + $0x1c0] sm:$0xff]
    %v5630 = vld [vmem:[%s5572 + $0x1c8] sm:$0xff]
    %v5631 = vld [vmem:[%s5572 + $0x1d0] sm:$0xff]
    %v5632 = vld [vmem:[%s5572 + $0x1d8] sm:$0xff]
    %v5633 = vld [vmem:[%s5572 + $0x1e0] sm:$0xff]
    %v5634 = vld [vmem:[%s5572 + $0x1e8] sm:$0xff]
    %v5635 = vld [vmem:[%s5572 + $0x1f0] sm:$0x11]
    %v5636 = vld [vmem:[%s5572 + $0x1f8] sm:$0x11]
    %v5701 = vunpack.c.l.b16 %v5573
    %v5702 = vunpack.c.h.b16 %v5573
    %v5703 = vunpack.c.l.b16 %v5574
    %v5704 = vunpack.c.h.b16 %v5574
    %v5705 = vunpack.c.l.b16 %v5575
    %v5706 = vunpack.c.h.b16 %v5575
    %v5707 = vunpack.c.l.b16 %v5576
    %v5708 = vunpack.c.h.b16 %v5576
    %v5709 = vunpack.c.l.b16 %v5577
    %v5710 = vunpack.c.h.b16 %v5577
    %v5711 = vunpack.c.l.b16 %v5578
    %v5712 = vunpack.c.h.b16 %v5578
    %v5713 = vunpack.c.l.b16 %v5579
    %v5714 = vunpack.c.h.b16 %v5579
    %v5715 = vunpack.c.l.b16 %v5580
    %v5716 = vunpack.c.h.b16 %v5580
    %v5717 = vunpack.c.l.b16 %v5581
    %v5718 = vunpack.c.h.b16 %v5581
    %v5719 = vunpack.c.l.b16 %v5582
    %v5720 = vunpack.c.h.b16 %v5582
    %v5721 = vunpack.c.l.b16 %v5583
    %v5722 = vunpack.c.h.b16 %v5583
    %v5723 = vunpack.c.l.b16 %v5584
    %v5724 = vunpack.c.h.b16 %v5584
    %v5725 = vunpack.c.l.b16 %v5585
    %v5726 = vunpack.c.h.b16 %v5585
    %v5727 = vunpack.c.l.b16 %v5586
    %v5728 = vunpack.c.h.b16 %v5586
    %v5729 = vunpack.c.l.b16 %v5587
    %v5730 = vunpack.c.h.b16 %v5587
    %v5731 = vunpack.c.l.b16 %v5588
    %v5732 = vunpack.c.h.b16 %v5588
    %v5733 = vunpack.c.l.b16 %v5589
    %v5734 = vunpack.c.h.b16 %v5589
    %v5735 = vunpack.c.l.b16 %v5590
    %v5736 = vunpack.c.h.b16 %v5590
    %v5737 = vunpack.c.l.b16 %v5591
    %v5738 = vunpack.c.h.b16 %v5591
    %v5739 = vunpack.c.l.b16 %v5592
    %v5740 = vunpack.c.h.b16 %v5592
    %v5741 = vunpack.c.l.b16 %v5593
    %v5742 = vunpack.c.h.b16 %v5593
    %v5743 = vunpack.c.l.b16 %v5594
    %v5744 = vunpack.c.h.b16 %v5594
    %v5745 = vunpack.c.l.b16 %v5595
    %v5746 = vunpack.c.h.b16 %v5595
    %v5747 = vunpack.c.l.b16 %v5596
    %v5748 = vunpack.c.h.b16 %v5596
    %v5749 = vunpack.c.l.b16 %v5597
    %v5750 = vunpack.c.h.b16 %v5597
    %v5751 = vunpack.c.l.b16 %v5598
    %v5752 = vunpack.c.h.b16 %v5598
    %v5753 = vunpack.c.l.b16 %v5599
    %v5754 = vunpack.c.h.b16 %v5599
    %v5755 = vunpack.c.l.b16 %v5600
    %v5756 = vunpack.c.h.b16 %v5600
    %v5757 = vunpack.c.l.b16 %v5601
    %v5758 = vunpack.c.h.b16 %v5601
    %v5759 = vunpack.c.l.b16 %v5602
    %v5760 = vunpack.c.h.b16 %v5602
    %v5761 = vunpack.c.l.b16 %v5603
    %v5762 = vunpack.c.h.b16 %v5603
    %v5763 = vunpack.c.l.b16 %v5604
    %v5764 = vunpack.c.h.b16 %v5604
    %v5765 = vunpack.c.l.b16 %v5605
    %v5766 = vunpack.c.h.b16 %v5605
    %v5767 = vunpack.c.l.b16 %v5606
    %v5768 = vunpack.c.h.b16 %v5606
    %v5769 = vunpack.c.l.b16 %v5607
    %v5770 = vunpack.c.h.b16 %v5607
    %v5771 = vunpack.c.l.b16 %v5608
    %v5772 = vunpack.c.h.b16 %v5608
    %v5773 = vunpack.c.l.b16 %v5609
    %v5774 = vunpack.c.h.b16 %v5609
    %v5775 = vunpack.c.l.b16 %v5610
    %v5776 = vunpack.c.h.b16 %v5610
    %v5777 = vunpack.c.l.b16 %v5611
    %v5778 = vunpack.c.h.b16 %v5611
    %v5779 = vunpack.c.l.b16 %v5612
    %v5780 = vunpack.c.h.b16 %v5612
    %v5781 = vunpack.c.l.b16 %v5613
    %v5782 = vunpack.c.h.b16 %v5613
    %v5783 = vunpack.c.l.b16 %v5614
    %v5784 = vunpack.c.h.b16 %v5614
    %v5785 = vunpack.c.l.b16 %v5615
    %v5786 = vunpack.c.h.b16 %v5615
    %v5787 = vunpack.c.l.b16 %v5616
    %v5788 = vunpack.c.h.b16 %v5616
    %v5789 = vunpack.c.l.b16 %v5617
    %v5790 = vunpack.c.h.b16 %v5617
    %v5791 = vunpack.c.l.b16 %v5618
    %v5792 = vunpack.c.h.b16 %v5618
    %v5793 = vunpack.c.l.b16 %v5619
    %v5794 = vunpack.c.h.b16 %v5619
    %v5795 = vunpack.c.l.b16 %v5620
    %v5796 = vunpack.c.h.b16 %v5620
    %v5797 = vunpack.c.l.b16 %v5621
    %v5798 = vunpack.c.h.b16 %v5621
    %v5799 = vunpack.c.l.b16 %v5622
    %v5800 = vunpack.c.h.b16 %v5622
    %v5801 = vunpack.c.l.b16 %v5623
    %v5802 = vunpack.c.h.b16 %v5623
    %v5803 = vunpack.c.l.b16 %v5624
    %v5804 = vunpack.c.h.b16 %v5624
    %v5805 = vunpack.c.l.b16 %v5625
    %v5806 = vunpack.c.h.b16 %v5625
    %v5807 = vunpack.c.l.b16 %v5626
    %v5808 = vunpack.c.h.b16 %v5626
    %v5809 = vunpack.c.l.b16 %v5627
    %v5810 = vunpack.c.h.b16 %v5627
    %v5811 = vunpack.c.l.b16 %v5628
    %v5812 = vunpack.c.h.b16 %v5628
    %v5813 = vunpack.c.l.b16 %v5629
    %v5814 = vunpack.c.h.b16 %v5629
    %v5815 = vunpack.c.l.b16 %v5630
    %v5816 = vunpack.c.h.b16 %v5630
    %v5817 = vunpack.c.l.b16 %v5631
    %v5818 = vunpack.c.h.b16 %v5631
    %v5819 = vunpack.c.l.b16 %v5632
    %v5820 = vunpack.c.h.b16 %v5632
    %v5821 = vunpack.c.l.b16 %v5633
    %v5822 = vunpack.c.h.b16 %v5633
    %v5823 = vunpack.c.l.b16 %v5634
    %v5824 = vunpack.c.h.b16 %v5634
    %v5825 = vunpack.c.l.b16 %v5635
    %v5826 = vunpack.c.h.b16 %v5635
    %v5827 = vunpack.c.l.b16 %v5636
    %v5828 = vunpack.c.h.b16 %v5636
    %v5829 = vpack.c.b16 %v5705, %v5701
    %v5830 = vpack.c.b16 %v5706, %v5702
    %v5831 = vpack.c.b16 %v5707, %v5703
    %v5832 = vpack.c.b16 %v5708, %v5704
    %v5833 = vpack.c.b16 %v5713, %v5709
    %v5834 = vpack.c.b16 %v5714, %v5710
    %v5835 = vpack.c.b16 %v5715, %v5711
    %v5836 = vpack.c.b16 %v5716, %v5712
    %v5837 = vpack.c.b16 %v5721, %v5717
    %v5838 = vpack.c.b16 %v5722, %v5718
    %v5839 = vpack.c.b16 %v5723, %v5719
    %v5840 = vpack.c.b16 %v5724, %v5720
    %v5841 = vpack.c.b16 %v5729, %v5725
    %v5842 = vpack.c.b16 %v5730, %v5726
    %v5843 = vpack.c.b16 %v5731, %v5727
    %v5844 = vpack.c.b16 %v5732, %v5728
    %v5845 = vpack.c.b16 %v5737, %v5733
    %v5846 = vpack.c.b16 %v5738, %v5734
    %v5847 = vpack.c.b16 %v5739, %v5735
    %v5848 = vpack.c.b16 %v5740, %v5736
    %v5849 = vpack.c.b16 %v5745, %v5741
    %v5850 = vpack.c.b16 %v5746, %v5742
    %v5851 = vpack.c.b16 %v5747, %v5743
    %v5852 = vpack.c.b16 %v5748, %v5744
    %v5853 = vpack.c.b16 %v5753, %v5749
    %v5854 = vpack.c.b16 %v5754, %v5750
    %v5855 = vpack.c.b16 %v5755, %v5751
    %v5856 = vpack.c.b16 %v5756, %v5752
    %v5857 = vpack.c.b16 %v5761, %v5757
    %v5858 = vpack.c.b16 %v5762, %v5758
    %v5859 = vpack.c.b16 %v5763, %v5759
    %v5860 = vpack.c.b16 %v5764, %v5760
    %v5861 = vpack.c.b16 %v5769, %v5765
    %v5862 = vpack.c.b16 %v5770, %v5766
    %v5863 = vpack.c.b16 %v5771, %v5767
    %v5864 = vpack.c.b16 %v5772, %v5768
    %v5865 = vpack.c.b16 %v5777, %v5773
    %v5866 = vpack.c.b16 %v5778, %v5774
    %v5867 = vpack.c.b16 %v5779, %v5775
    %v5868 = vpack.c.b16 %v5780, %v5776
    %v5869 = vpack.c.b16 %v5785, %v5781
    %v5870 = vpack.c.b16 %v5786, %v5782
    %v5871 = vpack.c.b16 %v5787, %v5783
    %v5872 = vpack.c.b16 %v5788, %v5784
    %v5873 = vpack.c.b16 %v5793, %v5789
    %v5874 = vpack.c.b16 %v5794, %v5790
    %v5875 = vpack.c.b16 %v5795, %v5791
    %v5876 = vpack.c.b16 %v5796, %v5792
    %v5877 = vpack.c.b16 %v5801, %v5797
    %v5878 = vpack.c.b16 %v5802, %v5798
    %v5879 = vpack.c.b16 %v5803, %v5799
    %v5880 = vpack.c.b16 %v5804, %v5800
    %v5881 = vpack.c.b16 %v5809, %v5805
    %v5882 = vpack.c.b16 %v5810, %v5806
    %v5883 = vpack.c.b16 %v5811, %v5807
    %v5884 = vpack.c.b16 %v5812, %v5808
    %v5885 = vpack.c.b16 %v5817, %v5813
    %v5886 = vpack.c.b16 %v5818, %v5814
    %v5887 = vpack.c.b16 %v5819, %v5815
    %v5888 = vpack.c.b16 %v5820, %v5816
    %v5889 = vpack.c.b16 %v5825, %v5821
    %v5890 = vpack.c.b16 %v5826, %v5822
    %v5891 = vpack.c.b16 %v5827, %v5823
    %v5892 = vpack.c.b16 %v5828, %v5824
    %v5954 = vsel %vm4578, %v4127, 0
    %v5957 = vsel %vm4582, %v5889, 0
    %v5960 = vsel %vm4582, %v5890, 0
    %v5963 = vsel %vm4582, %v5891, 0
    %v5966 = vsel %vm4582, %v5892, 0
    %5968 = vmatprep.subr.bf16.mxu0 %v5830
    %5969 = vmatpush1.bf16.msra.mxu0 %v5829
    %5970 = vmatprep.subr.bf16.mxu0 %v5834
    %5971 = vmatpush1.bf16.msra.mxu0 %v5833
    %5972 = vmatprep.subr.bf16.mxu0 %v5838
    %5973 = vmatpush1.bf16.msra.mxu0 %v5837
    %5974 = vmatprep.subr.bf16.mxu0 %v5842
    %5975 = vmatpush1.bf16.msra.mxu0 %v5841
    %5976 = vmatprep.subr.bf16.mxu0 %v5846
    %5977 = vmatpush1.bf16.msra.mxu0 %v5845
    %5978 = vmatprep.subr.bf16.mxu0 %v5850
    %5979 = vmatpush1.bf16.msra.mxu0 %v5849
    %5980 = vmatprep.subr.bf16.mxu0 %v5854
    %5981 = vmatpush1.bf16.msra.mxu0 %v5853
    %5982 = vmatprep.subr.bf16.mxu0 %v5858
    %5983 = vmatpush1.bf16.msra.mxu0 %v5857
    %5984 = vmatprep.subr.bf16.mxu0 %v5862
    %5985 = vmatpush1.bf16.msra.mxu0 %v5861
    %5986 = vmatprep.subr.bf16.mxu0 %v5866
    %5987 = vmatpush1.bf16.msra.mxu0 %v5865
    %5988 = vmatprep.subr.bf16.mxu0 %v5870
    %5989 = vmatpush1.bf16.msra.mxu0 %v5869
    %5990 = vmatprep.subr.bf16.mxu0 %v5874
    %5991 = vmatpush1.bf16.msra.mxu0 %v5873
    %5992 = vmatprep.subr.bf16.mxu0 %v5878
    %5993 = vmatpush1.bf16.msra.mxu0 %v5877
    %5994 = vmatprep.subr.bf16.mxu0 %v5882
    %5995 = vmatpush1.bf16.msra.mxu0 %v5881
    %5996 = vmatprep.subr.bf16.mxu0 %v5886
    %5997 = vmatpush1.bf16.msra.mxu0 %v5885
    %5998 = vmatprep.subr.bf16.mxu0 %v5960
    %5999 = vmatpush1.bf16.msra.mxu0 %v5957
    %6000 = vmatprep.mubr.bf16.mxu0 %v5954
    %6001 = vmatmul.mubr.bf16.gmra.mrb[0].mxu0 %v4126
    %v6002 = vpop.f32.mrb[0].mxu0
    %v6003 = vadd.f32 0.0, %v6002
    %v6004 = vpop.f32.mrb[0].mxu0
    %v6005 = vadd.f32 0.0, %v6004
    %v6006 = vpop.f32.mrb[0].mxu0
    %v6007 = vpop.f32.mrb[0].mxu0
    %6008 = vdwg.mxu0
    %6009 = vmatprep.subr.bf16.mxu0 %v5832
    %6010 = vmatpush1.bf16.msra.mxu0 %v5831
    %6011 = vmatprep.subr.bf16.mxu0 %v5836
    %6012 = vmatpush1.bf16.msra.mxu0 %v5835
    %6013 = vmatprep.subr.bf16.mxu0 %v5840
    %6014 = vmatpush1.bf16.msra.mxu0 %v5839
    %6015 = vmatprep.subr.bf16.mxu0 %v5844
    %6016 = vmatpush1.bf16.msra.mxu0 %v5843
    %6017 = vmatprep.subr.bf16.mxu0 %v5848
    %6018 = vmatpush1.bf16.msra.mxu0 %v5847
    %6019 = vmatprep.subr.bf16.mxu0 %v5852
    %6020 = vmatpush1.bf16.msra.mxu0 %v5851
    %6021 = vmatprep.subr.bf16.mxu0 %v5856
    %6022 = vmatpush1.bf16.msra.mxu0 %v5855
    %6023 = vmatprep.subr.bf16.mxu0 %v5860
    %6024 = vmatpush1.bf16.msra.mxu0 %v5859
    %6025 = vmatprep.subr.bf16.mxu0 %v5864
    %6026 = vmatpush1.bf16.msra.mxu0 %v5863
    %6027 = vmatprep.subr.bf16.mxu0 %v5868
    %6028 = vmatpush1.bf16.msra.mxu0 %v5867
    %6029 = vmatprep.subr.bf16.mxu0 %v5872
    %6030 = vmatpush1.bf16.msra.mxu0 %v5871
    %6031 = vmatprep.subr.bf16.mxu0 %v5876
    %6032 = vmatpush1.bf16.msra.mxu0 %v5875
    %6033 = vmatprep.subr.bf16.mxu0 %v5880
    %6034 = vmatpush1.bf16.msra.mxu0 %v5879
    %6035 = vmatprep.subr.bf16.mxu0 %v5884
    %6036 = vmatpush1.bf16.msra.mxu0 %v5883
    %6037 = vmatprep.subr.bf16.mxu0 %v5888
    %6038 = vmatpush1.bf16.msra.mxu0 %v5887
    %6039 = vmatprep.subr.bf16.mxu0 %v5966
    %6040 = vmatpush1.bf16.msra.mxu0 %v5963
    %6041 = vmatprep.mubr.bf16.mxu0 %v5954
    %6042 = vmatmul.mubr.bf16.gmra.mrb[0].mxu0 %v4126
    %v6043 = vpop.f32.mrb[0].mxu0
    %v6044 = vadd.f32 0.0, %v6043
    %v6045 = vpop.f32.mrb[0].mxu0
    %v6046 = vadd.f32 0.0, %v6045
    %v6047 = vpop.f32.mrb[0].mxu0
    %v6048 = vpop.f32.mrb[0].mxu0
    %6049 = vdwg.mxu0
    %v6050 = vadd.f32 %v5568, %v6003
    %v6051 = vadd.f32 %v5569, %v6005
    %v6052 = vadd.f32 %v5570, %v6044
    %v6053 = vadd.f32 %v5571, %v6046
    %v6054 = vld [vmem:[%s2] ss:$8 sm:$0xf]
    %v6056 = vlaneseq
    %v6057 = vshrl.u32 %v6056, 7
    %v6058 = vsub.s32 0, %v6057
    %v6059 = vrot.slane %v6054, %v6058
    %v6060 = vlaneseq
    %v6061 = vshrl.u32 %v6060, 7
    %v6062 = vsub.s32 1, %v6061
    %v6063 = vrot.slane %v6054, %v6062
    %v6064 = vlaneseq
    %v6065 = vshrl.u32 %v6064, 7
    %v6066 = vsub.s32 2, %v6065
    %v6067 = vrot.slane %v6054, %v6066
    %v6068 = vlaneseq
    %v6069 = vshrl.u32 %v6068, 7
    %v6070 = vsub.s32 3, %v6069
    %v6071 = vrot.slane %v6054, %v6070
    %v6076 = vadd.f32 %v6050, %v6059
    %v6077 = vadd.f32 %v6051, %v6063
    %v6078 = vadd.f32 %v6052, %v6067
    %v6079 = vadd.f32 %v6053, %v6071
    %v6080 = vmax.f32 %v6076, 0.0
    %v6081 = vmax.f32 %v6077, 0.0
    %v6082 = vmax.f32 %v6078, 0.0
    %v6083 = vmax.f32 %v6079, 0.0
    %s6084 = smul.u32 4, 64
    %s6085 = smul.u32 %s6084, 4
    %s6086 = sshll.u32 %s6085, 4
    %6087 = dma.done %s585, %s6086
    %v6088 = vpack.c.bf16 %v6080, %v6080
    %v6089 = vpack.c.bf16 %v6081, %v6081
    %v6090 = vpack.c.bf16 %v6082, %v6082
    %v6091 = vpack.c.bf16 %v6083, %v6083
    %v6092 = vld [vmem:[#allocation3] sm:$0xff]
    %v6093 = vld [vmem:[#allocation3 + $0x8] sm:$0xff]
    %v6094 = vld [vmem:[#allocation3 + $0x10] sm:$0xff]
    %v6095 = vld [vmem:[#allocation3 + $0x18] sm:$0xff]
    %v6096 = vld [vmem:[#allocation3 + $0x20] sm:$0xff]
    %v6097 = vld [vmem:[#allocation3 + $0x28] sm:$0xff]
    %v6098 = vld [vmem:[#allocation3 + $0x30] sm:$0xff]
    %v6099 = vld [vmem:[#allocation3 + $0x38] sm:$0xff]
    %v6100 = vld [vmem:[#allocation3 + $0x40] sm:$0xff]
    %v6101 = vld [vmem:[#allocation3 + $0x48] sm:$0xff]
    %v6102 = vld [vmem:[#allocation3 + $0x50] sm:$0xff]
    %v6103 = vld [vmem:[#allocation3 + $0x58] sm:$0xff]
    %v6104 = vld [vmem:[#allocation3 + $0x60] sm:$0xff]
    %v6105 = vld [vmem:[#allocation3 + $0x68] sm:$0xff]
    %v6106 = vld [vmem:[#allocation3 + $0x70] sm:$0xff]
    %v6107 = vld [vmem:[#allocation3 + $0x78] sm:$0xff]
    %v6108 = vld [vmem:[#allocation3 + $0x80] sm:$0xff]
    %v6109 = vld [vmem:[#allocation3 + $0x88] sm:$0xff]
    %v6110 = vld [vmem:[#allocation3 + $0x90] sm:$0xff]
    %v6111 = vld [vmem:[#allocation3 + $0x98] sm:$0xff]
    %v6112 = vld [vmem:[#allocation3 + $0xa0] sm:$0xff]
    %v6113 = vld [vmem:[#allocation3 + $0xa8] sm:$0xff]
    %v6114 = vld [vmem:[#allocation3 + $0xb0] sm:$0xff]
    %v6115 = vld [vmem:[#allocation3 + $0xb8] sm:$0xff]
    %v6116 = vld [vmem:[#allocation3 + $0xc0] sm:$0xff]
    %v6117 = vld [vmem:[#allocation3 + $0xc8] sm:$0xff]
    %v6118 = vld [vmem:[#allocation3 + $0xd0] sm:$0xff]
    %v6119 = vld [vmem:[#allocation3 + $0xd8] sm:$0xff]
    %v6120 = vld [vmem:[#allocation3 + $0xe0] sm:$0xff]
    %v6121 = vld [vmem:[#allocation3 + $0xe8] sm:$0xff]
    %v6122 = vld [vmem:[#allocation3 + $0xf0] sm:$0xff]
    %v6123 = vld [vmem:[#allocation3 + $0xf8] sm:$0xff]
    %v6124 = vld [vmem:[#allocation3 + $0x100] sm:$0xff]
    %v6125 = vld [vmem:[#allocation3 + $0x108] sm:$0xff]
    %v6126 = vld [vmem:[#allocation3 + $0x110] sm:$0xff]
    %v6127 = vld [vmem:[#allocation3 + $0x118] sm:$0xff]
    %v6128 = vld [vmem:[#allocation3 + $0x120] sm:$0xff]
    %v6129 = vld [vmem:[#allocation3 + $0x128] sm:$0xff]
    %v6130 = vld [vmem:[#allocation3 + $0x130] sm:$0xff]
    %v6131 = vld [vmem:[#allocation3 + $0x138] sm:$0xff]
    %v6132 = vld [vmem:[#allocation3 + $0x140] sm:$0xff]
    %v6133 = vld [vmem:[#allocation3 + $0x148] sm:$0xff]
    %v6134 = vld [vmem:[#allocation3 + $0x150] sm:$0xff]
    %v6135 = vld [vmem:[#allocation3 + $0x158] sm:$0xff]
    %v6136 = vld [vmem:[#allocation3 + $0x160] sm:$0xff]
    %v6137 = vld [vmem:[#allocation3 + $0x168] sm:$0xff]
    %v6138 = vld [vmem:[#allocation3 + $0x170] sm:$0xff]
    %v6139 = vld [vmem:[#allocation3 + $0x178] sm:$0xff]
    %v6140 = vld [vmem:[#allocation3 + $0x180] sm:$0xff]
    %v6141 = vld [vmem:[#allocation3 + $0x188] sm:$0xff]
    %v6142 = vld [vmem:[#allocation3 + $0x190] sm:$0xff]
    %v6143 = vld [vmem:[#allocation3 + $0x198] sm:$0xff]
    %v6144 = vld [vmem:[#allocation3 + $0x1a0] sm:$0xff]
    %v6145 = vld [vmem:[#allocation3 + $0x1a8] sm:$0xff]
    %v6146 = vld [vmem:[#allocation3 + $0x1b0] sm:$0xff]
    %v6147 = vld [vmem:[#allocation3 + $0x1b8] sm:$0xff]
    %v6148 = vld [vmem:[#allocation3 + $0x1c0] sm:$0xff]
    %v6149 = vld [vmem:[#allocation3 + $0x1c8] sm:$0xff]
    %v6150 = vld [vmem:[#allocation3 + $0x1d0] sm:$0xff]
    %v6151 = vld [vmem:[#allocation3 + $0x1d8] sm:$0xff]
    %v6152 = vld [vmem:[#allocation3 + $0x1e0] sm:$0xff]
    %v6153 = vld [vmem:[#allocation3 + $0x1e8] sm:$0xff]
    %v6154 = vld [vmem:[#allocation3 + $0x1f0] sm:$0xff]
    %v6155 = vld [vmem:[#allocation3 + $0x1f8] sm:$0xff]
    %v6156 = vld [vmem:[#allocation3 + $0x200] sm:$0xff]
    %v6157 = vld [vmem:[#allocation3 + $0x208] sm:$0xff]
    %v6158 = vld [vmem:[#allocation3 + $0x210] sm:$0xff]
    %v6159 = vld [vmem:[#allocation3 + $0x218] sm:$0xff]
    %v6160 = vld [vmem:[#allocation3 + $0x220] sm:$0xff]
    %v6161 = vld [vmem:[#allocation3 + $0x228] sm:$0xff]
    %v6162 = vld [vmem:[#allocation3 + $0x230] sm:$0xff]
    %v6163 = vld [vmem:[#allocation3 + $0x238] sm:$0xff]
    %v6164 = vld [vmem:[#allocation3 + $0x240] sm:$0xff]
    %v6165 = vld [vmem:[#allocation3 + $0x248] sm:$0xff]
    %v6166 = vld [vmem:[#allocation3 + $0x250] sm:$0xff]
    %v6167 = vld [vmem:[#allocation3 + $0x258] sm:$0xff]
    %v6168 = vld [vmem:[#allocation3 + $0x260] sm:$0xff]
    %v6169 = vld [vmem:[#allocation3 + $0x268] sm:$0xff]
    %v6170 = vld [vmem:[#allocation3 + $0x270] sm:$0xff]
    %v6171 = vld [vmem:[#allocation3 + $0x278] sm:$0xff]
    %v6172 = vld [vmem:[#allocation3 + $0x280] sm:$0xff]
    %v6173 = vld [vmem:[#allocation3 + $0x288] sm:$0xff]
    %v6174 = vld [vmem:[#allocation3 + $0x290] sm:$0xff]
    %v6175 = vld [vmem:[#allocation3 + $0x298] sm:$0xff]
    %v6176 = vld [vmem:[#allocation3 + $0x2a0] sm:$0xff]
    %v6177 = vld [vmem:[#allocation3 + $0x2a8] sm:$0xff]
    %v6178 = vld [vmem:[#allocation3 + $0x2b0] sm:$0xff]
    %v6179 = vld [vmem:[#allocation3 + $0x2b8] sm:$0xff]
    %v6180 = vld [vmem:[#allocation3 + $0x2c0] sm:$0xff]
    %v6181 = vld [vmem:[#allocation3 + $0x2c8] sm:$0xff]
    %v6182 = vld [vmem:[#allocation3 + $0x2d0] sm:$0xff]
    %v6183 = vld [vmem:[#allocation3 + $0x2d8] sm:$0xff]
    %v6184 = vld [vmem:[#allocation3 + $0x2e0] sm:$0xff]
    %v6185 = vld [vmem:[#allocation3 + $0x2e8] sm:$0xff]
    %v6186 = vld [vmem:[#allocation3 + $0x2f0] sm:$0xff]
    %v6187 = vld [vmem:[#allocation3 + $0x2f8] sm:$0xff]
    %v6188 = vld [vmem:[#allocation3 + $0x300] sm:$0xff]
    %v6189 = vld [vmem:[#allocation3 + $0x308] sm:$0xff]
    %v6190 = vld [vmem:[#allocation3 + $0x310] sm:$0xff]
    %v6191 = vld [vmem:[#allocation3 + $0x318] sm:$0xff]
    %v6192 = vld [vmem:[#allocation3 + $0x320] sm:$0xff]
    %v6193 = vld [vmem:[#allocation3 + $0x328] sm:$0xff]
    %v6194 = vld [vmem:[#allocation3 + $0x330] sm:$0xff]
    %v6195 = vld [vmem:[#allocation3 + $0x338] sm:$0xff]
    %v6196 = vld [vmem:[#allocation3 + $0x340] sm:$0xff]
    %v6197 = vld [vmem:[#allocation3 + $0x348] sm:$0xff]
    %v6198 = vld [vmem:[#allocation3 + $0x350] sm:$0xff]
    %v6199 = vld [vmem:[#allocation3 + $0x358] sm:$0xff]
    %v6200 = vld [vmem:[#allocation3 + $0x360] sm:$0xff]
    %v6201 = vld [vmem:[#allocation3 + $0x368] sm:$0xff]
    %v6202 = vld [vmem:[#allocation3 + $0x370] sm:$0xff]
    %v6203 = vld [vmem:[#allocation3 + $0x378] sm:$0xff]
    %v6204 = vld [vmem:[#allocation3 + $0x380] sm:$0xff]
    %v6205 = vld [vmem:[#allocation3 + $0x388] sm:$0xff]
    %v6206 = vld [vmem:[#allocation3 + $0x390] sm:$0xff]
    %v6207 = vld [vmem:[#allocation3 + $0x398] sm:$0xff]
    %v6208 = vld [vmem:[#allocation3 + $0x3a0] sm:$0xff]
    %v6209 = vld [vmem:[#allocation3 + $0x3a8] sm:$0xff]
    %v6210 = vld [vmem:[#allocation3 + $0x3b0] sm:$0xff]
    %v6211 = vld [vmem:[#allocation3 + $0x3b8] sm:$0xff]
    %v6212 = vld [vmem:[#allocation3 + $0x3c0] sm:$0xff]
    %v6213 = vld [vmem:[#allocation3 + $0x3c8] sm:$0xff]
    %v6214 = vld [vmem:[#allocation3 + $0x3d0] sm:$0xff]
    %v6215 = vld [vmem:[#allocation3 + $0x3d8] sm:$0xff]
    %v6216 = vld [vmem:[#allocation3 + $0x3e0] sm:$0xff]
    %v6217 = vld [vmem:[#allocation3 + $0x3e8] sm:$0xff]
    %v6218 = vld [vmem:[#allocation3 + $0x3f0] sm:$0xff]
    %v6219 = vld [vmem:[#allocation3 + $0x3f8] sm:$0xff]
    %s6220 = scalar_lea.vmem %s2, 1
    %v6221 = vld [vmem:[%s6220] ss:$8 sm:$0xf]
    %v6223 = vlaneseq
    %v6224 = vshrl.u32 %v6223, 7
    %v6225 = vsub.s32 0, %v6224
    %v6226 = vrot.slane %v6221, %v6225
    %v6227 = vlaneseq
    %v6228 = vshrl.u32 %v6227, 7
    %v6229 = vsub.s32 1, %v6228
    %v6230 = vrot.slane %v6221, %v6229
    %v6231 = vlaneseq
    %v6232 = vshrl.u32 %v6231, 7
    %v6233 = vsub.s32 2, %v6232
    %v6234 = vrot.slane %v6221, %v6233
    %v6235 = vlaneseq
    %v6236 = vshrl.u32 %v6235, 7
    %v6237 = vsub.s32 3, %v6236
    %v6238 = vrot.slane %v6221, %v6237
    %6243 = vmatprep.subr.bf16.mxu0 %v6093
    %6244 = vmatpush1.bf16.msra.mxu0 %v6092
    %6245 = vmatprep.subr.bf16.mxu0 %v6097
    %6246 = vmatpush1.bf16.msra.mxu0 %v6096
    %6247 = vmatprep.subr.bf16.mxu0 %v6101
    %6248 = vmatpush1.bf16.msra.mxu0 %v6100
    %6249 = vmatprep.subr.bf16.mxu0 %v6105
    %6250 = vmatpush1.bf16.msra.mxu0 %v6104
    %6251 = vmatprep.subr.bf16.mxu0 %v6109
    %6252 = vmatpush1.bf16.msra.mxu0 %v6108
    %6253 = vmatprep.subr.bf16.mxu0 %v6113
    %6254 = vmatpush1.bf16.msra.mxu0 %v6112
    %6255 = vmatprep.subr.bf16.mxu0 %v6117
    %6256 = vmatpush1.bf16.msra.mxu0 %v6116
    %6257 = vmatprep.subr.bf16.mxu0 %v6121
    %6258 = vmatpush1.bf16.msra.mxu0 %v6120
    %6259 = vmatprep.subr.bf16.mxu0 %v6125
    %6260 = vmatpush1.bf16.msra.mxu0 %v6124
    %6261 = vmatprep.subr.bf16.mxu0 %v6129
    %6262 = vmatpush1.bf16.msra.mxu0 %v6128
    %6263 = vmatprep.subr.bf16.mxu0 %v6133
    %6264 = vmatpush1.bf16.msra.mxu0 %v6132
    %6265 = vmatprep.subr.bf16.mxu0 %v6137
    %6266 = vmatpush1.bf16.msra.mxu0 %v6136
    %6267 = vmatprep.subr.bf16.mxu0 %v6141
    %6268 = vmatpush1.bf16.msra.mxu0 %v6140
    %6269 = vmatprep.subr.bf16.mxu0 %v6145
    %6270 = vmatpush1.bf16.msra.mxu0 %v6144
    %6271 = vmatprep.subr.bf16.mxu0 %v6149
    %6272 = vmatpush1.bf16.msra.mxu0 %v6148
    %6273 = vmatprep.subr.bf16.mxu0 %v6153
    %6274 = vmatpush1.bf16.msra.mxu0 %v6152
    %6275 = vmatprep.mubr.bf16.mxu0 %v6089
    %6276 = vmatmul.mubr.bf16.gmra.mrb[0].mxu0 %v6088
    %v6277 = vpop.f32.mrb[0].mxu0
    %v6278 = vadd.f32 %v6226, %v6277
    %v6279 = vpop.f32.mrb[0].mxu0
    %v6280 = vadd.f32 %v6230, %v6279
    %v6281 = vpop.f32.mrb[0].mxu0
    %v6282 = vpop.f32.mrb[0].mxu0
    %6283 = vdwg.mxu0
    %6284 = vmatprep.subr.bf16.mxu0 %v6157
    %6285 = vmatpush1.bf16.msra.mxu0 %v6156
    %6286 = vmatprep.subr.bf16.mxu0 %v6161
    %6287 = vmatpush1.bf16.msra.mxu0 %v6160
    %6288 = vmatprep.subr.bf16.mxu0 %v6165
    %6289 = vmatpush1.bf16.msra.mxu0 %v6164
    %6290 = vmatprep.subr.bf16.mxu0 %v6169
    %6291 = vmatpush1.bf16.msra.mxu0 %v6168
    %6292 = vmatprep.subr.bf16.mxu0 %v6173
    %6293 = vmatpush1.bf16.msra.mxu0 %v6172
    %6294 = vmatprep.subr.bf16.mxu0 %v6177
    %6295 = vmatpush1.bf16.msra.mxu0 %v6176
    %6296 = vmatprep.subr.bf16.mxu0 %v6181
    %6297 = vmatpush1.bf16.msra.mxu0 %v6180
    %6298 = vmatprep.subr.bf16.mxu0 %v6185
    %6299 = vmatpush1.bf16.msra.mxu0 %v6184
    %6300 = vmatprep.subr.bf16.mxu0 %v6189
    %6301 = vmatpush1.bf16.msra.mxu0 %v6188
    %6302 = vmatprep.subr.bf16.mxu0 %v6193
    %6303 = vmatpush1.bf16.msra.mxu0 %v6192
    %6304 = vmatprep.subr.bf16.mxu0 %v6197
    %6305 = vmatpush1.bf16.msra.mxu0 %v6196
    %6306 = vmatprep.subr.bf16.mxu0 %v6201
    %6307 = vmatpush1.bf16.msra.mxu0 %v6200
    %6308 = vmatprep.subr.bf16.mxu0 %v6205
    %6309 = vmatpush1.bf16.msra.mxu0 %v6204
    %6310 = vmatprep.subr.bf16.mxu0 %v6209
    %6311 = vmatpush1.bf16.msra.mxu0 %v6208
    %6312 = vmatprep.subr.bf16.mxu0 %v6213
    %6313 = vmatpush1.bf16.msra.mxu0 %v6212
    %6314 = vmatprep.subr.bf16.mxu0 %v6217
    %6315 = vmatpush1.bf16.msra.mxu0 %v6216
    %6316 = vmatprep.mubr.bf16.mxu0 %v6091
    %6317 = vmatmul.mubr.bf16.gmra.mrb[0].mxu0 %v6090
    %v6318 = vpop.f32.mrb[0].mxu0
    %v6319 = vadd.f32 %v6278, %v6318
    %v6320 = vpop.f32.mrb[0].mxu0
    %v6321 = vadd.f32 %v6280, %v6320
    %v6322 = vpop.f32.mrb[0].mxu0
    %v6323 = vpop.f32.mrb[0].mxu0
    %6324 = vdwg.mxu0
    %6325 = vmatprep.subr.bf16.mxu0 %v6095
    %6326 = vmatpush1.bf16.msra.mxu0 %v6094
    %6327 = vmatprep.subr.bf16.mxu0 %v6099
    %6328 = vmatpush1.bf16.msra.mxu0 %v6098
    %6329 = vmatprep.subr.bf16.mxu0 %v6103
    %6330 = vmatpush1.bf16.msra.mxu0 %v6102
    %6331 = vmatprep.subr.bf16.mxu0 %v6107
    %6332 = vmatpush1.bf16.msra.mxu0 %v6106
    %6333 = vmatprep.subr.bf16.mxu0 %v6111
    %6334 = vmatpush1.bf16.msra.mxu0 %v6110
    %6335 = vmatprep.subr.bf16.mxu0 %v6115
    %6336 = vmatpush1.bf16.msra.mxu0 %v6114
    %6337 = vmatprep.subr.bf16.mxu0 %v6119
    %6338 = vmatpush1.bf16.msra.mxu0 %v6118
    %6339 = vmatprep.subr.bf16.mxu0 %v6123
    %6340 = vmatpush1.bf16.msra.mxu0 %v6122
    %6341 = vmatprep.subr.bf16.mxu0 %v6127
    %6342 = vmatpush1.bf16.msra.mxu0 %v6126
    %6343 = vmatprep.subr.bf16.mxu0 %v6131
    %6344 = vmatpush1.bf16.msra.mxu0 %v6130
    %6345 = vmatprep.subr.bf16.mxu0 %v6135
    %6346 = vmatpush1.bf16.msra.mxu0 %v6134
    %6347 = vmatprep.subr.bf16.mxu0 %v6139
    %6348 = vmatpush1.bf16.msra.mxu0 %v6138
    %6349 = vmatprep.subr.bf16.mxu0 %v6143
    %6350 = vmatpush1.bf16.msra.mxu0 %v6142
    %6351 = vmatprep.subr.bf16.mxu0 %v6147
    %6352 = vmatpush1.bf16.msra.mxu0 %v6146
    %6353 = vmatprep.subr.bf16.mxu0 %v6151
    %6354 = vmatpush1.bf16.msra.mxu0 %v6150
    %6355 = vmatprep.subr.bf16.mxu0 %v6155
    %6356 = vmatpush1.bf16.msra.mxu0 %v6154
    %6357 = vmatprep.mubr.bf16.mxu0 %v6089
    %6358 = vmatmul.mubr.bf16.gmra.mrb[0].mxu0 %v6088
    %v6359 = vpop.f32.mrb[0].mxu0
    %v6360 = vadd.f32 %v6234, %v6359
    %v6361 = vpop.f32.mrb[0].mxu0
    %v6362 = vadd.f32 %v6238, %v6361
    %v6363 = vpop.f32.mrb[0].mxu0
    %v6364 = vpop.f32.mrb[0].mxu0
    %6365 = vdwg.mxu0
    %6366 = vmatprep.subr.bf16.mxu0 %v6159
    %6367 = vmatpush1.bf16.msra.mxu0 %v6158
    %6368 = vmatprep.subr.bf16.mxu0 %v6163
    %6369 = vmatpush1.bf16.msra.mxu0 %v6162
    %6370 = vmatprep.subr.bf16.mxu0 %v6167
    %6371 = vmatpush1.bf16.msra.mxu0 %v6166
    %6372 = vmatprep.subr.bf16.mxu0 %v6171
    %6373 = vmatpush1.bf16.msra.mxu0 %v6170
    %6374 = vmatprep.subr.bf16.mxu0 %v6175
    %6375 = vmatpush1.bf16.msra.mxu0 %v6174
    %6376 = vmatprep.subr.bf16.mxu0 %v6179
    %6377 = vmatpush1.bf16.msra.mxu0 %v6178
    %6378 = vmatprep.subr.bf16.mxu0 %v6183
    %6379 = vmatpush1.bf16.msra.mxu0 %v6182
    %6380 = vmatprep.subr.bf16.mxu0 %v6187
    %6381 = vmatpush1.bf16.msra.mxu0 %v6186
    %6382 = vmatprep.subr.bf16.mxu0 %v6191
    %6383 = vmatpush1.bf16.msra.mxu0 %v6190
    %6384 = vmatprep.subr.bf16.mxu0 %v6195
    %6385 = vmatpush1.bf16.msra.mxu0 %v6194
    %6386 = vmatprep.subr.bf16.mxu0 %v6199
    %6387 = vmatpush1.bf16.msra.mxu0 %v6198
    %6388 = vmatprep.subr.bf16.mxu0 %v6203
    %6389 = vmatpush1.bf16.msra.mxu0 %v6202
    %6390 = vmatprep.subr.bf16.mxu0 %v6207
    %6391 = vmatpush1.bf16.msra.mxu0 %v6206
    %6392 = vmatprep.subr.bf16.mxu0 %v6211
    %6393 = vmatpush1.bf16.msra.mxu0 %v6210
    %6394 = vmatprep.subr.bf16.mxu0 %v6215
    %6395 = vmatpush1.bf16.msra.mxu0 %v6214
    %6396 = vmatprep.subr.bf16.mxu0 %v6219
    %6397 = vmatpush1.bf16.msra.mxu0 %v6218
    %6398 = vmatprep.mubr.bf16.mxu0 %v6091
    %6399 = vmatmul.mubr.bf16.gmra.mrb[0].mxu0 %v6090
    %v6400 = vpop.f32.mrb[0].mxu0
    %v6401 = vadd.f32 %v6360, %v6400
    %v6402 = vpop.f32.mrb[0].mxu0
    %v6403 = vadd.f32 %v6362, %v6402
    %v6404 = vpop.f32.mrb[0].mxu0
    %v6405 = vpop.f32.mrb[0].mxu0
    %6406 = vdwg.mxu0
    %v6407 = vmax.f32 %v6319, 0.0
    %v6408 = vmax.f32 %v6321, 0.0
    %v6409 = vmax.f32 %v6401, 0.0
    %v6410 = vmax.f32 %v6403, 0.0
    %s6411 = smul.u32 %s6084, 2
    %s6412 = sshll.u32 %s6411, 4
    %6413 = dma.done %s1658, %s6412
    %v6414 = vpack.c.bf16 %v6407, %v6407
    %v6415 = vpack.c.bf16 %v6408, %v6408
    %v6416 = vpack.c.bf16 %v6409, %v6409
    %v6417 = vpack.c.bf16 %v6410, %v6410
    %v6418 = vld [vmem:[#allocation4] sm:$0xff]
    %v6419 = vld [vmem:[#allocation4 + $0x8] sm:$0xff]
    %v6420 = vld [vmem:[#allocation4 + $0x10] sm:$0xff]
    %v6421 = vld [vmem:[#allocation4 + $0x18] sm:$0xff]
    %v6422 = vld [vmem:[#allocation4 + $0x20] sm:$0xff]
    %v6423 = vld [vmem:[#allocation4 + $0x28] sm:$0xff]
    %v6424 = vld [vmem:[#allocation4 + $0x30] sm:$0xff]
    %v6425 = vld [vmem:[#allocation4 + $0x38] sm:$0xff]
    %v6426 = vld [vmem:[#allocation4 + $0x40] sm:$0xff]
    %v6427 = vld [vmem:[#allocation4 + $0x48] sm:$0xff]
    %v6428 = vld [vmem:[#allocation4 + $0x50] sm:$0xff]
    %v6429 = vld [vmem:[#allocation4 + $0x58] sm:$0xff]
    %v6430 = vld [vmem:[#allocation4 + $0x60] sm:$0xff]
    %v6431 = vld [vmem:[#allocation4 + $0x68] sm:$0xff]
    %v6432 = vld [vmem:[#allocation4 + $0x70] sm:$0xff]
    %v6433 = vld [vmem:[#allocation4 + $0x78] sm:$0xff]
    %v6434 = vld [vmem:[#allocation4 + $0x80] sm:$0xff]
    %v6435 = vld [vmem:[#allocation4 + $0x88] sm:$0xff]
    %v6436 = vld [vmem:[#allocation4 + $0x90] sm:$0xff]
    %v6437 = vld [vmem:[#allocation4 + $0x98] sm:$0xff]
    %v6438 = vld [vmem:[#allocation4 + $0xa0] sm:$0xff]
    %v6439 = vld [vmem:[#allocation4 + $0xa8] sm:$0xff]
    %v6440 = vld [vmem:[#allocation4 + $0xb0] sm:$0xff]
    %v6441 = vld [vmem:[#allocation4 + $0xb8] sm:$0xff]
    %v6442 = vld [vmem:[#allocation4 + $0xc0] sm:$0xff]
    %v6443 = vld [vmem:[#allocation4 + $0xc8] sm:$0xff]
    %v6444 = vld [vmem:[#allocation4 + $0xd0] sm:$0xff]
    %v6445 = vld [vmem:[#allocation4 + $0xd8] sm:$0xff]
    %v6446 = vld [vmem:[#allocation4 + $0xe0] sm:$0xff]
    %v6447 = vld [vmem:[#allocation4 + $0xe8] sm:$0xff]
    %v6448 = vld [vmem:[#allocation4 + $0xf0] sm:$0xff]
    %v6449 = vld [vmem:[#allocation4 + $0xf8] sm:$0xff]
    %v6450 = vld [vmem:[#allocation4 + $0x100] sm:$0xff]
    %v6451 = vld [vmem:[#allocation4 + $0x108] sm:$0xff]
    %v6452 = vld [vmem:[#allocation4 + $0x110] sm:$0xff]
    %v6453 = vld [vmem:[#allocation4 + $0x118] sm:$0xff]
    %v6454 = vld [vmem:[#allocation4 + $0x120] sm:$0xff]
    %v6455 = vld [vmem:[#allocation4 + $0x128] sm:$0xff]
    %v6456 = vld [vmem:[#allocation4 + $0x130] sm:$0xff]
    %v6457 = vld [vmem:[#allocation4 + $0x138] sm:$0xff]
    %v6458 = vld [vmem:[#allocation4 + $0x140] sm:$0xff]
    %v6459 = vld [vmem:[#allocation4 + $0x148] sm:$0xff]
    %v6460 = vld [vmem:[#allocation4 + $0x150] sm:$0xff]
    %v6461 = vld [vmem:[#allocation4 + $0x158] sm:$0xff]
    %v6462 = vld [vmem:[#allocation4 + $0x160] sm:$0xff]
    %v6463 = vld [vmem:[#allocation4 + $0x168] sm:$0xff]
    %v6464 = vld [vmem:[#allocation4 + $0x170] sm:$0xff]
    %v6465 = vld [vmem:[#allocation4 + $0x178] sm:$0xff]
    %v6466 = vld [vmem:[#allocation4 + $0x180] sm:$0xff]
    %v6467 = vld [vmem:[#allocation4 + $0x188] sm:$0xff]
    %v6468 = vld [vmem:[#allocation4 + $0x190] sm:$0xff]
    %v6469 = vld [vmem:[#allocation4 + $0x198] sm:$0xff]
    %v6470 = vld [vmem:[#allocation4 + $0x1a0] sm:$0xff]
    %v6471 = vld [vmem:[#allocation4 + $0x1a8] sm:$0xff]
    %v6472 = vld [vmem:[#allocation4 + $0x1b0] sm:$0xff]
    %v6473 = vld [vmem:[#allocation4 + $0x1b8] sm:$0xff]
    %v6474 = vld [vmem:[#allocation4 + $0x1c0] sm:$0xff]
    %v6475 = vld [vmem:[#allocation4 + $0x1c8] sm:$0xff]
    %v6476 = vld [vmem:[#allocation4 + $0x1d0] sm:$0xff]
    %v6477 = vld [vmem:[#allocation4 + $0x1d8] sm:$0xff]
    %v6478 = vld [vmem:[#allocation4 + $0x1e0] sm:$0xff]
    %v6479 = vld [vmem:[#allocation4 + $0x1e8] sm:$0xff]
    %v6480 = vld [vmem:[#allocation4 + $0x1f0] sm:$0xff]
    %v6481 = vld [vmem:[#allocation4 + $0x1f8] sm:$0xff]
    %s6482 = scalar_lea.vmem %s2, 2
    %v6483 = vld [vmem:[%s6482] ss:$8 sm:$0x3]
    %v6485 = vlaneseq
    %v6486 = vshrl.u32 %v6485, 7
    %v6487 = vsub.s32 0, %v6486
    %v6488 = vrot.slane %v6483, %v6487
    %v6489 = vlaneseq
    %v6490 = vshrl.u32 %v6489, 7
    %v6491 = vsub.s32 1, %v6490
    %v6492 = vrot.slane %v6483, %v6491
    %6495 = vmatprep.subr.bf16.mxu0 %v6419
    %6496 = vmatpush1.bf16.msra.mxu0 %v6418
    %6497 = vmatprep.subr.bf16.mxu0 %v6421
    %6498 = vmatpush1.bf16.msra.mxu0 %v6420
    %6499 = vmatprep.subr.bf16.mxu0 %v6423
    %6500 = vmatpush1.bf16.msra.mxu0 %v6422
    %6501 = vmatprep.subr.bf16.mxu0 %v6425
    %6502 = vmatpush1.bf16.msra.mxu0 %v6424
    %6503 = vmatprep.subr.bf16.mxu0 %v6427
    %6504 = vmatpush1.bf16.msra.mxu0 %v6426
    %6505 = vmatprep.subr.bf16.mxu0 %v6429
    %6506 = vmatpush1.bf16.msra.mxu0 %v6428
    %6507 = vmatprep.subr.bf16.mxu0 %v6431
    %6508 = vmatpush1.bf16.msra.mxu0 %v6430
    %6509 = vmatprep.subr.bf16.mxu0 %v6433
    %6510 = vmatpush1.bf16.msra.mxu0 %v6432
    %6511 = vmatprep.subr.bf16.mxu0 %v6435
    %6512 = vmatpush1.bf16.msra.mxu0 %v6434
    %6513 = vmatprep.subr.bf16.mxu0 %v6437
    %6514 = vmatpush1.bf16.msra.mxu0 %v6436
    %6515 = vmatprep.subr.bf16.mxu0 %v6439
    %6516 = vmatpush1.bf16.msra.mxu0 %v6438
    %6517 = vmatprep.subr.bf16.mxu0 %v6441
    %6518 = vmatpush1.bf16.msra.mxu0 %v6440
    %6519 = vmatprep.subr.bf16.mxu0 %v6443
    %6520 = vmatpush1.bf16.msra.mxu0 %v6442
    %6521 = vmatprep.subr.bf16.mxu0 %v6445
    %6522 = vmatpush1.bf16.msra.mxu0 %v6444
    %6523 = vmatprep.subr.bf16.mxu0 %v6447
    %6524 = vmatpush1.bf16.msra.mxu0 %v6446
    %6525 = vmatprep.subr.bf16.mxu0 %v6449
    %6526 = vmatpush1.bf16.msra.mxu0 %v6448
    %6527 = vmatprep.mubr.bf16.mxu0 %v6415
    %6528 = vmatmul.mubr.bf16.gmra.mrb[0].mxu0 %v6414
    %v6529 = vpop.f32.mrb[0].mxu0
    %v6530 = vadd.f32 %v6488, %v6529
    %v6531 = vpop.f32.mrb[0].mxu0
    %v6532 = vadd.f32 %v6492, %v6531
    %v6533 = vpop.f32.mrb[0].mxu0
    %v6534 = vpop.f32.mrb[0].mxu0
    %6535 = vdwg.mxu0
    %6536 = vmatprep.subr.bf16.mxu0 %v6451
    %6537 = vmatpush1.bf16.msra.mxu0 %v6450
    %6538 = vmatprep.subr.bf16.mxu0 %v6453
    %6539 = vmatpush1.bf16.msra.mxu0 %v6452
    %6540 = vmatprep.subr.bf16.mxu0 %v6455
    %6541 = vmatpush1.bf16.msra.mxu0 %v6454
    %6542 = vmatprep.subr.bf16.mxu0 %v6457
    %6543 = vmatpush1.bf16.msra.mxu0 %v6456
    %6544 = vmatprep.subr.bf16.mxu0 %v6459
    %6545 = vmatpush1.bf16.msra.mxu0 %v6458
    %6546 = vmatprep.subr.bf16.mxu0 %v6461
    %6547 = vmatpush1.bf16.msra.mxu0 %v6460
    %6548 = vmatprep.subr.bf16.mxu0 %v6463
    %6549 = vmatpush1.bf16.msra.mxu0 %v6462
    %6550 = vmatprep.subr.bf16.mxu0 %v6465
    %6551 = vmatpush1.bf16.msra.mxu0 %v6464
    %6552 = vmatprep.subr.bf16.mxu0 %v6467
    %6553 = vmatpush1.bf16.msra.mxu0 %v6466
    %6554 = vmatprep.subr.bf16.mxu0 %v6469
    %6555 = vmatpush1.bf16.msra.mxu0 %v6468
    %6556 = vmatprep.subr.bf16.mxu0 %v6471
    %6557 = vmatpush1.bf16.msra.mxu0 %v6470
    %6558 = vmatprep.subr.bf16.mxu0 %v6473
    %6559 = vmatpush1.bf16.msra.mxu0 %v6472
    %6560 = vmatprep.subr.bf16.mxu0 %v6475
    %6561 = vmatpush1.bf16.msra.mxu0 %v6474
    %6562 = vmatprep.subr.bf16.mxu0 %v6477
    %6563 = vmatpush1.bf16.msra.mxu0 %v6476
    %6564 = vmatprep.subr.bf16.mxu0 %v6479
    %6565 = vmatpush1.bf16.msra.mxu0 %v6478
    %6566 = vmatprep.subr.bf16.mxu0 %v6481
    %6567 = vmatpush1.bf16.msra.mxu0 %v6480
    %6568 = vmatprep.mubr.bf16.mxu0 %v6417
    %6569 = vmatmul.mubr.bf16.gmra.mrb[0].mxu0 %v6416
    %v6570 = vpop.f32.mrb[0].mxu0
    %v6571 = vadd.f32 %v6530, %v6570
    %v6572 = vpop.f32.mrb[0].mxu0
    %v6573 = vadd.f32 %v6532, %v6572
    %v6574 = vpop.f32.mrb[0].mxu0
    %v6575 = vpop.f32.mrb[0].mxu0
    %6576 = vdwg.mxu0
    %v6577 = vmax.f32 %v6571, 0.0
    %v6578 = vmax.f32 %v6573, 0.0
    %s6579 = smul.u32 4, 32
    %s6580 = smul.u32 %s6579, 1
    %s6581 = sshll.u32 %s6580, 4
    %6582 = dma.done %s2219, %s6581
    %v6583 = vpack.c.bf16 %v6577, %v6577
    %v6584 = vpack.c.bf16 %v6578, %v6578
    %v6585 = vld [vmem:[#allocation5] sm:$0xff]
    %v6586 = vld [vmem:[#allocation5 + $0x8] sm:$0xff]
    %v6587 = vld [vmem:[#allocation5 + $0x10] sm:$0xff]
    %v6588 = vld [vmem:[#allocation5 + $0x18] sm:$0xff]
    %v6589 = vld [vmem:[#allocation5 + $0x20] sm:$0xff]
    %v6590 = vld [vmem:[#allocation5 + $0x28] sm:$0xff]
    %v6591 = vld [vmem:[#allocation5 + $0x30] sm:$0xff]
    %v6592 = vld [vmem:[#allocation5 + $0x38] sm:$0xff]
    %v6593 = vld [vmem:[#allocation5 + $0x40] sm:$0xff]
    %v6594 = vld [vmem:[#allocation5 + $0x48] sm:$0xff]
    %v6595 = vld [vmem:[#allocation5 + $0x50] sm:$0xff]
    %v6596 = vld [vmem:[#allocation5 + $0x58] sm:$0xff]
    %v6597 = vld [vmem:[#allocation5 + $0x60] sm:$0xff]
    %v6598 = vld [vmem:[#allocation5 + $0x68] sm:$0xff]
    %v6599 = vld [vmem:[#allocation5 + $0x70] sm:$0xff]
    %v6600 = vld [vmem:[#allocation5 + $0x78] sm:$0xff]
    %v6601 = vld [vmem:[%s2 + $0x3] ss:$0 sm:$0xff]
    %6602 = vmatprep.subr.bf16.mxu0 0
    %6603 = vmatpush1.bf16.msra.mxu0 %v6585
    %6604 = vmatprep.subr.bf16.mxu0 0
    %6605 = vmatpush1.bf16.msra.mxu0 %v6586
    %6606 = vmatprep.subr.bf16.mxu0 0
    %6607 = vmatpush1.bf16.msra.mxu0 %v6587
    %6608 = vmatprep.subr.bf16.mxu0 0
    %6609 = vmatpush1.bf16.msra.mxu0 %v6588
    %6610 = vmatprep.subr.bf16.mxu0 0
    %6611 = vmatpush1.bf16.msra.mxu0 %v6589
    %6612 = vmatprep.subr.bf16.mxu0 0
    %6613 = vmatpush1.bf16.msra.mxu0 %v6590
    %6614 = vmatprep.subr.bf16.mxu0 0
    %6615 = vmatpush1.bf16.msra.mxu0 %v6591
    %6616 = vmatprep.subr.bf16.mxu0 0
    %6617 = vmatpush1.bf16.msra.mxu0 %v6592
    %6618 = vmatprep.subr.bf16.mxu0 0
    %6619 = vmatpush1.bf16.msra.mxu0 %v6593
    %6620 = vmatprep.subr.bf16.mxu0 0
    %6621 = vmatpush1.bf16.msra.mxu0 %v6594
    %6622 = vmatprep.subr.bf16.mxu0 0
    %6623 = vmatpush1.bf16.msra.mxu0 %v6595
    %6624 = vmatprep.subr.bf16.mxu0 0
    %6625 = vmatpush1.bf16.msra.mxu0 %v6596
    %6626 = vmatprep.subr.bf16.mxu0 0
    %6627 = vmatpush1.bf16.msra.mxu0 %v6597
    %6628 = vmatprep.subr.bf16.mxu0 0
    %6629 = vmatpush1.bf16.msra.mxu0 %v6598
    %6630 = vmatprep.subr.bf16.mxu0 0
    %6631 = vmatpush1.bf16.msra.mxu0 %v6599
    %6632 = vmatprep.subr.bf16.mxu0 0
    %6633 = vmatpush1.bf16.msra.mxu0 %v6600
    %6634 = vmatprep.mubr.bf16.mxu0 %v6584
    %6635 = vmatmul.mubr.bf16.gmra.mrb[0].mxu0 %v6583
    %v6636 = vpop.f32.mrb[0].mxu0
    %v6637 = vadd.f32 %v6601, %v6636
    %v6638 = vpop.f32.mrb[0].mxu0
    %v6639 = vpop.f32.mrb[0].mxu0
    %v6640 = vpop.f32.mrb[0].mxu0
    %6641 = vdwg.mxu0
    %v6642 = vmax.f32 %v6637, 0.0
    %s6643 = smul.u32 4, 16
    %s6644 = smul.u32 %s6643, 1
    %s6645 = sshll.u32 %s6644, 4
    %6646 = dma.done %s2292, %s6645
    %v6647 = vpack.c.bf16 %v6642, %v6642
    %v6648 = vld [vmem:[#allocation6] sm:$0xff]
    %v6649 = vld [vmem:[#allocation6 + $0x8] sm:$0xff]
    %v6650 = vld [vmem:[#allocation6 + $0x10] sm:$0xff]
    %v6651 = vld [vmem:[#allocation6 + $0x18] sm:$0xff]
    %v6652 = vld [vmem:[#allocation6 + $0x20] sm:$0xff]
    %v6653 = vld [vmem:[#allocation6 + $0x28] sm:$0xff]
    %v6654 = vld [vmem:[#allocation6 + $0x30] sm:$0xff]
    %v6655 = vld [vmem:[#allocation6 + $0x38] sm:$0xff]
    %v6656 = vld [vmem:[%s2 + $0x4] ss:$0 sm:$0xff]
    %6657 = vmatprep.subr.bf16.mxu0 0
    %6658 = vmatpush1.bf16.msra.mxu0 %v6648
    %6659 = vmatprep.subr.bf16.mxu0 0
    %6660 = vmatpush1.bf16.msra.mxu0 %v6649
    %6661 = vmatprep.subr.bf16.mxu0 0
    %6662 = vmatpush1.bf16.msra.mxu0 %v6650
    %6663 = vmatprep.subr.bf16.mxu0 0
    %6664 = vmatpush1.bf16.msra.mxu0 %v6651
    %6665 = vmatprep.subr.bf16.mxu0 0
    %6666 = vmatpush1.bf16.msra.mxu0 %v6652
    %6667 = vmatprep.subr.bf16.mxu0 0
    %6668 = vmatpush1.bf16.msra.mxu0 %v6653
    %6669 = vmatprep.subr.bf16.mxu0 0
    %6670 = vmatpush1.bf16.msra.mxu0 %v6654
    %6671 = vmatprep.subr.bf16.mxu0 0
    %6672 = vmatpush1.bf16.msra.mxu0 %v6655
    %6673 = vmatprep.subr.bf16.mxu0 0
    %6674 = vmatpush1.bf16.msra.mxu0 0
    %6675 = vmatprep.subr.bf16.mxu0 0
    %6676 = vmatpush1.bf16.msra.mxu0 0
    %6677 = vmatprep.subr.bf16.mxu0 0
    %6678 = vmatpush1.bf16.msra.mxu0 0
    %6679 = vmatprep.subr.bf16.mxu0 0
    %6680 = vmatpush1.bf16.msra.mxu0 0
    %6681 = vmatprep.subr.bf16.mxu0 0
    %6682 = vmatpush1.bf16.msra.mxu0 0
    %6683 = vmatprep.subr.bf16.mxu0 0
    %6684 = vmatpush1.bf16.msra.mxu0 0
    %6685 = vmatprep.subr.bf16.mxu0 0
    %6686 = vmatpush1.bf16.msra.mxu0 0
    %6687 = vmatprep.subr.bf16.mxu0 0
    %6688 = vmatpush1.bf16.msra.mxu0 0
    %6689 = vmatprep.mubr.bf16.mxu0 0
    %6690 = vmatmul.mubr.bf16.gmra.mrb[0].mxu0 %v6647
    %v6691 = vpop.f32.mrb[0].mxu0
    %v6692 = vadd.f32 %v6656, %v6691
    %v6693 = vpop.f32.mrb[0].mxu0
    %v6694 = vpop.f32.mrb[0].mxu0
    %v6695 = vpop.f32.mrb[0].mxu0
    %6696 = vdwg.mxu0
    %v6697 = vmax.f32 %v6692, 0.0
    %v6698 = vld [vmem:[%s2 + $0x6] ss:$0 sm:$0xff]
    %v6699 = vld [vmem:[%s2 + $0x5] ss:$0 sm:$0xff]
    %v6700 = vmul.f32 %v6697, %v6698
    %vm6701 = vcmask 517120
    %v6702 = vsel %vm6701, %v6700, 0.0
    %6703 = vadd.xlane.f32.xlu0 %v6702
    %v6704 = vpop.xlane.xlu0 %6703
    %v6705 = vadd.f32 %v6704, %v6699
    %v6706 = vmax.f32 %v6705, 0.0
    %vm6707 = vcmask 1024
    %6708 = vst.msk [vmem:[%s8] sm:$0x3] %vm6707, %v6706
    // Predicated region
    $region194: #{model_forward.1} parent=1 // pred_check
      _
    $region195: #{model_forward.1} parent=1 // pred_check_branch
      %6710 = sbr.rel (0) target = $region197
    $region196: #{model_forward.1} parent=1 // pred_region
      _
    $region197: #{model_forward.1} parent=1 // pred_fallthru
      _
    // Predicated region
    $region198: #{model_forward.1} parent=1 // pred_check
      _
    $region199: #{model_forward.1} parent=1 // pred_check_branch
      %6712 = sbr.rel (0) target = $region201
    $region200: #{model_forward.1} parent=1 // pred_region
      _
    $region201: #{model_forward.1} parent=1 // pred_fallthru
      _
    %6713 = vsyncpa [#allocation9], 1
  %6714 = vsyncmov [#allocation7]
  %s6715 = vpop.sfrf %6714
  %p6716 = scmp.eq.s32.totalorder %s6715, 0
  %p6717 = pneg %p6716
  %6719 = shalt.err (%p6717)
  %s6720 = scalar_lea.sflag [#allocation7], 1
  %6721 = vsyncmov %s6720
  %s6722 = vpop.sfrf %6721
  %p6723 = scmp.eq.s32.totalorder %s6722, 0
  %p6724 = pneg %p6723
  %6726 = shalt.err (%p6724)
  %s6727 = scalar_lea.sflag [#allocation7], 2
  %6728 = vsyncmov %s6727
  %s6729 = vpop.sfrf %6728
  %p6730 = scmp.eq.s32.totalorder %s6729, 0
  %p6731 = pneg %p6730
  %6733 = shalt.err (%p6731)
  %s6734 = scalar_lea.sflag [#allocation7], 3
  %6735 = vsyncmov %s6734
  %s6736 = vpop.sfrf %6735
  %p6737 = scmp.eq.s32.totalorder %s6736, 0
  %p6738 = pneg %p6737
  %6740 = shalt.err (%p6738)
  %s6741 = scalar_lea.sflag [#allocation7], 4
  %6742 = vsyncmov %s6741
  %s6743 = vpop.sfrf %6742
  %p6744 = scmp.eq.s32.totalorder %s6743, 0
  %p6745 = pneg %p6744
  %6747 = shalt.err (%p6745)

</llo_original>
